<compile_context>
chip_gen: v7x
topology: tpu7x:2x2x1
jax: 0.10.0
libtpu: 0.0.40
codegen_flags: <defaults>
</compile_context>

<pallas_src>
import jax
import jax.numpy as jnp
from jax.experimental import pallas as pl
from jax.experimental.pallas import tpu as pltpu

EPS = 1e-8       # matches module-level EPS
LN_EPS = 1e-5    # PyTorch nn.LayerNorm default eps
PATCH_SIZE = 14
STRIDE = 7


def _round_up(x, m):
    return ((x + m - 1) // m) * m


def _tpu_vmem_bytes():
    """Per-core VMEM capacity; falls back to the v7x floor (64 MiB) if the query fails."""
    try:
        return int(pltpu.get_tpu_info().vmem_capacity_bytes)
    except Exception:  # pragma: no cover - query unavailable
        return 64 * 1024 * 1024


# ----------------------------------------------------------------------------
# Kernel helpers
# ----------------------------------------------------------------------------
def _layernorm(x, g, b):
    mu = jnp.mean(x, axis=-1, keepdims=True)
    var = jnp.mean((x - mu) ** 2, axis=-1, keepdims=True)
    return (x - mu) * jax.lax.rsqrt(var + LN_EPS) * g + b


# ----------------------------------------------------------------------------
# Kernel 1: FeatureFusion, grid = (token_tiles,)
#   All 5 pyramid levels are handled inside one grid step.  Weights are grid-invariant
#   (fetched once); the 5 projector matrices are held resident in a VMEM scratch that is
#   filled by a single manual DMA at the first grid step.
# ----------------------------------------------------------------------------
def fusion_kernel(pyw_ref,                       # SMEM (5,) softmaxed pyramid weights
                  dino_ref, blocks_ref, pW_hbm,  # activations + HBM-resident projector weights
                  dg_ref, db_ref,
                  plg_ref, plb_ref, pb_ref,
                  cg_ref, cb_ref, cW_ref, cbias_ref,
                  pyg_ref, pyb_ref,
                  fg1_ref, fb1_ref, fg2_ref, fb2_ref,
                  fW1_ref, fW2_ref, fbias_ref,
                  out_ref,
                  pW_vmem, pW_sem):
    # Load all 5 projector weight matrices into VMEM once; they stay resident for the grid.
    @pl.when(pl.program_id(0) == 0)
    def _():
        cp = pltpu.make_async_copy(pW_hbm, pW_vmem, pW_sem)
        cp.start()
        cp.wait()

    # ---- dino branch: LayerNorm + L2 norm (f32 math on the bf16-streamed tokens) ----
    dino = dino_ref[...].astype(jnp.float32)                           # [TT, C]
    dino_n = _layernorm(dino, dg_ref[...], db_ref[...])
    dino_l2 = jnp.sqrt(jnp.sum(dino_n * dino_n, axis=-1, keepdims=True))

    # ---- 5-level pyramid: LN -> Linear (bf16 MXU) -> ReLU -> norm rescale -> weighted sum ----
    combined = jnp.zeros_like(dino_n)
    for lvl in range(5):                                               # static unroll
        x = blocks_ref[lvl].astype(jnp.float32)                        # [TT, COG]
        x = _layernorm(x, plg_ref[lvl], plb_ref[lvl])
        proj = jnp.dot(x.astype(jnp.bfloat16), pW_vmem[lvl],           # bf16 x bf16 -> f32
                       preferred_element_type=jnp.float32) + pb_ref[lvl]
        proj = jnp.maximum(proj, 0.0)
        inv_n = jax.lax.rsqrt(jnp.sum(proj * proj, axis=-1, keepdims=True) + EPS)
        combined = combined + pyw_ref[lvl] * (proj * (dino_l2 * inv_n))

    # ---- combiner, pyramid_norm ----
    comb = jnp.maximum(
        jnp.dot(_layernorm(combined, cg_ref[...], cb_ref[...]).astype(jnp.bfloat16),
                cW_ref[...], preferred_element_type=jnp.float32) + cbias_ref[...], 0.0)
    comb = _layernorm(comb, pyg_ref[...], pyb_ref[...])

    # ---- final_fusion: LayerNorm over concat([dino_n, comb], -1) WITHOUT the concat,
    #      using the centered (two-pass) variance for numerical stability ----
    c = dino_n.shape[-1]
    two_c = 2.0 * c
    mu = (jnp.sum(dino_n, axis=-1, keepdims=True)
          + jnp.sum(comb, axis=-1, keepdims=True)) / two_c
    dd = dino_n - mu
    cc = comb - mu
    var = (jnp.sum(dd * dd, axis=-1, keepdims=True)
           + jnp.sum(cc * cc, axis=-1, keepdims=True)) / two_c
    inv = jax.lax.rsqrt(var + LN_EPS)
    d_h = dd * inv * fg1_ref[...] + fb1_ref[...]
    c_h = cc * inv * fg2_ref[...] + fb2_ref[...]
    fused = (jnp.dot(d_h.astype(jnp.bfloat16), fW1_ref[...],
                     preferred_element_type=jnp.float32)
             + jnp.dot(c_h.astype(jnp.bfloat16), fW2_ref[...],
                       preferred_element_type=jnp.float32)
             + fbias_ref[...])
    out_ref[...] = jnp.maximum(fused, 0.0).astype(out_ref.dtype)


def feature_fusion_forward(p, cog_stack, dino_nchw, token_tile=None):
    """cog_stack: [5, N*H*W, COG]; dino_nchw: [N, C, H, W] -> fused [N, H, W, C] (bf16)."""
    n, c, h, w = dino_nchw.shape
    n_tok = n * h * w
    cog = cog_stack.shape[-1]

    vmem_cap = _tpu_vmem_bytes()
    vmem_limit = int(vmem_cap * 0.8)             # headroom for compiler internal scratch
    if token_tile is None:
        token_tile = 512 if vmem_cap >= 96 * 1024 * 1024 else 256

    tt = min(token_tile, _round_up(n_tok, 16))   # >= 16 for bf16 tiling
    n_pad = _round_up(n_tok, tt)

    # bf16 activation streaming (f32 math happens in-kernel after the load)
    dino_tok = dino_nchw.transpose(0, 2, 3, 1).reshape(n_tok, c).astype(jnp.bfloat16)
    cog_tok = cog_stack.astype(jnp.bfloat16)
    if n_pad != n_tok:
        dino_tok = jnp.pad(dino_tok, ((0, n_pad - n_tok), (0, 0)))
        cog_tok = jnp.pad(cog_tok, ((0, 0), (0, n_pad - n_tok), (0, 0)))

    # softmaxed pyramid weights via scalar prefetch (SMEM)
    pyw = jax.nn.softmax(p['pyramid_weights'].astype(jnp.float32))     # (5,)

    # bf16 weights for the MXU (halves weight DMA / VMEM footprint)
    pW_bf = p['proj_W'].astype(jnp.bfloat16)            # (5, COG, C) - stays in HBM, cached once
    cW_bf = p['comb_W'].astype(jnp.bfloat16)            # (C, C)
    fW1_bf = p['fin_W'][:c].astype(jnp.bfloat16)        # (C, C)
    fW2_bf = p['fin_W'][c:].astype(jnp.bfloat16)        # (C, C)
    fg1, fg2 = p['fin_ln_g'][:, :c], p['fin_ln_g'][:, c:]
    fb1, fb2 = p['fin_ln_b'][:, :c], p['fin_ln_b'][:, c:]

    plg = p['proj_ln_g'][:, None, :]                    # (5, 1, COG)
    plb = p['proj_ln_b'][:, None, :]
    pb = p['proj_b'][:, None, :]                        # (5, 1, C)

    tok = lambda i, pw: (i, 0)
    blk = lambda i, pw: (0, i, 0)
    cst2 = lambda i, pw: (0, 0)
    cst3 = lambda i, pw: (0, 0, 0)

    out = pl.pallas_call(
        fusion_kernel,
        out_shape=jax.ShapeDtypeStruct((n_pad, c), jnp.bfloat16),
        grid_spec=pltpu.PrefetchScalarGridSpec(
            num_scalar_prefetch=1,
            grid=(n_pad // tt,),
            in_specs=[
                pl.BlockSpec((tt, c), tok),                                   # dino tokens (bf16)
                pl.BlockSpec((5, tt, cog), blk),                              # 5-level slab (bf16)
                pl.BlockSpec(memory_space=pl.ANY),                            # projector weights (HBM)
                pl.BlockSpec((1, c), cst2), pl.BlockSpec((1, c), cst2),       # dino_norm g,b
                pl.BlockSpec((5, 1, cog), cst3), pl.BlockSpec((5, 1, cog), cst3),  # proj LN g,b
                pl.BlockSpec((5, 1, c), cst3),                                # proj bias
                pl.BlockSpec((1, c), cst2), pl.BlockSpec((1, c), cst2),       # combiner LN g,b
                pl.BlockSpec((c, c), cst2), pl.BlockSpec((1, c), cst2),       # combiner W,b
                pl.BlockSpec((1, c), cst2), pl.BlockSpec((1, c), cst2),       # pyramid_norm g,b
                pl.BlockSpec((1, c), cst2), pl.BlockSpec((1, c), cst2),       # final LN g1,b1
                pl.BlockSpec((1, c), cst2), pl.BlockSpec((1, c), cst2),       # final LN g2,b2
                pl.BlockSpec((c, c), cst2), pl.BlockSpec((c, c), cst2),       # final W halves
                pl.BlockSpec((1, c), cst2),                                   # final bias
            ],
            out_specs=pl.BlockSpec((tt, c), tok),
            scratch_shapes=[pltpu.VMEM((5, cog, c), jnp.bfloat16),   # resident projector weights
                            pltpu.SemaphoreType.DMA(())],
        ),
        compiler_params=pltpu.CompilerParams(
            dimension_semantics=("arbitrary",),      # sequential -> one-shot weight load is safe
            vmem_limit_bytes=vmem_limit),
    )(pyw, dino_tok, cog_tok, pW_bf,
      p['dino_ln_g'], p['dino_ln_b'],
      plg, plb, pb,
      p['comb_ln_g'], p['comb_ln_b'], cW_bf, p['comb_b'],
      p['pyr_ln_g'], p['pyr_ln_b'],
      fg1, fb1, fg2, fb2, fW1_bf, fW2_bf, p['fin_b'])
    return out[:n_tok].reshape(n, h, w, c)            # NHWC, bf16 (token-major native layout)


# ----------------------------------------------------------------------------
# Kernel 2: cosine-normalized correlation maps + ReLU
#   grid = (hw_tiles, frames); output is lane-dense [B, HW]; frame axis is the
#   (sequential) accumulation axis, hw tiles can be sharded across cores.
# ----------------------------------------------------------------------------
def corr_kernel(src_ref, snorm_ref, tidx_ref, frames_ref, out_ref):
    ni = pl.program_id(1)

    @pl.when(ni == 0)
    def _():
        out_ref[...] = jnp.zeros_like(out_ref)

    f = frames_ref[0]                                                  # [THW, C] (bf16)
    # [B, THW] = src @ f^T  (HW on the 128-lane axis -> unmasked stores)
    corr = jax.lax.dot_general(src_ref[...], f, (((1,), (1,)), ((), ())),
                               preferred_element_type=jnp.float32)
    # frame-embedding norms in [1, THW] layout via a ones-vector matmul (no relayout)
    f32 = f.astype(jnp.float32)
    ones = jnp.ones((1, f32.shape[-1]), jnp.float32)
    en2 = jax.lax.dot_general(ones, f32 * f32, (((1,), (1,)), ((), ())),
                              preferred_element_type=jnp.float32)      # [1, THW]
    emb_norm = jnp.sqrt(en2)
    denom = jnp.maximum(snorm_ref[...] * emb_norm, EPS)                # clamp(min=EPS)
    val = jnp.maximum(corr * pl.reciprocal(denom, approx=True), 0.0)   # cosine + cmap_relu
    # TODO(synk): for large B, sort points by target frame + scalar-prefetch column offsets
    # to avoid the N_frames x masked matmul work below.
    mask = tidx_ref[...] == ni                                         # [B, 1] target-frame select
    out_ref[...] = out_ref[...] + jnp.where(mask, val, 0.0)


def corr_maps_relu_pallas(src_emb, fused_nhwc, target_frame_indices, hw_tile=512):
    n, h, w, c = fused_nhwc.shape
    hw = h * w
    b = src_emb.shape[0]

    hw_pad = _round_up(hw, 128)
    thw = min(hw_tile, hw_pad)
    hw_pad = _round_up(hw_pad, thw)
    b_pad = _round_up(b, 8)

    frames = fused_nhwc.reshape(n, hw, c).astype(jnp.bfloat16)          # token-major, no transpose
    if hw_pad != hw:
        frames = jnp.pad(frames, ((0, 0), (0, hw_pad - hw), (0, 0)))

    src32 = src_emb.astype(jnp.float32)
    src_bf = src32.astype(jnp.bfloat16)                                 # [B, C]
    snorm = jnp.linalg.norm(src32, axis=1, keepdims=True)               # [B, 1]
    tidx = target_frame_indices.astype(jnp.int32)[:, None]              # [B, 1]
    if b_pad != b:
        src_bf = jnp.pad(src_bf, ((0, b_pad - b), (0, 0)))
        snorm = jnp.pad(snorm, ((0, b_pad - b), (0, 0)))
        tidx = jnp.pad(tidx, ((0, b_pad - b), (0, 0)))

    out_b_hw = pl.pallas_call(
        corr_kernel,
        out_shape=jax.ShapeDtypeStruct((b_pad, hw_pad), jnp.float32),
        grid_spec=pltpu.PrefetchScalarGridSpec(
            num_scalar_prefetch=0,
            grid=(hw_pad // thw, n),
            in_specs=[
                pl.BlockSpec((b_pad, c), lambda hi, ni: (0, 0)),         # source embeddings
                pl.BlockSpec((b_pad, 1), lambda hi, ni: (0, 0)),         # source norms
                pl.BlockSpec((b_pad, 1), lambda hi, ni: (0, 0)),         # target frame ids
                pl.BlockSpec((1, thw, c), lambda hi, ni: (ni, hi, 0)),   # frame hw-tile
            ],
            out_specs=pl.BlockSpec((b_pad, thw), lambda hi, ni: (0, hi)),
        ),
        compiler_params=pltpu.CompilerParams(
            dimension_semantics=("parallel", "arbitrary"),
            vmem_limit_bytes=int(_tpu_vmem_bytes() * 0.8)),
    )(src_bf, snorm, tidx, frames)
    return out_b_hw[:b, :hw].reshape(b, 1, h, w)                        # pure reshape, no transpose


# ----------------------------------------------------------------------------
# Glue (plain JAX): point normalization + bilinear sampling of embeddings
# ----------------------------------------------------------------------------
def normalize_points_for_sampling(points, vid_h, vid_w, patch_size, stride):
    last_coord_h = (vid_h - patch_size) // stride * stride + patch_size / 2
    last_coord_w = (vid_w - patch_size) // stride * stride + patch_size / 2
    ah = 2 / (last_coord_h - patch_size / 2)
    aw = 2 / (last_coord_w - patch_size / 2)
    bh = 1 - last_coord_h * 2 / (last_coord_h - patch_size / 2)
    bw = 1 - last_coord_w * 2 / (last_coord_w - patch_size / 2)
    a = jnp.array([[aw, ah, 1.0]], jnp.float32)
    b = jnp.array([[bw, bh, 0.0]], jnp.float32)
    return a * points.astype(jnp.float32) + b


def sample_embeddings_bilinear(fused_nhwc, pts_xy, src_frame_idx):
    # TODO(synk): bilinear_interpolate_video is external; align_corners bilinear in x/y,
    # exact integer frame index in t (which is what the Tracker feeds it).
    n, h, w, c = fused_nhwc.shape
    bsz = pts_xy.shape[0]
    px = jnp.clip((pts_xy[:, 0] + 1.0) * 0.5 * (w - 1), 0.0, w - 1)
    py = jnp.clip((pts_xy[:, 1] + 1.0) * 0.5 * (h - 1), 0.0, h - 1)
    x0 = jnp.floor(px); y0 = jnp.floor(py)
    x1 = jnp.minimum(x0 + 1, w - 1); y1 = jnp.minimum(y0 + 1, h - 1)
    wx = (px - x0)[:, None]; wy = (py - y0)[:, None]
    f = fused_nhwc[src_frame_idx.astype(jnp.int32)].astype(jnp.float32)  # [B, H, W, C]
    bi = jnp.arange(bsz)

    def g(yi, xi):
        return f[bi, yi.astype(jnp.int32), xi.astype(jnp.int32), :]      # [B, C]

    return (g(y0, x0) * (1 - wx) * (1 - wy) + g(y0, x1) * wx * (1 - wy)
            + g(y1, x0) * (1 - wx) * wy + g(y1, x1) * wx * wy)


# ----------------------------------------------------------------------------
# Tracker.forward
# ----------------------------------------------------------------------------
def tracker_forward(params, vid_hw, dino_embed_video, cogvideo_features,
                    source_points, source_frame_indices, target_frame_indices,
                    frames_set_t):
    vid_h, vid_w = vid_hw
    frames_dino = dino_embed_video[frames_set_t]                    # [N, C, H, W]
    # TODO(synk): DeltaDINO residual refiner source not provided; residual embeddings = 0.
    refined_dino = frames_dino

    blocks = [0, 7, 14, 21, 29]
    cog_dim = cogvideo_features['block_0_hidden'].shape[-1]
    cog_stack = jnp.stack(
        [cogvideo_features[f'block_{b}_hidden'].reshape(-1, cog_dim) for b in blocks], axis=0)

    fused_nhwc = feature_fusion_forward(params, cog_stack, refined_dino)  # [N, H, W, C] bf16

    pts_norm = normalize_points_for_sampling(source_points, vid_h, vid_w, PATCH_SIZE, STRIDE)
    src_emb = sample_embeddings_bilinear(fused_nhwc, pts_norm[:, :2], source_frame_indices)

    corr_maps = corr_maps_relu_pallas(src_emb, fused_nhwc, target_frame_indices)  # [B, 1, H, W]
    # TODO(synk): TrackerHead (CNN refiner + coordinate regression) source not provided;
    # returning the relu'd correlation maps that feed it.
    return {'corr_maps': corr_maps, 'fused': fused_nhwc, 'src_emb': src_emb}


# ----------------------------------------------------------------------------
# Deterministic parameter init
# ----------------------------------------------------------------------------
def init_params(key, c, cog):
    ks = list(jax.random.split(key, 20))

    def nz(k, shape, s=0.05):
        return (jax.random.normal(k, shape) * s).astype(jnp.float32)

    p = {}
    # init_weights = ones(5) + randn(5)*0.01 ; temperature = 1.0 (TODO(synk): config missing)
    p['pyramid_weights'] = (jnp.ones(5) + jax.random.normal(ks[0], (5,)) * 0.01).astype(jnp.float32)
    p['dino_ln_g'] = jnp.ones((1, c), jnp.float32) + nz(ks[1], (1, c), 0.02)
    p['dino_ln_b'] = nz(ks[2], (1, c), 0.02)
    p['proj_ln_g'] = jnp.ones((5, cog), jnp.float32) + nz(ks[3], (5, cog), 0.02)
    p['proj_ln_b'] = nz(ks[4], (5, cog), 0.02)
    p['proj_W'] = nz(ks[5], (5, cog, c), 0.1)
    p['proj_b'] = nz(ks[6], (5, c), 0.02)
    p['comb_ln_g'] = jnp.ones((1, c), jnp.float32) + nz(ks[7], (1, c), 0.02)
    p['comb_ln_b'] = nz(ks[8], (1, c), 0.02)
    p['comb_W'] = nz(ks[9], (c, c), 0.1)
    p['comb_b'] = nz(ks[10], (1, c), 0.02)
    p['pyr_ln_g'] = jnp.ones((1, c), jnp.float32) + nz(ks[11], (1, c), 0.02)
    p['pyr_ln_b'] = nz(ks[12], (1, c), 0.02)
    p['fin_ln_g'] = jnp.ones((1, 2 * c), jnp.float32) + nz(ks[13], (1, 2 * c), 0.02)
    p['fin_ln_b'] = nz(ks[14], (1, 2 * c), 0.02)
    p['fin_W'] = nz(ks[15], (2 * c, c), 0.1)
    p['fin_b'] = nz(ks[16], (1, c), 0.02)
    return p


# ----------------------------------------------------------------------------
# Pure-JAX references (for a light numerical check)
# ----------------------------------------------------------------------------
def fusion_reference(p, cog_stack, dino_nchw):
    n, c, h, w = dino_nchw.shape

    def ln(v, g, b):
        mu = v.mean(-1, keepdims=True)
        var = ((v - mu) ** 2).mean(-1, keepdims=True)
        return (v - mu) / jnp.sqrt(var + LN_EPS) * g + b

    x = dino_nchw.transpose(0, 2, 3, 1)
    dino_n = ln(x, p['dino_ln_g'][0], p['dino_ln_b'][0])
    dino_l2 = jnp.linalg.norm(dino_n, axis=-1, keepdims=True)
    pw = jax.nn.softmax(p['pyramid_weights'])
    combined = jnp.zeros_like(dino_n)
    for lvl in range(5):
        bf = cog_stack[lvl].reshape(n, h, w, -1)
        z = ln(bf, p['proj_ln_g'][lvl], p['proj_ln_b'][lvl])
        proj = jax.nn.relu(z @ p['proj_W'][lvl] + p['proj_b'][lvl])
        fn = jnp.linalg.norm(proj, axis=-1, keepdims=True)
        proj = proj * dino_l2 / (fn + EPS)
        combined = combined + pw[lvl] * proj
    combined = jax.nn.relu(ln(combined, p['comb_ln_g'][0], p['comb_ln_b'][0]) @ p['comb_W']
                           + p['comb_b'][0])
    combined = ln(combined, p['pyr_ln_g'][0], p['pyr_ln_b'][0])
    cat = jnp.concatenate([dino_n, combined], axis=-1)
    fused = jax.nn.relu(ln(cat, p['fin_ln_g'][0], p['fin_ln_b'][0]) @ p['fin_W'] + p['fin_b'][0])
    return fused                                                # NHWC


def corr_reference(src_emb, fused_nhwc, tidx):
    b = src_emb.shape[0]
    f32 = fused_nhwc.astype(jnp.float32)
    corr_set = jnp.einsum('bc,nhwc->bnhw', src_emb, f32)
    corr = corr_set[jnp.arange(b), tidx]
    emb_norm = jnp.linalg.norm(f32, axis=-1)                    # [N, H, W]
    tnorm = emb_norm[tidx]
    snorm = jnp.linalg.norm(src_emb, axis=1)[:, None, None]
    corr = corr / jnp.maximum(snorm * tnorm, EPS)
    return jax.nn.relu(corr)[:, None]


# ----------------------------------------------------------------------------
if __name__ == "__main__":
    key = jax.random.PRNGKey(0)
    T_VIDEO, C, H, W = 5, 32, 8, 8       # DINO feature video T x C x H x W
    COG = 48                             # cogvideo hidden dim (small stand-in for 1920)
    VID_H = VID_W = 63                   # 7*(8-1)+14 -> 8x8 DINO grid (patch=14, stride=7)
    N_SET = 3                            # frames in frames_set_t
    B_PTS = 4                            # query points

    kp, kd, kc, kpts, ksrc, ktgt = jax.random.split(key, 6)
    params = init_params(kp, C, COG)

    dino_embed_video = jax.random.normal(kd, (T_VIDEO, C, H, W), jnp.float32)
    frames_set_t = jnp.array([0, 2, 4], jnp.int32)

    cog_keys = jax.random.split(kc, 5)
    cogvideo_features = {
        f'block_{b}_hidden': jax.random.normal(cog_keys[i], (N_SET, H * W, COG), jnp.float32)
        for i, b in enumerate([0, 7, 14, 21, 29])
    }

    source_points = jnp.concatenate(
        [jax.random.uniform(kpts, (B_PTS, 2), minval=8.0, maxval=55.0),
         jnp.zeros((B_PTS, 1), jnp.float32)], axis=-1)
    source_frame_indices = jax.random.randint(ksrc, (B_PTS,), 0, N_SET)
    target_frame_indices = jax.random.randint(ktgt, (B_PTS,), 0, N_SET)

    out = tracker_forward(params, (VID_H, VID_W), dino_embed_video, cogvideo_features,
                          source_points, source_frame_indices, target_frame_indices,
                          frames_set_t)
    corr_maps = jax.block_until_ready(out['corr_maps'])

    # Light correctness checks against pure-JAX f32 references (kernels stream bf16 activations
    # and use bf16 MXU operands / an approximate reciprocal, so tolerances are loosened).
    blocks = [0, 7, 14, 21, 29]
    cog_stack = jnp.stack(
        [cogvideo_features[f'block_{b}_hidden'].reshape(-1, COG) for b in blocks], axis=0)
    fused_ref = fusion_reference(params, cog_stack, dino_embed_video[frames_set_t])   # NHWC f32
    corr_ref = corr_reference(out['src_emb'], out['fused'],
                              target_frame_indices.astype(jnp.int32))

    fused_err = float(jnp.max(jnp.abs(out['fused'].astype(jnp.float32) - fused_ref)))
    corr_err = float(jnp.max(jnp.abs(corr_maps - corr_ref)))
    assert fused_err < 1.5e-1, f"fused max abs err {fused_err}"
    assert corr_err < 4e-2, f"corr max abs err {corr_err}"
    assert corr_maps.shape == (B_PTS, 1, H, W)

    print("KERNEL_OK")
</pallas_src>

<mosaic_0001>
module attributes {stable_mosaic.version = 11 : i64} {
  func.func @fusion_kernel(%arg0: i32, %arg1: memref<5xf32, #tpu.memory_space<smem>>, %arg2: memref<192x32xbf16, #tpu.memory_space<vmem>>, %arg3: memref<5x192x48xbf16, #tpu.memory_space<vmem>>, %arg4: memref<5x48x32xbf16, #tpu.memory_space<any>>, %arg5: memref<1x32xf32, #tpu.memory_space<vmem>>, %arg6: memref<1x32xf32, #tpu.memory_space<vmem>>, %arg7: memref<5x1x48xf32, #tpu.memory_space<vmem>>, %arg8: memref<5x1x48xf32, #tpu.memory_space<vmem>>, %arg9: memref<5x1x32xf32, #tpu.memory_space<vmem>>, %arg10: memref<1x32xf32, #tpu.memory_space<vmem>>, %arg11: memref<1x32xf32, #tpu.memory_space<vmem>>, %arg12: memref<32x32xbf16, #tpu.memory_space<vmem>>, %arg13: memref<1x32xf32, #tpu.memory_space<vmem>>, %arg14: memref<1x32xf32, #tpu.memory_space<vmem>>, %arg15: memref<1x32xf32, #tpu.memory_space<vmem>>, %arg16: memref<1x32xf32, #tpu.memory_space<vmem>>, %arg17: memref<1x32xf32, #tpu.memory_space<vmem>>, %arg18: memref<1x32xf32, #tpu.memory_space<vmem>>, %arg19: memref<1x32xf32, #tpu.memory_space<vmem>>, %arg20: memref<32x32xbf16, #tpu.memory_space<vmem>>, %arg21: memref<32x32xbf16, #tpu.memory_space<vmem>>, %arg22: memref<1x32xf32, #tpu.memory_space<vmem>>, %arg23: memref<192x32xbf16, #tpu.memory_space<vmem>>, %arg24: memref<5x48x32xbf16, #tpu.memory_space<vmem>>, %arg25: memref<!tpu.dma_semaphore, #tpu.memory_space<semaphore_mem>>) attributes {dimension_semantics = [#tpu.dimension_semantics<arbitrary>], iteration_bounds = array<i64: 1>, scalar_prefetch = 1 : i64, scratch_operands = 2 : i64, tpu.core_type = #tpu.core_type<tc>, window_params = [{transform_indices = @transform_0, window_bounds = array<i64: 192, 32>}, {transform_indices = @transform_1, window_bounds = array<i64: 5, 192, 48>}, {}, {pipeline_mode = #tpu.pipeline_mode<synchronous>, transform_indices = @transform_3, window_bounds = array<i64: 1, 32>}, {pipeline_mode = #tpu.pipeline_mode<synchronous>, transform_indices = @transform_4, window_bounds = array<i64: 1, 32>}, {pipeline_mode = #tpu.pipeline_mode<synchronous>, transform_indices = @transform_5, window_bounds = array<i64: 5, 1, 48>}, {pipeline_mode = #tpu.pipeline_mode<synchronous>, transform_indices = @transform_6, window_bounds = array<i64: 5, 1, 48>}, {pipeline_mode = #tpu.pipeline_mode<synchronous>, transform_indices = @transform_7, window_bounds = array<i64: 5, 1, 32>}, {pipeline_mode = #tpu.pipeline_mode<synchronous>, transform_indices = @transform_8, window_bounds = array<i64: 1, 32>}, {pipeline_mode = #tpu.pipeline_mode<synchronous>, transform_indices = @transform_9, window_bounds = array<i64: 1, 32>}, {pipeline_mode = #tpu.pipeline_mode<synchronous>, transform_indices = @transform_10, window_bounds = array<i64: 32, 32>}, {pipeline_mode = #tpu.pipeline_mode<synchronous>, transform_indices = @transform_11, window_bounds = array<i64: 1, 32>}, {pipeline_mode = #tpu.pipeline_mode<synchronous>, transform_indices = @transform_12, window_bounds = array<i64: 1, 32>}, {pipeline_mode = #tpu.pipeline_mode<synchronous>, transform_indices = @transform_13, window_bounds = array<i64: 1, 32>}, {pipeline_mode = #tpu.pipeline_mode<synchronous>, transform_indices = @transform_14, window_bounds = array<i64: 1, 32>}, {pipeline_mode = #tpu.pipeline_mode<synchronous>, transform_indices = @transform_15, window_bounds = array<i64: 1, 32>}, {pipeline_mode = #tpu.pipeline_mode<synchronous>, transform_indices = @transform_16, window_bounds = array<i64: 1, 32>}, {pipeline_mode = #tpu.pipeline_mode<synchronous>, transform_indices = @transform_17, window_bounds = array<i64: 1, 32>}, {pipeline_mode = #tpu.pipeline_mode<synchronous>, transform_indices = @transform_18, window_bounds = array<i64: 32, 32>}, {pipeline_mode = #tpu.pipeline_mode<synchronous>, transform_indices = @transform_19, window_bounds = array<i64: 32, 32>}, {pipeline_mode = #tpu.pipeline_mode<synchronous>, transform_indices = @transform_20, window_bounds = array<i64: 1, 32>}, {transform_indices = @transform_21, window_bounds = array<i64: 192, 32>}]} {
    %c0_i32 = arith.constant 0 : i32
    %0 = arith.cmpi eq, %arg0, %c0_i32 : i32
    %1 = arith.extui %0 : i1 to i32
    %c0_i32_0 = arith.constant 0 : i32
    %2 = arith.cmpi ne, %1, %c0_i32_0 : i32
    scf.if %2 {
      tpu.enqueue_dma source(%arg4 : memref<5x48x32xbf16, #tpu.memory_space<any>>) target(%arg24 : memref<5x48x32xbf16, #tpu.memory_space<vmem>>) target_semaphore(%arg25 : memref<!tpu.dma_semaphore, #tpu.memory_space<semaphore_mem>>)
      tpu.wait_dma2 semaphore(%arg25 : memref<!tpu.dma_semaphore, #tpu.memory_space<semaphore_mem>>) src(%arg4 : memref<5x48x32xbf16, #tpu.memory_space<any>>) dst(%arg24 : memref<5x48x32xbf16, #tpu.memory_space<vmem>>)
    } else {
    }
    %c0 = arith.constant 0 : index
    %c0_1 = arith.constant 0 : index
    %3 = vector.load %arg2[%c0, %c0_1] : memref<192x32xbf16, #tpu.memory_space<vmem>>, vector<192x32xbf16>
    %4 = arith.extf %3 : vector<192x32xbf16> to vector<192x32xf32>
    %c0_2 = arith.constant 0 : index
    %c0_3 = arith.constant 0 : index
    %5 = vector.load %arg5[%c0_2, %c0_3] : memref<1x32xf32, #tpu.memory_space<vmem>>, vector<1x32xf32>
    %c0_4 = arith.constant 0 : index
    %c0_5 = arith.constant 0 : index
    %6 = vector.load %arg6[%c0_4, %c0_5] : memref<1x32xf32, #tpu.memory_space<vmem>>, vector<1x32xf32>
    %cst = arith.constant dense<0.000000e+00> : vector<192xf32>
    %7 = vector.multi_reduction <add>, %4, %cst [1] : vector<192x32xf32> to vector<192xf32>
    %8 = vector.shape_cast %7 : vector<192xf32> to vector<192x1xf32>
    %cst_6 = arith.constant 3.200000e+01 : f32
    %9 = vector.broadcast %cst_6 : f32 to vector<192x1xf32>
    %10 = arith.divf %8, %9 : vector<192x1xf32>
    %11 = vector.broadcast %10 : vector<192x1xf32> to vector<192x32xf32>
    %12 = arith.subf %4, %11 : vector<192x32xf32>
    %13 = arith.mulf %12, %12 : vector<192x32xf32>
    %cst_7 = arith.constant dense<0.000000e+00> : vector<192xf32>
    %14 = vector.multi_reduction <add>, %13, %cst_7 [1] : vector<192x32xf32> to vector<192xf32>
    %15 = vector.shape_cast %14 : vector<192xf32> to vector<192x1xf32>
    %cst_8 = arith.constant 3.200000e+01 : f32
    %16 = vector.broadcast %cst_8 : f32 to vector<192x1xf32>
    %17 = arith.divf %15, %16 : vector<192x1xf32>
    %18 = vector.broadcast %10 : vector<192x1xf32> to vector<192x32xf32>
    %19 = arith.subf %4, %18 : vector<192x32xf32>
    %cst_9 = arith.constant 9.99999974E-6 : f32
    %20 = vector.broadcast %cst_9 : f32 to vector<192x1xf32>
    %21 = arith.addf %17, %20 : vector<192x1xf32>
    %22 = math.rsqrt %21 : vector<192x1xf32>
    %23 = vector.broadcast %22 : vector<192x1xf32> to vector<192x32xf32>
    %24 = arith.mulf %19, %23 : vector<192x32xf32>
    %25 = vector.broadcast %5 : vector<1x32xf32> to vector<192x32xf32>
    %26 = arith.mulf %24, %25 : vector<192x32xf32>
    %27 = vector.broadcast %6 : vector<1x32xf32> to vector<192x32xf32>
    %28 = arith.addf %26, %27 : vector<192x32xf32>
    %29 = arith.mulf %28, %28 : vector<192x32xf32>
    %cst_10 = arith.constant dense<0.000000e+00> : vector<192xf32>
    %30 = vector.multi_reduction <add>, %29, %cst_10 [1] : vector<192x32xf32> to vector<192xf32>
    %31 = vector.shape_cast %30 : vector<192xf32> to vector<192x1xf32>
    %32 = math.sqrt %31 : vector<192x1xf32>
    %cst_11 = arith.constant 0.000000e+00 : f32
    %33 = vector.broadcast %cst_11 : f32 to vector<192x32xf32>
    %c0_12 = arith.constant 0 : index
    %c0_13 = arith.constant 0 : index
    %c0_14 = arith.constant 0 : index
    %34 = vector.load %arg3[%c0_12, %c0_13, %c0_14] : memref<5x192x48xbf16, #tpu.memory_space<vmem>>, vector<1x192x48xbf16>
    %35 = vector.shape_cast %34 : vector<1x192x48xbf16> to vector<192x48xbf16>
    %36 = arith.extf %35 : vector<192x48xbf16> to vector<192x48xf32>
    %c0_15 = arith.constant 0 : index
    %c0_16 = arith.constant 0 : index
    %c0_17 = arith.constant 0 : index
    %37 = vector.load %arg7[%c0_15, %c0_16, %c0_17] : memref<5x1x48xf32, #tpu.memory_space<vmem>>, vector<1x1x48xf32>
    %38 = vector.shape_cast %37 : vector<1x1x48xf32> to vector<1x48xf32>
    %c0_18 = arith.constant 0 : index
    %c0_19 = arith.constant 0 : index
    %c0_20 = arith.constant 0 : index
    %39 = vector.load %arg8[%c0_18, %c0_19, %c0_20] : memref<5x1x48xf32, #tpu.memory_space<vmem>>, vector<1x1x48xf32>
    %40 = vector.shape_cast %39 : vector<1x1x48xf32> to vector<1x48xf32>
    %cst_21 = arith.constant dense<0.000000e+00> : vector<192xf32>
    %41 = vector.multi_reduction <add>, %36, %cst_21 [1] : vector<192x48xf32> to vector<192xf32>
    %42 = vector.shape_cast %41 : vector<192xf32> to vector<192x1xf32>
    %cst_22 = arith.constant 4.800000e+01 : f32
    %43 = vector.broadcast %cst_22 : f32 to vector<192x1xf32>
    %44 = arith.divf %42, %43 : vector<192x1xf32>
    %45 = vector.broadcast %44 : vector<192x1xf32> to vector<192x48xf32>
    %46 = arith.subf %36, %45 : vector<192x48xf32>
    %47 = arith.mulf %46, %46 : vector<192x48xf32>
    %cst_23 = arith.constant dense<0.000000e+00> : vector<192xf32>
    %48 = vector.multi_reduction <add>, %47, %cst_23 [1] : vector<192x48xf32> to vector<192xf32>
    %49 = vector.shape_cast %48 : vector<192xf32> to vector<192x1xf32>
    %cst_24 = arith.constant 4.800000e+01 : f32
    %50 = vector.broadcast %cst_24 : f32 to vector<192x1xf32>
    %51 = arith.divf %49, %50 : vector<192x1xf32>
    %52 = vector.broadcast %44 : vector<192x1xf32> to vector<192x48xf32>
    %53 = arith.subf %36, %52 : vector<192x48xf32>
    %cst_25 = arith.constant 9.99999974E-6 : f32
    %54 = vector.broadcast %cst_25 : f32 to vector<192x1xf32>
    %55 = arith.addf %51, %54 : vector<192x1xf32>
    %56 = math.rsqrt %55 : vector<192x1xf32>
    %57 = vector.broadcast %56 : vector<192x1xf32> to vector<192x48xf32>
    %58 = arith.mulf %53, %57 : vector<192x48xf32>
    %59 = vector.broadcast %38 : vector<1x48xf32> to vector<192x48xf32>
    %60 = arith.mulf %58, %59 : vector<192x48xf32>
    %61 = vector.broadcast %40 : vector<1x48xf32> to vector<192x48xf32>
    %62 = arith.addf %60, %61 : vector<192x48xf32>
    %63 = arith.truncf %62 : vector<192x48xf32> to vector<192x48xbf16>
    %c0_26 = arith.constant 0 : index
    %c0_27 = arith.constant 0 : index
    %c0_28 = arith.constant 0 : index
    %64 = vector.load %arg24[%c0_26, %c0_27, %c0_28] : memref<5x48x32xbf16, #tpu.memory_space<vmem>>, vector<1x48x32xbf16>
    %65 = vector.shape_cast %64 : vector<1x48x32xbf16> to vector<48x32xbf16>
    %cst_29 = arith.constant dense<0.000000e+00> : vector<192x32xf32>
    %66 = tpu.matmul %63, %65, %cst_29 {dimension_numbers = #tpu.dot_dimension_numbers<[1], [0], [0], [1], [0, 0, 1, 1], [], []>} : vector<192x48xbf16>, vector<48x32xbf16>, vector<192x32xf32> -> vector<192x32xf32>
    %c0_30 = arith.constant 0 : index
    %c0_31 = arith.constant 0 : index
    %c0_32 = arith.constant 0 : index
    %67 = vector.load %arg9[%c0_30, %c0_31, %c0_32] : memref<5x1x32xf32, #tpu.memory_space<vmem>>, vector<1x1x32xf32>
    %68 = vector.shape_cast %67 : vector<1x1x32xf32> to vector<1x32xf32>
    %69 = vector.broadcast %68 : vector<1x32xf32> to vector<192x32xf32>
    %70 = arith.addf %66, %69 : vector<192x32xf32>
    %cst_33 = arith.constant 0.000000e+00 : f32
    %71 = vector.broadcast %cst_33 : f32 to vector<192x32xf32>
    %72 = arith.maximumf %70, %71 : vector<192x32xf32>
    %73 = arith.mulf %72, %72 : vector<192x32xf32>
    %cst_34 = arith.constant dense<0.000000e+00> : vector<192xf32>
    %74 = vector.multi_reduction <add>, %73, %cst_34 [1] : vector<192x32xf32> to vector<192xf32>
    %75 = vector.shape_cast %74 : vector<192xf32> to vector<192x1xf32>
    %cst_35 = arith.constant 9.99999993E-9 : f32
    %76 = vector.broadcast %cst_35 : f32 to vector<192x1xf32>
    %77 = arith.addf %75, %76 : vector<192x1xf32>
    %78 = math.rsqrt %77 : vector<192x1xf32>
    %c0_36 = arith.constant 0 : index
    %79 = memref.load %arg1[%c0_36] : memref<5xf32, #tpu.memory_space<smem>>
    %80 = arith.mulf %32, %78 : vector<192x1xf32>
    %81 = vector.broadcast %80 : vector<192x1xf32> to vector<192x32xf32>
    %82 = arith.mulf %72, %81 : vector<192x32xf32>
    %83 = vector.broadcast %79 : f32 to vector<192x32xf32>
    %84 = arith.mulf %83, %82 : vector<192x32xf32>
    %85 = arith.addf %33, %84 : vector<192x32xf32>
    %c1 = arith.constant 1 : index
    %c0_37 = arith.constant 0 : index
    %c0_38 = arith.constant 0 : index
    %86 = vector.load %arg3[%c1, %c0_37, %c0_38] : memref<5x192x48xbf16, #tpu.memory_space<vmem>>, vector<1x192x48xbf16>
    %87 = vector.shape_cast %86 : vector<1x192x48xbf16> to vector<192x48xbf16>
    %88 = arith.extf %87 : vector<192x48xbf16> to vector<192x48xf32>
    %c1_39 = arith.constant 1 : index
    %c0_40 = arith.constant 0 : index
    %c0_41 = arith.constant 0 : index
    %89 = vector.load %arg7[%c1_39, %c0_40, %c0_41] : memref<5x1x48xf32, #tpu.memory_space<vmem>>, vector<1x1x48xf32>
    %90 = vector.shape_cast %89 : vector<1x1x48xf32> to vector<1x48xf32>
    %c1_42 = arith.constant 1 : index
    %c0_43 = arith.constant 0 : index
    %c0_44 = arith.constant 0 : index
    %91 = vector.load %arg8[%c1_42, %c0_43, %c0_44] : memref<5x1x48xf32, #tpu.memory_space<vmem>>, vector<1x1x48xf32>
    %92 = vector.shape_cast %91 : vector<1x1x48xf32> to vector<1x48xf32>
    %cst_45 = arith.constant dense<0.000000e+00> : vector<192xf32>
    %93 = vector.multi_reduction <add>, %88, %cst_45 [1] : vector<192x48xf32> to vector<192xf32>
    %94 = vector.shape_cast %93 : vector<192xf32> to vector<192x1xf32>
    %cst_46 = arith.constant 4.800000e+01 : f32
    %95 = vector.broadcast %cst_46 : f32 to vector<192x1xf32>
    %96 = arith.divf %94, %95 : vector<192x1xf32>
    %97 = vector.broadcast %96 : vector<192x1xf32> to vector<192x48xf32>
    %98 = arith.subf %88, %97 : vector<192x48xf32>
    %99 = arith.mulf %98, %98 : vector<192x48xf32>
    %cst_47 = arith.constant dense<0.000000e+00> : vector<192xf32>
    %100 = vector.multi_reduction <add>, %99, %cst_47 [1] : vector<192x48xf32> to vector<192xf32>
    %101 = vector.shape_cast %100 : vector<192xf32> to vector<192x1xf32>
    %cst_48 = arith.constant 4.800000e+01 : f32
    %102 = vector.broadcast %cst_48 : f32 to vector<192x1xf32>
    %103 = arith.divf %101, %102 : vector<192x1xf32>
    %104 = vector.broadcast %96 : vector<192x1xf32> to vector<192x48xf32>
    %105 = arith.subf %88, %104 : vector<192x48xf32>
    %cst_49 = arith.constant 9.99999974E-6 : f32
    %106 = vector.broadcast %cst_49 : f32 to vector<192x1xf32>
    %107 = arith.addf %103, %106 : vector<192x1xf32>
    %108 = math.rsqrt %107 : vector<192x1xf32>
    %109 = vector.broadcast %108 : vector<192x1xf32> to vector<192x48xf32>
    %110 = arith.mulf %105, %109 : vector<192x48xf32>
    %111 = vector.broadcast %90 : vector<1x48xf32> to vector<192x48xf32>
    %112 = arith.mulf %110, %111 : vector<192x48xf32>
    %113 = vector.broadcast %92 : vector<1x48xf32> to vector<192x48xf32>
    %114 = arith.addf %112, %113 : vector<192x48xf32>
    %115 = arith.truncf %114 : vector<192x48xf32> to vector<192x48xbf16>
    %c1_50 = arith.constant 1 : index
    %c0_51 = arith.constant 0 : index
    %c0_52 = arith.constant 0 : index
    %116 = vector.load %arg24[%c1_50, %c0_51, %c0_52] : memref<5x48x32xbf16, #tpu.memory_space<vmem>>, vector<1x48x32xbf16>
    %117 = vector.shape_cast %116 : vector<1x48x32xbf16> to vector<48x32xbf16>
    %cst_53 = arith.constant dense<0.000000e+00> : vector<192x32xf32>
    %118 = tpu.matmul %115, %117, %cst_53 {dimension_numbers = #tpu.dot_dimension_numbers<[1], [0], [0], [1], [0, 0, 1, 1], [], []>} : vector<192x48xbf16>, vector<48x32xbf16>, vector<192x32xf32> -> vector<192x32xf32>
    %c1_54 = arith.constant 1 : index
    %c0_55 = arith.constant 0 : index
    %c0_56 = arith.constant 0 : index
    %119 = vector.load %arg9[%c1_54, %c0_55, %c0_56] : memref<5x1x32xf32, #tpu.memory_space<vmem>>, vector<1x1x32xf32>
    %120 = vector.shape_cast %119 : vector<1x1x32xf32> to vector<1x32xf32>
    %121 = vector.broadcast %120 : vector<1x32xf32> to vector<192x32xf32>
    %122 = arith.addf %118, %121 : vector<192x32xf32>
    %cst_57 = arith.constant 0.000000e+00 : f32
    %123 = vector.broadcast %cst_57 : f32 to vector<192x32xf32>
    %124 = arith.maximumf %122, %123 : vector<192x32xf32>
    %125 = arith.mulf %124, %124 : vector<192x32xf32>
    %cst_58 = arith.constant dense<0.000000e+00> : vector<192xf32>
    %126 = vector.multi_reduction <add>, %125, %cst_58 [1] : vector<192x32xf32> to vector<192xf32>
    %127 = vector.shape_cast %126 : vector<192xf32> to vector<192x1xf32>
    %cst_59 = arith.constant 9.99999993E-9 : f32
    %128 = vector.broadcast %cst_59 : f32 to vector<192x1xf32>
    %129 = arith.addf %127, %128 : vector<192x1xf32>
    %130 = math.rsqrt %129 : vector<192x1xf32>
    %c1_60 = arith.constant 1 : index
    %131 = memref.load %arg1[%c1_60] : memref<5xf32, #tpu.memory_space<smem>>
    %132 = arith.mulf %32, %130 : vector<192x1xf32>
    %133 = vector.broadcast %132 : vector<192x1xf32> to vector<192x32xf32>
    %134 = arith.mulf %124, %133 : vector<192x32xf32>
    %135 = vector.broadcast %131 : f32 to vector<192x32xf32>
    %136 = arith.mulf %135, %134 : vector<192x32xf32>
    %137 = arith.addf %85, %136 : vector<192x32xf32>
    %c2 = arith.constant 2 : index
    %c0_61 = arith.constant 0 : index
    %c0_62 = arith.constant 0 : index
    %138 = vector.load %arg3[%c2, %c0_61, %c0_62] : memref<5x192x48xbf16, #tpu.memory_space<vmem>>, vector<1x192x48xbf16>
    %139 = vector.shape_cast %138 : vector<1x192x48xbf16> to vector<192x48xbf16>
    %140 = arith.extf %139 : vector<192x48xbf16> to vector<192x48xf32>
    %c2_63 = arith.constant 2 : index
    %c0_64 = arith.constant 0 : index
    %c0_65 = arith.constant 0 : index
    %141 = vector.load %arg7[%c2_63, %c0_64, %c0_65] : memref<5x1x48xf32, #tpu.memory_space<vmem>>, vector<1x1x48xf32>
    %142 = vector.shape_cast %141 : vector<1x1x48xf32> to vector<1x48xf32>
    %c2_66 = arith.constant 2 : index
    %c0_67 = arith.constant 0 : index
    %c0_68 = arith.constant 0 : index
    %143 = vector.load %arg8[%c2_66, %c0_67, %c0_68] : memref<5x1x48xf32, #tpu.memory_space<vmem>>, vector<1x1x48xf32>
    %144 = vector.shape_cast %143 : vector<1x1x48xf32> to vector<1x48xf32>
    %cst_69 = arith.constant dense<0.000000e+00> : vector<192xf32>
    %145 = vector.multi_reduction <add>, %140, %cst_69 [1] : vector<192x48xf32> to vector<192xf32>
    %146 = vector.shape_cast %145 : vector<192xf32> to vector<192x1xf32>
    %cst_70 = arith.constant 4.800000e+01 : f32
    %147 = vector.broadcast %cst_70 : f32 to vector<192x1xf32>
    %148 = arith.divf %146, %147 : vector<192x1xf32>
    %149 = vector.broadcast %148 : vector<192x1xf32> to vector<192x48xf32>
    %150 = arith.subf %140, %149 : vector<192x48xf32>
    %151 = arith.mulf %150, %150 : vector<192x48xf32>
    %cst_71 = arith.constant dense<0.000000e+00> : vector<192xf32>
    %152 = vector.multi_reduction <add>, %151, %cst_71 [1] : vector<192x48xf32> to vector<192xf32>
    %153 = vector.shape_cast %152 : vector<192xf32> to vector<192x1xf32>
    %cst_72 = arith.constant 4.800000e+01 : f32
    %154 = vector.broadcast %cst_72 : f32 to vector<192x1xf32>
    %155 = arith.divf %153, %154 : vector<192x1xf32>
    %156 = vector.broadcast %148 : vector<192x1xf32> to vector<192x48xf32>
    %157 = arith.subf %140, %156 : vector<192x48xf32>
    %cst_73 = arith.constant 9.99999974E-6 : f32
    %158 = vector.broadcast %cst_73 : f32 to vector<192x1xf32>
    %159 = arith.addf %155, %158 : vector<192x1xf32>
    %160 = math.rsqrt %159 : vector<192x1xf32>
    %161 = vector.broadcast %160 : vector<192x1xf32> to vector<192x48xf32>
    %162 = arith.mulf %157, %161 : vector<192x48xf32>
    %163 = vector.broadcast %142 : vector<1x48xf32> to vector<192x48xf32>
    %164 = arith.mulf %162, %163 : vector<192x48xf32>
    %165 = vector.broadcast %144 : vector<1x48xf32> to vector<192x48xf32>
    %166 = arith.addf %164, %165 : vector<192x48xf32>
    %167 = arith.truncf %166 : vector<192x48xf32> to vector<192x48xbf16>
    %c2_74 = arith.constant 2 : index
    %c0_75 = arith.constant 0 : index
    %c0_76 = arith.constant 0 : index
    %168 = vector.load %arg24[%c2_74, %c0_75, %c0_76] : memref<5x48x32xbf16, #tpu.memory_space<vmem>>, vector<1x48x32xbf16>
    %169 = vector.shape_cast %168 : vector<1x48x32xbf16> to vector<48x32xbf16>
    %cst_77 = arith.constant dense<0.000000e+00> : vector<192x32xf32>
    %170 = tpu.matmul %167, %169, %cst_77 {dimension_numbers = #tpu.dot_dimension_numbers<[1], [0], [0], [1], [0, 0, 1, 1], [], []>} : vector<192x48xbf16>, vector<48x32xbf16>, vector<192x32xf32> -> vector<192x32xf32>
    %c2_78 = arith.constant 2 : index
    %c0_79 = arith.constant 0 : index
    %c0_80 = arith.constant 0 : index
    %171 = vector.load %arg9[%c2_78, %c0_79, %c0_80] : memref<5x1x32xf32, #tpu.memory_space<vmem>>, vector<1x1x32xf32>
    %172 = vector.shape_cast %171 : vector<1x1x32xf32> to vector<1x32xf32>
    %173 = vector.broadcast %172 : vector<1x32xf32> to vector<192x32xf32>
    %174 = arith.addf %170, %173 : vector<192x32xf32>
    %cst_81 = arith.constant 0.000000e+00 : f32
    %175 = vector.broadcast %cst_81 : f32 to vector<192x32xf32>
    %176 = arith.maximumf %174, %175 : vector<192x32xf32>
    %177 = arith.mulf %176, %176 : vector<192x32xf32>
    %cst_82 = arith.constant dense<0.000000e+00> : vector<192xf32>
    %178 = vector.multi_reduction <add>, %177, %cst_82 [1] : vector<192x32xf32> to vector<192xf32>
    %179 = vector.shape_cast %178 : vector<192xf32> to vector<192x1xf32>
    %cst_83 = arith.constant 9.99999993E-9 : f32
    %180 = vector.broadcast %cst_83 : f32 to vector<192x1xf32>
    %181 = arith.addf %179, %180 : vector<192x1xf32>
    %182 = math.rsqrt %181 : vector<192x1xf32>
    %c2_84 = arith.constant 2 : index
    %183 = memref.load %arg1[%c2_84] : memref<5xf32, #tpu.memory_space<smem>>
    %184 = arith.mulf %32, %182 : vector<192x1xf32>
    %185 = vector.broadcast %184 : vector<192x1xf32> to vector<192x32xf32>
    %186 = arith.mulf %176, %185 : vector<192x32xf32>
    %187 = vector.broadcast %183 : f32 to vector<192x32xf32>
    %188 = arith.mulf %187, %186 : vector<192x32xf32>
    %189 = arith.addf %137, %188 : vector<192x32xf32>
    %c3 = arith.constant 3 : index
    %c0_85 = arith.constant 0 : index
    %c0_86 = arith.constant 0 : index
    %190 = vector.load %arg3[%c3, %c0_85, %c0_86] : memref<5x192x48xbf16, #tpu.memory_space<vmem>>, vector<1x192x48xbf16>
    %191 = vector.shape_cast %190 : vector<1x192x48xbf16> to vector<192x48xbf16>
    %192 = arith.extf %191 : vector<192x48xbf16> to vector<192x48xf32>
    %c3_87 = arith.constant 3 : index
    %c0_88 = arith.constant 0 : index
    %c0_89 = arith.constant 0 : index
    %193 = vector.load %arg7[%c3_87, %c0_88, %c0_89] : memref<5x1x48xf32, #tpu.memory_space<vmem>>, vector<1x1x48xf32>
    %194 = vector.shape_cast %193 : vector<1x1x48xf32> to vector<1x48xf32>
    %c3_90 = arith.constant 3 : index
    %c0_91 = arith.constant 0 : index
    %c0_92 = arith.constant 0 : index
    %195 = vector.load %arg8[%c3_90, %c0_91, %c0_92] : memref<5x1x48xf32, #tpu.memory_space<vmem>>, vector<1x1x48xf32>
    %196 = vector.shape_cast %195 : vector<1x1x48xf32> to vector<1x48xf32>
    %cst_93 = arith.constant dense<0.000000e+00> : vector<192xf32>
    %197 = vector.multi_reduction <add>, %192, %cst_93 [1] : vector<192x48xf32> to vector<192xf32>
    %198 = vector.shape_cast %197 : vector<192xf32> to vector<192x1xf32>
    %cst_94 = arith.constant 4.800000e+01 : f32
    %199 = vector.broadcast %cst_94 : f32 to vector<192x1xf32>
    %200 = arith.divf %198, %199 : vector<192x1xf32>
    %201 = vector.broadcast %200 : vector<192x1xf32> to vector<192x48xf32>
    %202 = arith.subf %192, %201 : vector<192x48xf32>
    %203 = arith.mulf %202, %202 : vector<192x48xf32>
    %cst_95 = arith.constant dense<0.000000e+00> : vector<192xf32>
    %204 = vector.multi_reduction <add>, %203, %cst_95 [1] : vector<192x48xf32> to vector<192xf32>
    %205 = vector.shape_cast %204 : vector<192xf32> to vector<192x1xf32>
    %cst_96 = arith.constant 4.800000e+01 : f32
    %206 = vector.broadcast %cst_96 : f32 to vector<192x1xf32>
    %207 = arith.divf %205, %206 : vector<192x1xf32>
    %208 = vector.broadcast %200 : vector<192x1xf32> to vector<192x48xf32>
    %209 = arith.subf %192, %208 : vector<192x48xf32>
    %cst_97 = arith.constant 9.99999974E-6 : f32
    %210 = vector.broadcast %cst_97 : f32 to vector<192x1xf32>
    %211 = arith.addf %207, %210 : vector<192x1xf32>
    %212 = math.rsqrt %211 : vector<192x1xf32>
    %213 = vector.broadcast %212 : vector<192x1xf32> to vector<192x48xf32>
    %214 = arith.mulf %209, %213 : vector<192x48xf32>
    %215 = vector.broadcast %194 : vector<1x48xf32> to vector<192x48xf32>
    %216 = arith.mulf %214, %215 : vector<192x48xf32>
    %217 = vector.broadcast %196 : vector<1x48xf32> to vector<192x48xf32>
    %218 = arith.addf %216, %217 : vector<192x48xf32>
    %219 = arith.truncf %218 : vector<192x48xf32> to vector<192x48xbf16>
    %c3_98 = arith.constant 3 : index
    %c0_99 = arith.constant 0 : index
    %c0_100 = arith.constant 0 : index
    %220 = vector.load %arg24[%c3_98, %c0_99, %c0_100] : memref<5x48x32xbf16, #tpu.memory_space<vmem>>, vector<1x48x32xbf16>
    %221 = vector.shape_cast %220 : vector<1x48x32xbf16> to vector<48x32xbf16>
    %cst_101 = arith.constant dense<0.000000e+00> : vector<192x32xf32>
    %222 = tpu.matmul %219, %221, %cst_101 {dimension_numbers = #tpu.dot_dimension_numbers<[1], [0], [0], [1], [0, 0, 1, 1], [], []>} : vector<192x48xbf16>, vector<48x32xbf16>, vector<192x32xf32> -> vector<192x32xf32>
    %c3_102 = arith.constant 3 : index
    %c0_103 = arith.constant 0 : index
    %c0_104 = arith.constant 0 : index
    %223 = vector.load %arg9[%c3_102, %c0_103, %c0_104] : memref<5x1x32xf32, #tpu.memory_space<vmem>>, vector<1x1x32xf32>
    %224 = vector.shape_cast %223 : vector<1x1x32xf32> to vector<1x32xf32>
    %225 = vector.broadcast %224 : vector<1x32xf32> to vector<192x32xf32>
    %226 = arith.addf %222, %225 : vector<192x32xf32>
    %cst_105 = arith.constant 0.000000e+00 : f32
    %227 = vector.broadcast %cst_105 : f32 to vector<192x32xf32>
    %228 = arith.maximumf %226, %227 : vector<192x32xf32>
    %229 = arith.mulf %228, %228 : vector<192x32xf32>
    %cst_106 = arith.constant dense<0.000000e+00> : vector<192xf32>
    %230 = vector.multi_reduction <add>, %229, %cst_106 [1] : vector<192x32xf32> to vector<192xf32>
    %231 = vector.shape_cast %230 : vector<192xf32> to vector<192x1xf32>
    %cst_107 = arith.constant 9.99999993E-9 : f32
    %232 = vector.broadcast %cst_107 : f32 to vector<192x1xf32>
    %233 = arith.addf %231, %232 : vector<192x1xf32>
    %234 = math.rsqrt %233 : vector<192x1xf32>
    %c3_108 = arith.constant 3 : index
    %235 = memref.load %arg1[%c3_108] : memref<5xf32, #tpu.memory_space<smem>>
    %236 = arith.mulf %32, %234 : vector<192x1xf32>
    %237 = vector.broadcast %236 : vector<192x1xf32> to vector<192x32xf32>
    %238 = arith.mulf %228, %237 : vector<192x32xf32>
    %239 = vector.broadcast %235 : f32 to vector<192x32xf32>
    %240 = arith.mulf %239, %238 : vector<192x32xf32>
    %241 = arith.addf %189, %240 : vector<192x32xf32>
    %c4 = arith.constant 4 : index
    %c0_109 = arith.constant 0 : index
    %c0_110 = arith.constant 0 : index
    %242 = vector.load %arg3[%c4, %c0_109, %c0_110] : memref<5x192x48xbf16, #tpu.memory_space<vmem>>, vector<1x192x48xbf16>
    %243 = vector.shape_cast %242 : vector<1x192x48xbf16> to vector<192x48xbf16>
    %244 = arith.extf %243 : vector<192x48xbf16> to vector<192x48xf32>
    %c4_111 = arith.constant 4 : index
    %c0_112 = arith.constant 0 : index
    %c0_113 = arith.constant 0 : index
    %245 = vector.load %arg7[%c4_111, %c0_112, %c0_113] : memref<5x1x48xf32, #tpu.memory_space<vmem>>, vector<1x1x48xf32>
    %246 = vector.shape_cast %245 : vector<1x1x48xf32> to vector<1x48xf32>
    %c4_114 = arith.constant 4 : index
    %c0_115 = arith.constant 0 : index
    %c0_116 = arith.constant 0 : index
    %247 = vector.load %arg8[%c4_114, %c0_115, %c0_116] : memref<5x1x48xf32, #tpu.memory_space<vmem>>, vector<1x1x48xf32>
    %248 = vector.shape_cast %247 : vector<1x1x48xf32> to vector<1x48xf32>
    %cst_117 = arith.constant dense<0.000000e+00> : vector<192xf32>
    %249 = vector.multi_reduction <add>, %244, %cst_117 [1] : vector<192x48xf32> to vector<192xf32>
    %250 = vector.shape_cast %249 : vector<192xf32> to vector<192x1xf32>
    %cst_118 = arith.constant 4.800000e+01 : f32
    %251 = vector.broadcast %cst_118 : f32 to vector<192x1xf32>
    %252 = arith.divf %250, %251 : vector<192x1xf32>
    %253 = vector.broadcast %252 : vector<192x1xf32> to vector<192x48xf32>
    %254 = arith.subf %244, %253 : vector<192x48xf32>
    %255 = arith.mulf %254, %254 : vector<192x48xf32>
    %cst_119 = arith.constant dense<0.000000e+00> : vector<192xf32>
    %256 = vector.multi_reduction <add>, %255, %cst_119 [1] : vector<192x48xf32> to vector<192xf32>
    %257 = vector.shape_cast %256 : vector<192xf32> to vector<192x1xf32>
    %cst_120 = arith.constant 4.800000e+01 : f32
    %258 = vector.broadcast %cst_120 : f32 to vector<192x1xf32>
    %259 = arith.divf %257, %258 : vector<192x1xf32>
    %260 = vector.broadcast %252 : vector<192x1xf32> to vector<192x48xf32>
    %261 = arith.subf %244, %260 : vector<192x48xf32>
    %cst_121 = arith.constant 9.99999974E-6 : f32
    %262 = vector.broadcast %cst_121 : f32 to vector<192x1xf32>
    %263 = arith.addf %259, %262 : vector<192x1xf32>
    %264 = math.rsqrt %263 : vector<192x1xf32>
    %265 = vector.broadcast %264 : vector<192x1xf32> to vector<192x48xf32>
    %266 = arith.mulf %261, %265 : vector<192x48xf32>
    %267 = vector.broadcast %246 : vector<1x48xf32> to vector<192x48xf32>
    %268 = arith.mulf %266, %267 : vector<192x48xf32>
    %269 = vector.broadcast %248 : vector<1x48xf32> to vector<192x48xf32>
    %270 = arith.addf %268, %269 : vector<192x48xf32>
    %271 = arith.truncf %270 : vector<192x48xf32> to vector<192x48xbf16>
    %c4_122 = arith.constant 4 : index
    %c0_123 = arith.constant 0 : index
    %c0_124 = arith.constant 0 : index
    %272 = vector.load %arg24[%c4_122, %c0_123, %c0_124] : memref<5x48x32xbf16, #tpu.memory_space<vmem>>, vector<1x48x32xbf16>
    %273 = vector.shape_cast %272 : vector<1x48x32xbf16> to vector<48x32xbf16>
    %cst_125 = arith.constant dense<0.000000e+00> : vector<192x32xf32>
    %274 = tpu.matmul %271, %273, %cst_125 {dimension_numbers = #tpu.dot_dimension_numbers<[1], [0], [0], [1], [0, 0, 1, 1], [], []>} : vector<192x48xbf16>, vector<48x32xbf16>, vector<192x32xf32> -> vector<192x32xf32>
    %c4_126 = arith.constant 4 : index
    %c0_127 = arith.constant 0 : index
    %c0_128 = arith.constant 0 : index
    %275 = vector.load %arg9[%c4_126, %c0_127, %c0_128] : memref<5x1x32xf32, #tpu.memory_space<vmem>>, vector<1x1x32xf32>
    %276 = vector.shape_cast %275 : vector<1x1x32xf32> to vector<1x32xf32>
    %277 = vector.broadcast %276 : vector<1x32xf32> to vector<192x32xf32>
    %278 = arith.addf %274, %277 : vector<192x32xf32>
    %cst_129 = arith.constant 0.000000e+00 : f32
    %279 = vector.broadcast %cst_129 : f32 to vector<192x32xf32>
    %280 = arith.maximumf %278, %279 : vector<192x32xf32>
    %281 = arith.mulf %280, %280 : vector<192x32xf32>
    %cst_130 = arith.constant dense<0.000000e+00> : vector<192xf32>
    %282 = vector.multi_reduction <add>, %281, %cst_130 [1] : vector<192x32xf32> to vector<192xf32>
    %283 = vector.shape_cast %282 : vector<192xf32> to vector<192x1xf32>
    %cst_131 = arith.constant 9.99999993E-9 : f32
    %284 = vector.broadcast %cst_131 : f32 to vector<192x1xf32>
    %285 = arith.addf %283, %284 : vector<192x1xf32>
    %286 = math.rsqrt %285 : vector<192x1xf32>
    %c4_132 = arith.constant 4 : index
    %287 = memref.load %arg1[%c4_132] : memref<5xf32, #tpu.memory_space<smem>>
    %288 = arith.mulf %32, %286 : vector<192x1xf32>
    %289 = vector.broadcast %288 : vector<192x1xf32> to vector<192x32xf32>
    %290 = arith.mulf %280, %289 : vector<192x32xf32>
    %291 = vector.broadcast %287 : f32 to vector<192x32xf32>
    %292 = arith.mulf %291, %290 : vector<192x32xf32>
    %293 = arith.addf %241, %292 : vector<192x32xf32>
    %c0_133 = arith.constant 0 : index
    %c0_134 = arith.constant 0 : index
    %294 = vector.load %arg10[%c0_133, %c0_134] : memref<1x32xf32, #tpu.memory_space<vmem>>, vector<1x32xf32>
    %c0_135 = arith.constant 0 : index
    %c0_136 = arith.constant 0 : index
    %295 = vector.load %arg11[%c0_135, %c0_136] : memref<1x32xf32, #tpu.memory_space<vmem>>, vector<1x32xf32>
    %cst_137 = arith.constant dense<0.000000e+00> : vector<192xf32>
    %296 = vector.multi_reduction <add>, %293, %cst_137 [1] : vector<192x32xf32> to vector<192xf32>
    %297 = vector.shape_cast %296 : vector<192xf32> to vector<192x1xf32>
    %cst_138 = arith.constant 3.200000e+01 : f32
    %298 = vector.broadcast %cst_138 : f32 to vector<192x1xf32>
    %299 = arith.divf %297, %298 : vector<192x1xf32>
    %300 = vector.broadcast %299 : vector<192x1xf32> to vector<192x32xf32>
    %301 = arith.subf %293, %300 : vector<192x32xf32>
    %302 = arith.mulf %301, %301 : vector<192x32xf32>
    %cst_139 = arith.constant dense<0.000000e+00> : vector<192xf32>
    %303 = vector.multi_reduction <add>, %302, %cst_139 [1] : vector<192x32xf32> to vector<192xf32>
    %304 = vector.shape_cast %303 : vector<192xf32> to vector<192x1xf32>
    %cst_140 = arith.constant 3.200000e+01 : f32
    %305 = vector.broadcast %cst_140 : f32 to vector<192x1xf32>
    %306 = arith.divf %304, %305 : vector<192x1xf32>
    %307 = vector.broadcast %299 : vector<192x1xf32> to vector<192x32xf32>
    %308 = arith.subf %293, %307 : vector<192x32xf32>
    %cst_141 = arith.constant 9.99999974E-6 : f32
    %309 = vector.broadcast %cst_141 : f32 to vector<192x1xf32>
    %310 = arith.addf %306, %309 : vector<192x1xf32>
    %311 = math.rsqrt %310 : vector<192x1xf32>
    %312 = vector.broadcast %311 : vector<192x1xf32> to vector<192x32xf32>
    %313 = arith.mulf %308, %312 : vector<192x32xf32>
    %314 = vector.broadcast %294 : vector<1x32xf32> to vector<192x32xf32>
    %315 = arith.mulf %313, %314 : vector<192x32xf32>
    %316 = vector.broadcast %295 : vector<1x32xf32> to vector<192x32xf32>
    %317 = arith.addf %315, %316 : vector<192x32xf32>
    %318 = arith.truncf %317 : vector<192x32xf32> to vector<192x32xbf16>
    %c0_142 = arith.constant 0 : index
    %c0_143 = arith.constant 0 : index
    %319 = vector.load %arg12[%c0_142, %c0_143] : memref<32x32xbf16, #tpu.memory_space<vmem>>, vector<32x32xbf16>
    %cst_144 = arith.constant dense<0.000000e+00> : vector<192x32xf32>
    %320 = tpu.matmul %318, %319, %cst_144 {dimension_numbers = #tpu.dot_dimension_numbers<[1], [0], [0], [1], [0, 0, 1, 1], [], []>} : vector<192x32xbf16>, vector<32x32xbf16>, vector<192x32xf32> -> vector<192x32xf32>
    %c0_145 = arith.constant 0 : index
    %c0_146 = arith.constant 0 : index
    %321 = vector.load %arg13[%c0_145, %c0_146] : memref<1x32xf32, #tpu.memory_space<vmem>>, vector<1x32xf32>
    %322 = vector.broadcast %321 : vector<1x32xf32> to vector<192x32xf32>
    %323 = arith.addf %320, %322 : vector<192x32xf32>
    %cst_147 = arith.constant 0.000000e+00 : f32
    %324 = vector.broadcast %cst_147 : f32 to vector<192x32xf32>
    %325 = arith.maximumf %323, %324 : vector<192x32xf32>
    %c0_148 = arith.constant 0 : index
    %c0_149 = arith.constant 0 : index
    %326 = vector.load %arg14[%c0_148, %c0_149] : memref<1x32xf32, #tpu.memory_space<vmem>>, vector<1x32xf32>
    %c0_150 = arith.constant 0 : index
    %c0_151 = arith.constant 0 : index
    %327 = vector.load %arg15[%c0_150, %c0_151] : memref<1x32xf32, #tpu.memory_space<vmem>>, vector<1x32xf32>
    %cst_152 = arith.constant dense<0.000000e+00> : vector<192xf32>
    %328 = vector.multi_reduction <add>, %325, %cst_152 [1] : vector<192x32xf32> to vector<192xf32>
    %329 = vector.shape_cast %328 : vector<192xf32> to vector<192x1xf32>
    %cst_153 = arith.constant 3.200000e+01 : f32
    %330 = vector.broadcast %cst_153 : f32 to vector<192x1xf32>
    %331 = arith.divf %329, %330 : vector<192x1xf32>
    %332 = vector.broadcast %331 : vector<192x1xf32> to vector<192x32xf32>
    %333 = arith.subf %325, %332 : vector<192x32xf32>
    %334 = arith.mulf %333, %333 : vector<192x32xf32>
    %cst_154 = arith.constant dense<0.000000e+00> : vector<192xf32>
    %335 = vector.multi_reduction <add>, %334, %cst_154 [1] : vector<192x32xf32> to vector<192xf32>
    %336 = vector.shape_cast %335 : vector<192xf32> to vector<192x1xf32>
    %cst_155 = arith.constant 3.200000e+01 : f32
    %337 = vector.broadcast %cst_155 : f32 to vector<192x1xf32>
    %338 = arith.divf %336, %337 : vector<192x1xf32>
    %339 = vector.broadcast %331 : vector<192x1xf32> to vector<192x32xf32>
    %340 = arith.subf %325, %339 : vector<192x32xf32>
    %cst_156 = arith.constant 9.99999974E-6 : f32
    %341 = vector.broadcast %cst_156 : f32 to vector<192x1xf32>
    %342 = arith.addf %338, %341 : vector<192x1xf32>
    %343 = math.rsqrt %342 : vector<192x1xf32>
    %344 = vector.broadcast %343 : vector<192x1xf32> to vector<192x32xf32>
    %345 = arith.mulf %340, %344 : vector<192x32xf32>
    %346 = vector.broadcast %326 : vector<1x32xf32> to vector<192x32xf32>
    %347 = arith.mulf %345, %346 : vector<192x32xf32>
    %348 = vector.broadcast %327 : vector<1x32xf32> to vector<192x32xf32>
    %349 = arith.addf %347, %348 : vector<192x32xf32>
    %cst_157 = arith.constant dense<0.000000e+00> : vector<192xf32>
    %350 = vector.multi_reduction <add>, %28, %cst_157 [1] : vector<192x32xf32> to vector<192xf32>
    %351 = vector.shape_cast %350 : vector<192xf32> to vector<192x1xf32>
    %cst_158 = arith.constant dense<0.000000e+00> : vector<192xf32>
    %352 = vector.multi_reduction <add>, %349, %cst_158 [1] : vector<192x32xf32> to vector<192xf32>
    %353 = vector.shape_cast %352 : vector<192xf32> to vector<192x1xf32>
    %354 = arith.addf %351, %353 : vector<192x1xf32>
    %cst_159 = arith.constant 6.400000e+01 : f32
    %355 = vector.broadcast %cst_159 : f32 to vector<192x1xf32>
    %356 = arith.divf %354, %355 : vector<192x1xf32>
    %357 = vector.broadcast %356 : vector<192x1xf32> to vector<192x32xf32>
    %358 = arith.subf %28, %357 : vector<192x32xf32>
    %359 = vector.broadcast %356 : vector<192x1xf32> to vector<192x32xf32>
    %360 = arith.subf %349, %359 : vector<192x32xf32>
    %361 = arith.mulf %358, %358 : vector<192x32xf32>
    %cst_160 = arith.constant dense<0.000000e+00> : vector<192xf32>
    %362 = vector.multi_reduction <add>, %361, %cst_160 [1] : vector<192x32xf32> to vector<192xf32>
    %363 = vector.shape_cast %362 : vector<192xf32> to vector<192x1xf32>
    %364 = arith.mulf %360, %360 : vector<192x32xf32>
    %cst_161 = arith.constant dense<0.000000e+00> : vector<192xf32>
    %365 = vector.multi_reduction <add>, %364, %cst_161 [1] : vector<192x32xf32> to vector<192xf32>
    %366 = vector.shape_cast %365 : vector<192xf32> to vector<192x1xf32>
    %367 = arith.addf %363, %366 : vector<192x1xf32>
    %cst_162 = arith.constant 6.400000e+01 : f32
    %368 = vector.broadcast %cst_162 : f32 to vector<192x1xf32>
    %369 = arith.divf %367, %368 : vector<192x1xf32>
    %cst_163 = arith.constant 9.99999974E-6 : f32
    %370 = vector.broadcast %cst_163 : f32 to vector<192x1xf32>
    %371 = arith.addf %369, %370 : vector<192x1xf32>
    %372 = math.rsqrt %371 : vector<192x1xf32>
    %373 = vector.broadcast %372 : vector<192x1xf32> to vector<192x32xf32>
    %374 = arith.mulf %358, %373 : vector<192x32xf32>
    %c0_164 = arith.constant 0 : index
    %c0_165 = arith.constant 0 : index
    %375 = vector.load %arg16[%c0_164, %c0_165] : memref<1x32xf32, #tpu.memory_space<vmem>>, vector<1x32xf32>
    %376 = vector.broadcast %375 : vector<1x32xf32> to vector<192x32xf32>
    %377 = arith.mulf %374, %376 : vector<192x32xf32>
    %c0_166 = arith.constant 0 : index
    %c0_167 = arith.constant 0 : index
    %378 = vector.load %arg17[%c0_166, %c0_167] : memref<1x32xf32, #tpu.memory_space<vmem>>, vector<1x32xf32>
    %379 = vector.broadcast %378 : vector<1x32xf32> to vector<192x32xf32>
    %380 = arith.addf %377, %379 : vector<192x32xf32>
    %381 = vector.broadcast %372 : vector<192x1xf32> to vector<192x32xf32>
    %382 = arith.mulf %360, %381 : vector<192x32xf32>
    %c0_168 = arith.constant 0 : index
    %c0_169 = arith.constant 0 : index
    %383 = vector.load %arg18[%c0_168, %c0_169] : memref<1x32xf32, #tpu.memory_space<vmem>>, vector<1x32xf32>
    %384 = vector.broadcast %383 : vector<1x32xf32> to vector<192x32xf32>
    %385 = arith.mulf %382, %384 : vector<192x32xf32>
    %c0_170 = arith.constant 0 : index
    %c0_171 = arith.constant 0 : index
    %386 = vector.load %arg19[%c0_170, %c0_171] : memref<1x32xf32, #tpu.memory_space<vmem>>, vector<1x32xf32>
    %387 = vector.broadcast %386 : vector<1x32xf32> to vector<192x32xf32>
    %388 = arith.addf %385, %387 : vector<192x32xf32>
    %389 = arith.truncf %380 : vector<192x32xf32> to vector<192x32xbf16>
    %c0_172 = arith.constant 0 : index
    %c0_173 = arith.constant 0 : index
    %390 = vector.load %arg20[%c0_172, %c0_173] : memref<32x32xbf16, #tpu.memory_space<vmem>>, vector<32x32xbf16>
    %cst_174 = arith.constant dense<0.000000e+00> : vector<192x32xf32>
    %391 = tpu.matmul %389, %390, %cst_174 {dimension_numbers = #tpu.dot_dimension_numbers<[1], [0], [0], [1], [0, 0, 1, 1], [], []>} : vector<192x32xbf16>, vector<32x32xbf16>, vector<192x32xf32> -> vector<192x32xf32>
    %392 = arith.truncf %388 : vector<192x32xf32> to vector<192x32xbf16>
    %c0_175 = arith.constant 0 : index
    %c0_176 = arith.constant 0 : index
    %393 = vector.load %arg21[%c0_175, %c0_176] : memref<32x32xbf16, #tpu.memory_space<vmem>>, vector<32x32xbf16>
    %cst_177 = arith.constant dense<0.000000e+00> : vector<192x32xf32>
    %394 = tpu.matmul %392, %393, %cst_177 {dimension_numbers = #tpu.dot_dimension_numbers<[1], [0], [0], [1], [0, 0, 1, 1], [], []>} : vector<192x32xbf16>, vector<32x32xbf16>, vector<192x32xf32> -> vector<192x32xf32>
    %395 = arith.addf %391, %394 : vector<192x32xf32>
    %c0_178 = arith.constant 0 : index
    %c0_179 = arith.constant 0 : index
    %396 = vector.load %arg22[%c0_178, %c0_179] : memref<1x32xf32, #tpu.memory_space<vmem>>, vector<1x32xf32>
    %397 = vector.broadcast %396 : vector<1x32xf32> to vector<192x32xf32>
    %398 = arith.addf %395, %397 : vector<192x32xf32>
    %cst_180 = arith.constant 0.000000e+00 : f32
    %399 = vector.broadcast %cst_180 : f32 to vector<192x32xf32>
    %400 = arith.maximumf %398, %399 : vector<192x32xf32>
    %401 = arith.truncf %400 : vector<192x32xf32> to vector<192x32xbf16>
    %c0_181 = arith.constant 0 : index
    %c0_182 = arith.constant 0 : index
    %402 = vector.load %arg23[%c0_181, %c0_182] : memref<192x32xbf16, #tpu.memory_space<vmem>>, vector<192x32xbf16>
    tpu.vector_store %arg23[%c0_181, %c0_182], %401 {strides = array<i32>} : memref<192x32xbf16, #tpu.memory_space<vmem>>, vector<192x32xbf16>,
    return
  }
  func.func @transform_0(%arg0: i32, %arg1: memref<5xf32, #tpu.memory_space<smem>>) -> (i32, i32) {
    %c0_i32 = arith.constant 0 : i32
    %c0_i32_0 = arith.constant 0 : i32
    return %arg0, %c0_i32 : i32, i32
  }
  func.func @transform_1(%arg0: i32, %arg1: memref<5xf32, #tpu.memory_space<smem>>) -> (i32, i32, i32) {
    %c0_i32 = arith.constant 0 : i32
    %c0_i32_0 = arith.constant 0 : i32
    %c0_i32_1 = arith.constant 0 : i32
    return %c0_i32, %arg0, %c0_i32_0 : i32, i32, i32
  }
  func.func @transform_3(%arg0: i32, %arg1: memref<5xf32, #tpu.memory_space<smem>>) -> (i32, i32) {
    %c0_i32 = arith.constant 0 : i32
    %c0_i32_0 = arith.constant 0 : i32
    %c0_i32_1 = arith.constant 0 : i32
    return %c0_i32, %c0_i32_0 : i32, i32
  }
  func.func @transform_4(%arg0: i32, %arg1: memref<5xf32, #tpu.memory_space<smem>>) -> (i32, i32) {
    %c0_i32 = arith.constant 0 : i32
    %c0_i32_0 = arith.constant 0 : i32
    %c0_i32_1 = arith.constant 0 : i32
    return %c0_i32, %c0_i32_0 : i32, i32
  }
  func.func @transform_5(%arg0: i32, %arg1: memref<5xf32, #tpu.memory_space<smem>>) -> (i32, i32, i32) {
    %c0_i32 = arith.constant 0 : i32
    %c0_i32_0 = arith.constant 0 : i32
    %c0_i32_1 = arith.constant 0 : i32
    %c0_i32_2 = arith.constant 0 : i32
    return %c0_i32, %c0_i32_0, %c0_i32_1 : i32, i32, i32
  }
  func.func @transform_6(%arg0: i32, %arg1: memref<5xf32, #tpu.memory_space<smem>>) -> (i32, i32, i32) {
    %c0_i32 = arith.constant 0 : i32
    %c0_i32_0 = arith.constant 0 : i32
    %c0_i32_1 = arith.constant 0 : i32
    %c0_i32_2 = arith.constant 0 : i32
    return %c0_i32, %c0_i32_0, %c0_i32_1 : i32, i32, i32
  }
  func.func @transform_7(%arg0: i32, %arg1: memref<5xf32, #tpu.memory_space<smem>>) -> (i32, i32, i32) {
    %c0_i32 = arith.constant 0 : i32
    %c0_i32_0 = arith.constant 0 : i32
    %c0_i32_1 = arith.constant 0 : i32
    %c0_i32_2 = arith.constant 0 : i32
    return %c0_i32, %c0_i32_0, %c0_i32_1 : i32, i32, i32
  }
  func.func @transform_8(%arg0: i32, %arg1: memref<5xf32, #tpu.memory_space<smem>>) -> (i32, i32) {
    %c0_i32 = arith.constant 0 : i32
    %c0_i32_0 = arith.constant 0 : i32
    %c0_i32_1 = arith.constant 0 : i32
    return %c0_i32, %c0_i32_0 : i32, i32
  }
  func.func @transform_9(%arg0: i32, %arg1: memref<5xf32, #tpu.memory_space<smem>>) -> (i32, i32) {
    %c0_i32 = arith.constant 0 : i32
    %c0_i32_0 = arith.constant 0 : i32
    %c0_i32_1 = arith.constant 0 : i32
    return %c0_i32, %c0_i32_0 : i32, i32
  }
  func.func @transform_10(%arg0: i32, %arg1: memref<5xf32, #tpu.memory_space<smem>>) -> (i32, i32) {
    %c0_i32 = arith.constant 0 : i32
    %c0_i32_0 = arith.constant 0 : i32
    %c0_i32_1 = arith.constant 0 : i32
    return %c0_i32, %c0_i32_0 : i32, i32
  }
  func.func @transform_11(%arg0: i32, %arg1: memref<5xf32, #tpu.memory_space<smem>>) -> (i32, i32) {
    %c0_i32 = arith.constant 0 : i32
    %c0_i32_0 = arith.constant 0 : i32
    %c0_i32_1 = arith.constant 0 : i32
    return %c0_i32, %c0_i32_0 : i32, i32
  }
  func.func @transform_12(%arg0: i32, %arg1: memref<5xf32, #tpu.memory_space<smem>>) -> (i32, i32) {
    %c0_i32 = arith.constant 0 : i32
    %c0_i32_0 = arith.constant 0 : i32
    %c0_i32_1 = arith.constant 0 : i32
    return %c0_i32, %c0_i32_0 : i32, i32
  }
  func.func @transform_13(%arg0: i32, %arg1: memref<5xf32, #tpu.memory_space<smem>>) -> (i32, i32) {
    %c0_i32 = arith.constant 0 : i32
    %c0_i32_0 = arith.constant 0 : i32
    %c0_i32_1 = arith.constant 0 : i32
    return %c0_i32, %c0_i32_0 : i32, i32
  }
  func.func @transform_14(%arg0: i32, %arg1: memref<5xf32, #tpu.memory_space<smem>>) -> (i32, i32) {
    %c0_i32 = arith.constant 0 : i32
    %c0_i32_0 = arith.constant 0 : i32
    %c0_i32_1 = arith.constant 0 : i32
    return %c0_i32, %c0_i32_0 : i32, i32
  }
  func.func @transform_15(%arg0: i32, %arg1: memref<5xf32, #tpu.memory_space<smem>>) -> (i32, i32) {
    %c0_i32 = arith.constant 0 : i32
    %c0_i32_0 = arith.constant 0 : i32
    %c0_i32_1 = arith.constant 0 : i32
    return %c0_i32, %c0_i32_0 : i32, i32
  }
  func.func @transform_16(%arg0: i32, %arg1: memref<5xf32, #tpu.memory_space<smem>>) -> (i32, i32) {
    %c0_i32 = arith.constant 0 : i32
    %c0_i32_0 = arith.constant 0 : i32
    %c0_i32_1 = arith.constant 0 : i32
    return %c0_i32, %c0_i32_0 : i32, i32
  }
  func.func @transform_17(%arg0: i32, %arg1: memref<5xf32, #tpu.memory_space<smem>>) -> (i32, i32) {
    %c0_i32 = arith.constant 0 : i32
    %c0_i32_0 = arith.constant 0 : i32
    %c0_i32_1 = arith.constant 0 : i32
    return %c0_i32, %c0_i32_0 : i32, i32
  }
  func.func @transform_18(%arg0: i32, %arg1: memref<5xf32, #tpu.memory_space<smem>>) -> (i32, i32) {
    %c0_i32 = arith.constant 0 : i32
    %c0_i32_0 = arith.constant 0 : i32
    %c0_i32_1 = arith.constant 0 : i32
    return %c0_i32, %c0_i32_0 : i32, i32
  }
  func.func @transform_19(%arg0: i32, %arg1: memref<5xf32, #tpu.memory_space<smem>>) -> (i32, i32) {
    %c0_i32 = arith.constant 0 : i32
    %c0_i32_0 = arith.constant 0 : i32
    %c0_i32_1 = arith.constant 0 : i32
    return %c0_i32, %c0_i32_0 : i32, i32
  }
  func.func @transform_20(%arg0: i32, %arg1: memref<5xf32, #tpu.memory_space<smem>>) -> (i32, i32) {
    %c0_i32 = arith.constant 0 : i32
    %c0_i32_0 = arith.constant 0 : i32
    %c0_i32_1 = arith.constant 0 : i32
    return %c0_i32, %c0_i32_0 : i32, i32
  }
  func.func @transform_21(%arg0: i32, %arg1: memref<5xf32, #tpu.memory_space<smem>>) -> (i32, i32) {
    %c0_i32 = arith.constant 0 : i32
    %c0_i32_0 = arith.constant 0 : i32
    return %arg0, %c0_i32 : i32, i32
  }
}

</mosaic_0001>

<llo_original>
// kernel: tpu_custom_call.1
$region0: #{tpu_custom_call.1}
  #allocation0 [shape = 'u32[]', space=smem, size = 0x4, offset = 0x4, fixed_abs, tag = 'smem constant byte address 0x4 - core index']
  #allocation1 [shape = 'u32[144,128]{1,0:T(1,128)}', space=vmem, size = 0x12000, scoped, tag = 'internal scratch']
  #allocation2 [shape = 'bf16[5,48,32]{2,1,0:T(16,128)(2,1)}', space=vmem, size = 0xf000, scoped, tag = 'scratch operand']
  #allocation3 [shape = 's32[1]{0}', space=sflag, size = 0x4, scoped, tag = 'scratch operand']
  #allocation4 [shape = 's32[1]{0}', space=sflag, size = 0x4, scoped, tag = 'scoped memory for tpu_custom_call.1']
  #allocation5 [shape = 'u8[512]{0}', space=smem, size = 0x200, scoped, tag = 'prefetched SMEM operand 0']
  #allocation6 [shape = 's32[]', space=sflag, size = 0x4, offset = 0, fixed_abs, tag = 'sflag constant byte address 0x0 - dummy sync flag']
  %s0 = inlined_call_operand.vmem [shape: f32[5], index: 0, kind: input, shape index: {}]
  %s1 = inlined_call_operand.vmem [shape: bf16[192,32], index: 1, kind: input, shape index: {}]
  %s2 = inlined_call_operand.vmem [shape: bf16[5,192,48], index: 2, kind: input, shape index: {}]
  %s3 = inlined_call_operand.vmem [shape: bf16[5,48,32], index: 3, kind: input, shape index: {}]
  %s4 = inlined_call_operand.vmem [shape: f32[1,32], index: 4, kind: input, shape index: {}]
  %s5 = inlined_call_operand.vmem [shape: f32[1,32], index: 5, kind: input, shape index: {}]
  %s6 = inlined_call_operand.vmem [shape: f32[5,1,48], index: 6, kind: input, shape index: {}]
  %s7 = inlined_call_operand.vmem [shape: f32[5,1,48], index: 7, kind: input, shape index: {}]
  %s8 = inlined_call_operand.vmem [shape: f32[5,1,32], index: 8, kind: input, shape index: {}]
  %s9 = inlined_call_operand.vmem [shape: f32[1,32], index: 9, kind: input, shape index: {}]
  %s10 = inlined_call_operand.vmem [shape: f32[1,32], index: 10, kind: input, shape index: {}]
  %s11 = inlined_call_operand.vmem [shape: bf16[32,32], index: 11, kind: input, shape index: {}]
  %s12 = inlined_call_operand.vmem [shape: f32[1,32], index: 12, kind: input, shape index: {}]
  %s13 = inlined_call_operand.vmem [shape: f32[1,32], index: 13, kind: input, shape index: {}]
  %s14 = inlined_call_operand.vmem [shape: f32[1,32], index: 14, kind: input, shape index: {}]
  %s15 = inlined_call_operand.vmem [shape: f32[1,32], index: 15, kind: input, shape index: {}]
  %s16 = inlined_call_operand.vmem [shape: f32[1,32], index: 16, kind: input, shape index: {}]
  %s17 = inlined_call_operand.vmem [shape: f32[1,32], index: 17, kind: input, shape index: {}]
  %s18 = inlined_call_operand.vmem [shape: f32[1,32], index: 18, kind: input, shape index: {}]
  %s19 = inlined_call_operand.vmem [shape: bf16[32,32], index: 19, kind: input, shape index: {}]
  %s20 = inlined_call_operand.vmem [shape: bf16[32,32], index: 20, kind: input, shape index: {}]
  %s21 = inlined_call_operand.vmem [shape: f32[1,32], index: 21, kind: input, shape index: {}]
  %s22 = inlined_call_operand.vmem [shape: bf16[192,32], index: 22, kind: output, shape index: {}]
  %s23 = sld [smem:[#allocation0]]
  $region128: #{tpu_custom_call.1} parent=0
    _
  %s25 = ssub.s32 1, %s23
  %s26 = scalar_select 0, %s25, %s23
  %s27 = sshll.u32 %s0, 4
  %s28 = int_to_ptr.vmem [resolvable:$true] %s27
  %30 = dma.vmem_to_smem %s28, 16, [#allocation5], [#allocation4]
  %31 = dma.done [#allocation4], 16
  %32 = sfence
  // Predicated region
  $region2: #{tpu_custom_call.1} parent=0 // pred_check
    _
  $region3: #{tpu_custom_call.1} parent=0 // pred_check_branch
    %34 = sbr.rel (0) target = $region5
  $region4: #{tpu_custom_call.1} parent=0 // pred_region
    _
  $region5: #{tpu_custom_call.1} parent=0 // pred_fallthru
    _
  // Predicated region
  $region6: #{tpu_custom_call.1} parent=0 // pred_check
    _
  $region7: #{tpu_custom_call.1} parent=0 // pred_check_branch
    %36 = sbr.rel (0) target = $region9
  $region8: #{tpu_custom_call.1} parent=0 // pred_region
    _
  $region9: #{tpu_custom_call.1} parent=0 // pred_fallthru
    _
  // Predicated region
  $region10: #{tpu_custom_call.1} parent=0 // pred_check
    _
  $region11: #{tpu_custom_call.1} parent=0 // pred_check_branch
    %38 = sbr.rel (0) target = $region13
  $region12: #{tpu_custom_call.1} parent=0 // pred_region
    _
  $region13: #{tpu_custom_call.1} parent=0 // pred_fallthru
    _
  // Predicated region
  $region14: #{tpu_custom_call.1} parent=0 // pred_check
    _
  $region15: #{tpu_custom_call.1} parent=0 // pred_check_branch
    %40 = sbr.rel (0) target = $region17
  $region16: #{tpu_custom_call.1} parent=0 // pred_region
    _
  $region17: #{tpu_custom_call.1} parent=0 // pred_fallthru
    _
  // Predicated region
  $region18: #{tpu_custom_call.1} parent=0 // pred_check
    _
  $region19: #{tpu_custom_call.1} parent=0 // pred_check_branch
    %42 = sbr.rel (0) target = $region21
  $region20: #{tpu_custom_call.1} parent=0 // pred_region
    _
  $region21: #{tpu_custom_call.1} parent=0 // pred_fallthru
    _
  // Predicated region
  $region22: #{tpu_custom_call.1} parent=0 // pred_check
    _
  $region23: #{tpu_custom_call.1} parent=0 // pred_check_branch
    %44 = sbr.rel (0) target = $region25
  $region24: #{tpu_custom_call.1} parent=0 // pred_region
    _
  $region25: #{tpu_custom_call.1} parent=0 // pred_fallthru
    _
  // Predicated region
  $region26: #{tpu_custom_call.1} parent=0 // pred_check
    _
  $region27: #{tpu_custom_call.1} parent=0 // pred_check_branch
    %46 = sbr.rel (0) target = $region29
  $region28: #{tpu_custom_call.1} parent=0 // pred_region
    _
  $region29: #{tpu_custom_call.1} parent=0 // pred_fallthru
    _
  // Predicated region
  $region30: #{tpu_custom_call.1} parent=0 // pred_check
    _
  $region31: #{tpu_custom_call.1} parent=0 // pred_check_branch
    %48 = sbr.rel (0) target = $region33
  $region32: #{tpu_custom_call.1} parent=0 // pred_region
    _
  $region33: #{tpu_custom_call.1} parent=0 // pred_fallthru
    _
  // Predicated region
  $region34: #{tpu_custom_call.1} parent=0 // pred_check
    _
  $region35: #{tpu_custom_call.1} parent=0 // pred_check_branch
    %50 = sbr.rel (0) target = $region37
  $region36: #{tpu_custom_call.1} parent=0 // pred_region
    _
  $region37: #{tpu_custom_call.1} parent=0 // pred_fallthru
    _
  // Predicated region
  $region38: #{tpu_custom_call.1} parent=0 // pred_check
    _
  $region39: #{tpu_custom_call.1} parent=0 // pred_check_branch
    %52 = sbr.rel (0) target = $region41
  $region40: #{tpu_custom_call.1} parent=0 // pred_region
    _
  $region41: #{tpu_custom_call.1} parent=0 // pred_fallthru
    _
  // Predicated region
  $region42: #{tpu_custom_call.1} parent=0 // pred_check
    _
  $region43: #{tpu_custom_call.1} parent=0 // pred_check_branch
    %54 = sbr.rel (0) target = $region45
  $region44: #{tpu_custom_call.1} parent=0 // pred_region
    _
  $region45: #{tpu_custom_call.1} parent=0 // pred_fallthru
    _
  // Predicated region
  $region46: #{tpu_custom_call.1} parent=0 // pred_check
    _
  $region47: #{tpu_custom_call.1} parent=0 // pred_check_branch
    %56 = sbr.rel (0) target = $region49
  $region48: #{tpu_custom_call.1} parent=0 // pred_region
    _
  $region49: #{tpu_custom_call.1} parent=0 // pred_fallthru
    _
  // Predicated region
  $region50: #{tpu_custom_call.1} parent=0 // pred_check
    _
  $region51: #{tpu_custom_call.1} parent=0 // pred_check_branch
    %58 = sbr.rel (0) target = $region53
  $region52: #{tpu_custom_call.1} parent=0 // pred_region
    _
  $region53: #{tpu_custom_call.1} parent=0 // pred_fallthru
    _
  // Predicated region
  $region54: #{tpu_custom_call.1} parent=0 // pred_check
    _
  $region55: #{tpu_custom_call.1} parent=0 // pred_check_branch
    %60 = sbr.rel (0) target = $region57
  $region56: #{tpu_custom_call.1} parent=0 // pred_region
    _
  $region57: #{tpu_custom_call.1} parent=0 // pred_fallthru
    _
  // Predicated region
  $region58: #{tpu_custom_call.1} parent=0 // pred_check
    _
  $region59: #{tpu_custom_call.1} parent=0 // pred_check_branch
    %62 = sbr.rel (0) target = $region61
  $region60: #{tpu_custom_call.1} parent=0 // pred_region
    _
  $region61: #{tpu_custom_call.1} parent=0 // pred_fallthru
    _
  // Predicated region
  $region62: #{tpu_custom_call.1} parent=0 // pred_check
    _
  $region63: #{tpu_custom_call.1} parent=0 // pred_check_branch
    %64 = sbr.rel (0) target = $region65
  $region64: #{tpu_custom_call.1} parent=0 // pred_region
    _
  $region65: #{tpu_custom_call.1} parent=0 // pred_fallthru
    _
  // Predicated region
  $region66: #{tpu_custom_call.1} parent=0 // pred_check
    _
  $region67: #{tpu_custom_call.1} parent=0 // pred_check_branch
    %66 = sbr.rel (0) target = $region69
  $region68: #{tpu_custom_call.1} parent=0 // pred_region
    _
  $region69: #{tpu_custom_call.1} parent=0 // pred_fallthru
    _
  // Predicated region
  $region70: #{tpu_custom_call.1} parent=0 // pred_check
    _
  $region71: #{tpu_custom_call.1} parent=0 // pred_check_branch
    %68 = sbr.rel (0) target = $region73
  $region72: #{tpu_custom_call.1} parent=0 // pred_region
    _
  $region73: #{tpu_custom_call.1} parent=0 // pred_fallthru
    _
  // Predicated region
  $region74: #{tpu_custom_call.1} parent=0 // pred_check
    _
  $region75: #{tpu_custom_call.1} parent=0 // pred_check_branch
    %70 = sbr.rel (0) target = $region77
  $region76: #{tpu_custom_call.1} parent=0 // pred_region
    _
  $region77: #{tpu_custom_call.1} parent=0 // pred_fallthru
    _
  // Predicated region
  $region78: #{tpu_custom_call.1} parent=0 // pred_check
    _
  $region79: #{tpu_custom_call.1} parent=0 // pred_check_branch
    %72 = sbr.rel (0) target = $region81
  $region80: #{tpu_custom_call.1} parent=0 // pred_region
    _
  $region81: #{tpu_custom_call.1} parent=0 // pred_fallthru
    _
  %p74 = scmp.eq.s32.totalorder 0, 0
  // Predicated region
  $region82: #{tpu_custom_call.1} parent=0 // pred_check
    %p75 = pneg %p74
  $region83: #{tpu_custom_call.1} parent=0 // pred_check_branch
    %77 = sbr.rel (%p75) target = $region85
  $region84: #{tpu_custom_call.1} parent=0 // pred_region
    %p79 = scmp.lt.u32.totalorder 120, 8
    %p80 = pneg %p79
    // Predicated region
    $region86: #{tpu_custom_call.1} parent=84 // pred_check
      _
    $region87: #{tpu_custom_call.1} parent=84 // pred_check_branch
      %82 = sbr.rel (%p79) target = $region89
    $region88: #{tpu_custom_call.1} parent=84 // pred_region
      %s97 = sand.u32 120, 7
      %p98 = scmp.eq.s32.totalorder %s97, 0
      // Predicated region
      $region101: #{tpu_custom_call.1} parent=88 // pred_check
        %p99 = pneg %p98
      $region102: #{tpu_custom_call.1} parent=88 // pred_check_branch
        %101 = sbr.rel (%p99) target = $region104
      $region103: #{tpu_custom_call.1} parent=88 // pred_region
        loop: start=0, step=1, limit=1
        $region105: #{tpu_custom_call.1} parent=103 // loop_pre_header
          _
        $region106: #{tpu_custom_call.1} parent=103 // loop_header
          %s103 = sphi 0, %s107
          %p104 = scmp.ge.s32.totalorder %s103, 1
          %s108 = sphi %s3, %s3
          %s109 = sphi [#allocation2], [#allocation2]
        $region107: #{tpu_custom_call.1} parent=103 // loop_header_branch
          %106 = sbr.rel (%p104) target = $region111
        $region108: #{tpu_custom_call.1} parent=103 // loop_body
          %v110 = vld [vmem:[%s108] sm:$0xff]
          %111 = vst [vmem:[%s109] sm:$0xff] %v110
          %v112 = vld [vmem:[%s108 + $0x8] sm:$0xff]
          %113 = vst [vmem:[%s109 + $0x8] sm:$0xff] %v112
          %v114 = vld [vmem:[%s108 + $0x10] sm:$0xff]
          %115 = vst [vmem:[%s109 + $0x10] sm:$0xff] %v114
          %v116 = vld [vmem:[%s108 + $0x18] sm:$0xff]
          %117 = vst [vmem:[%s109 + $0x18] sm:$0xff] %v116
          %v118 = vld [vmem:[%s108 + $0x20] sm:$0xff]
          %119 = vst [vmem:[%s109 + $0x20] sm:$0xff] %v118
          %v120 = vld [vmem:[%s108 + $0x28] sm:$0xff]
          %121 = vst [vmem:[%s109 + $0x28] sm:$0xff] %v120
          %v122 = vld [vmem:[%s108 + $0x30] sm:$0xff]
          %123 = vst [vmem:[%s109 + $0x30] sm:$0xff] %v122
          %v124 = vld [vmem:[%s108 + $0x38] sm:$0xff]
          %125 = vst [vmem:[%s109 + $0x38] sm:$0xff] %v124
          %v126 = vld [vmem:[%s108 + $0x40] sm:$0xff]
          %127 = vst [vmem:[%s109 + $0x40] sm:$0xff] %v126
          %v128 = vld [vmem:[%s108 + $0x48] sm:$0xff]
          %129 = vst [vmem:[%s109 + $0x48] sm:$0xff] %v128
          %v130 = vld [vmem:[%s108 + $0x50] sm:$0xff]
          %131 = vst [vmem:[%s109 + $0x50] sm:$0xff] %v130
          %v132 = vld [vmem:[%s108 + $0x58] sm:$0xff]
          %133 = vst [vmem:[%s109 + $0x58] sm:$0xff] %v132
          %v134 = vld [vmem:[%s108 + $0x60] sm:$0xff]
          %135 = vst [vmem:[%s109 + $0x60] sm:$0xff] %v134
          %v136 = vld [vmem:[%s108 + $0x68] sm:$0xff]
          %137 = vst [vmem:[%s109 + $0x68] sm:$0xff] %v136
          %v138 = vld [vmem:[%s108 + $0x70] sm:$0xff]
          %139 = vst [vmem:[%s109 + $0x70] sm:$0xff] %v138
        $region109: #{tpu_custom_call.1} parent=103 // loop_footer
          %s107 = sadd.s32 1, %s103
        $region110: #{tpu_custom_call.1} parent=103 // loop_footer_branch
          %102 = sbr.rel target = $region106
        $region111: #{tpu_custom_call.1} parent=103 // loop_exit
          _
      $region104: #{tpu_custom_call.1} parent=88 // pred_fallthru
        _
      %p140 = pneg %p98
      // Predicated region
      $region112: #{tpu_custom_call.1} parent=88 // pred_check
        _
      $region113: #{tpu_custom_call.1} parent=88 // pred_check_branch
        %142 = sbr.rel (%p98) target = $region115
      $region114: #{tpu_custom_call.1} parent=88 // pred_region
        %s143 = sand.u32 120, 7
      $region115: #{tpu_custom_call.1} parent=88 // pred_fallthru
        _
    $region89: #{tpu_custom_call.1} parent=84 // pred_fallthru
      _
    // Predicated region
    $region90: #{tpu_custom_call.1} parent=84 // pred_check
      %p83 = pneg %p79
    $region91: #{tpu_custom_call.1} parent=84 // pred_check_branch
      %85 = sbr.rel (%p83) target = $region93
    $region92: #{tpu_custom_call.1} parent=84 // pred_region
      %s86 = sshllo.u32 0, 120
      loop: start=0, step=1, limit=1
      $region94: #{tpu_custom_call.1} parent=92 // loop_pre_header
        _
      $region95: #{tpu_custom_call.1} parent=92 // loop_header
        %s88 = sphi 0, %s92
        %p89 = scmp.ge.s32.totalorder %s88, 1
        %s93 = sphi %s3, %s3
        %s94 = sphi [#allocation2], [#allocation2]
      $region96: #{tpu_custom_call.1} parent=92 // loop_header_branch
        %91 = sbr.rel (%p89) target = $region100
      $region97: #{tpu_custom_call.1} parent=92 // loop_body
        %v95 = vld [vmem:[%s93] sm:%s86]
        %96 = vst [vmem:[%s94] sm:%s86] %v95
      $region98: #{tpu_custom_call.1} parent=92 // loop_footer
        %s92 = sadd.s32 1, %s88
      $region99: #{tpu_custom_call.1} parent=92 // loop_footer_branch
        %87 = sbr.rel target = $region95
      $region100: #{tpu_custom_call.1} parent=92 // loop_exit
        _
    $region93: #{tpu_custom_call.1} parent=84 // pred_fallthru
      _
    // Predicated region
    $region116: #{tpu_custom_call.1} parent=84 // pred_check
      _
    $region117: #{tpu_custom_call.1} parent=84 // pred_check_branch
      %146 = sbr.rel (0) target = $region119
    $region118: #{tpu_custom_call.1} parent=84 // pred_region
      %147 = vsyncadd [#allocation3], 1920
    $region119: #{tpu_custom_call.1} parent=84 // pred_fallthru
      _
    %s148 = smul.u32 4, 5
    %s149 = smul.u32 %s148, 6
    %s150 = smul.u32 %s149, 1
    %s151 = sshll.u32 %s150, 4
    %152 = dma.done [#allocation3], %s151
  $region85: #{tpu_custom_call.1} parent=0 // pred_fallthru
    _
  %v153 = vld [vmem:[%s1] sm:$0xf]
  %v154 = vld [vmem:[%s1 + $0x4] sm:$0xf]
  %v155 = vld [vmem:[%s1 + $0x8] sm:$0xf]
  %v156 = vld [vmem:[%s1 + $0xc] sm:$0xf]
  %v157 = vld [vmem:[%s1 + $0x10] sm:$0xf]
  %v158 = vld [vmem:[%s1 + $0x14] sm:$0xf]
  %v159 = vld [vmem:[%s1 + $0x18] sm:$0xf]
  %v160 = vld [vmem:[%s1 + $0x1c] sm:$0xf]
  %v161 = vld [vmem:[%s1 + $0x20] sm:$0xf]
  %v162 = vld [vmem:[%s1 + $0x24] sm:$0xf]
  %v163 = vld [vmem:[%s1 + $0x28] sm:$0xf]
  %v164 = vld [vmem:[%s1 + $0x2c] sm:$0xf]
  %v165 = vld [vmem:[%s1 + $0x30] sm:$0xf]
  %v166 = vld [vmem:[%s1 + $0x34] sm:$0xf]
  %v167 = vld [vmem:[%s1 + $0x38] sm:$0xf]
  %v168 = vld [vmem:[%s1 + $0x3c] sm:$0xf]
  %v169 = vld [vmem:[%s1 + $0x40] sm:$0xf]
  %v170 = vld [vmem:[%s1 + $0x44] sm:$0xf]
  %v171 = vld [vmem:[%s1 + $0x48] sm:$0xf]
  %v172 = vld [vmem:[%s1 + $0x4c] sm:$0xf]
  %v173 = vld [vmem:[%s1 + $0x50] sm:$0xf]
  %v174 = vld [vmem:[%s1 + $0x54] sm:$0xf]
  %v175 = vld [vmem:[%s1 + $0x58] sm:$0xf]
  %v176 = vld [vmem:[%s1 + $0x5c] sm:$0xf]
  %v177 = vunpack.c.l.bf16 %v153
  %v178 = vunpack.c.l.bf16 %v154
  %v179 = vunpack.c.l.bf16 %v155
  %v180 = vunpack.c.l.bf16 %v156
  %v181 = vunpack.c.l.bf16 %v157
  %v182 = vunpack.c.l.bf16 %v158
  %v183 = vunpack.c.l.bf16 %v159
  %v184 = vunpack.c.l.bf16 %v160
  %v185 = vunpack.c.l.bf16 %v161
  %v186 = vunpack.c.l.bf16 %v162
  %v187 = vunpack.c.l.bf16 %v163
  %v188 = vunpack.c.l.bf16 %v164
  %v189 = vunpack.c.l.bf16 %v165
  %v190 = vunpack.c.l.bf16 %v166
  %v191 = vunpack.c.l.bf16 %v167
  %v192 = vunpack.c.l.bf16 %v168
  %v193 = vunpack.c.l.bf16 %v169
  %v194 = vunpack.c.l.bf16 %v170
  %v195 = vunpack.c.l.bf16 %v171
  %v196 = vunpack.c.l.bf16 %v172
  %v197 = vunpack.c.l.bf16 %v173
  %v198 = vunpack.c.l.bf16 %v174
  %v199 = vunpack.c.l.bf16 %v175
  %v200 = vunpack.c.l.bf16 %v176
  %v201 = vld [vmem:[%s4] sm:$0x1]
  %v202 = vld [vmem:[%s5] sm:$0x1]
  %vm203 = vcmask 261120
  %v204 = vsel %vm203, %v177, 0.0
  %205 = vadd.xlane.f32.xlu0 %v204
  %v206 = vpop.xlane.xlu0 %205
  %v207 = vsel %vm203, %v178, 0.0
  %208 = vadd.xlane.f32.xlu0 %v207
  %v209 = vpop.xlane.xlu0 %208
  %v210 = vsel %vm203, %v179, 0.0
  %211 = vadd.xlane.f32.xlu0 %v210
  %v212 = vpop.xlane.xlu0 %211
  %v213 = vsel %vm203, %v180, 0.0
  %214 = vadd.xlane.f32.xlu0 %v213
  %v215 = vpop.xlane.xlu0 %214
  %v216 = vsel %vm203, %v181, 0.0
  %217 = vadd.xlane.f32.xlu0 %v216
  %v218 = vpop.xlane.xlu0 %217
  %v219 = vsel %vm203, %v182, 0.0
  %220 = vadd.xlane.f32.xlu0 %v219
  %v221 = vpop.xlane.xlu0 %220
  %v222 = vsel %vm203, %v183, 0.0
  %223 = vadd.xlane.f32.xlu0 %v222
  %v224 = vpop.xlane.xlu0 %223
  %v225 = vsel %vm203, %v184, 0.0
  %226 = vadd.xlane.f32.xlu0 %v225
  %v227 = vpop.xlane.xlu0 %226
  %v228 = vsel %vm203, %v185, 0.0
  %229 = vadd.xlane.f32.xlu0 %v228
  %v230 = vpop.xlane.xlu0 %229
  %v231 = vsel %vm203, %v186, 0.0
  %232 = vadd.xlane.f32.xlu0 %v231
  %v233 = vpop.xlane.xlu0 %232
  %v234 = vsel %vm203, %v187, 0.0
  %235 = vadd.xlane.f32.xlu0 %v234
  %v236 = vpop.xlane.xlu0 %235
  %v237 = vsel %vm203, %v188, 0.0
  %238 = vadd.xlane.f32.xlu0 %v237
  %v239 = vpop.xlane.xlu0 %238
  %v240 = vsel %vm203, %v189, 0.0
  %241 = vadd.xlane.f32.xlu0 %v240
  %v242 = vpop.xlane.xlu0 %241
  %v243 = vsel %vm203, %v190, 0.0
  %244 = vadd.xlane.f32.xlu0 %v243
  %v245 = vpop.xlane.xlu0 %244
  %v246 = vsel %vm203, %v191, 0.0
  %247 = vadd.xlane.f32.xlu0 %v246
  %v248 = vpop.xlane.xlu0 %247
  %v249 = vsel %vm203, %v192, 0.0
  %250 = vadd.xlane.f32.xlu0 %v249
  %v251 = vpop.xlane.xlu0 %250
  %v252 = vsel %vm203, %v193, 0.0
  %253 = vadd.xlane.f32.xlu0 %v252
  %v254 = vpop.xlane.xlu0 %253
  %v255 = vsel %vm203, %v194, 0.0
  %256 = vadd.xlane.f32.xlu0 %v255
  %v257 = vpop.xlane.xlu0 %256
  %v258 = vsel %vm203, %v195, 0.0
  %259 = vadd.xlane.f32.xlu0 %v258
  %v260 = vpop.xlane.xlu0 %259
  %v261 = vsel %vm203, %v196, 0.0
  %262 = vadd.xlane.f32.xlu0 %v261
  %v263 = vpop.xlane.xlu0 %262
  %v264 = vsel %vm203, %v197, 0.0
  %265 = vadd.xlane.f32.xlu0 %v264
  %v266 = vpop.xlane.xlu0 %265
  %v267 = vsel %vm203, %v198, 0.0
  %268 = vadd.xlane.f32.xlu0 %v267
  %v269 = vpop.xlane.xlu0 %268
  %v270 = vsel %vm203, %v199, 0.0
  %271 = vadd.xlane.f32.xlu0 %v270
  %v272 = vpop.xlane.xlu0 %271
  %v273 = vsel %vm203, %v200, 0.0
  %274 = vadd.xlane.f32.xlu0 %v273
  %v275 = vpop.xlane.xlu0 %274
  %v276 = vrcp.pop 32.0
  %v277 = vmul.f32 %v206, %v276
  %v278 = vmul.f32 %v209, %v276
  %v279 = vmul.f32 %v212, %v276
  %v280 = vmul.f32 %v215, %v276
  %v281 = vmul.f32 %v218, %v276
  %v282 = vmul.f32 %v221, %v276
  %v283 = vmul.f32 %v224, %v276
  %v284 = vmul.f32 %v227, %v276
  %v285 = vmul.f32 %v230, %v276
  %v286 = vmul.f32 %v233, %v276
  %v287 = vmul.f32 %v236, %v276
  %v288 = vmul.f32 %v239, %v276
  %v289 = vmul.f32 %v242, %v276
  %v290 = vmul.f32 %v245, %v276
  %v291 = vmul.f32 %v248, %v276
  %v292 = vmul.f32 %v251, %v276
  %v293 = vmul.f32 %v254, %v276
  %v294 = vmul.f32 %v257, %v276
  %v295 = vmul.f32 %v260, %v276
  %v296 = vmul.f32 %v263, %v276
  %v297 = vmul.f32 %v266, %v276
  %v298 = vmul.f32 %v269, %v276
  %v299 = vmul.f32 %v272, %v276
  %v300 = vmul.f32 %v275, %v276
  %v301 = vsub.f32 %v177, %v277
  %v302 = vsub.f32 %v178, %v278
  %v303 = vsub.f32 %v179, %v279
  %v304 = vsub.f32 %v180, %v280
  %v305 = vsub.f32 %v181, %v281
  %v306 = vsub.f32 %v182, %v282
  %v307 = vsub.f32 %v183, %v283
  %v308 = vsub.f32 %v184, %v284
  %v309 = vsub.f32 %v185, %v285
  %v310 = vsub.f32 %v186, %v286
  %v311 = vsub.f32 %v187, %v287
  %v312 = vsub.f32 %v188, %v288
  %v313 = vsub.f32 %v189, %v289
  %v314 = vsub.f32 %v190, %v290
  %v315 = vsub.f32 %v191, %v291
  %v316 = vsub.f32 %v192, %v292
  %v317 = vsub.f32 %v193, %v293
  %v318 = vsub.f32 %v194, %v294
  %v319 = vsub.f32 %v195, %v295
  %v320 = vsub.f32 %v196, %v296
  %v321 = vsub.f32 %v197, %v297
  %v322 = vsub.f32 %v198, %v298
  %v323 = vsub.f32 %v199, %v299
  %v324 = vsub.f32 %v200, %v300
  %v325 = vmul.f32 %v301, %v301
  %v326 = vmul.f32 %v302, %v302
  %v327 = vmul.f32 %v303, %v303
  %v328 = vmul.f32 %v304, %v304
  %v329 = vmul.f32 %v305, %v305
  %v330 = vmul.f32 %v306, %v306
  %v331 = vmul.f32 %v307, %v307
  %v332 = vmul.f32 %v308, %v308
  %v333 = vmul.f32 %v309, %v309
  %v334 = vmul.f32 %v310, %v310
  %v335 = vmul.f32 %v311, %v311
  %v336 = vmul.f32 %v312, %v312
  %v337 = vmul.f32 %v313, %v313
  %v338 = vmul.f32 %v314, %v314
  %v339 = vmul.f32 %v315, %v315
  %v340 = vmul.f32 %v316, %v316
  %v341 = vmul.f32 %v317, %v317
  %v342 = vmul.f32 %v318, %v318
  %v343 = vmul.f32 %v319, %v319
  %v344 = vmul.f32 %v320, %v320
  %v345 = vmul.f32 %v321, %v321
  %v346 = vmul.f32 %v322, %v322
  %v347 = vmul.f32 %v323, %v323
  %v348 = vmul.f32 %v324, %v324
  %v349 = vsel %vm203, %v325, 0.0
  %350 = vadd.xlane.f32.xlu0 %v349
  %v351 = vpop.xlane.xlu0 %350
  %v352 = vsel %vm203, %v326, 0.0
  %353 = vadd.xlane.f32.xlu0 %v352
  %v354 = vpop.xlane.xlu0 %353
  %v355 = vsel %vm203, %v327, 0.0
  %356 = vadd.xlane.f32.xlu0 %v355
  %v357 = vpop.xlane.xlu0 %356
  %v358 = vsel %vm203, %v328, 0.0
  %359 = vadd.xlane.f32.xlu0 %v358
  %v360 = vpop.xlane.xlu0 %359
  %v361 = vsel %vm203, %v329, 0.0
  %362 = vadd.xlane.f32.xlu0 %v361
  %v363 = vpop.xlane.xlu0 %362
  %v364 = vsel %vm203, %v330, 0.0
  %365 = vadd.xlane.f32.xlu0 %v364
  %v366 = vpop.xlane.xlu0 %365
  %v367 = vsel %vm203, %v331, 0.0
  %368 = vadd.xlane.f32.xlu0 %v367
  %v369 = vpop.xlane.xlu0 %368
  %v370 = vsel %vm203, %v332, 0.0
  %371 = vadd.xlane.f32.xlu0 %v370
  %v372 = vpop.xlane.xlu0 %371
  %v373 = vsel %vm203, %v333, 0.0
  %374 = vadd.xlane.f32.xlu0 %v373
  %v375 = vpop.xlane.xlu0 %374
  %v376 = vsel %vm203, %v334, 0.0
  %377 = vadd.xlane.f32.xlu0 %v376
  %v378 = vpop.xlane.xlu0 %377
  %v379 = vsel %vm203, %v335, 0.0
  %380 = vadd.xlane.f32.xlu0 %v379
  %v381 = vpop.xlane.xlu0 %380
  %v382 = vsel %vm203, %v336, 0.0
  %383 = vadd.xlane.f32.xlu0 %v382
  %v384 = vpop.xlane.xlu0 %383
  %v385 = vsel %vm203, %v337, 0.0
  %386 = vadd.xlane.f32.xlu0 %v385
  %v387 = vpop.xlane.xlu0 %386
  %v388 = vsel %vm203, %v338, 0.0
  %389 = vadd.xlane.f32.xlu0 %v388
  %v390 = vpop.xlane.xlu0 %389
  %v391 = vsel %vm203, %v339, 0.0
  %392 = vadd.xlane.f32.xlu0 %v391
  %v393 = vpop.xlane.xlu0 %392
  %v394 = vsel %vm203, %v340, 0.0
  %395 = vadd.xlane.f32.xlu0 %v394
  %v396 = vpop.xlane.xlu0 %395
  %v397 = vsel %vm203, %v341, 0.0
  %398 = vadd.xlane.f32.xlu0 %v397
  %v399 = vpop.xlane.xlu0 %398
  %v400 = vsel %vm203, %v342, 0.0
  %401 = vadd.xlane.f32.xlu0 %v400
  %v402 = vpop.xlane.xlu0 %401
  %v403 = vsel %vm203, %v343, 0.0
  %404 = vadd.xlane.f32.xlu0 %v403
  %v405 = vpop.xlane.xlu0 %404
  %v406 = vsel %vm203, %v344, 0.0
  %407 = vadd.xlane.f32.xlu0 %v406
  %v408 = vpop.xlane.xlu0 %407
  %v409 = vsel %vm203, %v345, 0.0
  %410 = vadd.xlane.f32.xlu0 %v409
  %v411 = vpop.xlane.xlu0 %410
  %v412 = vsel %vm203, %v346, 0.0
  %413 = vadd.xlane.f32.xlu0 %v412
  %v414 = vpop.xlane.xlu0 %413
  %v415 = vsel %vm203, %v347, 0.0
  %416 = vadd.xlane.f32.xlu0 %v415
  %v417 = vpop.xlane.xlu0 %416
  %v418 = vsel %vm203, %v348, 0.0
  %419 = vadd.xlane.f32.xlu0 %v418
  %v420 = vpop.xlane.xlu0 %419
  %v421 = vmul.f32 %v351, %v276
  %v422 = vmul.f32 %v354, %v276
  %v423 = vmul.f32 %v357, %v276
  %v424 = vmul.f32 %v360, %v276
  %v425 = vmul.f32 %v363, %v276
  %v426 = vmul.f32 %v366, %v276
  %v427 = vmul.f32 %v369, %v276
  %v428 = vmul.f32 %v372, %v276
  %v429 = vmul.f32 %v375, %v276
  %v430 = vmul.f32 %v378, %v276
  %v431 = vmul.f32 %v381, %v276
  %v432 = vmul.f32 %v384, %v276
  %v433 = vmul.f32 %v387, %v276
  %v434 = vmul.f32 %v390, %v276
  %v435 = vmul.f32 %v393, %v276
  %v436 = vmul.f32 %v396, %v276
  %v437 = vmul.f32 %v399, %v276
  %v438 = vmul.f32 %v402, %v276
  %v439 = vmul.f32 %v405, %v276
  %v440 = vmul.f32 %v408, %v276
  %v441 = vmul.f32 %v411, %v276
  %v442 = vmul.f32 %v414, %v276
  %v443 = vmul.f32 %v417, %v276
  %v444 = vmul.f32 %v420, %v276
  %v445 = vadd.f32 %v421, 1e-05
  %v446 = vadd.f32 %v422, 1e-05
  %v447 = vadd.f32 %v423, 1e-05
  %v448 = vadd.f32 %v424, 1e-05
  %v449 = vadd.f32 %v425, 1e-05
  %v450 = vadd.f32 %v426, 1e-05
  %v451 = vadd.f32 %v427, 1e-05
  %v452 = vadd.f32 %v428, 1e-05
  %v453 = vadd.f32 %v429, 1e-05
  %v454 = vadd.f32 %v430, 1e-05
  %v455 = vadd.f32 %v431, 1e-05
  %v456 = vadd.f32 %v432, 1e-05
  %v457 = vadd.f32 %v433, 1e-05
  %v458 = vadd.f32 %v434, 1e-05
  %v459 = vadd.f32 %v435, 1e-05
  %v460 = vadd.f32 %v436, 1e-05
  %v461 = vadd.f32 %v437, 1e-05
  %v462 = vadd.f32 %v438, 1e-05
  %v463 = vadd.f32 %v439, 1e-05
  %v464 = vadd.f32 %v440, 1e-05
  %v465 = vadd.f32 %v441, 1e-05
  %v466 = vadd.f32 %v442, 1e-05
  %v467 = vadd.f32 %v443, 1e-05
  %v468 = vadd.f32 %v444, 1e-05
  %v469 = vrsqrt.pop %v445
  %v470 = vrsqrt.pop %v446
  %v471 = vrsqrt.pop %v447
  %v472 = vrsqrt.pop %v448
  %v473 = vrsqrt.pop %v449
  %v474 = vrsqrt.pop %v450
  %v475 = vrsqrt.pop %v451
  %v476 = vrsqrt.pop %v452
  %v477 = vrsqrt.pop %v453
  %v478 = vrsqrt.pop %v454
  %v479 = vrsqrt.pop %v455
  %v480 = vrsqrt.pop %v456
  %v481 = vrsqrt.pop %v457
  %v482 = vrsqrt.pop %v458
  %v483 = vrsqrt.pop %v459
  %v484 = vrsqrt.pop %v460
  %v485 = vrsqrt.pop %v461
  %v486 = vrsqrt.pop %v462
  %v487 = vrsqrt.pop %v463
  %v488 = vrsqrt.pop %v464
  %v489 = vrsqrt.pop %v465
  %v490 = vrsqrt.pop %v466
  %v491 = vrsqrt.pop %v467
  %v492 = vrsqrt.pop %v468
  %v493 = vmul.f32 %v301, %v469
  %v494 = vmul.f32 %v302, %v470
  %v495 = vmul.f32 %v303, %v471
  %v496 = vmul.f32 %v304, %v472
  %v497 = vmul.f32 %v305, %v473
  %v498 = vmul.f32 %v306, %v474
  %v499 = vmul.f32 %v307, %v475
  %v500 = vmul.f32 %v308, %v476
  %v501 = vmul.f32 %v309, %v477
  %v502 = vmul.f32 %v310, %v478
  %v503 = vmul.f32 %v311, %v479
  %v504 = vmul.f32 %v312, %v480
  %v505 = vmul.f32 %v313, %v481
  %v506 = vmul.f32 %v314, %v482
  %v507 = vmul.f32 %v315, %v483
  %v508 = vmul.f32 %v316, %v484
  %v509 = vmul.f32 %v317, %v485
  %v510 = vmul.f32 %v318, %v486
  %v511 = vmul.f32 %v319, %v487
  %v512 = vmul.f32 %v320, %v488
  %v513 = vmul.f32 %v321, %v489
  %v514 = vmul.f32 %v322, %v490
  %v515 = vmul.f32 %v323, %v491
  %v516 = vmul.f32 %v324, %v492
  %v518 = vlaneseq
  %v519 = vshrl.u32 %v518, 7
  %v520 = vsub.s32 0, %v519
  %v521 = vrot.slane %v201, %v520
  %v523 = vmul.f32 %v493, %v521
  %v524 = vmul.f32 %v494, %v521
  %v525 = vmul.f32 %v495, %v521
  %v526 = vmul.f32 %v496, %v521
  %v527 = vmul.f32 %v497, %v521
  %v528 = vmul.f32 %v498, %v521
  %v529 = vmul.f32 %v499, %v521
  %v530 = vmul.f32 %v500, %v521
  %v531 = vmul.f32 %v501, %v521
  %v532 = vmul.f32 %v502, %v521
  %v533 = vmul.f32 %v503, %v521
  %v534 = vmul.f32 %v504, %v521
  %v535 = vmul.f32 %v505, %v521
  %v536 = vmul.f32 %v506, %v521
  %v537 = vmul.f32 %v507, %v521
  %v538 = vmul.f32 %v508, %v521
  %v539 = vmul.f32 %v509, %v521
  %v540 = vmul.f32 %v510, %v521
  %v541 = vmul.f32 %v511, %v521
  %v542 = vmul.f32 %v512, %v521
  %v543 = vmul.f32 %v513, %v521
  %v544 = vmul.f32 %v514, %v521
  %v545 = vmul.f32 %v515, %v521
  %v546 = vmul.f32 %v516, %v521
  %v548 = vlaneseq
  %v549 = vshrl.u32 %v548, 7
  %v550 = vsub.s32 0, %v549
  %v551 = vrot.slane %v202, %v550
  %v553 = vadd.f32 %v523, %v551
  %v554 = vadd.f32 %v524, %v551
  %v555 = vadd.f32 %v525, %v551
  %v556 = vadd.f32 %v526, %v551
  %v557 = vadd.f32 %v527, %v551
  %v558 = vadd.f32 %v528, %v551
  %v559 = vadd.f32 %v529, %v551
  %v560 = vadd.f32 %v530, %v551
  %v561 = vadd.f32 %v531, %v551
  %v562 = vadd.f32 %v532, %v551
  %v563 = vadd.f32 %v533, %v551
  %v564 = vadd.f32 %v534, %v551
  %v565 = vadd.f32 %v535, %v551
  %v566 = vadd.f32 %v536, %v551
  %v567 = vadd.f32 %v537, %v551
  %v568 = vadd.f32 %v538, %v551
  %v569 = vadd.f32 %v539, %v551
  %v570 = vadd.f32 %v540, %v551
  %v571 = vadd.f32 %v541, %v551
  %v572 = vadd.f32 %v542, %v551
  %v573 = vadd.f32 %v543, %v551
  %v574 = vadd.f32 %v544, %v551
  %v575 = vadd.f32 %v545, %v551
  %v576 = vadd.f32 %v546, %v551
  %v577 = vmul.f32 %v553, %v553
  %v578 = vmul.f32 %v554, %v554
  %v579 = vmul.f32 %v555, %v555
  %v580 = vmul.f32 %v556, %v556
  %v581 = vmul.f32 %v557, %v557
  %v582 = vmul.f32 %v558, %v558
  %v583 = vmul.f32 %v559, %v559
  %v584 = vmul.f32 %v560, %v560
  %v585 = vmul.f32 %v561, %v561
  %v586 = vmul.f32 %v562, %v562
  %v587 = vmul.f32 %v563, %v563
  %v588 = vmul.f32 %v564, %v564
  %v589 = vmul.f32 %v565, %v565
  %v590 = vmul.f32 %v566, %v566
  %v591 = vmul.f32 %v567, %v567
  %v592 = vmul.f32 %v568, %v568
  %v593 = vmul.f32 %v569, %v569
  %v594 = vmul.f32 %v570, %v570
  %v595 = vmul.f32 %v571, %v571
  %v596 = vmul.f32 %v572, %v572
  %v597 = vmul.f32 %v573, %v573
  %v598 = vmul.f32 %v574, %v574
  %v599 = vmul.f32 %v575, %v575
  %v600 = vmul.f32 %v576, %v576
  %v601 = vsel %vm203, %v577, 0.0
  %602 = vadd.xlane.f32.xlu0 %v601
  %v603 = vpop.xlane.xlu0 %602
  %v604 = vsel %vm203, %v578, 0.0
  %605 = vadd.xlane.f32.xlu0 %v604
  %v606 = vpop.xlane.xlu0 %605
  %v607 = vsel %vm203, %v579, 0.0
  %608 = vadd.xlane.f32.xlu0 %v607
  %v609 = vpop.xlane.xlu0 %608
  %v610 = vsel %vm203, %v580, 0.0
  %611 = vadd.xlane.f32.xlu0 %v610
  %v612 = vpop.xlane.xlu0 %611
  %v613 = vsel %vm203, %v581, 0.0
  %614 = vadd.xlane.f32.xlu0 %v613
  %v615 = vpop.xlane.xlu0 %614
  %v616 = vsel %vm203, %v582, 0.0
  %617 = vadd.xlane.f32.xlu0 %v616
  %v618 = vpop.xlane.xlu0 %617
  %v619 = vsel %vm203, %v583, 0.0
  %620 = vadd.xlane.f32.xlu0 %v619
  %v621 = vpop.xlane.xlu0 %620
  %v622 = vsel %vm203, %v584, 0.0
  %623 = vadd.xlane.f32.xlu0 %v622
  %v624 = vpop.xlane.xlu0 %623
  %v625 = vsel %vm203, %v585, 0.0
  %626 = vadd.xlane.f32.xlu0 %v625
  %v627 = vpop.xlane.xlu0 %626
  %v628 = vsel %vm203, %v586, 0.0
  %629 = vadd.xlane.f32.xlu0 %v628
  %v630 = vpop.xlane.xlu0 %629
  %v631 = vsel %vm203, %v587, 0.0
  %632 = vadd.xlane.f32.xlu0 %v631
  %v633 = vpop.xlane.xlu0 %632
  %v634 = vsel %vm203, %v588, 0.0
  %635 = vadd.xlane.f32.xlu0 %v634
  %v636 = vpop.xlane.xlu0 %635
  %v637 = vsel %vm203, %v589, 0.0
  %638 = vadd.xlane.f32.xlu0 %v637
  %v639 = vpop.xlane.xlu0 %638
  %v640 = vsel %vm203, %v590, 0.0
  %641 = vadd.xlane.f32.xlu0 %v640
  %v642 = vpop.xlane.xlu0 %641
  %v643 = vsel %vm203, %v591, 0.0
  %644 = vadd.xlane.f32.xlu0 %v643
  %v645 = vpop.xlane.xlu0 %644
  %v646 = vsel %vm203, %v592, 0.0
  %647 = vadd.xlane.f32.xlu0 %v646
  %v648 = vpop.xlane.xlu0 %647
  %v649 = vsel %vm203, %v593, 0.0
  %650 = vadd.xlane.f32.xlu0 %v649
  %v651 = vpop.xlane.xlu0 %650
  %v652 = vsel %vm203, %v594, 0.0
  %653 = vadd.xlane.f32.xlu0 %v652
  %v654 = vpop.xlane.xlu0 %653
  %v655 = vsel %vm203, %v595, 0.0
  %656 = vadd.xlane.f32.xlu0 %v655
  %v657 = vpop.xlane.xlu0 %656
  %v658 = vsel %vm203, %v596, 0.0
  %659 = vadd.xlane.f32.xlu0 %v658
  %v660 = vpop.xlane.xlu0 %659
  %v661 = vsel %vm203, %v597, 0.0
  %662 = vadd.xlane.f32.xlu0 %v661
  %v663 = vpop.xlane.xlu0 %662
  %v664 = vsel %vm203, %v598, 0.0
  %665 = vadd.xlane.f32.xlu0 %v664
  %v666 = vpop.xlane.xlu0 %665
  %v667 = vsel %vm203, %v599, 0.0
  %668 = vadd.xlane.f32.xlu0 %v667
  %v669 = vpop.xlane.xlu0 %668
  %v670 = vsel %vm203, %v600, 0.0
  %671 = vadd.xlane.f32.xlu0 %v670
  %v672 = vpop.xlane.xlu0 %671
  %v673 = vrsqrt.pop %v603
  %v674 = vmul.f32 %v603, %v673
  %vm675 = vcmp.eq.f32.partialorder %v603, inf
  %v676 = vsel %vm675, %v603, %v674
  %vm677 = vcmp.eq.f32.partialorder %v603, 0.0
  %v678 = vand.u32 %v603, 2147483648
  %v679 = vsel %vm677, %v678, %v676
  %v680 = vrsqrt.pop %v606
  %v681 = vmul.f32 %v606, %v680
  %vm682 = vcmp.eq.f32.partialorder %v606, inf
  %v683 = vsel %vm682, %v606, %v681
  %vm684 = vcmp.eq.f32.partialorder %v606, 0.0
  %v685 = vand.u32 %v606, 2147483648
  %v686 = vsel %vm684, %v685, %v683
  %v687 = vrsqrt.pop %v609
  %v688 = vmul.f32 %v609, %v687
  %vm689 = vcmp.eq.f32.partialorder %v609, inf
  %v690 = vsel %vm689, %v609, %v688
  %vm691 = vcmp.eq.f32.partialorder %v609, 0.0
  %v692 = vand.u32 %v609, 2147483648
  %v693 = vsel %vm691, %v692, %v690
  %v694 = vrsqrt.pop %v612
  %v695 = vmul.f32 %v612, %v694
  %vm696 = vcmp.eq.f32.partialorder %v612, inf
  %v697 = vsel %vm696, %v612, %v695
  %vm698 = vcmp.eq.f32.partialorder %v612, 0.0
  %v699 = vand.u32 %v612, 2147483648
  %v700 = vsel %vm698, %v699, %v697
  %v701 = vrsqrt.pop %v615
  %v702 = vmul.f32 %v615, %v701
  %vm703 = vcmp.eq.f32.partialorder %v615, inf
  %v704 = vsel %vm703, %v615, %v702
  %vm705 = vcmp.eq.f32.partialorder %v615, 0.0
  %v706 = vand.u32 %v615, 2147483648
  %v707 = vsel %vm705, %v706, %v704
  %v708 = vrsqrt.pop %v618
  %v709 = vmul.f32 %v618, %v708
  %vm710 = vcmp.eq.f32.partialorder %v618, inf
  %v711 = vsel %vm710, %v618, %v709
  %vm712 = vcmp.eq.f32.partialorder %v618, 0.0
  %v713 = vand.u32 %v618, 2147483648
  %v714 = vsel %vm712, %v713, %v711
  %v715 = vrsqrt.pop %v621
  %v716 = vmul.f32 %v621, %v715
  %vm717 = vcmp.eq.f32.partialorder %v621, inf
  %v718 = vsel %vm717, %v621, %v716
  %vm719 = vcmp.eq.f32.partialorder %v621, 0.0
  %v720 = vand.u32 %v621, 2147483648
  %v721 = vsel %vm719, %v720, %v718
  %v722 = vrsqrt.pop %v624
  %v723 = vmul.f32 %v624, %v722
  %vm724 = vcmp.eq.f32.partialorder %v624, inf
  %v725 = vsel %vm724, %v624, %v723
  %vm726 = vcmp.eq.f32.partialorder %v624, 0.0
  %v727 = vand.u32 %v624, 2147483648
  %v728 = vsel %vm726, %v727, %v725
  %v729 = vrsqrt.pop %v627
  %v730 = vmul.f32 %v627, %v729
  %vm731 = vcmp.eq.f32.partialorder %v627, inf
  %v732 = vsel %vm731, %v627, %v730
  %vm733 = vcmp.eq.f32.partialorder %v627, 0.0
  %v734 = vand.u32 %v627, 2147483648
  %v735 = vsel %vm733, %v734, %v732
  %v736 = vrsqrt.pop %v630
  %v737 = vmul.f32 %v630, %v736
  %vm738 = vcmp.eq.f32.partialorder %v630, inf
  %v739 = vsel %vm738, %v630, %v737
  %vm740 = vcmp.eq.f32.partialorder %v630, 0.0
  %v741 = vand.u32 %v630, 2147483648
  %v742 = vsel %vm740, %v741, %v739
  %v743 = vrsqrt.pop %v633
  %v744 = vmul.f32 %v633, %v743
  %vm745 = vcmp.eq.f32.partialorder %v633, inf
  %v746 = vsel %vm745, %v633, %v744
  %vm747 = vcmp.eq.f32.partialorder %v633, 0.0
  %v748 = vand.u32 %v633, 2147483648
  %v749 = vsel %vm747, %v748, %v746
  %v750 = vrsqrt.pop %v636
  %v751 = vmul.f32 %v636, %v750
  %vm752 = vcmp.eq.f32.partialorder %v636, inf
  %v753 = vsel %vm752, %v636, %v751
  %vm754 = vcmp.eq.f32.partialorder %v636, 0.0
  %v755 = vand.u32 %v636, 2147483648
  %v756 = vsel %vm754, %v755, %v753
  %v757 = vrsqrt.pop %v639
  %v758 = vmul.f32 %v639, %v757
  %vm759 = vcmp.eq.f32.partialorder %v639, inf
  %v760 = vsel %vm759, %v639, %v758
  %vm761 = vcmp.eq.f32.partialorder %v639, 0.0
  %v762 = vand.u32 %v639, 2147483648
  %v763 = vsel %vm761, %v762, %v760
  %v764 = vrsqrt.pop %v642
  %v765 = vmul.f32 %v642, %v764
  %vm766 = vcmp.eq.f32.partialorder %v642, inf
  %v767 = vsel %vm766, %v642, %v765
  %vm768 = vcmp.eq.f32.partialorder %v642, 0.0
  %v769 = vand.u32 %v642, 2147483648
  %v770 = vsel %vm768, %v769, %v767
  %v771 = vrsqrt.pop %v645
  %v772 = vmul.f32 %v645, %v771
  %vm773 = vcmp.eq.f32.partialorder %v645, inf
  %v774 = vsel %vm773, %v645, %v772
  %vm775 = vcmp.eq.f32.partialorder %v645, 0.0
  %v776 = vand.u32 %v645, 2147483648
  %v777 = vsel %vm775, %v776, %v774
  %v778 = vrsqrt.pop %v648
  %v779 = vmul.f32 %v648, %v778
  %vm780 = vcmp.eq.f32.partialorder %v648, inf
  %v781 = vsel %vm780, %v648, %v779
  %vm782 = vcmp.eq.f32.partialorder %v648, 0.0
  %v783 = vand.u32 %v648, 2147483648
  %v784 = vsel %vm782, %v783, %v781
  %v785 = vrsqrt.pop %v651
  %v786 = vmul.f32 %v651, %v785
  %vm787 = vcmp.eq.f32.partialorder %v651, inf
  %v788 = vsel %vm787, %v651, %v786
  %vm789 = vcmp.eq.f32.partialorder %v651, 0.0
  %v790 = vand.u32 %v651, 2147483648
  %v791 = vsel %vm789, %v790, %v788
  %v792 = vrsqrt.pop %v654
  %v793 = vmul.f32 %v654, %v792
  %vm794 = vcmp.eq.f32.partialorder %v654, inf
  %v795 = vsel %vm794, %v654, %v793
  %vm796 = vcmp.eq.f32.partialorder %v654, 0.0
  %v797 = vand.u32 %v654, 2147483648
  %v798 = vsel %vm796, %v797, %v795
  %v799 = vrsqrt.pop %v657
  %v800 = vmul.f32 %v657, %v799
  %vm801 = vcmp.eq.f32.partialorder %v657, inf
  %v802 = vsel %vm801, %v657, %v800
  %vm803 = vcmp.eq.f32.partialorder %v657, 0.0
  %v804 = vand.u32 %v657, 2147483648
  %v805 = vsel %vm803, %v804, %v802
  %v806 = vrsqrt.pop %v660
  %v807 = vmul.f32 %v660, %v806
  %vm808 = vcmp.eq.f32.partialorder %v660, inf
  %v809 = vsel %vm808, %v660, %v807
  %vm810 = vcmp.eq.f32.partialorder %v660, 0.0
  %v811 = vand.u32 %v660, 2147483648
  %v812 = vsel %vm810, %v811, %v809
  %v813 = vrsqrt.pop %v663
  %v814 = vmul.f32 %v663, %v813
  %vm815 = vcmp.eq.f32.partialorder %v663, inf
  %v816 = vsel %vm815, %v663, %v814
  %vm817 = vcmp.eq.f32.partialorder %v663, 0.0
  %v818 = vand.u32 %v663, 2147483648
  %v819 = vsel %vm817, %v818, %v816
  %v820 = vrsqrt.pop %v666
  %v821 = vmul.f32 %v666, %v820
  %vm822 = vcmp.eq.f32.partialorder %v666, inf
  %v823 = vsel %vm822, %v666, %v821
  %vm824 = vcmp.eq.f32.partialorder %v666, 0.0
  %v825 = vand.u32 %v666, 2147483648
  %v826 = vsel %vm824, %v825, %v823
  %v827 = vrsqrt.pop %v669
  %v828 = vmul.f32 %v669, %v827
  %vm829 = vcmp.eq.f32.partialorder %v669, inf
  %v830 = vsel %vm829, %v669, %v828
  %vm831 = vcmp.eq.f32.partialorder %v669, 0.0
  %v832 = vand.u32 %v669, 2147483648
  %v833 = vsel %vm831, %v832, %v830
  %v834 = vrsqrt.pop %v672
  %v835 = vmul.f32 %v672, %v834
  %vm836 = vcmp.eq.f32.partialorder %v672, inf
  %v837 = vsel %vm836, %v672, %v835
  %vm838 = vcmp.eq.f32.partialorder %v672, 0.0
  %v839 = vand.u32 %v672, 2147483648
  %v840 = vsel %vm838, %v839, %v837
  %v841 = vld [vmem:[%s2] sm:$0xf]
  %v842 = vld [vmem:[%s2 + $0x4] sm:$0xf]
  %v843 = vld [vmem:[%s2 + $0x8] sm:$0xf]
  %v844 = vld [vmem:[%s2 + $0xc] sm:$0xf]
  %v845 = vld [vmem:[%s2 + $0x10] sm:$0xf]
  %v846 = vld [vmem:[%s2 + $0x14] sm:$0xf]
  %v847 = vld [vmem:[%s2 + $0x18] sm:$0xf]
  %v848 = vld [vmem:[%s2 + $0x1c] sm:$0xf]
  %v849 = vld [vmem:[%s2 + $0x20] sm:$0xf]
  %v850 = vld [vmem:[%s2 + $0x24] sm:$0xf]
  %v851 = vld [vmem:[%s2 + $0x28] sm:$0xf]
  %v852 = vld [vmem:[%s2 + $0x2c] sm:$0xf]
  %v853 = vld [vmem:[%s2 + $0x30] sm:$0xf]
  %v854 = vld [vmem:[%s2 + $0x34] sm:$0xf]
  %v855 = vld [vmem:[%s2 + $0x38] sm:$0xf]
  %v856 = vld [vmem:[%s2 + $0x3c] sm:$0xf]
  %v857 = vld [vmem:[%s2 + $0x40] sm:$0xf]
  %v858 = vld [vmem:[%s2 + $0x44] sm:$0xf]
  %v859 = vld [vmem:[%s2 + $0x48] sm:$0xf]
  %v860 = vld [vmem:[%s2 + $0x4c] sm:$0xf]
  %v861 = vld [vmem:[%s2 + $0x50] sm:$0xf]
  %v862 = vld [vmem:[%s2 + $0x54] sm:$0xf]
  %v863 = vld [vmem:[%s2 + $0x58] sm:$0xf]
  %v864 = vld [vmem:[%s2 + $0x5c] sm:$0xf]
  %v865 = vunpack.c.l.bf16 %v841
  %v866 = vunpack.c.l.bf16 %v842
  %v867 = vunpack.c.l.bf16 %v843
  %v868 = vunpack.c.l.bf16 %v844
  %v869 = vunpack.c.l.bf16 %v845
  %v870 = vunpack.c.l.bf16 %v846
  %v871 = vunpack.c.l.bf16 %v847
  %v872 = vunpack.c.l.bf16 %v848
  %v873 = vunpack.c.l.bf16 %v849
  %v874 = vunpack.c.l.bf16 %v850
  %v875 = vunpack.c.l.bf16 %v851
  %v876 = vunpack.c.l.bf16 %v852
  %v877 = vunpack.c.l.bf16 %v853
  %v878 = vunpack.c.l.bf16 %v854
  %v879 = vunpack.c.l.bf16 %v855
  %v880 = vunpack.c.l.bf16 %v856
  %v881 = vunpack.c.l.bf16 %v857
  %v882 = vunpack.c.l.bf16 %v858
  %v883 = vunpack.c.l.bf16 %v859
  %v884 = vunpack.c.l.bf16 %v860
  %v885 = vunpack.c.l.bf16 %v861
  %v886 = vunpack.c.l.bf16 %v862
  %v887 = vunpack.c.l.bf16 %v863
  %v888 = vunpack.c.l.bf16 %v864
  %v889 = vld [vmem:[%s6] sm:$0x1]
  %v890 = vld [vmem:[%s7] sm:$0x1]
  %vm891 = vcmask 392192
  %v892 = vsel %vm891, %v865, 0.0
  %893 = vadd.xlane.f32.xlu0 %v892
  %v894 = vpop.xlane.xlu0 %893
  %v895 = vsel %vm891, %v866, 0.0
  %896 = vadd.xlane.f32.xlu0 %v895
  %v897 = vpop.xlane.xlu0 %896
  %v898 = vsel %vm891, %v867, 0.0
  %899 = vadd.xlane.f32.xlu0 %v898
  %v900 = vpop.xlane.xlu0 %899
  %v901 = vsel %vm891, %v868, 0.0
  %902 = vadd.xlane.f32.xlu0 %v901
  %v903 = vpop.xlane.xlu0 %902
  %v904 = vsel %vm891, %v869, 0.0
  %905 = vadd.xlane.f32.xlu0 %v904
  %v906 = vpop.xlane.xlu0 %905
  %v907 = vsel %vm891, %v870, 0.0
  %908 = vadd.xlane.f32.xlu0 %v907
  %v909 = vpop.xlane.xlu0 %908
  %v910 = vsel %vm891, %v871, 0.0
  %911 = vadd.xlane.f32.xlu0 %v910
  %v912 = vpop.xlane.xlu0 %911
  %v913 = vsel %vm891, %v872, 0.0
  %914 = vadd.xlane.f32.xlu0 %v913
  %v915 = vpop.xlane.xlu0 %914
  %v916 = vsel %vm891, %v873, 0.0
  %917 = vadd.xlane.f32.xlu0 %v916
  %v918 = vpop.xlane.xlu0 %917
  %v919 = vsel %vm891, %v874, 0.0
  %920 = vadd.xlane.f32.xlu0 %v919
  %v921 = vpop.xlane.xlu0 %920
  %v922 = vsel %vm891, %v875, 0.0
  %923 = vadd.xlane.f32.xlu0 %v922
  %v924 = vpop.xlane.xlu0 %923
  %v925 = vsel %vm891, %v876, 0.0
  %926 = vadd.xlane.f32.xlu0 %v925
  %v927 = vpop.xlane.xlu0 %926
  %v928 = vsel %vm891, %v877, 0.0
  %929 = vadd.xlane.f32.xlu0 %v928
  %v930 = vpop.xlane.xlu0 %929
  %v931 = vsel %vm891, %v878, 0.0
  %932 = vadd.xlane.f32.xlu0 %v931
  %v933 = vpop.xlane.xlu0 %932
  %v934 = vsel %vm891, %v879, 0.0
  %935 = vadd.xlane.f32.xlu0 %v934
  %v936 = vpop.xlane.xlu0 %935
  %v937 = vsel %vm891, %v880, 0.0
  %938 = vadd.xlane.f32.xlu0 %v937
  %v939 = vpop.xlane.xlu0 %938
  %v940 = vsel %vm891, %v881, 0.0
  %941 = vadd.xlane.f32.xlu0 %v940
  %v942 = vpop.xlane.xlu0 %941
  %v943 = vsel %vm891, %v882, 0.0
  %944 = vadd.xlane.f32.xlu0 %v943
  %v945 = vpop.xlane.xlu0 %944
  %v946 = vsel %vm891, %v883, 0.0
  %947 = vadd.xlane.f32.xlu0 %v946
  %v948 = vpop.xlane.xlu0 %947
  %v949 = vsel %vm891, %v884, 0.0
  %950 = vadd.xlane.f32.xlu0 %v949
  %v951 = vpop.xlane.xlu0 %950
  %v952 = vsel %vm891, %v885, 0.0
  %953 = vadd.xlane.f32.xlu0 %v952
  %v954 = vpop.xlane.xlu0 %953
  %v955 = vsel %vm891, %v886, 0.0
  %956 = vadd.xlane.f32.xlu0 %v955
  %v957 = vpop.xlane.xlu0 %956
  %v958 = vsel %vm891, %v887, 0.0
  %959 = vadd.xlane.f32.xlu0 %v958
  %v960 = vpop.xlane.xlu0 %959
  %v961 = vsel %vm891, %v888, 0.0
  %962 = vadd.xlane.f32.xlu0 %v961
  %v963 = vpop.xlane.xlu0 %962
  %v964 = vrcp.pop 48.0
  %v965 = vmul.f32 %v894, %v964
  %v966 = vmul.f32 %v897, %v964
  %v967 = vmul.f32 %v900, %v964
  %v968 = vmul.f32 %v903, %v964
  %v969 = vmul.f32 %v906, %v964
  %v970 = vmul.f32 %v909, %v964
  %v971 = vmul.f32 %v912, %v964
  %v972 = vmul.f32 %v915, %v964
  %v973 = vmul.f32 %v918, %v964
  %v974 = vmul.f32 %v921, %v964
  %v975 = vmul.f32 %v924, %v964
  %v976 = vmul.f32 %v927, %v964
  %v977 = vmul.f32 %v930, %v964
  %v978 = vmul.f32 %v933, %v964
  %v979 = vmul.f32 %v936, %v964
  %v980 = vmul.f32 %v939, %v964
  %v981 = vmul.f32 %v942, %v964
  %v982 = vmul.f32 %v945, %v964
  %v983 = vmul.f32 %v948, %v964
  %v984 = vmul.f32 %v951, %v964
  %v985 = vmul.f32 %v954, %v964
  %v986 = vmul.f32 %v957, %v964
  %v987 = vmul.f32 %v960, %v964
  %v988 = vmul.f32 %v963, %v964
  %v989 = vsub.f32 %v865, %v965
  %v990 = vsub.f32 %v866, %v966
  %v991 = vsub.f32 %v867, %v967
  %v992 = vsub.f32 %v868, %v968
  %v993 = vsub.f32 %v869, %v969
  %v994 = vsub.f32 %v870, %v970
  %v995 = vsub.f32 %v871, %v971
  %v996 = vsub.f32 %v872, %v972
  %v997 = vsub.f32 %v873, %v973
  %v998 = vsub.f32 %v874, %v974
  %v999 = vsub.f32 %v875, %v975
  %v1000 = vsub.f32 %v876, %v976
  %v1001 = vsub.f32 %v877, %v977
  %v1002 = vsub.f32 %v878, %v978
  %v1003 = vsub.f32 %v879, %v979
  %v1004 = vsub.f32 %v880, %v980
  %v1005 = vsub.f32 %v881, %v981
  %v1006 = vsub.f32 %v882, %v982
  %v1007 = vsub.f32 %v883, %v983
  %v1008 = vsub.f32 %v884, %v984
  %v1009 = vsub.f32 %v885, %v985
  %v1010 = vsub.f32 %v886, %v986
  %v1011 = vsub.f32 %v887, %v987
  %v1012 = vsub.f32 %v888, %v988
  %v1013 = vmul.f32 %v989, %v989
  %v1014 = vmul.f32 %v990, %v990
  %v1015 = vmul.f32 %v991, %v991
  %v1016 = vmul.f32 %v992, %v992
  %v1017 = vmul.f32 %v993, %v993
  %v1018 = vmul.f32 %v994, %v994
  %v1019 = vmul.f32 %v995, %v995
  %v1020 = vmul.f32 %v996, %v996
  %v1021 = vmul.f32 %v997, %v997
  %v1022 = vmul.f32 %v998, %v998
  %v1023 = vmul.f32 %v999, %v999
  %v1024 = vmul.f32 %v1000, %v1000
  %v1025 = vmul.f32 %v1001, %v1001
  %v1026 = vmul.f32 %v1002, %v1002
  %v1027 = vmul.f32 %v1003, %v1003
  %v1028 = vmul.f32 %v1004, %v1004
  %v1029 = vmul.f32 %v1005, %v1005
  %v1030 = vmul.f32 %v1006, %v1006
  %v1031 = vmul.f32 %v1007, %v1007
  %v1032 = vmul.f32 %v1008, %v1008
  %v1033 = vmul.f32 %v1009, %v1009
  %v1034 = vmul.f32 %v1010, %v1010
  %v1035 = vmul.f32 %v1011, %v1011
  %v1036 = vmul.f32 %v1012, %v1012
  %v1037 = vsel %vm891, %v1013, 0.0
  %1038 = vadd.xlane.f32.xlu0 %v1037
  %v1039 = vpop.xlane.xlu0 %1038
  %v1040 = vsel %vm891, %v1014, 0.0
  %1041 = vadd.xlane.f32.xlu0 %v1040
  %v1042 = vpop.xlane.xlu0 %1041
  %v1043 = vsel %vm891, %v1015, 0.0
  %1044 = vadd.xlane.f32.xlu0 %v1043
  %v1045 = vpop.xlane.xlu0 %1044
  %v1046 = vsel %vm891, %v1016, 0.0
  %1047 = vadd.xlane.f32.xlu0 %v1046
  %v1048 = vpop.xlane.xlu0 %1047
  %v1049 = vsel %vm891, %v1017, 0.0
  %1050 = vadd.xlane.f32.xlu0 %v1049
  %v1051 = vpop.xlane.xlu0 %1050
  %v1052 = vsel %vm891, %v1018, 0.0
  %1053 = vadd.xlane.f32.xlu0 %v1052
  %v1054 = vpop.xlane.xlu0 %1053
  %v1055 = vsel %vm891, %v1019, 0.0
  %1056 = vadd.xlane.f32.xlu0 %v1055
  %v1057 = vpop.xlane.xlu0 %1056
  %v1058 = vsel %vm891, %v1020, 0.0
  %1059 = vadd.xlane.f32.xlu0 %v1058
  %v1060 = vpop.xlane.xlu0 %1059
  %v1061 = vsel %vm891, %v1021, 0.0
  %1062 = vadd.xlane.f32.xlu0 %v1061
  %v1063 = vpop.xlane.xlu0 %1062
  %v1064 = vsel %vm891, %v1022, 0.0
  %1065 = vadd.xlane.f32.xlu0 %v1064
  %v1066 = vpop.xlane.xlu0 %1065
  %v1067 = vsel %vm891, %v1023, 0.0
  %1068 = vadd.xlane.f32.xlu0 %v1067
  %v1069 = vpop.xlane.xlu0 %1068
  %v1070 = vsel %vm891, %v1024, 0.0
  %1071 = vadd.xlane.f32.xlu0 %v1070
  %v1072 = vpop.xlane.xlu0 %1071
  %v1073 = vsel %vm891, %v1025, 0.0
  %1074 = vadd.xlane.f32.xlu0 %v1073
  %v1075 = vpop.xlane.xlu0 %1074
  %v1076 = vsel %vm891, %v1026, 0.0
  %1077 = vadd.xlane.f32.xlu0 %v1076
  %v1078 = vpop.xlane.xlu0 %1077
  %v1079 = vsel %vm891, %v1027, 0.0
  %1080 = vadd.xlane.f32.xlu0 %v1079
  %v1081 = vpop.xlane.xlu0 %1080
  %v1082 = vsel %vm891, %v1028, 0.0
  %1083 = vadd.xlane.f32.xlu0 %v1082
  %v1084 = vpop.xlane.xlu0 %1083
  %v1085 = vsel %vm891, %v1029, 0.0
  %1086 = vadd.xlane.f32.xlu0 %v1085
  %v1087 = vpop.xlane.xlu0 %1086
  %v1088 = vsel %vm891, %v1030, 0.0
  %1089 = vadd.xlane.f32.xlu0 %v1088
  %v1090 = vpop.xlane.xlu0 %1089
  %v1091 = vsel %vm891, %v1031, 0.0
  %1092 = vadd.xlane.f32.xlu0 %v1091
  %v1093 = vpop.xlane.xlu0 %1092
  %v1094 = vsel %vm891, %v1032, 0.0
  %1095 = vadd.xlane.f32.xlu0 %v1094
  %v1096 = vpop.xlane.xlu0 %1095
  %v1097 = vsel %vm891, %v1033, 0.0
  %1098 = vadd.xlane.f32.xlu0 %v1097
  %v1099 = vpop.xlane.xlu0 %1098
  %v1100 = vsel %vm891, %v1034, 0.0
  %1101 = vadd.xlane.f32.xlu0 %v1100
  %v1102 = vpop.xlane.xlu0 %1101
  %v1103 = vsel %vm891, %v1035, 0.0
  %1104 = vadd.xlane.f32.xlu0 %v1103
  %v1105 = vpop.xlane.xlu0 %1104
  %v1106 = vsel %vm891, %v1036, 0.0
  %1107 = vadd.xlane.f32.xlu0 %v1106
  %v1108 = vpop.xlane.xlu0 %1107
  %v1109 = vmul.f32 %v1039, %v964
  %v1110 = vmul.f32 %v1042, %v964
  %v1111 = vmul.f32 %v1045, %v964
  %v1112 = vmul.f32 %v1048, %v964
  %v1113 = vmul.f32 %v1051, %v964
  %v1114 = vmul.f32 %v1054, %v964
  %v1115 = vmul.f32 %v1057, %v964
  %v1116 = vmul.f32 %v1060, %v964
  %v1117 = vmul.f32 %v1063, %v964
  %v1118 = vmul.f32 %v1066, %v964
  %v1119 = vmul.f32 %v1069, %v964
  %v1120 = vmul.f32 %v1072, %v964
  %v1121 = vmul.f32 %v1075, %v964
  %v1122 = vmul.f32 %v1078, %v964
  %v1123 = vmul.f32 %v1081, %v964
  %v1124 = vmul.f32 %v1084, %v964
  %v1125 = vmul.f32 %v1087, %v964
  %v1126 = vmul.f32 %v1090, %v964
  %v1127 = vmul.f32 %v1093, %v964
  %v1128 = vmul.f32 %v1096, %v964
  %v1129 = vmul.f32 %v1099, %v964
  %v1130 = vmul.f32 %v1102, %v964
  %v1131 = vmul.f32 %v1105, %v964
  %v1132 = vmul.f32 %v1108, %v964
  %v1133 = vadd.f32 %v1109, 1e-05
  %v1134 = vadd.f32 %v1110, 1e-05
  %v1135 = vadd.f32 %v1111, 1e-05
  %v1136 = vadd.f32 %v1112, 1e-05
  %v1137 = vadd.f32 %v1113, 1e-05
  %v1138 = vadd.f32 %v1114, 1e-05
  %v1139 = vadd.f32 %v1115, 1e-05
  %v1140 = vadd.f32 %v1116, 1e-05
  %v1141 = vadd.f32 %v1117, 1e-05
  %v1142 = vadd.f32 %v1118, 1e-05
  %v1143 = vadd.f32 %v1119, 1e-05
  %v1144 = vadd.f32 %v1120, 1e-05
  %v1145 = vadd.f32 %v1121, 1e-05
  %v1146 = vadd.f32 %v1122, 1e-05
  %v1147 = vadd.f32 %v1123, 1e-05
  %v1148 = vadd.f32 %v1124, 1e-05
  %v1149 = vadd.f32 %v1125, 1e-05
  %v1150 = vadd.f32 %v1126, 1e-05
  %v1151 = vadd.f32 %v1127, 1e-05
  %v1152 = vadd.f32 %v1128, 1e-05
  %v1153 = vadd.f32 %v1129, 1e-05
  %v1154 = vadd.f32 %v1130, 1e-05
  %v1155 = vadd.f32 %v1131, 1e-05
  %v1156 = vadd.f32 %v1132, 1e-05
  %v1157 = vrsqrt.pop %v1133
  %v1158 = vrsqrt.pop %v1134
  %v1159 = vrsqrt.pop %v1135
  %v1160 = vrsqrt.pop %v1136
  %v1161 = vrsqrt.pop %v1137
  %v1162 = vrsqrt.pop %v1138
  %v1163 = vrsqrt.pop %v1139
  %v1164 = vrsqrt.pop %v1140
  %v1165 = vrsqrt.pop %v1141
  %v1166 = vrsqrt.pop %v1142
  %v1167 = vrsqrt.pop %v1143
  %v1168 = vrsqrt.pop %v1144
  %v1169 = vrsqrt.pop %v1145
  %v1170 = vrsqrt.pop %v1146
  %v1171 = vrsqrt.pop %v1147
  %v1172 = vrsqrt.pop %v1148
  %v1173 = vrsqrt.pop %v1149
  %v1174 = vrsqrt.pop %v1150
  %v1175 = vrsqrt.pop %v1151
  %v1176 = vrsqrt.pop %v1152
  %v1177 = vrsqrt.pop %v1153
  %v1178 = vrsqrt.pop %v1154
  %v1179 = vrsqrt.pop %v1155
  %v1180 = vrsqrt.pop %v1156
  %v1181 = vmul.f32 %v989, %v1157
  %v1182 = vmul.f32 %v990, %v1158
  %v1183 = vmul.f32 %v991, %v1159
  %v1184 = vmul.f32 %v992, %v1160
  %v1185 = vmul.f32 %v993, %v1161
  %v1186 = vmul.f32 %v994, %v1162
  %v1187 = vmul.f32 %v995, %v1163
  %v1188 = vmul.f32 %v996, %v1164
  %v1189 = vmul.f32 %v997, %v1165
  %v1190 = vmul.f32 %v998, %v1166
  %v1191 = vmul.f32 %v999, %v1167
  %v1192 = vmul.f32 %v1000, %v1168
  %v1193 = vmul.f32 %v1001, %v1169
  %v1194 = vmul.f32 %v1002, %v1170
  %v1195 = vmul.f32 %v1003, %v1171
  %v1196 = vmul.f32 %v1004, %v1172
  %v1197 = vmul.f32 %v1005, %v1173
  %v1198 = vmul.f32 %v1006, %v1174
  %v1199 = vmul.f32 %v1007, %v1175
  %v1200 = vmul.f32 %v1008, %v1176
  %v1201 = vmul.f32 %v1009, %v1177
  %v1202 = vmul.f32 %v1010, %v1178
  %v1203 = vmul.f32 %v1011, %v1179
  %v1204 = vmul.f32 %v1012, %v1180
  %v1206 = vlaneseq
  %v1207 = vshrl.u32 %v1206, 7
  %v1208 = vsub.s32 0, %v1207
  %v1209 = vrot.slane %v889, %v1208
  %v1211 = vmul.f32 %v1181, %v1209
  %v1212 = vmul.f32 %v1182, %v1209
  %v1213 = vmul.f32 %v1183, %v1209
  %v1214 = vmul.f32 %v1184, %v1209
  %v1215 = vmul.f32 %v1185, %v1209
  %v1216 = vmul.f32 %v1186, %v1209
  %v1217 = vmul.f32 %v1187, %v1209
  %v1218 = vmul.f32 %v1188, %v1209
  %v1219 = vmul.f32 %v1189, %v1209
  %v1220 = vmul.f32 %v1190, %v1209
  %v1221 = vmul.f32 %v1191, %v1209
  %v1222 = vmul.f32 %v1192, %v1209
  %v1223 = vmul.f32 %v1193, %v1209
  %v1224 = vmul.f32 %v1194, %v1209
  %v1225 = vmul.f32 %v1195, %v1209
  %v1226 = vmul.f32 %v1196, %v1209
  %v1227 = vmul.f32 %v1197, %v1209
  %v1228 = vmul.f32 %v1198, %v1209
  %v1229 = vmul.f32 %v1199, %v1209
  %v1230 = vmul.f32 %v1200, %v1209
  %v1231 = vmul.f32 %v1201, %v1209
  %v1232 = vmul.f32 %v1202, %v1209
  %v1233 = vmul.f32 %v1203, %v1209
  %v1234 = vmul.f32 %v1204, %v1209
  %v1236 = vlaneseq
  %v1237 = vshrl.u32 %v1236, 7
  %v1238 = vsub.s32 0, %v1237
  %v1239 = vrot.slane %v890, %v1238
  %v1241 = vadd.f32 %v1211, %v1239
  %v1242 = vadd.f32 %v1212, %v1239
  %v1243 = vadd.f32 %v1213, %v1239
  %v1244 = vadd.f32 %v1214, %v1239
  %v1245 = vadd.f32 %v1215, %v1239
  %v1246 = vadd.f32 %v1216, %v1239
  %v1247 = vadd.f32 %v1217, %v1239
  %v1248 = vadd.f32 %v1218, %v1239
  %v1249 = vadd.f32 %v1219, %v1239
  %v1250 = vadd.f32 %v1220, %v1239
  %v1251 = vadd.f32 %v1221, %v1239
  %v1252 = vadd.f32 %v1222, %v1239
  %v1253 = vadd.f32 %v1223, %v1239
  %v1254 = vadd.f32 %v1224, %v1239
  %v1255 = vadd.f32 %v1225, %v1239
  %v1256 = vadd.f32 %v1226, %v1239
  %v1257 = vadd.f32 %v1227, %v1239
  %v1258 = vadd.f32 %v1228, %v1239
  %v1259 = vadd.f32 %v1229, %v1239
  %v1260 = vadd.f32 %v1230, %v1239
  %v1261 = vadd.f32 %v1231, %v1239
  %v1262 = vadd.f32 %v1232, %v1239
  %v1263 = vadd.f32 %v1233, %v1239
  %v1264 = vadd.f32 %v1234, %v1239
  %v1265 = vpack.c.bf16 %v1242, %v1241
  %v1266 = vpack.c.bf16 %v1244, %v1243
  %v1267 = vpack.c.bf16 %v1246, %v1245
  %v1268 = vpack.c.bf16 %v1248, %v1247
  %v1269 = vpack.c.bf16 %v1250, %v1249
  %v1270 = vpack.c.bf16 %v1252, %v1251
  %v1271 = vpack.c.bf16 %v1254, %v1253
  %v1272 = vpack.c.bf16 %v1256, %v1255
  %v1273 = vpack.c.bf16 %v1258, %v1257
  %v1274 = vpack.c.bf16 %v1260, %v1259
  %v1275 = vpack.c.bf16 %v1262, %v1261
  %v1276 = vpack.c.bf16 %v1264, %v1263
  %v1277 = vld [vmem:[#allocation2] sm:$0xff]
  %v1278 = vld [vmem:[#allocation2 + $0x8] sm:$0xff]
  %v1279 = vld [vmem:[#allocation2 + $0x10] sm:$0xff]
  %v1280 = vld [vmem:[%s8] sm:$0x1]
  %v1282 = vlaneseq
  %v1283 = vshrl.u32 %v1282, 7
  %v1284 = vsub.s32 0, %v1283
  %v1285 = vrot.slane %v1280, %v1284
  %v1288 = vsel %vm891, %v1265, 0
  %v1291 = vsel %vm891, %v1266, 0
  %v1294 = vsel %vm891, %v1267, 0
  %v1297 = vsel %vm891, %v1268, 0
  %v1300 = vsel %vm891, %v1269, 0
  %v1303 = vsel %vm891, %v1270, 0
  %v1306 = vsel %vm891, %v1271, 0
  %v1309 = vsel %vm891, %v1272, 0
  %v1312 = vsel %vm891, %v1273, 0
  %v1315 = vsel %vm891, %v1274, 0
  %v1318 = vsel %vm891, %v1275, 0
  %v1321 = vsel %vm891, %v1276, 0
  %1323 = vmatprep.subr.bf16.mxu0 0
  %1324 = vmatpush1.bf16.msra.mxu0 %v1277
  %1325 = vmatprep.subr.bf16.mxu0 0
  %1326 = vmatpush1.bf16.msra.mxu0 %v1278
  %1327 = vmatprep.subr.bf16.mxu0 0
  %1328 = vmatpush1.bf16.msra.mxu0 %v1279
  %1329 = vmatprep.subr.bf16.mxu0 0
  %1330 = vmatpush1.bf16.msra.mxu0 0
  %1331 = vmatprep.subr.bf16.mxu0 0
  %1332 = vmatpush1.bf16.msra.mxu0 0
  %1333 = vmatprep.subr.bf16.mxu0 0
  %1334 = vmatpush1.bf16.msra.mxu0 0
  %1335 = vmatprep.subr.bf16.mxu0 0
  %1336 = vmatpush1.bf16.msra.mxu0 0
  %1337 = vmatprep.subr.bf16.mxu0 0
  %1338 = vmatpush1.bf16.msra.mxu0 0
  %1339 = vmatprep.subr.bf16.mxu0 0
  %1340 = vmatpush1.bf16.msra.mxu0 0
  %1341 = vmatprep.subr.bf16.mxu0 0
  %1342 = vmatpush1.bf16.msra.mxu0 0
  %1343 = vmatprep.subr.bf16.mxu0 0
  %1344 = vmatpush1.bf16.msra.mxu0 0
  %1345 = vmatprep.subr.bf16.mxu0 0
  %1346 = vmatpush1.bf16.msra.mxu0 0
  %1347 = vmatprep.subr.bf16.mxu0 0
  %1348 = vmatpush1.bf16.msra.mxu0 0
  %1349 = vmatprep.subr.bf16.mxu0 0
  %1350 = vmatpush1.bf16.msra.mxu0 0
  %1351 = vmatprep.subr.bf16.mxu0 0
  %1352 = vmatpush1.bf16.msra.mxu0 0
  %1353 = vmatprep.subr.bf16.mxu0 0
  %1354 = vmatpush1.bf16.msra.mxu0 0
  %1355 = vmatprep.mubr.bf16.mxu0 0
  %1356 = vmatmul.mubr.bf16.gmra.mrb[0].mxu0 %v1288
  %v1357 = vpop.f32.mrb[0].mxu0
  %v1358 = vadd.f32 %v1285, %v1357
  %v1359 = vpop.f32.mrb[0].mxu0
  %v1360 = vpop.f32.mrb[0].mxu0
  %v1361 = vadd.f32 %v1285, %v1360
  %v1362 = vpop.f32.mrb[0].mxu0
  %1363 = vmatprep.mubr.bf16.mxu0 0
  %1364 = vmatmul.mubr.bf16.gmra.mrb[0].mxu0 %v1291
  %v1365 = vpop.f32.mrb[0].mxu0
  %v1366 = vadd.f32 %v1285, %v1365
  %v1367 = vpop.f32.mrb[0].mxu0
  %v1368 = vpop.f32.mrb[0].mxu0
  %v1369 = vadd.f32 %v1285, %v1368
  %v1370 = vpop.f32.mrb[0].mxu0
  %1371 = vmatprep.mubr.bf16.mxu0 0
  %1372 = vmatmul.mubr.bf16.gmra.mrb[0].mxu0 %v1294
  %v1373 = vpop.f32.mrb[0].mxu0
  %v1374 = vadd.f32 %v1285, %v1373
  %v1375 = vpop.f32.mrb[0].mxu0
  %v1376 = vpop.f32.mrb[0].mxu0
  %v1377 = vadd.f32 %v1285, %v1376
  %v1378 = vpop.f32.mrb[0].mxu0
  %1379 = vmatprep.mubr.bf16.mxu0 0
  %1380 = vmatmul.mubr.bf16.gmra.mrb[0].mxu0 %v1297
  %v1381 = vpop.f32.mrb[0].mxu0
  %v1382 = vadd.f32 %v1285, %v1381
  %v1383 = vpop.f32.mrb[0].mxu0
  %v1384 = vpop.f32.mrb[0].mxu0
  %v1385 = vadd.f32 %v1285, %v1384
  %v1386 = vpop.f32.mrb[0].mxu0
  %1387 = vmatprep.mubr.bf16.mxu0 0
  %1388 = vmatmul.mubr.bf16.gmra.mrb[0].mxu0 %v1300
  %v1389 = vpop.f32.mrb[0].mxu0
  %v1390 = vadd.f32 %v1285, %v1389
  %v1391 = vpop.f32.mrb[0].mxu0
  %v1392 = vpop.f32.mrb[0].mxu0
  %v1393 = vadd.f32 %v1285, %v1392
  %v1394 = vpop.f32.mrb[0].mxu0
  %1395 = vmatprep.mubr.bf16.mxu0 0
  %1396 = vmatmul.mubr.bf16.gmra.mrb[0].mxu0 %v1303
  %v1397 = vpop.f32.mrb[0].mxu0
  %v1398 = vadd.f32 %v1285, %v1397
  %v1399 = vpop.f32.mrb[0].mxu0
  %v1400 = vpop.f32.mrb[0].mxu0
  %v1401 = vadd.f32 %v1285, %v1400
  %v1402 = vpop.f32.mrb[0].mxu0
  %1403 = vmatprep.mubr.bf16.mxu0 0
  %1404 = vmatmul.mubr.bf16.gmra.mrb[0].mxu0 %v1306
  %v1405 = vpop.f32.mrb[0].mxu0
  %v1406 = vadd.f32 %v1285, %v1405
  %v1407 = vpop.f32.mrb[0].mxu0
  %v1408 = vpop.f32.mrb[0].mxu0
  %v1409 = vadd.f32 %v1285, %v1408
  %v1410 = vpop.f32.mrb[0].mxu0
  %1411 = vmatprep.mubr.bf16.mxu0 0
  %1412 = vmatmul.mubr.bf16.gmra.mrb[0].mxu0 %v1309
  %v1413 = vpop.f32.mrb[0].mxu0
  %v1414 = vadd.f32 %v1285, %v1413
  %v1415 = vpop.f32.mrb[0].mxu0
  %v1416 = vpop.f32.mrb[0].mxu0
  %v1417 = vadd.f32 %v1285, %v1416
  %v1418 = vpop.f32.mrb[0].mxu0
  %1419 = vmatprep.mubr.bf16.mxu0 0
  %1420 = vmatmul.mubr.bf16.gmra.mrb[0].mxu0 %v1312
  %v1421 = vpop.f32.mrb[0].mxu0
  %v1422 = vadd.f32 %v1285, %v1421
  %v1423 = vpop.f32.mrb[0].mxu0
  %v1424 = vpop.f32.mrb[0].mxu0
  %v1425 = vadd.f32 %v1285, %v1424
  %v1426 = vpop.f32.mrb[0].mxu0
  %1427 = vmatprep.mubr.bf16.mxu0 0
  %1428 = vmatmul.mubr.bf16.gmra.mrb[0].mxu0 %v1315
  %v1429 = vpop.f32.mrb[0].mxu0
  %v1430 = vadd.f32 %v1285, %v1429
  %v1431 = vpop.f32.mrb[0].mxu0
  %v1432 = vpop.f32.mrb[0].mxu0
  %v1433 = vadd.f32 %v1285, %v1432
  %v1434 = vpop.f32.mrb[0].mxu0
  %1435 = vmatprep.mubr.bf16.mxu0 0
  %1436 = vmatmul.mubr.bf16.gmra.mrb[0].mxu0 %v1318
  %v1437 = vpop.f32.mrb[0].mxu0
  %v1438 = vadd.f32 %v1285, %v1437
  %v1439 = vpop.f32.mrb[0].mxu0
  %v1440 = vpop.f32.mrb[0].mxu0
  %v1441 = vadd.f32 %v1285, %v1440
  %v1442 = vpop.f32.mrb[0].mxu0
  %1443 = vmatprep.mubr.bf16.mxu0 0
  %1444 = vmatmul.mubr.bf16.gmra.mrb[0].mxu0 %v1321
  %v1445 = vpop.f32.mrb[0].mxu0
  %v1446 = vadd.f32 %v1285, %v1445
  %v1447 = vpop.f32.mrb[0].mxu0
  %v1448 = vpop.f32.mrb[0].mxu0
  %v1449 = vadd.f32 %v1285, %v1448
  %v1450 = vpop.f32.mrb[0].mxu0
  %1451 = vdwg.mxu0
  %v1452 = vmax.f32 %v1358, 0.0
  %v1453 = vmax.f32 %v1361, 0.0
  %v1454 = vmax.f32 %v1366, 0.0
  %v1455 = vmax.f32 %v1369, 0.0
  %v1456 = vmax.f32 %v1374, 0.0
  %v1457 = vmax.f32 %v1377, 0.0
  %v1458 = vmax.f32 %v1382, 0.0
  %v1459 = vmax.f32 %v1385, 0.0
  %v1460 = vmax.f32 %v1390, 0.0
  %v1461 = vmax.f32 %v1393, 0.0
  %v1462 = vmax.f32 %v1398, 0.0
  %v1463 = vmax.f32 %v1401, 0.0
  %v1464 = vmax.f32 %v1406, 0.0
  %v1465 = vmax.f32 %v1409, 0.0
  %v1466 = vmax.f32 %v1414, 0.0
  %v1467 = vmax.f32 %v1417, 0.0
  %v1468 = vmax.f32 %v1422, 0.0
  %v1469 = vmax.f32 %v1425, 0.0
  %v1470 = vmax.f32 %v1430, 0.0
  %v1471 = vmax.f32 %v1433, 0.0
  %v1472 = vmax.f32 %v1438, 0.0
  %v1473 = vmax.f32 %v1441, 0.0
  %v1474 = vmax.f32 %v1446, 0.0
  %v1475 = vmax.f32 %v1449, 0.0
  %v1476 = vmul.f32 %v1452, %v1452
  %v1477 = vmul.f32 %v1453, %v1453
  %v1478 = vmul.f32 %v1454, %v1454
  %v1479 = vmul.f32 %v1455, %v1455
  %v1480 = vmul.f32 %v1456, %v1456
  %v1481 = vmul.f32 %v1457, %v1457
  %v1482 = vmul.f32 %v1458, %v1458
  %v1483 = vmul.f32 %v1459, %v1459
  %v1484 = vmul.f32 %v1460, %v1460
  %v1485 = vmul.f32 %v1461, %v1461
  %v1486 = vmul.f32 %v1462, %v1462
  %v1487 = vmul.f32 %v1463, %v1463
  %v1488 = vmul.f32 %v1464, %v1464
  %v1489 = vmul.f32 %v1465, %v1465
  %v1490 = vmul.f32 %v1466, %v1466
  %v1491 = vmul.f32 %v1467, %v1467
  %v1492 = vmul.f32 %v1468, %v1468
  %v1493 = vmul.f32 %v1469, %v1469
  %v1494 = vmul.f32 %v1470, %v1470
  %v1495 = vmul.f32 %v1471, %v1471
  %v1496 = vmul.f32 %v1472, %v1472
  %v1497 = vmul.f32 %v1473, %v1473
  %v1498 = vmul.f32 %v1474, %v1474
  %v1499 = vmul.f32 %v1475, %v1475
  %v1500 = vsel %vm203, %v1476, 0.0
  %1501 = vadd.xlane.f32.xlu0 %v1500
  %v1502 = vpop.xlane.xlu0 %1501
  %v1503 = vsel %vm203, %v1477, 0.0
  %1504 = vadd.xlane.f32.xlu0 %v1503
  %v1505 = vpop.xlane.xlu0 %1504
  %v1506 = vsel %vm203, %v1478, 0.0
  %1507 = vadd.xlane.f32.xlu0 %v1506
  %v1508 = vpop.xlane.xlu0 %1507
  %v1509 = vsel %vm203, %v1479, 0.0
  %1510 = vadd.xlane.f32.xlu0 %v1509
  %v1511 = vpop.xlane.xlu0 %1510
  %v1512 = vsel %vm203, %v1480, 0.0
  %1513 = vadd.xlane.f32.xlu0 %v1512
  %v1514 = vpop.xlane.xlu0 %1513
  %v1515 = vsel %vm203, %v1481, 0.0
  %1516 = vadd.xlane.f32.xlu0 %v1515
  %v1517 = vpop.xlane.xlu0 %1516
  %v1518 = vsel %vm203, %v1482, 0.0
  %1519 = vadd.xlane.f32.xlu0 %v1518
  %v1520 = vpop.xlane.xlu0 %1519
  %v1521 = vsel %vm203, %v1483, 0.0
  %1522 = vadd.xlane.f32.xlu0 %v1521
  %v1523 = vpop.xlane.xlu0 %1522
  %v1524 = vsel %vm203, %v1484, 0.0
  %1525 = vadd.xlane.f32.xlu0 %v1524
  %v1526 = vpop.xlane.xlu0 %1525
  %v1527 = vsel %vm203, %v1485, 0.0
  %1528 = vadd.xlane.f32.xlu0 %v1527
  %v1529 = vpop.xlane.xlu0 %1528
  %v1530 = vsel %vm203, %v1486, 0.0
  %1531 = vadd.xlane.f32.xlu0 %v1530
  %v1532 = vpop.xlane.xlu0 %1531
  %v1533 = vsel %vm203, %v1487, 0.0
  %1534 = vadd.xlane.f32.xlu0 %v1533
  %v1535 = vpop.xlane.xlu0 %1534
  %v1536 = vsel %vm203, %v1488, 0.0
  %1537 = vadd.xlane.f32.xlu0 %v1536
  %v1538 = vpop.xlane.xlu0 %1537
  %v1539 = vsel %vm203, %v1489, 0.0
  %1540 = vadd.xlane.f32.xlu0 %v1539
  %v1541 = vpop.xlane.xlu0 %1540
  %v1542 = vsel %vm203, %v1490, 0.0
  %1543 = vadd.xlane.f32.xlu0 %v1542
  %v1544 = vpop.xlane.xlu0 %1543
  %v1545 = vsel %vm203, %v1491, 0.0
  %1546 = vadd.xlane.f32.xlu0 %v1545
  %v1547 = vpop.xlane.xlu0 %1546
  %v1548 = vsel %vm203, %v1492, 0.0
  %1549 = vadd.xlane.f32.xlu0 %v1548
  %v1550 = vpop.xlane.xlu0 %1549
  %v1551 = vsel %vm203, %v1493, 0.0
  %1552 = vadd.xlane.f32.xlu0 %v1551
  %v1553 = vpop.xlane.xlu0 %1552
  %v1554 = vsel %vm203, %v1494, 0.0
  %1555 = vadd.xlane.f32.xlu0 %v1554
  %v1556 = vpop.xlane.xlu0 %1555
  %v1557 = vsel %vm203, %v1495, 0.0
  %1558 = vadd.xlane.f32.xlu0 %v1557
  %v1559 = vpop.xlane.xlu0 %1558
  %v1560 = vsel %vm203, %v1496, 0.0
  %1561 = vadd.xlane.f32.xlu0 %v1560
  %v1562 = vpop.xlane.xlu0 %1561
  %v1563 = vsel %vm203, %v1497, 0.0
  %1564 = vadd.xlane.f32.xlu0 %v1563
  %v1565 = vpop.xlane.xlu0 %1564
  %v1566 = vsel %vm203, %v1498, 0.0
  %1567 = vadd.xlane.f32.xlu0 %v1566
  %v1568 = vpop.xlane.xlu0 %1567
  %v1569 = vsel %vm203, %v1499, 0.0
  %1570 = vadd.xlane.f32.xlu0 %v1569
  %v1571 = vpop.xlane.xlu0 %1570
  %v1572 = vadd.f32 %v1502, 1e-08
  %v1573 = vadd.f32 %v1505, 1e-08
  %v1574 = vadd.f32 %v1508, 1e-08
  %v1575 = vadd.f32 %v1511, 1e-08
  %v1576 = vadd.f32 %v1514, 1e-08
  %v1577 = vadd.f32 %v1517, 1e-08
  %v1578 = vadd.f32 %v1520, 1e-08
  %v1579 = vadd.f32 %v1523, 1e-08
  %v1580 = vadd.f32 %v1526, 1e-08
  %v1581 = vadd.f32 %v1529, 1e-08
  %v1582 = vadd.f32 %v1532, 1e-08
  %v1583 = vadd.f32 %v1535, 1e-08
  %v1584 = vadd.f32 %v1538, 1e-08
  %v1585 = vadd.f32 %v1541, 1e-08
  %v1586 = vadd.f32 %v1544, 1e-08
  %v1587 = vadd.f32 %v1547, 1e-08
  %v1588 = vadd.f32 %v1550, 1e-08
  %v1589 = vadd.f32 %v1553, 1e-08
  %v1590 = vadd.f32 %v1556, 1e-08
  %v1591 = vadd.f32 %v1559, 1e-08
  %v1592 = vadd.f32 %v1562, 1e-08
  %v1593 = vadd.f32 %v1565, 1e-08
  %v1594 = vadd.f32 %v1568, 1e-08
  %v1595 = vadd.f32 %v1571, 1e-08
  %v1596 = vrsqrt.pop %v1572
  %v1597 = vrsqrt.pop %v1573
  %v1598 = vrsqrt.pop %v1574
  %v1599 = vrsqrt.pop %v1575
  %v1600 = vrsqrt.pop %v1576
  %v1601 = vrsqrt.pop %v1577
  %v1602 = vrsqrt.pop %v1578
  %v1603 = vrsqrt.pop %v1579
  %v1604 = vrsqrt.pop %v1580
  %v1605 = vrsqrt.pop %v1581
  %v1606 = vrsqrt.pop %v1582
  %v1607 = vrsqrt.pop %v1583
  %v1608 = vrsqrt.pop %v1584
  %v1609 = vrsqrt.pop %v1585
  %v1610 = vrsqrt.pop %v1586
  %v1611 = vrsqrt.pop %v1587
  %v1612 = vrsqrt.pop %v1588
  %v1613 = vrsqrt.pop %v1589
  %v1614 = vrsqrt.pop %v1590
  %v1615 = vrsqrt.pop %v1591
  %v1616 = vrsqrt.pop %v1592
  %v1617 = vrsqrt.pop %v1593
  %v1618 = vrsqrt.pop %v1594
  %v1619 = vrsqrt.pop %v1595
  %s1620 = sld [smem:[#allocation5]]
  %v1621 = vmul.f32 %v679, %v1596
  %v1622 = vmul.f32 %v686, %v1597
  %v1623 = vmul.f32 %v693, %v1598
  %v1624 = vmul.f32 %v700, %v1599
  %v1625 = vmul.f32 %v707, %v1600
  %v1626 = vmul.f32 %v714, %v1601
  %v1627 = vmul.f32 %v721, %v1602
  %v1628 = vmul.f32 %v728, %v1603
  %v1629 = vmul.f32 %v735, %v1604
  %v1630 = vmul.f32 %v742, %v1605
  %v1631 = vmul.f32 %v749, %v1606
  %v1632 = vmul.f32 %v756, %v1607
  %v1633 = vmul.f32 %v763, %v1608
  %v1634 = vmul.f32 %v770, %v1609
  %v1635 = vmul.f32 %v777, %v1610
  %v1636 = vmul.f32 %v784, %v1611
  %v1637 = vmul.f32 %v791, %v1612
  %v1638 = vmul.f32 %v798, %v1613
  %v1639 = vmul.f32 %v805, %v1614
  %v1640 = vmul.f32 %v812, %v1615
  %v1641 = vmul.f32 %v819, %v1616
  %v1642 = vmul.f32 %v826, %v1617
  %v1643 = vmul.f32 %v833, %v1618
  %v1644 = vmul.f32 %v840, %v1619
  %v1645 = vmul.f32 %v1452, %v1621
  %v1646 = vmul.f32 %v1453, %v1622
  %v1647 = vmul.f32 %v1454, %v1623
  %v1648 = vmul.f32 %v1455, %v1624
  %v1649 = vmul.f32 %v1456, %v1625
  %v1650 = vmul.f32 %v1457, %v1626
  %v1651 = vmul.f32 %v1458, %v1627
  %v1652 = vmul.f32 %v1459, %v1628
  %v1653 = vmul.f32 %v1460, %v1629
  %v1654 = vmul.f32 %v1461, %v1630
  %v1655 = vmul.f32 %v1462, %v1631
  %v1656 = vmul.f32 %v1463, %v1632
  %v1657 = vmul.f32 %v1464, %v1633
  %v1658 = vmul.f32 %v1465, %v1634
  %v1659 = vmul.f32 %v1466, %v1635
  %v1660 = vmul.f32 %v1467, %v1636
  %v1661 = vmul.f32 %v1468, %v1637
  %v1662 = vmul.f32 %v1469, %v1638
  %v1663 = vmul.f32 %v1470, %v1639
  %v1664 = vmul.f32 %v1471, %v1640
  %v1665 = vmul.f32 %v1472, %v1641
  %v1666 = vmul.f32 %v1473, %v1642
  %v1667 = vmul.f32 %v1474, %v1643
  %v1668 = vmul.f32 %v1475, %v1644
  %v1669 = vstv %s1620
  %v1670 = vmul.f32 %v1669, %v1645
  %v1671 = vmul.f32 %v1669, %v1646
  %v1672 = vmul.f32 %v1669, %v1647
  %v1673 = vmul.f32 %v1669, %v1648
  %v1674 = vmul.f32 %v1669, %v1649
  %v1675 = vmul.f32 %v1669, %v1650
  %v1676 = vmul.f32 %v1669, %v1651
  %v1677 = vmul.f32 %v1669, %v1652
  %v1678 = vmul.f32 %v1669, %v1653
  %v1679 = vmul.f32 %v1669, %v1654
  %v1680 = vmul.f32 %v1669, %v1655
  %v1681 = vmul.f32 %v1669, %v1656
  %v1682 = vmul.f32 %v1669, %v1657
  %v1683 = vmul.f32 %v1669, %v1658
  %v1684 = vmul.f32 %v1669, %v1659
  %v1685 = vmul.f32 %v1669, %v1660
  %v1686 = vmul.f32 %v1669, %v1661
  %v1687 = vmul.f32 %v1669, %v1662
  %v1688 = vmul.f32 %v1669, %v1663
  %v1689 = vmul.f32 %v1669, %v1664
  %v1690 = vmul.f32 %v1669, %v1665
  %v1691 = vmul.f32 %v1669, %v1666
  %v1692 = vmul.f32 %v1669, %v1667
  %v1693 = vmul.f32 %v1669, %v1668
  %v1694 = vadd.f32 %v1670, 0.0
  %v1695 = vadd.f32 %v1671, 0.0
  %v1696 = vadd.f32 %v1672, 0.0
  %v1697 = vadd.f32 %v1673, 0.0
  %v1698 = vadd.f32 %v1674, 0.0
  %v1699 = vadd.f32 %v1675, 0.0
  %v1700 = vadd.f32 %v1676, 0.0
  %v1701 = vadd.f32 %v1677, 0.0
  %v1702 = vadd.f32 %v1678, 0.0
  %v1703 = vadd.f32 %v1679, 0.0
  %v1704 = vadd.f32 %v1680, 0.0
  %v1705 = vadd.f32 %v1681, 0.0
  %v1706 = vadd.f32 %v1682, 0.0
  %v1707 = vadd.f32 %v1683, 0.0
  %v1708 = vadd.f32 %v1684, 0.0
  %v1709 = vadd.f32 %v1685, 0.0
  %v1710 = vadd.f32 %v1686, 0.0
  %v1711 = vadd.f32 %v1687, 0.0
  %v1712 = vadd.f32 %v1688, 0.0
  %v1713 = vadd.f32 %v1689, 0.0
  %v1714 = vadd.f32 %v1690, 0.0
  %v1715 = vadd.f32 %v1691, 0.0
  %v1716 = vadd.f32 %v1692, 0.0
  %v1717 = vadd.f32 %v1693, 0.0
  %s1718 = scalar_lea.vmem %s2, 96
  %v1719 = vld [vmem:[%s1718] sm:$0xf]
  %v1720 = vld [vmem:[%s1718 + $0x4] sm:$0xf]
  %v1721 = vld [vmem:[%s1718 + $0x8] sm:$0xf]
  %v1722 = vld [vmem:[%s1718 + $0xc] sm:$0xf]
  %v1723 = vld [vmem:[%s1718 + $0x10] sm:$0xf]
  %v1724 = vld [vmem:[%s1718 + $0x14] sm:$0xf]
  %v1725 = vld [vmem:[%s1718 + $0x18] sm:$0xf]
  %v1726 = vld [vmem:[%s1718 + $0x1c] sm:$0xf]
  %v1727 = vld [vmem:[%s1718 + $0x20] sm:$0xf]
  %v1728 = vld [vmem:[%s1718 + $0x24] sm:$0xf]
  %v1729 = vld [vmem:[%s1718 + $0x28] sm:$0xf]
  %v1730 = vld [vmem:[%s1718 + $0x2c] sm:$0xf]
  %v1731 = vld [vmem:[%s1718 + $0x30] sm:$0xf]
  %v1732 = vld [vmem:[%s1718 + $0x34] sm:$0xf]
  %v1733 = vld [vmem:[%s1718 + $0x38] sm:$0xf]
  %v1734 = vld [vmem:[%s1718 + $0x3c] sm:$0xf]
  %v1735 = vld [vmem:[%s1718 + $0x40] sm:$0xf]
  %v1736 = vld [vmem:[%s1718 + $0x44] sm:$0xf]
  %v1737 = vld [vmem:[%s1718 + $0x48] sm:$0xf]
  %v1738 = vld [vmem:[%s1718 + $0x4c] sm:$0xf]
  %v1739 = vld [vmem:[%s1718 + $0x50] sm:$0xf]
  %v1740 = vld [vmem:[%s1718 + $0x54] sm:$0xf]
  %v1741 = vld [vmem:[%s1718 + $0x58] sm:$0xf]
  %v1742 = vld [vmem:[%s1718 + $0x5c] sm:$0xf]
  %v1743 = vunpack.c.l.bf16 %v1719
  %v1744 = vunpack.c.l.bf16 %v1720
  %v1745 = vunpack.c.l.bf16 %v1721
  %v1746 = vunpack.c.l.bf16 %v1722
  %v1747 = vunpack.c.l.bf16 %v1723
  %v1748 = vunpack.c.l.bf16 %v1724
  %v1749 = vunpack.c.l.bf16 %v1725
  %v1750 = vunpack.c.l.bf16 %v1726
  %v1751 = vunpack.c.l.bf16 %v1727
  %v1752 = vunpack.c.l.bf16 %v1728
  %v1753 = vunpack.c.l.bf16 %v1729
  %v1754 = vunpack.c.l.bf16 %v1730
  %v1755 = vunpack.c.l.bf16 %v1731
  %v1756 = vunpack.c.l.bf16 %v1732
  %v1757 = vunpack.c.l.bf16 %v1733
  %v1758 = vunpack.c.l.bf16 %v1734
  %v1759 = vunpack.c.l.bf16 %v1735
  %v1760 = vunpack.c.l.bf16 %v1736
  %v1761 = vunpack.c.l.bf16 %v1737
  %v1762 = vunpack.c.l.bf16 %v1738
  %v1763 = vunpack.c.l.bf16 %v1739
  %v1764 = vunpack.c.l.bf16 %v1740
  %v1765 = vunpack.c.l.bf16 %v1741
  %v1766 = vunpack.c.l.bf16 %v1742
  %s1767 = scalar_lea.vmem %s6, 1
  %v1768 = vld [vmem:[%s1767] sm:$0x1]
  %s1769 = scalar_lea.vmem %s7, 1
  %v1770 = vld [vmem:[%s1769] sm:$0x1]
  %v1771 = vsel %vm891, %v1743, 0.0
  %1772 = vadd.xlane.f32.xlu0 %v1771
  %v1773 = vpop.xlane.xlu0 %1772
  %v1774 = vsel %vm891, %v1744, 0.0
  %1775 = vadd.xlane.f32.xlu0 %v1774
  %v1776 = vpop.xlane.xlu0 %1775
  %v1777 = vsel %vm891, %v1745, 0.0
  %1778 = vadd.xlane.f32.xlu0 %v1777
  %v1779 = vpop.xlane.xlu0 %1778
  %v1780 = vsel %vm891, %v1746, 0.0
  %1781 = vadd.xlane.f32.xlu0 %v1780
  %v1782 = vpop.xlane.xlu0 %1781
  %v1783 = vsel %vm891, %v1747, 0.0
  %1784 = vadd.xlane.f32.xlu0 %v1783
  %v1785 = vpop.xlane.xlu0 %1784
  %v1786 = vsel %vm891, %v1748, 0.0
  %1787 = vadd.xlane.f32.xlu0 %v1786
  %v1788 = vpop.xlane.xlu0 %1787
  %v1789 = vsel %vm891, %v1749, 0.0
  %1790 = vadd.xlane.f32.xlu0 %v1789
  %v1791 = vpop.xlane.xlu0 %1790
  %v1792 = vsel %vm891, %v1750, 0.0
  %1793 = vadd.xlane.f32.xlu0 %v1792
  %v1794 = vpop.xlane.xlu0 %1793
  %v1795 = vsel %vm891, %v1751, 0.0
  %1796 = vadd.xlane.f32.xlu0 %v1795
  %v1797 = vpop.xlane.xlu0 %1796
  %v1798 = vsel %vm891, %v1752, 0.0
  %1799 = vadd.xlane.f32.xlu0 %v1798
  %v1800 = vpop.xlane.xlu0 %1799
  %v1801 = vsel %vm891, %v1753, 0.0
  %1802 = vadd.xlane.f32.xlu0 %v1801
  %v1803 = vpop.xlane.xlu0 %1802
  %v1804 = vsel %vm891, %v1754, 0.0
  %1805 = vadd.xlane.f32.xlu0 %v1804
  %v1806 = vpop.xlane.xlu0 %1805
  %v1807 = vsel %vm891, %v1755, 0.0
  %1808 = vadd.xlane.f32.xlu0 %v1807
  %v1809 = vpop.xlane.xlu0 %1808
  %v1810 = vsel %vm891, %v1756, 0.0
  %1811 = vadd.xlane.f32.xlu0 %v1810
  %v1812 = vpop.xlane.xlu0 %1811
  %v1813 = vsel %vm891, %v1757, 0.0
  %1814 = vadd.xlane.f32.xlu0 %v1813
  %v1815 = vpop.xlane.xlu0 %1814
  %v1816 = vsel %vm891, %v1758, 0.0
  %1817 = vadd.xlane.f32.xlu0 %v1816
  %v1818 = vpop.xlane.xlu0 %1817
  %v1819 = vsel %vm891, %v1759, 0.0
  %1820 = vadd.xlane.f32.xlu0 %v1819
  %v1821 = vpop.xlane.xlu0 %1820
  %v1822 = vsel %vm891, %v1760, 0.0
  %1823 = vadd.xlane.f32.xlu0 %v1822
  %v1824 = vpop.xlane.xlu0 %1823
  %v1825 = vsel %vm891, %v1761, 0.0
  %1826 = vadd.xlane.f32.xlu0 %v1825
  %v1827 = vpop.xlane.xlu0 %1826
  %v1828 = vsel %vm891, %v1762, 0.0
  %1829 = vadd.xlane.f32.xlu0 %v1828
  %v1830 = vpop.xlane.xlu0 %1829
  %v1831 = vsel %vm891, %v1763, 0.0
  %1832 = vadd.xlane.f32.xlu0 %v1831
  %v1833 = vpop.xlane.xlu0 %1832
  %v1834 = vsel %vm891, %v1764, 0.0
  %1835 = vadd.xlane.f32.xlu0 %v1834
  %v1836 = vpop.xlane.xlu0 %1835
  %v1837 = vsel %vm891, %v1765, 0.0
  %1838 = vadd.xlane.f32.xlu0 %v1837
  %v1839 = vpop.xlane.xlu0 %1838
  %v1840 = vsel %vm891, %v1766, 0.0
  %1841 = vadd.xlane.f32.xlu0 %v1840
  %v1842 = vpop.xlane.xlu0 %1841
  %v1843 = vmul.f32 %v1773, %v964
  %v1844 = vmul.f32 %v1776, %v964
  %v1845 = vmul.f32 %v1779, %v964
  %v1846 = vmul.f32 %v1782, %v964
  %v1847 = vmul.f32 %v1785, %v964
  %v1848 = vmul.f32 %v1788, %v964
  %v1849 = vmul.f32 %v1791, %v964
  %v1850 = vmul.f32 %v1794, %v964
  %v1851 = vmul.f32 %v1797, %v964
  %v1852 = vmul.f32 %v1800, %v964
  %v1853 = vmul.f32 %v1803, %v964
  %v1854 = vmul.f32 %v1806, %v964
  %v1855 = vmul.f32 %v1809, %v964
  %v1856 = vmul.f32 %v1812, %v964
  %v1857 = vmul.f32 %v1815, %v964
  %v1858 = vmul.f32 %v1818, %v964
  %v1859 = vmul.f32 %v1821, %v964
  %v1860 = vmul.f32 %v1824, %v964
  %v1861 = vmul.f32 %v1827, %v964
  %v1862 = vmul.f32 %v1830, %v964
  %v1863 = vmul.f32 %v1833, %v964
  %v1864 = vmul.f32 %v1836, %v964
  %v1865 = vmul.f32 %v1839, %v964
  %v1866 = vmul.f32 %v1842, %v964
  %v1867 = vsub.f32 %v1743, %v1843
  %v1868 = vsub.f32 %v1744, %v1844
  %v1869 = vsub.f32 %v1745, %v1845
  %v1870 = vsub.f32 %v1746, %v1846
  %v1871 = vsub.f32 %v1747, %v1847
  %v1872 = vsub.f32 %v1748, %v1848
  %v1873 = vsub.f32 %v1749, %v1849
  %v1874 = vsub.f32 %v1750, %v1850
  %v1875 = vsub.f32 %v1751, %v1851
  %v1876 = vsub.f32 %v1752, %v1852
  %v1877 = vsub.f32 %v1753, %v1853
  %v1878 = vsub.f32 %v1754, %v1854
  %v1879 = vsub.f32 %v1755, %v1855
  %v1880 = vsub.f32 %v1756, %v1856
  %v1881 = vsub.f32 %v1757, %v1857
  %v1882 = vsub.f32 %v1758, %v1858
  %v1883 = vsub.f32 %v1759, %v1859
  %v1884 = vsub.f32 %v1760, %v1860
  %v1885 = vsub.f32 %v1761, %v1861
  %v1886 = vsub.f32 %v1762, %v1862
  %v1887 = vsub.f32 %v1763, %v1863
  %v1888 = vsub.f32 %v1764, %v1864
  %v1889 = vsub.f32 %v1765, %v1865
  %v1890 = vsub.f32 %v1766, %v1866
  %v1891 = vmul.f32 %v1867, %v1867
  %v1892 = vmul.f32 %v1868, %v1868
  %v1893 = vmul.f32 %v1869, %v1869
  %v1894 = vmul.f32 %v1870, %v1870
  %v1895 = vmul.f32 %v1871, %v1871
  %v1896 = vmul.f32 %v1872, %v1872
  %v1897 = vmul.f32 %v1873, %v1873
  %v1898 = vmul.f32 %v1874, %v1874
  %v1899 = vmul.f32 %v1875, %v1875
  %v1900 = vmul.f32 %v1876, %v1876
  %v1901 = vmul.f32 %v1877, %v1877
  %v1902 = vmul.f32 %v1878, %v1878
  %v1903 = vmul.f32 %v1879, %v1879
  %v1904 = vmul.f32 %v1880, %v1880
  %v1905 = vmul.f32 %v1881, %v1881
  %v1906 = vmul.f32 %v1882, %v1882
  %v1907 = vmul.f32 %v1883, %v1883
  %v1908 = vmul.f32 %v1884, %v1884
  %v1909 = vmul.f32 %v1885, %v1885
  %v1910 = vmul.f32 %v1886, %v1886
  %v1911 = vmul.f32 %v1887, %v1887
  %v1912 = vmul.f32 %v1888, %v1888
  %v1913 = vmul.f32 %v1889, %v1889
  %v1914 = vmul.f32 %v1890, %v1890
  %v1915 = vsel %vm891, %v1891, 0.0
  %1916 = vadd.xlane.f32.xlu0 %v1915
  %v1917 = vpop.xlane.xlu0 %1916
  %v1918 = vsel %vm891, %v1892, 0.0
  %1919 = vadd.xlane.f32.xlu0 %v1918
  %v1920 = vpop.xlane.xlu0 %1919
  %v1921 = vsel %vm891, %v1893, 0.0
  %1922 = vadd.xlane.f32.xlu0 %v1921
  %v1923 = vpop.xlane.xlu0 %1922
  %v1924 = vsel %vm891, %v1894, 0.0
  %1925 = vadd.xlane.f32.xlu0 %v1924
  %v1926 = vpop.xlane.xlu0 %1925
  %v1927 = vsel %vm891, %v1895, 0.0
  %1928 = vadd.xlane.f32.xlu0 %v1927
  %v1929 = vpop.xlane.xlu0 %1928
  %v1930 = vsel %vm891, %v1896, 0.0
  %1931 = vadd.xlane.f32.xlu0 %v1930
  %v1932 = vpop.xlane.xlu0 %1931
  %v1933 = vsel %vm891, %v1897, 0.0
  %1934 = vadd.xlane.f32.xlu0 %v1933
  %v1935 = vpop.xlane.xlu0 %1934
  %v1936 = vsel %vm891, %v1898, 0.0
  %1937 = vadd.xlane.f32.xlu0 %v1936
  %v1938 = vpop.xlane.xlu0 %1937
  %v1939 = vsel %vm891, %v1899, 0.0
  %1940 = vadd.xlane.f32.xlu0 %v1939
  %v1941 = vpop.xlane.xlu0 %1940
  %v1942 = vsel %vm891, %v1900, 0.0
  %1943 = vadd.xlane.f32.xlu0 %v1942
  %v1944 = vpop.xlane.xlu0 %1943
  %v1945 = vsel %vm891, %v1901, 0.0
  %1946 = vadd.xlane.f32.xlu0 %v1945
  %v1947 = vpop.xlane.xlu0 %1946
  %v1948 = vsel %vm891, %v1902, 0.0
  %1949 = vadd.xlane.f32.xlu0 %v1948
  %v1950 = vpop.xlane.xlu0 %1949
  %v1951 = vsel %vm891, %v1903, 0.0
  %1952 = vadd.xlane.f32.xlu0 %v1951
  %v1953 = vpop.xlane.xlu0 %1952
  %v1954 = vsel %vm891, %v1904, 0.0
  %1955 = vadd.xlane.f32.xlu0 %v1954
  %v1956 = vpop.xlane.xlu0 %1955
  %v1957 = vsel %vm891, %v1905, 0.0
  %1958 = vadd.xlane.f32.xlu0 %v1957
  %v1959 = vpop.xlane.xlu0 %1958
  %v1960 = vsel %vm891, %v1906, 0.0
  %1961 = vadd.xlane.f32.xlu0 %v1960
  %v1962 = vpop.xlane.xlu0 %1961
  %v1963 = vsel %vm891, %v1907, 0.0
  %1964 = vadd.xlane.f32.xlu0 %v1963
  %v1965 = vpop.xlane.xlu0 %1964
  %v1966 = vsel %vm891, %v1908, 0.0
  %1967 = vadd.xlane.f32.xlu0 %v1966
  %v1968 = vpop.xlane.xlu0 %1967
  %v1969 = vsel %vm891, %v1909, 0.0
  %1970 = vadd.xlane.f32.xlu0 %v1969
  %v1971 = vpop.xlane.xlu0 %1970
  %v1972 = vsel %vm891, %v1910, 0.0
  %1973 = vadd.xlane.f32.xlu0 %v1972
  %v1974 = vpop.xlane.xlu0 %1973
  %v1975 = vsel %vm891, %v1911, 0.0
  %1976 = vadd.xlane.f32.xlu0 %v1975
  %v1977 = vpop.xlane.xlu0 %1976
  %v1978 = vsel %vm891, %v1912, 0.0
  %1979 = vadd.xlane.f32.xlu0 %v1978
  %v1980 = vpop.xlane.xlu0 %1979
  %v1981 = vsel %vm891, %v1913, 0.0
  %1982 = vadd.xlane.f32.xlu0 %v1981
  %v1983 = vpop.xlane.xlu0 %1982
  %v1984 = vsel %vm891, %v1914, 0.0
  %1985 = vadd.xlane.f32.xlu0 %v1984
  %v1986 = vpop.xlane.xlu0 %1985
  %v1987 = vmul.f32 %v1917, %v964
  %v1988 = vmul.f32 %v1920, %v964
  %v1989 = vmul.f32 %v1923, %v964
  %v1990 = vmul.f32 %v1926, %v964
  %v1991 = vmul.f32 %v1929, %v964
  %v1992 = vmul.f32 %v1932, %v964
  %v1993 = vmul.f32 %v1935, %v964
  %v1994 = vmul.f32 %v1938, %v964
  %v1995 = vmul.f32 %v1941, %v964
  %v1996 = vmul.f32 %v1944, %v964
  %v1997 = vmul.f32 %v1947, %v964
  %v1998 = vmul.f32 %v1950, %v964
  %v1999 = vmul.f32 %v1953, %v964
  %v2000 = vmul.f32 %v1956, %v964
  %v2001 = vmul.f32 %v1959, %v964
  %v2002 = vmul.f32 %v1962, %v964
  %v2003 = vmul.f32 %v1965, %v964
  %v2004 = vmul.f32 %v1968, %v964
  %v2005 = vmul.f32 %v1971, %v964
  %v2006 = vmul.f32 %v1974, %v964
  %v2007 = vmul.f32 %v1977, %v964
  %v2008 = vmul.f32 %v1980, %v964
  %v2009 = vmul.f32 %v1983, %v964
  %v2010 = vmul.f32 %v1986, %v964
  %v2011 = vadd.f32 %v1987, 1e-05
  %v2012 = vadd.f32 %v1988, 1e-05
  %v2013 = vadd.f32 %v1989, 1e-05
  %v2014 = vadd.f32 %v1990, 1e-05
  %v2015 = vadd.f32 %v1991, 1e-05
  %v2016 = vadd.f32 %v1992, 1e-05
  %v2017 = vadd.f32 %v1993, 1e-05
  %v2018 = vadd.f32 %v1994, 1e-05
  %v2019 = vadd.f32 %v1995, 1e-05
  %v2020 = vadd.f32 %v1996, 1e-05
  %v2021 = vadd.f32 %v1997, 1e-05
  %v2022 = vadd.f32 %v1998, 1e-05
  %v2023 = vadd.f32 %v1999, 1e-05
  %v2024 = vadd.f32 %v2000, 1e-05
  %v2025 = vadd.f32 %v2001, 1e-05
  %v2026 = vadd.f32 %v2002, 1e-05
  %v2027 = vadd.f32 %v2003, 1e-05
  %v2028 = vadd.f32 %v2004, 1e-05
  %v2029 = vadd.f32 %v2005, 1e-05
  %v2030 = vadd.f32 %v2006, 1e-05
  %v2031 = vadd.f32 %v2007, 1e-05
  %v2032 = vadd.f32 %v2008, 1e-05
  %v2033 = vadd.f32 %v2009, 1e-05
  %v2034 = vadd.f32 %v2010, 1e-05
  %v2035 = vrsqrt.pop %v2011
  %v2036 = vrsqrt.pop %v2012
  %v2037 = vrsqrt.pop %v2013
  %v2038 = vrsqrt.pop %v2014
  %v2039 = vrsqrt.pop %v2015
  %v2040 = vrsqrt.pop %v2016
  %v2041 = vrsqrt.pop %v2017
  %v2042 = vrsqrt.pop %v2018
  %v2043 = vrsqrt.pop %v2019
  %v2044 = vrsqrt.pop %v2020
  %v2045 = vrsqrt.pop %v2021
  %v2046 = vrsqrt.pop %v2022
  %v2047 = vrsqrt.pop %v2023
  %v2048 = vrsqrt.pop %v2024
  %v2049 = vrsqrt.pop %v2025
  %v2050 = vrsqrt.pop %v2026
  %v2051 = vrsqrt.pop %v2027
  %v2052 = vrsqrt.pop %v2028
  %v2053 = vrsqrt.pop %v2029
  %v2054 = vrsqrt.pop %v2030
  %v2055 = vrsqrt.pop %v2031
  %v2056 = vrsqrt.pop %v2032
  %v2057 = vrsqrt.pop %v2033
  %v2058 = vrsqrt.pop %v2034
  %v2059 = vmul.f32 %v1867, %v2035
  %v2060 = vmul.f32 %v1868, %v2036
  %v2061 = vmul.f32 %v1869, %v2037
  %v2062 = vmul.f32 %v1870, %v2038
  %v2063 = vmul.f32 %v1871, %v2039
  %v2064 = vmul.f32 %v1872, %v2040
  %v2065 = vmul.f32 %v1873, %v2041
  %v2066 = vmul.f32 %v1874, %v2042
  %v2067 = vmul.f32 %v1875, %v2043
  %v2068 = vmul.f32 %v1876, %v2044
  %v2069 = vmul.f32 %v1877, %v2045
  %v2070 = vmul.f32 %v1878, %v2046
  %v2071 = vmul.f32 %v1879, %v2047
  %v2072 = vmul.f32 %v1880, %v2048
  %v2073 = vmul.f32 %v1881, %v2049
  %v2074 = vmul.f32 %v1882, %v2050
  %v2075 = vmul.f32 %v1883, %v2051
  %v2076 = vmul.f32 %v1884, %v2052
  %v2077 = vmul.f32 %v1885, %v2053
  %v2078 = vmul.f32 %v1886, %v2054
  %v2079 = vmul.f32 %v1887, %v2055
  %v2080 = vmul.f32 %v1888, %v2056
  %v2081 = vmul.f32 %v1889, %v2057
  %v2082 = vmul.f32 %v1890, %v2058
  %v2084 = vlaneseq
  %v2085 = vshrl.u32 %v2084, 7
  %v2086 = vsub.s32 0, %v2085
  %v2087 = vrot.slane %v1768, %v2086
  %v2089 = vmul.f32 %v2059, %v2087
  %v2090 = vmul.f32 %v2060, %v2087
  %v2091 = vmul.f32 %v2061, %v2087
  %v2092 = vmul.f32 %v2062, %v2087
  %v2093 = vmul.f32 %v2063, %v2087
  %v2094 = vmul.f32 %v2064, %v2087
  %v2095 = vmul.f32 %v2065, %v2087
  %v2096 = vmul.f32 %v2066, %v2087
  %v2097 = vmul.f32 %v2067, %v2087
  %v2098 = vmul.f32 %v2068, %v2087
  %v2099 = vmul.f32 %v2069, %v2087
  %v2100 = vmul.f32 %v2070, %v2087
  %v2101 = vmul.f32 %v2071, %v2087
  %v2102 = vmul.f32 %v2072, %v2087
  %v2103 = vmul.f32 %v2073, %v2087
  %v2104 = vmul.f32 %v2074, %v2087
  %v2105 = vmul.f32 %v2075, %v2087
  %v2106 = vmul.f32 %v2076, %v2087
  %v2107 = vmul.f32 %v2077, %v2087
  %v2108 = vmul.f32 %v2078, %v2087
  %v2109 = vmul.f32 %v2079, %v2087
  %v2110 = vmul.f32 %v2080, %v2087
  %v2111 = vmul.f32 %v2081, %v2087
  %v2112 = vmul.f32 %v2082, %v2087
  %v2114 = vlaneseq
  %v2115 = vshrl.u32 %v2114, 7
  %v2116 = vsub.s32 0, %v2115
  %v2117 = vrot.slane %v1770, %v2116
  %v2119 = vadd.f32 %v2089, %v2117
  %v2120 = vadd.f32 %v2090, %v2117
  %v2121 = vadd.f32 %v2091, %v2117
  %v2122 = vadd.f32 %v2092, %v2117
  %v2123 = vadd.f32 %v2093, %v2117
  %v2124 = vadd.f32 %v2094, %v2117
  %v2125 = vadd.f32 %v2095, %v2117
  %v2126 = vadd.f32 %v2096, %v2117
  %v2127 = vadd.f32 %v2097, %v2117
  %v2128 = vadd.f32 %v2098, %v2117
  %v2129 = vadd.f32 %v2099, %v2117
  %v2130 = vadd.f32 %v2100, %v2117
  %v2131 = vadd.f32 %v2101, %v2117
  %v2132 = vadd.f32 %v2102, %v2117
  %v2133 = vadd.f32 %v2103, %v2117
  %v2134 = vadd.f32 %v2104, %v2117
  %v2135 = vadd.f32 %v2105, %v2117
  %v2136 = vadd.f32 %v2106, %v2117
  %v2137 = vadd.f32 %v2107, %v2117
  %v2138 = vadd.f32 %v2108, %v2117
  %v2139 = vadd.f32 %v2109, %v2117
  %v2140 = vadd.f32 %v2110, %v2117
  %v2141 = vadd.f32 %v2111, %v2117
  %v2142 = vadd.f32 %v2112, %v2117
  %v2143 = vpack.c.bf16 %v2120, %v2119
  %v2144 = vpack.c.bf16 %v2122, %v2121
  %v2145 = vpack.c.bf16 %v2124, %v2123
  %v2146 = vpack.c.bf16 %v2126, %v2125
  %v2147 = vpack.c.bf16 %v2128, %v2127
  %v2148 = vpack.c.bf16 %v2130, %v2129
  %v2149 = vpack.c.bf16 %v2132, %v2131
  %v2150 = vpack.c.bf16 %v2134, %v2133
  %v2151 = vpack.c.bf16 %v2136, %v2135
  %v2152 = vpack.c.bf16 %v2138, %v2137
  %v2153 = vpack.c.bf16 %v2140, %v2139
  %v2154 = vpack.c.bf16 %v2142, %v2141
  %s2155 = scalar_lea.vmem [#allocation2], 24
  %v2156 = vld [vmem:[%s2155] sm:$0xff]
  %v2157 = vld [vmem:[%s2155 + $0x8] sm:$0xff]
  %v2158 = vld [vmem:[%s2155 + $0x10] sm:$0xff]
  %s2159 = scalar_lea.vmem %s8, 1
  %v2160 = vld [vmem:[%s2159] sm:$0x1]
  %v2162 = vlaneseq
  %v2163 = vshrl.u32 %v2162, 7
  %v2164 = vsub.s32 0, %v2163
  %v2165 = vrot.slane %v2160, %v2164
  %v2168 = vsel %vm891, %v2143, 0
  %v2171 = vsel %vm891, %v2144, 0
  %v2174 = vsel %vm891, %v2145, 0
  %v2177 = vsel %vm891, %v2146, 0
  %v2180 = vsel %vm891, %v2147, 0
  %v2183 = vsel %vm891, %v2148, 0
  %v2186 = vsel %vm891, %v2149, 0
  %v2189 = vsel %vm891, %v2150, 0
  %v2192 = vsel %vm891, %v2151, 0
  %v2195 = vsel %vm891, %v2152, 0
  %v2198 = vsel %vm891, %v2153, 0
  %v2201 = vsel %vm891, %v2154, 0
  %2203 = vmatprep.subr.bf16.mxu0 0
  %2204 = vmatpush1.bf16.msra.mxu0 %v2156
  %2205 = vmatprep.subr.bf16.mxu0 0
  %2206 = vmatpush1.bf16.msra.mxu0 %v2157
  %2207 = vmatprep.subr.bf16.mxu0 0
  %2208 = vmatpush1.bf16.msra.mxu0 %v2158
  %2209 = vmatprep.subr.bf16.mxu0 0
  %2210 = vmatpush1.bf16.msra.mxu0 0
  %2211 = vmatprep.subr.bf16.mxu0 0
  %2212 = vmatpush1.bf16.msra.mxu0 0
  %2213 = vmatprep.subr.bf16.mxu0 0
  %2214 = vmatpush1.bf16.msra.mxu0 0
  %2215 = vmatprep.subr.bf16.mxu0 0
  %2216 = vmatpush1.bf16.msra.mxu0 0
  %2217 = vmatprep.subr.bf16.mxu0 0
  %2218 = vmatpush1.bf16.msra.mxu0 0
  %2219 = vmatprep.subr.bf16.mxu0 0
  %2220 = vmatpush1.bf16.msra.mxu0 0
  %2221 = vmatprep.subr.bf16.mxu0 0
  %2222 = vmatpush1.bf16.msra.mxu0 0
  %2223 = vmatprep.subr.bf16.mxu0 0
  %2224 = vmatpush1.bf16.msra.mxu0 0
  %2225 = vmatprep.subr.bf16.mxu0 0
  %2226 = vmatpush1.bf16.msra.mxu0 0
  %2227 = vmatprep.subr.bf16.mxu0 0
  %2228 = vmatpush1.bf16.msra.mxu0 0
  %2229 = vmatprep.subr.bf16.mxu0 0
  %2230 = vmatpush1.bf16.msra.mxu0 0
  %2231 = vmatprep.subr.bf16.mxu0 0
  %2232 = vmatpush1.bf16.msra.mxu0 0
  %2233 = vmatprep.subr.bf16.mxu0 0
  %2234 = vmatpush1.bf16.msra.mxu0 0
  %2235 = vmatprep.mubr.bf16.mxu0 0
  %2236 = vmatmul.mubr.bf16.gmra.mrb[0].mxu0 %v2168
  %v2237 = vpop.f32.mrb[0].mxu0
  %v2238 = vadd.f32 %v2165, %v2237
  %v2239 = vpop.f32.mrb[0].mxu0
  %v2240 = vpop.f32.mrb[0].mxu0
  %v2241 = vadd.f32 %v2165, %v2240
  %v2242 = vpop.f32.mrb[0].mxu0
  %2243 = vmatprep.mubr.bf16.mxu0 0
  %2244 = vmatmul.mubr.bf16.gmra.mrb[0].mxu0 %v2171
  %v2245 = vpop.f32.mrb[0].mxu0
  %v2246 = vadd.f32 %v2165, %v2245
  %v2247 = vpop.f32.mrb[0].mxu0
  %v2248 = vpop.f32.mrb[0].mxu0
  %v2249 = vadd.f32 %v2165, %v2248
  %v2250 = vpop.f32.mrb[0].mxu0
  %2251 = vmatprep.mubr.bf16.mxu0 0
  %2252 = vmatmul.mubr.bf16.gmra.mrb[0].mxu0 %v2174
  %v2253 = vpop.f32.mrb[0].mxu0
  %v2254 = vadd.f32 %v2165, %v2253
  %v2255 = vpop.f32.mrb[0].mxu0
  %v2256 = vpop.f32.mrb[0].mxu0
  %v2257 = vadd.f32 %v2165, %v2256
  %v2258 = vpop.f32.mrb[0].mxu0
  %2259 = vmatprep.mubr.bf16.mxu0 0
  %2260 = vmatmul.mubr.bf16.gmra.mrb[0].mxu0 %v2177
  %v2261 = vpop.f32.mrb[0].mxu0
  %v2262 = vadd.f32 %v2165, %v2261
  %v2263 = vpop.f32.mrb[0].mxu0
  %v2264 = vpop.f32.mrb[0].mxu0
  %v2265 = vadd.f32 %v2165, %v2264
  %v2266 = vpop.f32.mrb[0].mxu0
  %2267 = vmatprep.mubr.bf16.mxu0 0
  %2268 = vmatmul.mubr.bf16.gmra.mrb[0].mxu0 %v2180
  %v2269 = vpop.f32.mrb[0].mxu0
  %v2270 = vadd.f32 %v2165, %v2269
  %v2271 = vpop.f32.mrb[0].mxu0
  %v2272 = vpop.f32.mrb[0].mxu0
  %v2273 = vadd.f32 %v2165, %v2272
  %v2274 = vpop.f32.mrb[0].mxu0
  %2275 = vmatprep.mubr.bf16.mxu0 0
  %2276 = vmatmul.mubr.bf16.gmra.mrb[0].mxu0 %v2183
  %v2277 = vpop.f32.mrb[0].mxu0
  %v2278 = vadd.f32 %v2165, %v2277
  %v2279 = vpop.f32.mrb[0].mxu0
  %v2280 = vpop.f32.mrb[0].mxu0
  %v2281 = vadd.f32 %v2165, %v2280
  %v2282 = vpop.f32.mrb[0].mxu0
  %2283 = vmatprep.mubr.bf16.mxu0 0
  %2284 = vmatmul.mubr.bf16.gmra.mrb[0].mxu0 %v2186
  %v2285 = vpop.f32.mrb[0].mxu0
  %v2286 = vadd.f32 %v2165, %v2285
  %v2287 = vpop.f32.mrb[0].mxu0
  %v2288 = vpop.f32.mrb[0].mxu0
  %v2289 = vadd.f32 %v2165, %v2288
  %v2290 = vpop.f32.mrb[0].mxu0
  %2291 = vmatprep.mubr.bf16.mxu0 0
  %2292 = vmatmul.mubr.bf16.gmra.mrb[0].mxu0 %v2189
  %v2293 = vpop.f32.mrb[0].mxu0
  %v2294 = vadd.f32 %v2165, %v2293
  %v2295 = vpop.f32.mrb[0].mxu0
  %v2296 = vpop.f32.mrb[0].mxu0
  %v2297 = vadd.f32 %v2165, %v2296
  %v2298 = vpop.f32.mrb[0].mxu0
  %2299 = vmatprep.mubr.bf16.mxu0 0
  %2300 = vmatmul.mubr.bf16.gmra.mrb[0].mxu0 %v2192
  %v2301 = vpop.f32.mrb[0].mxu0
  %v2302 = vadd.f32 %v2165, %v2301
  %v2303 = vpop.f32.mrb[0].mxu0
  %v2304 = vpop.f32.mrb[0].mxu0
  %v2305 = vadd.f32 %v2165, %v2304
  %v2306 = vpop.f32.mrb[0].mxu0
  %2307 = vmatprep.mubr.bf16.mxu0 0
  %2308 = vmatmul.mubr.bf16.gmra.mrb[0].mxu0 %v2195
  %v2309 = vpop.f32.mrb[0].mxu0
  %v2310 = vadd.f32 %v2165, %v2309
  %v2311 = vpop.f32.mrb[0].mxu0
  %v2312 = vpop.f32.mrb[0].mxu0
  %v2313 = vadd.f32 %v2165, %v2312
  %v2314 = vpop.f32.mrb[0].mxu0
  %2315 = vmatprep.mubr.bf16.mxu0 0
  %2316 = vmatmul.mubr.bf16.gmra.mrb[0].mxu0 %v2198
  %v2317 = vpop.f32.mrb[0].mxu0
  %v2318 = vadd.f32 %v2165, %v2317
  %v2319 = vpop.f32.mrb[0].mxu0
  %v2320 = vpop.f32.mrb[0].mxu0
  %v2321 = vadd.f32 %v2165, %v2320
  %v2322 = vpop.f32.mrb[0].mxu0
  %2323 = vmatprep.mubr.bf16.mxu0 0
  %2324 = vmatmul.mubr.bf16.gmra.mrb[0].mxu0 %v2201
  %v2325 = vpop.f32.mrb[0].mxu0
  %v2326 = vadd.f32 %v2165, %v2325
  %v2327 = vpop.f32.mrb[0].mxu0
  %v2328 = vpop.f32.mrb[0].mxu0
  %v2329 = vadd.f32 %v2165, %v2328
  %v2330 = vpop.f32.mrb[0].mxu0
  %2331 = vdwg.mxu0
  %v2332 = vmax.f32 %v2238, 0.0
  %v2333 = vmax.f32 %v2241, 0.0
  %v2334 = vmax.f32 %v2246, 0.0
  %v2335 = vmax.f32 %v2249, 0.0
  %v2336 = vmax.f32 %v2254, 0.0
  %v2337 = vmax.f32 %v2257, 0.0
  %v2338 = vmax.f32 %v2262, 0.0
  %v2339 = vmax.f32 %v2265, 0.0
  %v2340 = vmax.f32 %v2270, 0.0
  %v2341 = vmax.f32 %v2273, 0.0
  %v2342 = vmax.f32 %v2278, 0.0
  %v2343 = vmax.f32 %v2281, 0.0
  %v2344 = vmax.f32 %v2286, 0.0
  %v2345 = vmax.f32 %v2289, 0.0
  %v2346 = vmax.f32 %v2294, 0.0
  %v2347 = vmax.f32 %v2297, 0.0
  %v2348 = vmax.f32 %v2302, 0.0
  %v2349 = vmax.f32 %v2305, 0.0
  %v2350 = vmax.f32 %v2310, 0.0
  %v2351 = vmax.f32 %v2313, 0.0
  %v2352 = vmax.f32 %v2318, 0.0
  %v2353 = vmax.f32 %v2321, 0.0
  %v2354 = vmax.f32 %v2326, 0.0
  %v2355 = vmax.f32 %v2329, 0.0
  %v2356 = vmul.f32 %v2332, %v2332
  %v2357 = vmul.f32 %v2333, %v2333
  %v2358 = vmul.f32 %v2334, %v2334
  %v2359 = vmul.f32 %v2335, %v2335
  %v2360 = vmul.f32 %v2336, %v2336
  %v2361 = vmul.f32 %v2337, %v2337
  %v2362 = vmul.f32 %v2338, %v2338
  %v2363 = vmul.f32 %v2339, %v2339
  %v2364 = vmul.f32 %v2340, %v2340
  %v2365 = vmul.f32 %v2341, %v2341
  %v2366 = vmul.f32 %v2342, %v2342
  %v2367 = vmul.f32 %v2343, %v2343
  %v2368 = vmul.f32 %v2344, %v2344
  %v2369 = vmul.f32 %v2345, %v2345
  %v2370 = vmul.f32 %v2346, %v2346
  %v2371 = vmul.f32 %v2347, %v2347
  %v2372 = vmul.f32 %v2348, %v2348
  %v2373 = vmul.f32 %v2349, %v2349
  %v2374 = vmul.f32 %v2350, %v2350
  %v2375 = vmul.f32 %v2351, %v2351
  %v2376 = vmul.f32 %v2352, %v2352
  %v2377 = vmul.f32 %v2353, %v2353
  %v2378 = vmul.f32 %v2354, %v2354
  %v2379 = vmul.f32 %v2355, %v2355
  %v2380 = vsel %vm203, %v2356, 0.0
  %2381 = vadd.xlane.f32.xlu0 %v2380
  %v2382 = vpop.xlane.xlu0 %2381
  %v2383 = vsel %vm203, %v2357, 0.0
  %2384 = vadd.xlane.f32.xlu0 %v2383
  %v2385 = vpop.xlane.xlu0 %2384
  %v2386 = vsel %vm203, %v2358, 0.0
  %2387 = vadd.xlane.f32.xlu0 %v2386
  %v2388 = vpop.xlane.xlu0 %2387
  %v2389 = vsel %vm203, %v2359, 0.0
  %2390 = vadd.xlane.f32.xlu0 %v2389
  %v2391 = vpop.xlane.xlu0 %2390
  %v2392 = vsel %vm203, %v2360, 0.0
  %2393 = vadd.xlane.f32.xlu0 %v2392
  %v2394 = vpop.xlane.xlu0 %2393
  %v2395 = vsel %vm203, %v2361, 0.0
  %2396 = vadd.xlane.f32.xlu0 %v2395
  %v2397 = vpop.xlane.xlu0 %2396
  %v2398 = vsel %vm203, %v2362, 0.0
  %2399 = vadd.xlane.f32.xlu0 %v2398
  %v2400 = vpop.xlane.xlu0 %2399
  %v2401 = vsel %vm203, %v2363, 0.0
  %2402 = vadd.xlane.f32.xlu0 %v2401
  %v2403 = vpop.xlane.xlu0 %2402
  %v2404 = vsel %vm203, %v2364, 0.0
  %2405 = vadd.xlane.f32.xlu0 %v2404
  %v2406 = vpop.xlane.xlu0 %2405
  %v2407 = vsel %vm203, %v2365, 0.0
  %2408 = vadd.xlane.f32.xlu0 %v2407
  %v2409 = vpop.xlane.xlu0 %2408
  %v2410 = vsel %vm203, %v2366, 0.0
  %2411 = vadd.xlane.f32.xlu0 %v2410
  %v2412 = vpop.xlane.xlu0 %2411
  %v2413 = vsel %vm203, %v2367, 0.0
  %2414 = vadd.xlane.f32.xlu0 %v2413
  %v2415 = vpop.xlane.xlu0 %2414
  %v2416 = vsel %vm203, %v2368, 0.0
  %2417 = vadd.xlane.f32.xlu0 %v2416
  %v2418 = vpop.xlane.xlu0 %2417
  %v2419 = vsel %vm203, %v2369, 0.0
  %2420 = vadd.xlane.f32.xlu0 %v2419
  %v2421 = vpop.xlane.xlu0 %2420
  %v2422 = vsel %vm203, %v2370, 0.0
  %2423 = vadd.xlane.f32.xlu0 %v2422
  %v2424 = vpop.xlane.xlu0 %2423
  %v2425 = vsel %vm203, %v2371, 0.0
  %2426 = vadd.xlane.f32.xlu0 %v2425
  %v2427 = vpop.xlane.xlu0 %2426
  %v2428 = vsel %vm203, %v2372, 0.0
  %2429 = vadd.xlane.f32.xlu0 %v2428
  %v2430 = vpop.xlane.xlu0 %2429
  %v2431 = vsel %vm203, %v2373, 0.0
  %2432 = vadd.xlane.f32.xlu0 %v2431
  %v2433 = vpop.xlane.xlu0 %2432
  %v2434 = vsel %vm203, %v2374, 0.0
  %2435 = vadd.xlane.f32.xlu0 %v2434
  %v2436 = vpop.xlane.xlu0 %2435
  %v2437 = vsel %vm203, %v2375, 0.0
  %2438 = vadd.xlane.f32.xlu0 %v2437
  %v2439 = vpop.xlane.xlu0 %2438
  %v2440 = vsel %vm203, %v2376, 0.0
  %2441 = vadd.xlane.f32.xlu0 %v2440
  %v2442 = vpop.xlane.xlu0 %2441
  %v2443 = vsel %vm203, %v2377, 0.0
  %2444 = vadd.xlane.f32.xlu0 %v2443
  %v2445 = vpop.xlane.xlu0 %2444
  %v2446 = vsel %vm203, %v2378, 0.0
  %2447 = vadd.xlane.f32.xlu0 %v2446
  %v2448 = vpop.xlane.xlu0 %2447
  %v2449 = vsel %vm203, %v2379, 0.0
  %2450 = vadd.xlane.f32.xlu0 %v2449
  %v2451 = vpop.xlane.xlu0 %2450
  %v2452 = vadd.f32 %v2382, 1e-08
  %v2453 = vadd.f32 %v2385, 1e-08
  %v2454 = vadd.f32 %v2388, 1e-08
  %v2455 = vadd.f32 %v2391, 1e-08
  %v2456 = vadd.f32 %v2394, 1e-08
  %v2457 = vadd.f32 %v2397, 1e-08
  %v2458 = vadd.f32 %v2400, 1e-08
  %v2459 = vadd.f32 %v2403, 1e-08
  %v2460 = vadd.f32 %v2406, 1e-08
  %v2461 = vadd.f32 %v2409, 1e-08
  %v2462 = vadd.f32 %v2412, 1e-08
  %v2463 = vadd.f32 %v2415, 1e-08
  %v2464 = vadd.f32 %v2418, 1e-08
  %v2465 = vadd.f32 %v2421, 1e-08
  %v2466 = vadd.f32 %v2424, 1e-08
  %v2467 = vadd.f32 %v2427, 1e-08
  %v2468 = vadd.f32 %v2430, 1e-08
  %v2469 = vadd.f32 %v2433, 1e-08
  %v2470 = vadd.f32 %v2436, 1e-08
  %v2471 = vadd.f32 %v2439, 1e-08
  %v2472 = vadd.f32 %v2442, 1e-08
  %v2473 = vadd.f32 %v2445, 1e-08
  %v2474 = vadd.f32 %v2448, 1e-08
  %v2475 = vadd.f32 %v2451, 1e-08
  %v2476 = vrsqrt.pop %v2452
  %v2477 = vrsqrt.pop %v2453
  %v2478 = vrsqrt.pop %v2454
  %v2479 = vrsqrt.pop %v2455
  %v2480 = vrsqrt.pop %v2456
  %v2481 = vrsqrt.pop %v2457
  %v2482 = vrsqrt.pop %v2458
  %v2483 = vrsqrt.pop %v2459
  %v2484 = vrsqrt.pop %v2460
  %v2485 = vrsqrt.pop %v2461
  %v2486 = vrsqrt.pop %v2462
  %v2487 = vrsqrt.pop %v2463
  %v2488 = vrsqrt.pop %v2464
  %v2489 = vrsqrt.pop %v2465
  %v2490 = vrsqrt.pop %v2466
  %v2491 = vrsqrt.pop %v2467
  %v2492 = vrsqrt.pop %v2468
  %v2493 = vrsqrt.pop %v2469
  %v2494 = vrsqrt.pop %v2470
  %v2495 = vrsqrt.pop %v2471
  %v2496 = vrsqrt.pop %v2472
  %v2497 = vrsqrt.pop %v2473
  %v2498 = vrsqrt.pop %v2474
  %v2499 = vrsqrt.pop %v2475
  %s2500 = sld [smem:[#allocation5 + $0x1]]
  %v2501 = vmul.f32 %v679, %v2476
  %v2502 = vmul.f32 %v686, %v2477
  %v2503 = vmul.f32 %v693, %v2478
  %v2504 = vmul.f32 %v700, %v2479
  %v2505 = vmul.f32 %v707, %v2480
  %v2506 = vmul.f32 %v714, %v2481
  %v2507 = vmul.f32 %v721, %v2482
  %v2508 = vmul.f32 %v728, %v2483
  %v2509 = vmul.f32 %v735, %v2484
  %v2510 = vmul.f32 %v742, %v2485
  %v2511 = vmul.f32 %v749, %v2486
  %v2512 = vmul.f32 %v756, %v2487
  %v2513 = vmul.f32 %v763, %v2488
  %v2514 = vmul.f32 %v770, %v2489
  %v2515 = vmul.f32 %v777, %v2490
  %v2516 = vmul.f32 %v784, %v2491
  %v2517 = vmul.f32 %v791, %v2492
  %v2518 = vmul.f32 %v798, %v2493
  %v2519 = vmul.f32 %v805, %v2494
  %v2520 = vmul.f32 %v812, %v2495
  %v2521 = vmul.f32 %v819, %v2496
  %v2522 = vmul.f32 %v826, %v2497
  %v2523 = vmul.f32 %v833, %v2498
  %v2524 = vmul.f32 %v840, %v2499
  %v2525 = vmul.f32 %v2332, %v2501
  %v2526 = vmul.f32 %v2333, %v2502
  %v2527 = vmul.f32 %v2334, %v2503
  %v2528 = vmul.f32 %v2335, %v2504
  %v2529 = vmul.f32 %v2336, %v2505
  %v2530 = vmul.f32 %v2337, %v2506
  %v2531 = vmul.f32 %v2338, %v2507
  %v2532 = vmul.f32 %v2339, %v2508
  %v2533 = vmul.f32 %v2340, %v2509
  %v2534 = vmul.f32 %v2341, %v2510
  %v2535 = vmul.f32 %v2342, %v2511
  %v2536 = vmul.f32 %v2343, %v2512
  %v2537 = vmul.f32 %v2344, %v2513
  %v2538 = vmul.f32 %v2345, %v2514
  %v2539 = vmul.f32 %v2346, %v2515
  %v2540 = vmul.f32 %v2347, %v2516
  %v2541 = vmul.f32 %v2348, %v2517
  %v2542 = vmul.f32 %v2349, %v2518
  %v2543 = vmul.f32 %v2350, %v2519
  %v2544 = vmul.f32 %v2351, %v2520
  %v2545 = vmul.f32 %v2352, %v2521
  %v2546 = vmul.f32 %v2353, %v2522
  %v2547 = vmul.f32 %v2354, %v2523
  %v2548 = vmul.f32 %v2355, %v2524
  %v2549 = vstv %s2500
  %v2550 = vmul.f32 %v2549, %v2525
  %v2551 = vmul.f32 %v2549, %v2526
  %v2552 = vmul.f32 %v2549, %v2527
  %v2553 = vmul.f32 %v2549, %v2528
  %v2554 = vmul.f32 %v2549, %v2529
  %v2555 = vmul.f32 %v2549, %v2530
  %v2556 = vmul.f32 %v2549, %v2531
  %v2557 = vmul.f32 %v2549, %v2532
  %v2558 = vmul.f32 %v2549, %v2533
  %v2559 = vmul.f32 %v2549, %v2534
  %v2560 = vmul.f32 %v2549, %v2535
  %v2561 = vmul.f32 %v2549, %v2536
  %v2562 = vmul.f32 %v2549, %v2537
  %v2563 = vmul.f32 %v2549, %v2538
  %v2564 = vmul.f32 %v2549, %v2539
  %v2565 = vmul.f32 %v2549, %v2540
  %v2566 = vmul.f32 %v2549, %v2541
  %v2567 = vmul.f32 %v2549, %v2542
  %v2568 = vmul.f32 %v2549, %v2543
  %v2569 = vmul.f32 %v2549, %v2544
  %v2570 = vmul.f32 %v2549, %v2545
  %v2571 = vmul.f32 %v2549, %v2546
  %v2572 = vmul.f32 %v2549, %v2547
  %v2573 = vmul.f32 %v2549, %v2548
  %v2574 = vadd.f32 %v1694, %v2550
  %v2575 = vadd.f32 %v1695, %v2551
  %v2576 = vadd.f32 %v1696, %v2552
  %v2577 = vadd.f32 %v1697, %v2553
  %v2578 = vadd.f32 %v1698, %v2554
  %v2579 = vadd.f32 %v1699, %v2555
  %v2580 = vadd.f32 %v1700, %v2556
  %v2581 = vadd.f32 %v1701, %v2557
  %v2582 = vadd.f32 %v1702, %v2558
  %v2583 = vadd.f32 %v1703, %v2559
  %v2584 = vadd.f32 %v1704, %v2560
  %v2585 = vadd.f32 %v1705, %v2561
  %v2586 = vadd.f32 %v1706, %v2562
  %v2587 = vadd.f32 %v1707, %v2563
  %v2588 = vadd.f32 %v1708, %v2564
  %v2589 = vadd.f32 %v1709, %v2565
  %v2590 = vadd.f32 %v1710, %v2566
  %v2591 = vadd.f32 %v1711, %v2567
  %v2592 = vadd.f32 %v1712, %v2568
  %v2593 = vadd.f32 %v1713, %v2569
  %v2594 = vadd.f32 %v1714, %v2570
  %v2595 = vadd.f32 %v1715, %v2571
  %v2596 = vadd.f32 %v1716, %v2572
  %v2597 = vadd.f32 %v1717, %v2573
  %s2598 = scalar_lea.vmem %s2, 192
  %v2599 = vld [vmem:[%s2598] sm:$0xf]
  %v2600 = vld [vmem:[%s2598 + $0x4] sm:$0xf]
  %v2601 = vld [vmem:[%s2598 + $0x8] sm:$0xf]
  %v2602 = vld [vmem:[%s2598 + $0xc] sm:$0xf]
  %v2603 = vld [vmem:[%s2598 + $0x10] sm:$0xf]
  %v2604 = vld [vmem:[%s2598 + $0x14] sm:$0xf]
  %v2605 = vld [vmem:[%s2598 + $0x18] sm:$0xf]
  %v2606 = vld [vmem:[%s2598 + $0x1c] sm:$0xf]
  %v2607 = vld [vmem:[%s2598 + $0x20] sm:$0xf]
  %v2608 = vld [vmem:[%s2598 + $0x24] sm:$0xf]
  %v2609 = vld [vmem:[%s2598 + $0x28] sm:$0xf]
  %v2610 = vld [vmem:[%s2598 + $0x2c] sm:$0xf]
  %v2611 = vld [vmem:[%s2598 + $0x30] sm:$0xf]
  %v2612 = vld [vmem:[%s2598 + $0x34] sm:$0xf]
  %v2613 = vld [vmem:[%s2598 + $0x38] sm:$0xf]
  %v2614 = vld [vmem:[%s2598 + $0x3c] sm:$0xf]
  %v2615 = vld [vmem:[%s2598 + $0x40] sm:$0xf]
  %v2616 = vld [vmem:[%s2598 + $0x44] sm:$0xf]
  %v2617 = vld [vmem:[%s2598 + $0x48] sm:$0xf]
  %v2618 = vld [vmem:[%s2598 + $0x4c] sm:$0xf]
  %v2619 = vld [vmem:[%s2598 + $0x50] sm:$0xf]
  %v2620 = vld [vmem:[%s2598 + $0x54] sm:$0xf]
  %v2621 = vld [vmem:[%s2598 + $0x58] sm:$0xf]
  %v2622 = vld [vmem:[%s2598 + $0x5c] sm:$0xf]
  %v2623 = vunpack.c.l.bf16 %v2599
  %v2624 = vunpack.c.l.bf16 %v2600
  %v2625 = vunpack.c.l.bf16 %v2601
  %v2626 = vunpack.c.l.bf16 %v2602
  %v2627 = vunpack.c.l.bf16 %v2603
  %v2628 = vunpack.c.l.bf16 %v2604
  %v2629 = vunpack.c.l.bf16 %v2605
  %v2630 = vunpack.c.l.bf16 %v2606
  %v2631 = vunpack.c.l.bf16 %v2607
  %v2632 = vunpack.c.l.bf16 %v2608
  %v2633 = vunpack.c.l.bf16 %v2609
  %v2634 = vunpack.c.l.bf16 %v2610
  %v2635 = vunpack.c.l.bf16 %v2611
  %v2636 = vunpack.c.l.bf16 %v2612
  %v2637 = vunpack.c.l.bf16 %v2613
  %v2638 = vunpack.c.l.bf16 %v2614
  %v2639 = vunpack.c.l.bf16 %v2615
  %v2640 = vunpack.c.l.bf16 %v2616
  %v2641 = vunpack.c.l.bf16 %v2617
  %v2642 = vunpack.c.l.bf16 %v2618
  %v2643 = vunpack.c.l.bf16 %v2619
  %v2644 = vunpack.c.l.bf16 %v2620
  %v2645 = vunpack.c.l.bf16 %v2621
  %v2646 = vunpack.c.l.bf16 %v2622
  %s2647 = scalar_lea.vmem %s6, 2
  %v2648 = vld [vmem:[%s2647] sm:$0x1]
  %s2649 = scalar_lea.vmem %s7, 2
  %v2650 = vld [vmem:[%s2649] sm:$0x1]
  %v2651 = vsel %vm891, %v2623, 0.0
  %2652 = vadd.xlane.f32.xlu0 %v2651
  %v2653 = vpop.xlane.xlu0 %2652
  %v2654 = vsel %vm891, %v2624, 0.0
  %2655 = vadd.xlane.f32.xlu0 %v2654
  %v2656 = vpop.xlane.xlu0 %2655
  %v2657 = vsel %vm891, %v2625, 0.0
  %2658 = vadd.xlane.f32.xlu0 %v2657
  %v2659 = vpop.xlane.xlu0 %2658
  %v2660 = vsel %vm891, %v2626, 0.0
  %2661 = vadd.xlane.f32.xlu0 %v2660
  %v2662 = vpop.xlane.xlu0 %2661
  %v2663 = vsel %vm891, %v2627, 0.0
  %2664 = vadd.xlane.f32.xlu0 %v2663
  %v2665 = vpop.xlane.xlu0 %2664
  %v2666 = vsel %vm891, %v2628, 0.0
  %2667 = vadd.xlane.f32.xlu0 %v2666
  %v2668 = vpop.xlane.xlu0 %2667
  %v2669 = vsel %vm891, %v2629, 0.0
  %2670 = vadd.xlane.f32.xlu0 %v2669
  %v2671 = vpop.xlane.xlu0 %2670
  %v2672 = vsel %vm891, %v2630, 0.0
  %2673 = vadd.xlane.f32.xlu0 %v2672
  %v2674 = vpop.xlane.xlu0 %2673
  %v2675 = vsel %vm891, %v2631, 0.0
  %2676 = vadd.xlane.f32.xlu0 %v2675
  %v2677 = vpop.xlane.xlu0 %2676
  %v2678 = vsel %vm891, %v2632, 0.0
  %2679 = vadd.xlane.f32.xlu0 %v2678
  %v2680 = vpop.xlane.xlu0 %2679
  %v2681 = vsel %vm891, %v2633, 0.0
  %2682 = vadd.xlane.f32.xlu0 %v2681
  %v2683 = vpop.xlane.xlu0 %2682
  %v2684 = vsel %vm891, %v2634, 0.0
  %2685 = vadd.xlane.f32.xlu0 %v2684
  %v2686 = vpop.xlane.xlu0 %2685
  %v2687 = vsel %vm891, %v2635, 0.0
  %2688 = vadd.xlane.f32.xlu0 %v2687
  %v2689 = vpop.xlane.xlu0 %2688
  %v2690 = vsel %vm891, %v2636, 0.0
  %2691 = vadd.xlane.f32.xlu0 %v2690
  %v2692 = vpop.xlane.xlu0 %2691
  %v2693 = vsel %vm891, %v2637, 0.0
  %2694 = vadd.xlane.f32.xlu0 %v2693
  %v2695 = vpop.xlane.xlu0 %2694
  %v2696 = vsel %vm891, %v2638, 0.0
  %2697 = vadd.xlane.f32.xlu0 %v2696
  %v2698 = vpop.xlane.xlu0 %2697
  %v2699 = vsel %vm891, %v2639, 0.0
  %2700 = vadd.xlane.f32.xlu0 %v2699
  %v2701 = vpop.xlane.xlu0 %2700
  %v2702 = vsel %vm891, %v2640, 0.0
  %2703 = vadd.xlane.f32.xlu0 %v2702
  %v2704 = vpop.xlane.xlu0 %2703
  %v2705 = vsel %vm891, %v2641, 0.0
  %2706 = vadd.xlane.f32.xlu0 %v2705
  %v2707 = vpop.xlane.xlu0 %2706
  %v2708 = vsel %vm891, %v2642, 0.0
  %2709 = vadd.xlane.f32.xlu0 %v2708
  %v2710 = vpop.xlane.xlu0 %2709
  %v2711 = vsel %vm891, %v2643, 0.0
  %2712 = vadd.xlane.f32.xlu0 %v2711
  %v2713 = vpop.xlane.xlu0 %2712
  %v2714 = vsel %vm891, %v2644, 0.0
  %2715 = vadd.xlane.f32.xlu0 %v2714
  %v2716 = vpop.xlane.xlu0 %2715
  %v2717 = vsel %vm891, %v2645, 0.0
  %2718 = vadd.xlane.f32.xlu0 %v2717
  %v2719 = vpop.xlane.xlu0 %2718
  %v2720 = vsel %vm891, %v2646, 0.0
  %2721 = vadd.xlane.f32.xlu0 %v2720
  %v2722 = vpop.xlane.xlu0 %2721
  %v2723 = vmul.f32 %v2653, %v964
  %v2724 = vmul.f32 %v2656, %v964
  %v2725 = vmul.f32 %v2659, %v964
  %v2726 = vmul.f32 %v2662, %v964
  %v2727 = vmul.f32 %v2665, %v964
  %v2728 = vmul.f32 %v2668, %v964
  %v2729 = vmul.f32 %v2671, %v964
  %v2730 = vmul.f32 %v2674, %v964
  %v2731 = vmul.f32 %v2677, %v964
  %v2732 = vmul.f32 %v2680, %v964
  %v2733 = vmul.f32 %v2683, %v964
  %v2734 = vmul.f32 %v2686, %v964
  %v2735 = vmul.f32 %v2689, %v964
  %v2736 = vmul.f32 %v2692, %v964
  %v2737 = vmul.f32 %v2695, %v964
  %v2738 = vmul.f32 %v2698, %v964
  %v2739 = vmul.f32 %v2701, %v964
  %v2740 = vmul.f32 %v2704, %v964
  %v2741 = vmul.f32 %v2707, %v964
  %v2742 = vmul.f32 %v2710, %v964
  %v2743 = vmul.f32 %v2713, %v964
  %v2744 = vmul.f32 %v2716, %v964
  %v2745 = vmul.f32 %v2719, %v964
  %v2746 = vmul.f32 %v2722, %v964
  %v2747 = vsub.f32 %v2623, %v2723
  %v2748 = vsub.f32 %v2624, %v2724
  %v2749 = vsub.f32 %v2625, %v2725
  %v2750 = vsub.f32 %v2626, %v2726
  %v2751 = vsub.f32 %v2627, %v2727
  %v2752 = vsub.f32 %v2628, %v2728
  %v2753 = vsub.f32 %v2629, %v2729
  %v2754 = vsub.f32 %v2630, %v2730
  %v2755 = vsub.f32 %v2631, %v2731
  %v2756 = vsub.f32 %v2632, %v2732
  %v2757 = vsub.f32 %v2633, %v2733
  %v2758 = vsub.f32 %v2634, %v2734
  %v2759 = vsub.f32 %v2635, %v2735
  %v2760 = vsub.f32 %v2636, %v2736
  %v2761 = vsub.f32 %v2637, %v2737
  %v2762 = vsub.f32 %v2638, %v2738
  %v2763 = vsub.f32 %v2639, %v2739
  %v2764 = vsub.f32 %v2640, %v2740
  %v2765 = vsub.f32 %v2641, %v2741
  %v2766 = vsub.f32 %v2642, %v2742
  %v2767 = vsub.f32 %v2643, %v2743
  %v2768 = vsub.f32 %v2644, %v2744
  %v2769 = vsub.f32 %v2645, %v2745
  %v2770 = vsub.f32 %v2646, %v2746
  %v2771 = vmul.f32 %v2747, %v2747
  %v2772 = vmul.f32 %v2748, %v2748
  %v2773 = vmul.f32 %v2749, %v2749
  %v2774 = vmul.f32 %v2750, %v2750
  %v2775 = vmul.f32 %v2751, %v2751
  %v2776 = vmul.f32 %v2752, %v2752
  %v2777 = vmul.f32 %v2753, %v2753
  %v2778 = vmul.f32 %v2754, %v2754
  %v2779 = vmul.f32 %v2755, %v2755
  %v2780 = vmul.f32 %v2756, %v2756
  %v2781 = vmul.f32 %v2757, %v2757
  %v2782 = vmul.f32 %v2758, %v2758
  %v2783 = vmul.f32 %v2759, %v2759
  %v2784 = vmul.f32 %v2760, %v2760
  %v2785 = vmul.f32 %v2761, %v2761
  %v2786 = vmul.f32 %v2762, %v2762
  %v2787 = vmul.f32 %v2763, %v2763
  %v2788 = vmul.f32 %v2764, %v2764
  %v2789 = vmul.f32 %v2765, %v2765
  %v2790 = vmul.f32 %v2766, %v2766
  %v2791 = vmul.f32 %v2767, %v2767
  %v2792 = vmul.f32 %v2768, %v2768
  %v2793 = vmul.f32 %v2769, %v2769
  %v2794 = vmul.f32 %v2770, %v2770
  %v2795 = vsel %vm891, %v2771, 0.0
  %2796 = vadd.xlane.f32.xlu0 %v2795
  %v2797 = vpop.xlane.xlu0 %2796
  %v2798 = vsel %vm891, %v2772, 0.0
  %2799 = vadd.xlane.f32.xlu0 %v2798
  %v2800 = vpop.xlane.xlu0 %2799
  %v2801 = vsel %vm891, %v2773, 0.0
  %2802 = vadd.xlane.f32.xlu0 %v2801
  %v2803 = vpop.xlane.xlu0 %2802
  %v2804 = vsel %vm891, %v2774, 0.0
  %2805 = vadd.xlane.f32.xlu0 %v2804
  %v2806 = vpop.xlane.xlu0 %2805
  %v2807 = vsel %vm891, %v2775, 0.0
  %2808 = vadd.xlane.f32.xlu0 %v2807
  %v2809 = vpop.xlane.xlu0 %2808
  %v2810 = vsel %vm891, %v2776, 0.0
  %2811 = vadd.xlane.f32.xlu0 %v2810
  %v2812 = vpop.xlane.xlu0 %2811
  %v2813 = vsel %vm891, %v2777, 0.0
  %2814 = vadd.xlane.f32.xlu0 %v2813
  %v2815 = vpop.xlane.xlu0 %2814
  %v2816 = vsel %vm891, %v2778, 0.0
  %2817 = vadd.xlane.f32.xlu0 %v2816
  %v2818 = vpop.xlane.xlu0 %2817
  %v2819 = vsel %vm891, %v2779, 0.0
  %2820 = vadd.xlane.f32.xlu0 %v2819
  %v2821 = vpop.xlane.xlu0 %2820
  %v2822 = vsel %vm891, %v2780, 0.0
  %2823 = vadd.xlane.f32.xlu0 %v2822
  %v2824 = vpop.xlane.xlu0 %2823
  %v2825 = vsel %vm891, %v2781, 0.0
  %2826 = vadd.xlane.f32.xlu0 %v2825
  %v2827 = vpop.xlane.xlu0 %2826
  %v2828 = vsel %vm891, %v2782, 0.0
  %2829 = vadd.xlane.f32.xlu0 %v2828
  %v2830 = vpop.xlane.xlu0 %2829
  %v2831 = vsel %vm891, %v2783, 0.0
  %2832 = vadd.xlane.f32.xlu0 %v2831
  %v2833 = vpop.xlane.xlu0 %2832
  %v2834 = vsel %vm891, %v2784, 0.0
  %2835 = vadd.xlane.f32.xlu0 %v2834
  %v2836 = vpop.xlane.xlu0 %2835
  %v2837 = vsel %vm891, %v2785, 0.0
  %2838 = vadd.xlane.f32.xlu0 %v2837
  %v2839 = vpop.xlane.xlu0 %2838
  %v2840 = vsel %vm891, %v2786, 0.0
  %2841 = vadd.xlane.f32.xlu0 %v2840
  %v2842 = vpop.xlane.xlu0 %2841
  %v2843 = vsel %vm891, %v2787, 0.0
  %2844 = vadd.xlane.f32.xlu0 %v2843
  %v2845 = vpop.xlane.xlu0 %2844
  %v2846 = vsel %vm891, %v2788, 0.0
  %2847 = vadd.xlane.f32.xlu0 %v2846
  %v2848 = vpop.xlane.xlu0 %2847
  %v2849 = vsel %vm891, %v2789, 0.0
  %2850 = vadd.xlane.f32.xlu0 %v2849
  %v2851 = vpop.xlane.xlu0 %2850
  %v2852 = vsel %vm891, %v2790, 0.0
  %2853 = vadd.xlane.f32.xlu0 %v2852
  %v2854 = vpop.xlane.xlu0 %2853
  %v2855 = vsel %vm891, %v2791, 0.0
  %2856 = vadd.xlane.f32.xlu0 %v2855
  %v2857 = vpop.xlane.xlu0 %2856
  %v2858 = vsel %vm891, %v2792, 0.0
  %2859 = vadd.xlane.f32.xlu0 %v2858
  %v2860 = vpop.xlane.xlu0 %2859
  %v2861 = vsel %vm891, %v2793, 0.0
  %2862 = vadd.xlane.f32.xlu0 %v2861
  %v2863 = vpop.xlane.xlu0 %2862
  %v2864 = vsel %vm891, %v2794, 0.0
  %2865 = vadd.xlane.f32.xlu0 %v2864
  %v2866 = vpop.xlane.xlu0 %2865
  %v2867 = vmul.f32 %v2797, %v964
  %v2868 = vmul.f32 %v2800, %v964
  %v2869 = vmul.f32 %v2803, %v964
  %v2870 = vmul.f32 %v2806, %v964
  %v2871 = vmul.f32 %v2809, %v964
  %v2872 = vmul.f32 %v2812, %v964
  %v2873 = vmul.f32 %v2815, %v964
  %v2874 = vmul.f32 %v2818, %v964
  %v2875 = vmul.f32 %v2821, %v964
  %v2876 = vmul.f32 %v2824, %v964
  %v2877 = vmul.f32 %v2827, %v964
  %v2878 = vmul.f32 %v2830, %v964
  %v2879 = vmul.f32 %v2833, %v964
  %v2880 = vmul.f32 %v2836, %v964
  %v2881 = vmul.f32 %v2839, %v964
  %v2882 = vmul.f32 %v2842, %v964
  %v2883 = vmul.f32 %v2845, %v964
  %v2884 = vmul.f32 %v2848, %v964
  %v2885 = vmul.f32 %v2851, %v964
  %v2886 = vmul.f32 %v2854, %v964
  %v2887 = vmul.f32 %v2857, %v964
  %v2888 = vmul.f32 %v2860, %v964
  %v2889 = vmul.f32 %v2863, %v964
  %v2890 = vmul.f32 %v2866, %v964
  %v2891 = vadd.f32 %v2867, 1e-05
  %v2892 = vadd.f32 %v2868, 1e-05
  %v2893 = vadd.f32 %v2869, 1e-05
  %v2894 = vadd.f32 %v2870, 1e-05
  %v2895 = vadd.f32 %v2871, 1e-05
  %v2896 = vadd.f32 %v2872, 1e-05
  %v2897 = vadd.f32 %v2873, 1e-05
  %v2898 = vadd.f32 %v2874, 1e-05
  %v2899 = vadd.f32 %v2875, 1e-05
  %v2900 = vadd.f32 %v2876, 1e-05
  %v2901 = vadd.f32 %v2877, 1e-05
  %v2902 = vadd.f32 %v2878, 1e-05
  %v2903 = vadd.f32 %v2879, 1e-05
  %v2904 = vadd.f32 %v2880, 1e-05
  %v2905 = vadd.f32 %v2881, 1e-05
  %v2906 = vadd.f32 %v2882, 1e-05
  %v2907 = vadd.f32 %v2883, 1e-05
  %v2908 = vadd.f32 %v2884, 1e-05
  %v2909 = vadd.f32 %v2885, 1e-05
  %v2910 = vadd.f32 %v2886, 1e-05
  %v2911 = vadd.f32 %v2887, 1e-05
  %v2912 = vadd.f32 %v2888, 1e-05
  %v2913 = vadd.f32 %v2889, 1e-05
  %v2914 = vadd.f32 %v2890, 1e-05
  %v2915 = vrsqrt.pop %v2891
  %v2916 = vrsqrt.pop %v2892
  %v2917 = vrsqrt.pop %v2893
  %v2918 = vrsqrt.pop %v2894
  %v2919 = vrsqrt.pop %v2895
  %v2920 = vrsqrt.pop %v2896
  %v2921 = vrsqrt.pop %v2897
  %v2922 = vrsqrt.pop %v2898
  %v2923 = vrsqrt.pop %v2899
  %v2924 = vrsqrt.pop %v2900
  %v2925 = vrsqrt.pop %v2901
  %v2926 = vrsqrt.pop %v2902
  %v2927 = vrsqrt.pop %v2903
  %v2928 = vrsqrt.pop %v2904
  %v2929 = vrsqrt.pop %v2905
  %v2930 = vrsqrt.pop %v2906
  %v2931 = vrsqrt.pop %v2907
  %v2932 = vrsqrt.pop %v2908
  %v2933 = vrsqrt.pop %v2909
  %v2934 = vrsqrt.pop %v2910
  %v2935 = vrsqrt.pop %v2911
  %v2936 = vrsqrt.pop %v2912
  %v2937 = vrsqrt.pop %v2913
  %v2938 = vrsqrt.pop %v2914
  %v2939 = vmul.f32 %v2747, %v2915
  %v2940 = vmul.f32 %v2748, %v2916
  %v2941 = vmul.f32 %v2749, %v2917
  %v2942 = vmul.f32 %v2750, %v2918
  %v2943 = vmul.f32 %v2751, %v2919
  %v2944 = vmul.f32 %v2752, %v2920
  %v2945 = vmul.f32 %v2753, %v2921
  %v2946 = vmul.f32 %v2754, %v2922
  %v2947 = vmul.f32 %v2755, %v2923
  %v2948 = vmul.f32 %v2756, %v2924
  %v2949 = vmul.f32 %v2757, %v2925
  %v2950 = vmul.f32 %v2758, %v2926
  %v2951 = vmul.f32 %v2759, %v2927
  %v2952 = vmul.f32 %v2760, %v2928
  %v2953 = vmul.f32 %v2761, %v2929
  %v2954 = vmul.f32 %v2762, %v2930
  %v2955 = vmul.f32 %v2763, %v2931
  %v2956 = vmul.f32 %v2764, %v2932
  %v2957 = vmul.f32 %v2765, %v2933
  %v2958 = vmul.f32 %v2766, %v2934
  %v2959 = vmul.f32 %v2767, %v2935
  %v2960 = vmul.f32 %v2768, %v2936
  %v2961 = vmul.f32 %v2769, %v2937
  %v2962 = vmul.f32 %v2770, %v2938
  %v2964 = vlaneseq
  %v2965 = vshrl.u32 %v2964, 7
  %v2966 = vsub.s32 0, %v2965
  %v2967 = vrot.slane %v2648, %v2966
  %v2969 = vmul.f32 %v2939, %v2967
  %v2970 = vmul.f32 %v2940, %v2967
  %v2971 = vmul.f32 %v2941, %v2967
  %v2972 = vmul.f32 %v2942, %v2967
  %v2973 = vmul.f32 %v2943, %v2967
  %v2974 = vmul.f32 %v2944, %v2967
  %v2975 = vmul.f32 %v2945, %v2967
  %v2976 = vmul.f32 %v2946, %v2967
  %v2977 = vmul.f32 %v2947, %v2967
  %v2978 = vmul.f32 %v2948, %v2967
  %v2979 = vmul.f32 %v2949, %v2967
  %v2980 = vmul.f32 %v2950, %v2967
  %v2981 = vmul.f32 %v2951, %v2967
  %v2982 = vmul.f32 %v2952, %v2967
  %v2983 = vmul.f32 %v2953, %v2967
  %v2984 = vmul.f32 %v2954, %v2967
  %v2985 = vmul.f32 %v2955, %v2967
  %v2986 = vmul.f32 %v2956, %v2967
  %v2987 = vmul.f32 %v2957, %v2967
  %v2988 = vmul.f32 %v2958, %v2967
  %v2989 = vmul.f32 %v2959, %v2967
  %v2990 = vmul.f32 %v2960, %v2967
  %v2991 = vmul.f32 %v2961, %v2967
  %v2992 = vmul.f32 %v2962, %v2967
  %v2994 = vlaneseq
  %v2995 = vshrl.u32 %v2994, 7
  %v2996 = vsub.s32 0, %v2995
  %v2997 = vrot.slane %v2650, %v2996
  %v2999 = vadd.f32 %v2969, %v2997
  %v3000 = vadd.f32 %v2970, %v2997
  %v3001 = vadd.f32 %v2971, %v2997
  %v3002 = vadd.f32 %v2972, %v2997
  %v3003 = vadd.f32 %v2973, %v2997
  %v3004 = vadd.f32 %v2974, %v2997
  %v3005 = vadd.f32 %v2975, %v2997
  %v3006 = vadd.f32 %v2976, %v2997
  %v3007 = vadd.f32 %v2977, %v2997
  %v3008 = vadd.f32 %v2978, %v2997
  %v3009 = vadd.f32 %v2979, %v2997
  %v3010 = vadd.f32 %v2980, %v2997
  %v3011 = vadd.f32 %v2981, %v2997
  %v3012 = vadd.f32 %v2982, %v2997
  %v3013 = vadd.f32 %v2983, %v2997
  %v3014 = vadd.f32 %v2984, %v2997
  %v3015 = vadd.f32 %v2985, %v2997
  %v3016 = vadd.f32 %v2986, %v2997
  %v3017 = vadd.f32 %v2987, %v2997
  %v3018 = vadd.f32 %v2988, %v2997
  %v3019 = vadd.f32 %v2989, %v2997
  %v3020 = vadd.f32 %v2990, %v2997
  %v3021 = vadd.f32 %v2991, %v2997
  %v3022 = vadd.f32 %v2992, %v2997
  %v3023 = vpack.c.bf16 %v3000, %v2999
  %v3024 = vpack.c.bf16 %v3002, %v3001
  %v3025 = vpack.c.bf16 %v3004, %v3003
  %v3026 = vpack.c.bf16 %v3006, %v3005
  %v3027 = vpack.c.bf16 %v3008, %v3007
  %v3028 = vpack.c.bf16 %v3010, %v3009
  %v3029 = vpack.c.bf16 %v3012, %v3011
  %v3030 = vpack.c.bf16 %v3014, %v3013
  %v3031 = vpack.c.bf16 %v3016, %v3015
  %v3032 = vpack.c.bf16 %v3018, %v3017
  %v3033 = vpack.c.bf16 %v3020, %v3019
  %v3034 = vpack.c.bf16 %v3022, %v3021
  %s3035 = scalar_lea.vmem [#allocation2], 48
  %v3036 = vld [vmem:[%s3035] sm:$0xff]
  %v3037 = vld [vmem:[%s3035 + $0x8] sm:$0xff]
  %v3038 = vld [vmem:[%s3035 + $0x10] sm:$0xff]
  %s3039 = scalar_lea.vmem %s8, 2
  %v3040 = vld [vmem:[%s3039] sm:$0x1]
  %v3042 = vlaneseq
  %v3043 = vshrl.u32 %v3042, 7
  %v3044 = vsub.s32 0, %v3043
  %v3045 = vrot.slane %v3040, %v3044
  %v3048 = vsel %vm891, %v3023, 0
  %v3051 = vsel %vm891, %v3024, 0
  %v3054 = vsel %vm891, %v3025, 0
  %v3057 = vsel %vm891, %v3026, 0
  %v3060 = vsel %vm891, %v3027, 0
  %v3063 = vsel %vm891, %v3028, 0
  %v3066 = vsel %vm891, %v3029, 0
  %v3069 = vsel %vm891, %v3030, 0
  %v3072 = vsel %vm891, %v3031, 0
  %v3075 = vsel %vm891, %v3032, 0
  %v3078 = vsel %vm891, %v3033, 0
  %v3081 = vsel %vm891, %v3034, 0
  %3083 = vmatprep.subr.bf16.mxu0 0
  %3084 = vmatpush1.bf16.msra.mxu0 %v3036
  %3085 = vmatprep.subr.bf16.mxu0 0
  %3086 = vmatpush1.bf16.msra.mxu0 %v3037
  %3087 = vmatprep.subr.bf16.mxu0 0
  %3088 = vmatpush1.bf16.msra.mxu0 %v3038
  %3089 = vmatprep.subr.bf16.mxu0 0
  %3090 = vmatpush1.bf16.msra.mxu0 0
  %3091 = vmatprep.subr.bf16.mxu0 0
  %3092 = vmatpush1.bf16.msra.mxu0 0
  %3093 = vmatprep.subr.bf16.mxu0 0
  %3094 = vmatpush1.bf16.msra.mxu0 0
  %3095 = vmatprep.subr.bf16.mxu0 0
  %3096 = vmatpush1.bf16.msra.mxu0 0
  %3097 = vmatprep.subr.bf16.mxu0 0
  %3098 = vmatpush1.bf16.msra.mxu0 0
  %3099 = vmatprep.subr.bf16.mxu0 0
  %3100 = vmatpush1.bf16.msra.mxu0 0
  %3101 = vmatprep.subr.bf16.mxu0 0
  %3102 = vmatpush1.bf16.msra.mxu0 0
  %3103 = vmatprep.subr.bf16.mxu0 0
  %3104 = vmatpush1.bf16.msra.mxu0 0
  %3105 = vmatprep.subr.bf16.mxu0 0
  %3106 = vmatpush1.bf16.msra.mxu0 0
  %3107 = vmatprep.subr.bf16.mxu0 0
  %3108 = vmatpush1.bf16.msra.mxu0 0
  %3109 = vmatprep.subr.bf16.mxu0 0
  %3110 = vmatpush1.bf16.msra.mxu0 0
  %3111 = vmatprep.subr.bf16.mxu0 0
  %3112 = vmatpush1.bf16.msra.mxu0 0
  %3113 = vmatprep.subr.bf16.mxu0 0
  %3114 = vmatpush1.bf16.msra.mxu0 0
  %3115 = vmatprep.mubr.bf16.mxu0 0
  %3116 = vmatmul.mubr.bf16.gmra.mrb[0].mxu0 %v3048
  %v3117 = vpop.f32.mrb[0].mxu0
  %v3118 = vadd.f32 %v3045, %v3117
  %v3119 = vpop.f32.mrb[0].mxu0
  %v3120 = vpop.f32.mrb[0].mxu0
  %v3121 = vadd.f32 %v3045, %v3120
  %v3122 = vpop.f32.mrb[0].mxu0
  %3123 = vmatprep.mubr.bf16.mxu0 0
  %3124 = vmatmul.mubr.bf16.gmra.mrb[0].mxu0 %v3051
  %v3125 = vpop.f32.mrb[0].mxu0
  %v3126 = vadd.f32 %v3045, %v3125
  %v3127 = vpop.f32.mrb[0].mxu0
  %v3128 = vpop.f32.mrb[0].mxu0
  %v3129 = vadd.f32 %v3045, %v3128
  %v3130 = vpop.f32.mrb[0].mxu0
  %3131 = vmatprep.mubr.bf16.mxu0 0
  %3132 = vmatmul.mubr.bf16.gmra.mrb[0].mxu0 %v3054
  %v3133 = vpop.f32.mrb[0].mxu0
  %v3134 = vadd.f32 %v3045, %v3133
  %v3135 = vpop.f32.mrb[0].mxu0
  %v3136 = vpop.f32.mrb[0].mxu0
  %v3137 = vadd.f32 %v3045, %v3136
  %v3138 = vpop.f32.mrb[0].mxu0
  %3139 = vmatprep.mubr.bf16.mxu0 0
  %3140 = vmatmul.mubr.bf16.gmra.mrb[0].mxu0 %v3057
  %v3141 = vpop.f32.mrb[0].mxu0
  %v3142 = vadd.f32 %v3045, %v3141
  %v3143 = vpop.f32.mrb[0].mxu0
  %v3144 = vpop.f32.mrb[0].mxu0
  %v3145 = vadd.f32 %v3045, %v3144
  %v3146 = vpop.f32.mrb[0].mxu0
  %3147 = vmatprep.mubr.bf16.mxu0 0
  %3148 = vmatmul.mubr.bf16.gmra.mrb[0].mxu0 %v3060
  %v3149 = vpop.f32.mrb[0].mxu0
  %v3150 = vadd.f32 %v3045, %v3149
  %v3151 = vpop.f32.mrb[0].mxu0
  %v3152 = vpop.f32.mrb[0].mxu0
  %v3153 = vadd.f32 %v3045, %v3152
  %v3154 = vpop.f32.mrb[0].mxu0
  %3155 = vmatprep.mubr.bf16.mxu0 0
  %3156 = vmatmul.mubr.bf16.gmra.mrb[0].mxu0 %v3063
  %v3157 = vpop.f32.mrb[0].mxu0
  %v3158 = vadd.f32 %v3045, %v3157
  %v3159 = vpop.f32.mrb[0].mxu0
  %v3160 = vpop.f32.mrb[0].mxu0
  %v3161 = vadd.f32 %v3045, %v3160
  %v3162 = vpop.f32.mrb[0].mxu0
  %3163 = vmatprep.mubr.bf16.mxu0 0
  %3164 = vmatmul.mubr.bf16.gmra.mrb[0].mxu0 %v3066
  %v3165 = vpop.f32.mrb[0].mxu0
  %v3166 = vadd.f32 %v3045, %v3165
  %v3167 = vpop.f32.mrb[0].mxu0
  %v3168 = vpop.f32.mrb[0].mxu0
  %v3169 = vadd.f32 %v3045, %v3168
  %v3170 = vpop.f32.mrb[0].mxu0
  %3171 = vmatprep.mubr.bf16.mxu0 0
  %3172 = vmatmul.mubr.bf16.gmra.mrb[0].mxu0 %v3069
  %v3173 = vpop.f32.mrb[0].mxu0
  %v3174 = vadd.f32 %v3045, %v3173
  %v3175 = vpop.f32.mrb[0].mxu0
  %v3176 = vpop.f32.mrb[0].mxu0
  %v3177 = vadd.f32 %v3045, %v3176
  %v3178 = vpop.f32.mrb[0].mxu0
  %3179 = vmatprep.mubr.bf16.mxu0 0
  %3180 = vmatmul.mubr.bf16.gmra.mrb[0].mxu0 %v3072
  %v3181 = vpop.f32.mrb[0].mxu0
  %v3182 = vadd.f32 %v3045, %v3181
  %v3183 = vpop.f32.mrb[0].mxu0
  %v3184 = vpop.f32.mrb[0].mxu0
  %v3185 = vadd.f32 %v3045, %v3184
  %v3186 = vpop.f32.mrb[0].mxu0
  %3187 = vmatprep.mubr.bf16.mxu0 0
  %3188 = vmatmul.mubr.bf16.gmra.mrb[0].mxu0 %v3075
  %v3189 = vpop.f32.mrb[0].mxu0
  %v3190 = vadd.f32 %v3045, %v3189
  %v3191 = vpop.f32.mrb[0].mxu0
  %v3192 = vpop.f32.mrb[0].mxu0
  %v3193 = vadd.f32 %v3045, %v3192
  %v3194 = vpop.f32.mrb[0].mxu0
  %3195 = vmatprep.mubr.bf16.mxu0 0
  %3196 = vmatmul.mubr.bf16.gmra.mrb[0].mxu0 %v3078
  %v3197 = vpop.f32.mrb[0].mxu0
  %v3198 = vadd.f32 %v3045, %v3197
  %v3199 = vpop.f32.mrb[0].mxu0
  %v3200 = vpop.f32.mrb[0].mxu0
  %v3201 = vadd.f32 %v3045, %v3200
  %v3202 = vpop.f32.mrb[0].mxu0
  %3203 = vmatprep.mubr.bf16.mxu0 0
  %3204 = vmatmul.mubr.bf16.gmra.mrb[0].mxu0 %v3081
  %v3205 = vpop.f32.mrb[0].mxu0
  %v3206 = vadd.f32 %v3045, %v3205
  %v3207 = vpop.f32.mrb[0].mxu0
  %v3208 = vpop.f32.mrb[0].mxu0
  %v3209 = vadd.f32 %v3045, %v3208
  %v3210 = vpop.f32.mrb[0].mxu0
  %3211 = vdwg.mxu0
  %v3212 = vmax.f32 %v3118, 0.0
  %v3213 = vmax.f32 %v3121, 0.0
  %v3214 = vmax.f32 %v3126, 0.0
  %v3215 = vmax.f32 %v3129, 0.0
  %v3216 = vmax.f32 %v3134, 0.0
  %v3217 = vmax.f32 %v3137, 0.0
  %v3218 = vmax.f32 %v3142, 0.0
  %v3219 = vmax.f32 %v3145, 0.0
  %v3220 = vmax.f32 %v3150, 0.0
  %v3221 = vmax.f32 %v3153, 0.0
  %v3222 = vmax.f32 %v3158, 0.0
  %v3223 = vmax.f32 %v3161, 0.0
  %v3224 = vmax.f32 %v3166, 0.0
  %v3225 = vmax.f32 %v3169, 0.0
  %v3226 = vmax.f32 %v3174, 0.0
  %v3227 = vmax.f32 %v3177, 0.0
  %v3228 = vmax.f32 %v3182, 0.0
  %v3229 = vmax.f32 %v3185, 0.0
  %v3230 = vmax.f32 %v3190, 0.0
  %v3231 = vmax.f32 %v3193, 0.0
  %v3232 = vmax.f32 %v3198, 0.0
  %v3233 = vmax.f32 %v3201, 0.0
  %v3234 = vmax.f32 %v3206, 0.0
  %v3235 = vmax.f32 %v3209, 0.0
  %v3236 = vmul.f32 %v3212, %v3212
  %v3237 = vmul.f32 %v3213, %v3213
  %v3238 = vmul.f32 %v3214, %v3214
  %v3239 = vmul.f32 %v3215, %v3215
  %v3240 = vmul.f32 %v3216, %v3216
  %v3241 = vmul.f32 %v3217, %v3217
  %v3242 = vmul.f32 %v3218, %v3218
  %v3243 = vmul.f32 %v3219, %v3219
  %v3244 = vmul.f32 %v3220, %v3220
  %v3245 = vmul.f32 %v3221, %v3221
  %v3246 = vmul.f32 %v3222, %v3222
  %v3247 = vmul.f32 %v3223, %v3223
  %v3248 = vmul.f32 %v3224, %v3224
  %v3249 = vmul.f32 %v3225, %v3225
  %v3250 = vmul.f32 %v3226, %v3226
  %v3251 = vmul.f32 %v3227, %v3227
  %v3252 = vmul.f32 %v3228, %v3228
  %v3253 = vmul.f32 %v3229, %v3229
  %v3254 = vmul.f32 %v3230, %v3230
  %v3255 = vmul.f32 %v3231, %v3231
  %v3256 = vmul.f32 %v3232, %v3232
  %v3257 = vmul.f32 %v3233, %v3233
  %v3258 = vmul.f32 %v3234, %v3234
  %v3259 = vmul.f32 %v3235, %v3235
  %v3260 = vsel %vm203, %v3236, 0.0
  %3261 = vadd.xlane.f32.xlu0 %v3260
  %v3262 = vpop.xlane.xlu0 %3261
  %v3263 = vsel %vm203, %v3237, 0.0
  %3264 = vadd.xlane.f32.xlu0 %v3263
  %v3265 = vpop.xlane.xlu0 %3264
  %v3266 = vsel %vm203, %v3238, 0.0
  %3267 = vadd.xlane.f32.xlu0 %v3266
  %v3268 = vpop.xlane.xlu0 %3267
  %v3269 = vsel %vm203, %v3239, 0.0
  %3270 = vadd.xlane.f32.xlu0 %v3269
  %v3271 = vpop.xlane.xlu0 %3270
  %v3272 = vsel %vm203, %v3240, 0.0
  %3273 = vadd.xlane.f32.xlu0 %v3272
  %v3274 = vpop.xlane.xlu0 %3273
  %v3275 = vsel %vm203, %v3241, 0.0
  %3276 = vadd.xlane.f32.xlu0 %v3275
  %v3277 = vpop.xlane.xlu0 %3276
  %v3278 = vsel %vm203, %v3242, 0.0
  %3279 = vadd.xlane.f32.xlu0 %v3278
  %v3280 = vpop.xlane.xlu0 %3279
  %v3281 = vsel %vm203, %v3243, 0.0
  %3282 = vadd.xlane.f32.xlu0 %v3281
  %v3283 = vpop.xlane.xlu0 %3282
  %v3284 = vsel %vm203, %v3244, 0.0
  %3285 = vadd.xlane.f32.xlu0 %v3284
  %v3286 = vpop.xlane.xlu0 %3285
  %v3287 = vsel %vm203, %v3245, 0.0
  %3288 = vadd.xlane.f32.xlu0 %v3287
  %v3289 = vpop.xlane.xlu0 %3288
  %v3290 = vsel %vm203, %v3246, 0.0
  %3291 = vadd.xlane.f32.xlu0 %v3290
  %v3292 = vpop.xlane.xlu0 %3291
  %v3293 = vsel %vm203, %v3247, 0.0
  %3294 = vadd.xlane.f32.xlu0 %v3293
  %v3295 = vpop.xlane.xlu0 %3294
  %v3296 = vsel %vm203, %v3248, 0.0
  %3297 = vadd.xlane.f32.xlu0 %v3296
  %v3298 = vpop.xlane.xlu0 %3297
  %v3299 = vsel %vm203, %v3249, 0.0
  %3300 = vadd.xlane.f32.xlu0 %v3299
  %v3301 = vpop.xlane.xlu0 %3300
  %v3302 = vsel %vm203, %v3250, 0.0
  %3303 = vadd.xlane.f32.xlu0 %v3302
  %v3304 = vpop.xlane.xlu0 %3303
  %v3305 = vsel %vm203, %v3251, 0.0
  %3306 = vadd.xlane.f32.xlu0 %v3305
  %v3307 = vpop.xlane.xlu0 %3306
  %v3308 = vsel %vm203, %v3252, 0.0
  %3309 = vadd.xlane.f32.xlu0 %v3308
  %v3310 = vpop.xlane.xlu0 %3309
  %v3311 = vsel %vm203, %v3253, 0.0
  %3312 = vadd.xlane.f32.xlu0 %v3311
  %v3313 = vpop.xlane.xlu0 %3312
  %v3314 = vsel %vm203, %v3254, 0.0
  %3315 = vadd.xlane.f32.xlu0 %v3314
  %v3316 = vpop.xlane.xlu0 %3315
  %v3317 = vsel %vm203, %v3255, 0.0
  %3318 = vadd.xlane.f32.xlu0 %v3317
  %v3319 = vpop.xlane.xlu0 %3318
  %v3320 = vsel %vm203, %v3256, 0.0
  %3321 = vadd.xlane.f32.xlu0 %v3320
  %v3322 = vpop.xlane.xlu0 %3321
  %v3323 = vsel %vm203, %v3257, 0.0
  %3324 = vadd.xlane.f32.xlu0 %v3323
  %v3325 = vpop.xlane.xlu0 %3324
  %v3326 = vsel %vm203, %v3258, 0.0
  %3327 = vadd.xlane.f32.xlu0 %v3326
  %v3328 = vpop.xlane.xlu0 %3327
  %v3329 = vsel %vm203, %v3259, 0.0
  %3330 = vadd.xlane.f32.xlu0 %v3329
  %v3331 = vpop.xlane.xlu0 %3330
  %v3332 = vadd.f32 %v3262, 1e-08
  %v3333 = vadd.f32 %v3265, 1e-08
  %v3334 = vadd.f32 %v3268, 1e-08
  %v3335 = vadd.f32 %v3271, 1e-08
  %v3336 = vadd.f32 %v3274, 1e-08
  %v3337 = vadd.f32 %v3277, 1e-08
  %v3338 = vadd.f32 %v3280, 1e-08
  %v3339 = vadd.f32 %v3283, 1e-08
  %v3340 = vadd.f32 %v3286, 1e-08
  %v3341 = vadd.f32 %v3289, 1e-08
  %v3342 = vadd.f32 %v3292, 1e-08
  %v3343 = vadd.f32 %v3295, 1e-08
  %v3344 = vadd.f32 %v3298, 1e-08
  %v3345 = vadd.f32 %v3301, 1e-08
  %v3346 = vadd.f32 %v3304, 1e-08
  %v3347 = vadd.f32 %v3307, 1e-08
  %v3348 = vadd.f32 %v3310, 1e-08
  %v3349 = vadd.f32 %v3313, 1e-08
  %v3350 = vadd.f32 %v3316, 1e-08
  %v3351 = vadd.f32 %v3319, 1e-08
  %v3352 = vadd.f32 %v3322, 1e-08
  %v3353 = vadd.f32 %v3325, 1e-08
  %v3354 = vadd.f32 %v3328, 1e-08
  %v3355 = vadd.f32 %v3331, 1e-08
  %v3356 = vrsqrt.pop %v3332
  %v3357 = vrsqrt.pop %v3333
  %v3358 = vrsqrt.pop %v3334
  %v3359 = vrsqrt.pop %v3335
  %v3360 = vrsqrt.pop %v3336
  %v3361 = vrsqrt.pop %v3337
  %v3362 = vrsqrt.pop %v3338
  %v3363 = vrsqrt.pop %v3339
  %v3364 = vrsqrt.pop %v3340
  %v3365 = vrsqrt.pop %v3341
  %v3366 = vrsqrt.pop %v3342
  %v3367 = vrsqrt.pop %v3343
  %v3368 = vrsqrt.pop %v3344
  %v3369 = vrsqrt.pop %v3345
  %v3370 = vrsqrt.pop %v3346
  %v3371 = vrsqrt.pop %v3347
  %v3372 = vrsqrt.pop %v3348
  %v3373 = vrsqrt.pop %v3349
  %v3374 = vrsqrt.pop %v3350
  %v3375 = vrsqrt.pop %v3351
  %v3376 = vrsqrt.pop %v3352
  %v3377 = vrsqrt.pop %v3353
  %v3378 = vrsqrt.pop %v3354
  %v3379 = vrsqrt.pop %v3355
  %s3380 = sld [smem:[#allocation5 + $0x2]]
  %v3381 = vmul.f32 %v679, %v3356
  %v3382 = vmul.f32 %v686, %v3357
  %v3383 = vmul.f32 %v693, %v3358
  %v3384 = vmul.f32 %v700, %v3359
  %v3385 = vmul.f32 %v707, %v3360
  %v3386 = vmul.f32 %v714, %v3361
  %v3387 = vmul.f32 %v721, %v3362
  %v3388 = vmul.f32 %v728, %v3363
  %v3389 = vmul.f32 %v735, %v3364
  %v3390 = vmul.f32 %v742, %v3365
  %v3391 = vmul.f32 %v749, %v3366
  %v3392 = vmul.f32 %v756, %v3367
  %v3393 = vmul.f32 %v763, %v3368
  %v3394 = vmul.f32 %v770, %v3369
  %v3395 = vmul.f32 %v777, %v3370
  %v3396 = vmul.f32 %v784, %v3371
  %v3397 = vmul.f32 %v791, %v3372
  %v3398 = vmul.f32 %v798, %v3373
  %v3399 = vmul.f32 %v805, %v3374
  %v3400 = vmul.f32 %v812, %v3375
  %v3401 = vmul.f32 %v819, %v3376
  %v3402 = vmul.f32 %v826, %v3377
  %v3403 = vmul.f32 %v833, %v3378
  %v3404 = vmul.f32 %v840, %v3379
  %v3405 = vmul.f32 %v3212, %v3381
  %v3406 = vmul.f32 %v3213, %v3382
  %v3407 = vmul.f32 %v3214, %v3383
  %v3408 = vmul.f32 %v3215, %v3384
  %v3409 = vmul.f32 %v3216, %v3385
  %v3410 = vmul.f32 %v3217, %v3386
  %v3411 = vmul.f32 %v3218, %v3387
  %v3412 = vmul.f32 %v3219, %v3388
  %v3413 = vmul.f32 %v3220, %v3389
  %v3414 = vmul.f32 %v3221, %v3390
  %v3415 = vmul.f32 %v3222, %v3391
  %v3416 = vmul.f32 %v3223, %v3392
  %v3417 = vmul.f32 %v3224, %v3393
  %v3418 = vmul.f32 %v3225, %v3394
  %v3419 = vmul.f32 %v3226, %v3395
  %v3420 = vmul.f32 %v3227, %v3396
  %v3421 = vmul.f32 %v3228, %v3397
  %v3422 = vmul.f32 %v3229, %v3398
  %v3423 = vmul.f32 %v3230, %v3399
  %v3424 = vmul.f32 %v3231, %v3400
  %v3425 = vmul.f32 %v3232, %v3401
  %v3426 = vmul.f32 %v3233, %v3402
  %v3427 = vmul.f32 %v3234, %v3403
  %v3428 = vmul.f32 %v3235, %v3404
  %v3429 = vstv %s3380
  %v3430 = vmul.f32 %v3429, %v3405
  %v3431 = vmul.f32 %v3429, %v3406
  %v3432 = vmul.f32 %v3429, %v3407
  %v3433 = vmul.f32 %v3429, %v3408
  %v3434 = vmul.f32 %v3429, %v3409
  %v3435 = vmul.f32 %v3429, %v3410
  %v3436 = vmul.f32 %v3429, %v3411
  %v3437 = vmul.f32 %v3429, %v3412
  %v3438 = vmul.f32 %v3429, %v3413
  %v3439 = vmul.f32 %v3429, %v3414
  %v3440 = vmul.f32 %v3429, %v3415
  %v3441 = vmul.f32 %v3429, %v3416
  %v3442 = vmul.f32 %v3429, %v3417
  %v3443 = vmul.f32 %v3429, %v3418
  %v3444 = vmul.f32 %v3429, %v3419
  %v3445 = vmul.f32 %v3429, %v3420
  %v3446 = vmul.f32 %v3429, %v3421
  %v3447 = vmul.f32 %v3429, %v3422
  %v3448 = vmul.f32 %v3429, %v3423
  %v3449 = vmul.f32 %v3429, %v3424
  %v3450 = vmul.f32 %v3429, %v3425
  %v3451 = vmul.f32 %v3429, %v3426
  %v3452 = vmul.f32 %v3429, %v3427
  %v3453 = vmul.f32 %v3429, %v3428
  %v3454 = vadd.f32 %v2574, %v3430
  %v3455 = vadd.f32 %v2575, %v3431
  %v3456 = vadd.f32 %v2576, %v3432
  %v3457 = vadd.f32 %v2577, %v3433
  %v3458 = vadd.f32 %v2578, %v3434
  %v3459 = vadd.f32 %v2579, %v3435
  %v3460 = vadd.f32 %v2580, %v3436
  %v3461 = vadd.f32 %v2581, %v3437
  %v3462 = vadd.f32 %v2582, %v3438
  %v3463 = vadd.f32 %v2583, %v3439
  %v3464 = vadd.f32 %v2584, %v3440
  %v3465 = vadd.f32 %v2585, %v3441
  %v3466 = vadd.f32 %v2586, %v3442
  %v3467 = vadd.f32 %v2587, %v3443
  %v3468 = vadd.f32 %v2588, %v3444
  %v3469 = vadd.f32 %v2589, %v3445
  %v3470 = vadd.f32 %v2590, %v3446
  %v3471 = vadd.f32 %v2591, %v3447
  %v3472 = vadd.f32 %v2592, %v3448
  %v3473 = vadd.f32 %v2593, %v3449
  %v3474 = vadd.f32 %v2594, %v3450
  %v3475 = vadd.f32 %v2595, %v3451
  %v3476 = vadd.f32 %v2596, %v3452
  %v3477 = vadd.f32 %v2597, %v3453
  %s3478 = scalar_lea.vmem %s2, 288
  %v3479 = vld [vmem:[%s3478] sm:$0xf]
  %v3480 = vld [vmem:[%s3478 + $0x4] sm:$0xf]
  %v3481 = vld [vmem:[%s3478 + $0x8] sm:$0xf]
  %v3482 = vld [vmem:[%s3478 + $0xc] sm:$0xf]
  %v3483 = vld [vmem:[%s3478 + $0x10] sm:$0xf]
  %v3484 = vld [vmem:[%s3478 + $0x14] sm:$0xf]
  %v3485 = vld [vmem:[%s3478 + $0x18] sm:$0xf]
  %v3486 = vld [vmem:[%s3478 + $0x1c] sm:$0xf]
  %v3487 = vld [vmem:[%s3478 + $0x20] sm:$0xf]
  %v3488 = vld [vmem:[%s3478 + $0x24] sm:$0xf]
  %v3489 = vld [vmem:[%s3478 + $0x28] sm:$0xf]
  %v3490 = vld [vmem:[%s3478 + $0x2c] sm:$0xf]
  %v3491 = vld [vmem:[%s3478 + $0x30] sm:$0xf]
  %v3492 = vld [vmem:[%s3478 + $0x34] sm:$0xf]
  %v3493 = vld [vmem:[%s3478 + $0x38] sm:$0xf]
  %v3494 = vld [vmem:[%s3478 + $0x3c] sm:$0xf]
  %v3495 = vld [vmem:[%s3478 + $0x40] sm:$0xf]
  %v3496 = vld [vmem:[%s3478 + $0x44] sm:$0xf]
  %v3497 = vld [vmem:[%s3478 + $0x48] sm:$0xf]
  %v3498 = vld [vmem:[%s3478 + $0x4c] sm:$0xf]
  %v3499 = vld [vmem:[%s3478 + $0x50] sm:$0xf]
  %v3500 = vld [vmem:[%s3478 + $0x54] sm:$0xf]
  %v3501 = vld [vmem:[%s3478 + $0x58] sm:$0xf]
  %v3502 = vld [vmem:[%s3478 + $0x5c] sm:$0xf]
  %v3503 = vunpack.c.l.bf16 %v3479
  %v3504 = vunpack.c.l.bf16 %v3480
  %v3505 = vunpack.c.l.bf16 %v3481
  %v3506 = vunpack.c.l.bf16 %v3482
  %v3507 = vunpack.c.l.bf16 %v3483
  %v3508 = vunpack.c.l.bf16 %v3484
  %v3509 = vunpack.c.l.bf16 %v3485
  %v3510 = vunpack.c.l.bf16 %v3486
  %v3511 = vunpack.c.l.bf16 %v3487
  %v3512 = vunpack.c.l.bf16 %v3488
  %v3513 = vunpack.c.l.bf16 %v3489
  %v3514 = vunpack.c.l.bf16 %v3490
  %v3515 = vunpack.c.l.bf16 %v3491
  %v3516 = vunpack.c.l.bf16 %v3492
  %v3517 = vunpack.c.l.bf16 %v3493
  %v3518 = vunpack.c.l.bf16 %v3494
  %v3519 = vunpack.c.l.bf16 %v3495
  %v3520 = vunpack.c.l.bf16 %v3496
  %v3521 = vunpack.c.l.bf16 %v3497
  %v3522 = vunpack.c.l.bf16 %v3498
  %v3523 = vunpack.c.l.bf16 %v3499
  %v3524 = vunpack.c.l.bf16 %v3500
  %v3525 = vunpack.c.l.bf16 %v3501
  %v3526 = vunpack.c.l.bf16 %v3502
  %s3527 = scalar_lea.vmem %s6, 3
  %v3528 = vld [vmem:[%s3527] sm:$0x1]
  %s3529 = scalar_lea.vmem %s7, 3
  %v3530 = vld [vmem:[%s3529] sm:$0x1]
  %v3531 = vsel %vm891, %v3503, 0.0
  %3532 = vadd.xlane.f32.xlu0 %v3531
  %v3533 = vpop.xlane.xlu0 %3532
  %v3534 = vsel %vm891, %v3504, 0.0
  %3535 = vadd.xlane.f32.xlu0 %v3534
  %v3536 = vpop.xlane.xlu0 %3535
  %v3537 = vsel %vm891, %v3505, 0.0
  %3538 = vadd.xlane.f32.xlu0 %v3537
  %v3539 = vpop.xlane.xlu0 %3538
  %v3540 = vsel %vm891, %v3506, 0.0
  %3541 = vadd.xlane.f32.xlu0 %v3540
  %v3542 = vpop.xlane.xlu0 %3541
  %v3543 = vsel %vm891, %v3507, 0.0
  %3544 = vadd.xlane.f32.xlu0 %v3543
  %v3545 = vpop.xlane.xlu0 %3544
  %v3546 = vsel %vm891, %v3508, 0.0
  %3547 = vadd.xlane.f32.xlu0 %v3546
  %v3548 = vpop.xlane.xlu0 %3547
  %v3549 = vsel %vm891, %v3509, 0.0
  %3550 = vadd.xlane.f32.xlu0 %v3549
  %v3551 = vpop.xlane.xlu0 %3550
  %v3552 = vsel %vm891, %v3510, 0.0
  %3553 = vadd.xlane.f32.xlu0 %v3552
  %v3554 = vpop.xlane.xlu0 %3553
  %v3555 = vsel %vm891, %v3511, 0.0
  %3556 = vadd.xlane.f32.xlu0 %v3555
  %v3557 = vpop.xlane.xlu0 %3556
  %v3558 = vsel %vm891, %v3512, 0.0
  %3559 = vadd.xlane.f32.xlu0 %v3558
  %v3560 = vpop.xlane.xlu0 %3559
  %v3561 = vsel %vm891, %v3513, 0.0
  %3562 = vadd.xlane.f32.xlu0 %v3561
  %v3563 = vpop.xlane.xlu0 %3562
  %v3564 = vsel %vm891, %v3514, 0.0
  %3565 = vadd.xlane.f32.xlu0 %v3564
  %v3566 = vpop.xlane.xlu0 %3565
  %v3567 = vsel %vm891, %v3515, 0.0
  %3568 = vadd.xlane.f32.xlu0 %v3567
  %v3569 = vpop.xlane.xlu0 %3568
  %v3570 = vsel %vm891, %v3516, 0.0
  %3571 = vadd.xlane.f32.xlu0 %v3570
  %v3572 = vpop.xlane.xlu0 %3571
  %v3573 = vsel %vm891, %v3517, 0.0
  %3574 = vadd.xlane.f32.xlu0 %v3573
  %v3575 = vpop.xlane.xlu0 %3574
  %v3576 = vsel %vm891, %v3518, 0.0
  %3577 = vadd.xlane.f32.xlu0 %v3576
  %v3578 = vpop.xlane.xlu0 %3577
  %v3579 = vsel %vm891, %v3519, 0.0
  %3580 = vadd.xlane.f32.xlu0 %v3579
  %v3581 = vpop.xlane.xlu0 %3580
  %v3582 = vsel %vm891, %v3520, 0.0
  %3583 = vadd.xlane.f32.xlu0 %v3582
  %v3584 = vpop.xlane.xlu0 %3583
  %v3585 = vsel %vm891, %v3521, 0.0
  %3586 = vadd.xlane.f32.xlu0 %v3585
  %v3587 = vpop.xlane.xlu0 %3586
  %v3588 = vsel %vm891, %v3522, 0.0
  %3589 = vadd.xlane.f32.xlu0 %v3588
  %v3590 = vpop.xlane.xlu0 %3589
  %v3591 = vsel %vm891, %v3523, 0.0
  %3592 = vadd.xlane.f32.xlu0 %v3591
  %v3593 = vpop.xlane.xlu0 %3592
  %v3594 = vsel %vm891, %v3524, 0.0
  %3595 = vadd.xlane.f32.xlu0 %v3594
  %v3596 = vpop.xlane.xlu0 %3595
  %v3597 = vsel %vm891, %v3525, 0.0
  %3598 = vadd.xlane.f32.xlu0 %v3597
  %v3599 = vpop.xlane.xlu0 %3598
  %v3600 = vsel %vm891, %v3526, 0.0
  %3601 = vadd.xlane.f32.xlu0 %v3600
  %v3602 = vpop.xlane.xlu0 %3601
  %v3603 = vmul.f32 %v3533, %v964
  %v3604 = vmul.f32 %v3536, %v964
  %v3605 = vmul.f32 %v3539, %v964
  %v3606 = vmul.f32 %v3542, %v964
  %v3607 = vmul.f32 %v3545, %v964
  %v3608 = vmul.f32 %v3548, %v964
  %v3609 = vmul.f32 %v3551, %v964
  %v3610 = vmul.f32 %v3554, %v964
  %v3611 = vmul.f32 %v3557, %v964
  %v3612 = vmul.f32 %v3560, %v964
  %v3613 = vmul.f32 %v3563, %v964
  %v3614 = vmul.f32 %v3566, %v964
  %v3615 = vmul.f32 %v3569, %v964
  %v3616 = vmul.f32 %v3572, %v964
  %v3617 = vmul.f32 %v3575, %v964
  %v3618 = vmul.f32 %v3578, %v964
  %v3619 = vmul.f32 %v3581, %v964
  %v3620 = vmul.f32 %v3584, %v964
  %v3621 = vmul.f32 %v3587, %v964
  %v3622 = vmul.f32 %v3590, %v964
  %v3623 = vmul.f32 %v3593, %v964
  %v3624 = vmul.f32 %v3596, %v964
  %v3625 = vmul.f32 %v3599, %v964
  %v3626 = vmul.f32 %v3602, %v964
  %v3627 = vsub.f32 %v3503, %v3603
  %v3628 = vsub.f32 %v3504, %v3604
  %v3629 = vsub.f32 %v3505, %v3605
  %v3630 = vsub.f32 %v3506, %v3606
  %v3631 = vsub.f32 %v3507, %v3607
  %v3632 = vsub.f32 %v3508, %v3608
  %v3633 = vsub.f32 %v3509, %v3609
  %v3634 = vsub.f32 %v3510, %v3610
  %v3635 = vsub.f32 %v3511, %v3611
  %v3636 = vsub.f32 %v3512, %v3612
  %v3637 = vsub.f32 %v3513, %v3613
  %v3638 = vsub.f32 %v3514, %v3614
  %v3639 = vsub.f32 %v3515, %v3615
  %v3640 = vsub.f32 %v3516, %v3616
  %v3641 = vsub.f32 %v3517, %v3617
  %v3642 = vsub.f32 %v3518, %v3618
  %v3643 = vsub.f32 %v3519, %v3619
  %v3644 = vsub.f32 %v3520, %v3620
  %v3645 = vsub.f32 %v3521, %v3621
  %v3646 = vsub.f32 %v3522, %v3622
  %v3647 = vsub.f32 %v3523, %v3623
  %v3648 = vsub.f32 %v3524, %v3624
  %v3649 = vsub.f32 %v3525, %v3625
  %v3650 = vsub.f32 %v3526, %v3626
  %v3651 = vmul.f32 %v3627, %v3627
  %v3652 = vmul.f32 %v3628, %v3628
  %v3653 = vmul.f32 %v3629, %v3629
  %v3654 = vmul.f32 %v3630, %v3630
  %v3655 = vmul.f32 %v3631, %v3631
  %v3656 = vmul.f32 %v3632, %v3632
  %v3657 = vmul.f32 %v3633, %v3633
  %v3658 = vmul.f32 %v3634, %v3634
  %v3659 = vmul.f32 %v3635, %v3635
  %v3660 = vmul.f32 %v3636, %v3636
  %v3661 = vmul.f32 %v3637, %v3637
  %v3662 = vmul.f32 %v3638, %v3638
  %v3663 = vmul.f32 %v3639, %v3639
  %v3664 = vmul.f32 %v3640, %v3640
  %v3665 = vmul.f32 %v3641, %v3641
  %v3666 = vmul.f32 %v3642, %v3642
  %v3667 = vmul.f32 %v3643, %v3643
  %v3668 = vmul.f32 %v3644, %v3644
  %v3669 = vmul.f32 %v3645, %v3645
  %v3670 = vmul.f32 %v3646, %v3646
  %v3671 = vmul.f32 %v3647, %v3647
  %v3672 = vmul.f32 %v3648, %v3648
  %v3673 = vmul.f32 %v3649, %v3649
  %v3674 = vmul.f32 %v3650, %v3650
  %v3675 = vsel %vm891, %v3651, 0.0
  %3676 = vadd.xlane.f32.xlu0 %v3675
  %v3677 = vpop.xlane.xlu0 %3676
  %v3678 = vsel %vm891, %v3652, 0.0
  %3679 = vadd.xlane.f32.xlu0 %v3678
  %v3680 = vpop.xlane.xlu0 %3679
  %v3681 = vsel %vm891, %v3653, 0.0
  %3682 = vadd.xlane.f32.xlu0 %v3681
  %v3683 = vpop.xlane.xlu0 %3682
  %v3684 = vsel %vm891, %v3654, 0.0
  %3685 = vadd.xlane.f32.xlu0 %v3684
  %v3686 = vpop.xlane.xlu0 %3685
  %v3687 = vsel %vm891, %v3655, 0.0
  %3688 = vadd.xlane.f32.xlu0 %v3687
  %v3689 = vpop.xlane.xlu0 %3688
  %v3690 = vsel %vm891, %v3656, 0.0
  %3691 = vadd.xlane.f32.xlu0 %v3690
  %v3692 = vpop.xlane.xlu0 %3691
  %v3693 = vsel %vm891, %v3657, 0.0
  %3694 = vadd.xlane.f32.xlu0 %v3693
  %v3695 = vpop.xlane.xlu0 %3694
  %v3696 = vsel %vm891, %v3658, 0.0
  %3697 = vadd.xlane.f32.xlu0 %v3696
  %v3698 = vpop.xlane.xlu0 %3697
  %v3699 = vsel %vm891, %v3659, 0.0
  %3700 = vadd.xlane.f32.xlu0 %v3699
  %v3701 = vpop.xlane.xlu0 %3700
  %v3702 = vsel %vm891, %v3660, 0.0
  %3703 = vadd.xlane.f32.xlu0 %v3702
  %v3704 = vpop.xlane.xlu0 %3703
  %v3705 = vsel %vm891, %v3661, 0.0
  %3706 = vadd.xlane.f32.xlu0 %v3705
  %v3707 = vpop.xlane.xlu0 %3706
  %v3708 = vsel %vm891, %v3662, 0.0
  %3709 = vadd.xlane.f32.xlu0 %v3708
  %v3710 = vpop.xlane.xlu0 %3709
  %v3711 = vsel %vm891, %v3663, 0.0
  %3712 = vadd.xlane.f32.xlu0 %v3711
  %v3713 = vpop.xlane.xlu0 %3712
  %v3714 = vsel %vm891, %v3664, 0.0
  %3715 = vadd.xlane.f32.xlu0 %v3714
  %v3716 = vpop.xlane.xlu0 %3715
  %v3717 = vsel %vm891, %v3665, 0.0
  %3718 = vadd.xlane.f32.xlu0 %v3717
  %v3719 = vpop.xlane.xlu0 %3718
  %v3720 = vsel %vm891, %v3666, 0.0
  %3721 = vadd.xlane.f32.xlu0 %v3720
  %v3722 = vpop.xlane.xlu0 %3721
  %v3723 = vsel %vm891, %v3667, 0.0
  %3724 = vadd.xlane.f32.xlu0 %v3723
  %v3725 = vpop.xlane.xlu0 %3724
  %v3726 = vsel %vm891, %v3668, 0.0
  %3727 = vadd.xlane.f32.xlu0 %v3726
  %v3728 = vpop.xlane.xlu0 %3727
  %v3729 = vsel %vm891, %v3669, 0.0
  %3730 = vadd.xlane.f32.xlu0 %v3729
  %v3731 = vpop.xlane.xlu0 %3730
  %v3732 = vsel %vm891, %v3670, 0.0
  %3733 = vadd.xlane.f32.xlu0 %v3732
  %v3734 = vpop.xlane.xlu0 %3733
  %v3735 = vsel %vm891, %v3671, 0.0
  %3736 = vadd.xlane.f32.xlu0 %v3735
  %v3737 = vpop.xlane.xlu0 %3736
  %v3738 = vsel %vm891, %v3672, 0.0
  %3739 = vadd.xlane.f32.xlu0 %v3738
  %v3740 = vpop.xlane.xlu0 %3739
  %v3741 = vsel %vm891, %v3673, 0.0
  %3742 = vadd.xlane.f32.xlu0 %v3741
  %v3743 = vpop.xlane.xlu0 %3742
  %v3744 = vsel %vm891, %v3674, 0.0
  %3745 = vadd.xlane.f32.xlu0 %v3744
  %v3746 = vpop.xlane.xlu0 %3745
  %v3747 = vmul.f32 %v3677, %v964
  %v3748 = vmul.f32 %v3680, %v964
  %v3749 = vmul.f32 %v3683, %v964
  %v3750 = vmul.f32 %v3686, %v964
  %v3751 = vmul.f32 %v3689, %v964
  %v3752 = vmul.f32 %v3692, %v964
  %v3753 = vmul.f32 %v3695, %v964
  %v3754 = vmul.f32 %v3698, %v964
  %v3755 = vmul.f32 %v3701, %v964
  %v3756 = vmul.f32 %v3704, %v964
  %v3757 = vmul.f32 %v3707, %v964
  %v3758 = vmul.f32 %v3710, %v964
  %v3759 = vmul.f32 %v3713, %v964
  %v3760 = vmul.f32 %v3716, %v964
  %v3761 = vmul.f32 %v3719, %v964
  %v3762 = vmul.f32 %v3722, %v964
  %v3763 = vmul.f32 %v3725, %v964
  %v3764 = vmul.f32 %v3728, %v964
  %v3765 = vmul.f32 %v3731, %v964
  %v3766 = vmul.f32 %v3734, %v964
  %v3767 = vmul.f32 %v3737, %v964
  %v3768 = vmul.f32 %v3740, %v964
  %v3769 = vmul.f32 %v3743, %v964
  %v3770 = vmul.f32 %v3746, %v964
  %v3771 = vadd.f32 %v3747, 1e-05
  %v3772 = vadd.f32 %v3748, 1e-05
  %v3773 = vadd.f32 %v3749, 1e-05
  %v3774 = vadd.f32 %v3750, 1e-05
  %v3775 = vadd.f32 %v3751, 1e-05
  %v3776 = vadd.f32 %v3752, 1e-05
  %v3777 = vadd.f32 %v3753, 1e-05
  %v3778 = vadd.f32 %v3754, 1e-05
  %v3779 = vadd.f32 %v3755, 1e-05
  %v3780 = vadd.f32 %v3756, 1e-05
  %v3781 = vadd.f32 %v3757, 1e-05
  %v3782 = vadd.f32 %v3758, 1e-05
  %v3783 = vadd.f32 %v3759, 1e-05
  %v3784 = vadd.f32 %v3760, 1e-05
  %v3785 = vadd.f32 %v3761, 1e-05
  %v3786 = vadd.f32 %v3762, 1e-05
  %v3787 = vadd.f32 %v3763, 1e-05
  %v3788 = vadd.f32 %v3764, 1e-05
  %v3789 = vadd.f32 %v3765, 1e-05
  %v3790 = vadd.f32 %v3766, 1e-05
  %v3791 = vadd.f32 %v3767, 1e-05
  %v3792 = vadd.f32 %v3768, 1e-05
  %v3793 = vadd.f32 %v3769, 1e-05
  %v3794 = vadd.f32 %v3770, 1e-05
  %v3795 = vrsqrt.pop %v3771
  %v3796 = vrsqrt.pop %v3772
  %v3797 = vrsqrt.pop %v3773
  %v3798 = vrsqrt.pop %v3774
  %v3799 = vrsqrt.pop %v3775
  %v3800 = vrsqrt.pop %v3776
  %v3801 = vrsqrt.pop %v3777
  %v3802 = vrsqrt.pop %v3778
  %v3803 = vrsqrt.pop %v3779
  %v3804 = vrsqrt.pop %v3780
  %v3805 = vrsqrt.pop %v3781
  %v3806 = vrsqrt.pop %v3782
  %v3807 = vrsqrt.pop %v3783
  %v3808 = vrsqrt.pop %v3784
  %v3809 = vrsqrt.pop %v3785
  %v3810 = vrsqrt.pop %v3786
  %v3811 = vrsqrt.pop %v3787
  %v3812 = vrsqrt.pop %v3788
  %v3813 = vrsqrt.pop %v3789
  %v3814 = vrsqrt.pop %v3790
  %v3815 = vrsqrt.pop %v3791
  %v3816 = vrsqrt.pop %v3792
  %v3817 = vrsqrt.pop %v3793
  %v3818 = vrsqrt.pop %v3794
  %v3819 = vmul.f32 %v3627, %v3795
  %v3820 = vmul.f32 %v3628, %v3796
  %v3821 = vmul.f32 %v3629, %v3797
  %v3822 = vmul.f32 %v3630, %v3798
  %v3823 = vmul.f32 %v3631, %v3799
  %v3824 = vmul.f32 %v3632, %v3800
  %v3825 = vmul.f32 %v3633, %v3801
  %v3826 = vmul.f32 %v3634, %v3802
  %v3827 = vmul.f32 %v3635, %v3803
  %v3828 = vmul.f32 %v3636, %v3804
  %v3829 = vmul.f32 %v3637, %v3805
  %v3830 = vmul.f32 %v3638, %v3806
  %v3831 = vmul.f32 %v3639, %v3807
  %v3832 = vmul.f32 %v3640, %v3808
  %v3833 = vmul.f32 %v3641, %v3809
  %v3834 = vmul.f32 %v3642, %v3810
  %v3835 = vmul.f32 %v3643, %v3811
  %v3836 = vmul.f32 %v3644, %v3812
  %v3837 = vmul.f32 %v3645, %v3813
  %v3838 = vmul.f32 %v3646, %v3814
  %v3839 = vmul.f32 %v3647, %v3815
  %v3840 = vmul.f32 %v3648, %v3816
  %v3841 = vmul.f32 %v3649, %v3817
  %v3842 = vmul.f32 %v3650, %v3818
  %v3844 = vlaneseq
  %v3845 = vshrl.u32 %v3844, 7
  %v3846 = vsub.s32 0, %v3845
  %v3847 = vrot.slane %v3528, %v3846
  %v3849 = vmul.f32 %v3819, %v3847
  %v3850 = vmul.f32 %v3820, %v3847
  %v3851 = vmul.f32 %v3821, %v3847
  %v3852 = vmul.f32 %v3822, %v3847
  %v3853 = vmul.f32 %v3823, %v3847
  %v3854 = vmul.f32 %v3824, %v3847
  %v3855 = vmul.f32 %v3825, %v3847
  %v3856 = vmul.f32 %v3826, %v3847
  %v3857 = vmul.f32 %v3827, %v3847
  %v3858 = vmul.f32 %v3828, %v3847
  %v3859 = vmul.f32 %v3829, %v3847
  %v3860 = vmul.f32 %v3830, %v3847
  %v3861 = vmul.f32 %v3831, %v3847
  %v3862 = vmul.f32 %v3832, %v3847
  %v3863 = vmul.f32 %v3833, %v3847
  %v3864 = vmul.f32 %v3834, %v3847
  %v3865 = vmul.f32 %v3835, %v3847
  %v3866 = vmul.f32 %v3836, %v3847
  %v3867 = vmul.f32 %v3837, %v3847
  %v3868 = vmul.f32 %v3838, %v3847
  %v3869 = vmul.f32 %v3839, %v3847
  %v3870 = vmul.f32 %v3840, %v3847
  %v3871 = vmul.f32 %v3841, %v3847
  %v3872 = vmul.f32 %v3842, %v3847
  %v3874 = vlaneseq
  %v3875 = vshrl.u32 %v3874, 7
  %v3876 = vsub.s32 0, %v3875
  %v3877 = vrot.slane %v3530, %v3876
  %v3879 = vadd.f32 %v3849, %v3877
  %v3880 = vadd.f32 %v3850, %v3877
  %v3881 = vadd.f32 %v3851, %v3877
  %v3882 = vadd.f32 %v3852, %v3877
  %v3883 = vadd.f32 %v3853, %v3877
  %v3884 = vadd.f32 %v3854, %v3877
  %v3885 = vadd.f32 %v3855, %v3877
  %v3886 = vadd.f32 %v3856, %v3877
  %v3887 = vadd.f32 %v3857, %v3877
  %v3888 = vadd.f32 %v3858, %v3877
  %v3889 = vadd.f32 %v3859, %v3877
  %v3890 = vadd.f32 %v3860, %v3877
  %v3891 = vadd.f32 %v3861, %v3877
  %v3892 = vadd.f32 %v3862, %v3877
  %v3893 = vadd.f32 %v3863, %v3877
  %v3894 = vadd.f32 %v3864, %v3877
  %v3895 = vadd.f32 %v3865, %v3877
  %v3896 = vadd.f32 %v3866, %v3877
  %v3897 = vadd.f32 %v3867, %v3877
  %v3898 = vadd.f32 %v3868, %v3877
  %v3899 = vadd.f32 %v3869, %v3877
  %v3900 = vadd.f32 %v3870, %v3877
  %v3901 = vadd.f32 %v3871, %v3877
  %v3902 = vadd.f32 %v3872, %v3877
  %v3903 = vpack.c.bf16 %v3880, %v3879
  %v3904 = vpack.c.bf16 %v3882, %v3881
  %v3905 = vpack.c.bf16 %v3884, %v3883
  %v3906 = vpack.c.bf16 %v3886, %v3885
  %v3907 = vpack.c.bf16 %v3888, %v3887
  %v3908 = vpack.c.bf16 %v3890, %v3889
  %v3909 = vpack.c.bf16 %v3892, %v3891
  %v3910 = vpack.c.bf16 %v3894, %v3893
  %v3911 = vpack.c.bf16 %v3896, %v3895
  %v3912 = vpack.c.bf16 %v3898, %v3897
  %v3913 = vpack.c.bf16 %v3900, %v3899
  %v3914 = vpack.c.bf16 %v3902, %v3901
  %s3915 = scalar_lea.vmem [#allocation2], 72
  %v3916 = vld [vmem:[%s3915] sm:$0xff]
  %v3917 = vld [vmem:[%s3915 + $0x8] sm:$0xff]
  %v3918 = vld [vmem:[%s3915 + $0x10] sm:$0xff]
  %s3919 = scalar_lea.vmem %s8, 3
  %v3920 = vld [vmem:[%s3919] sm:$0x1]
  %v3922 = vlaneseq
  %v3923 = vshrl.u32 %v3922, 7
  %v3924 = vsub.s32 0, %v3923
  %v3925 = vrot.slane %v3920, %v3924
  %v3928 = vsel %vm891, %v3903, 0
  %v3931 = vsel %vm891, %v3904, 0
  %v3934 = vsel %vm891, %v3905, 0
  %v3937 = vsel %vm891, %v3906, 0
  %v3940 = vsel %vm891, %v3907, 0
  %v3943 = vsel %vm891, %v3908, 0
  %v3946 = vsel %vm891, %v3909, 0
  %v3949 = vsel %vm891, %v3910, 0
  %v3952 = vsel %vm891, %v3911, 0
  %v3955 = vsel %vm891, %v3912, 0
  %v3958 = vsel %vm891, %v3913, 0
  %v3961 = vsel %vm891, %v3914, 0
  %3963 = vmatprep.subr.bf16.mxu0 0
  %3964 = vmatpush1.bf16.msra.mxu0 %v3916
  %3965 = vmatprep.subr.bf16.mxu0 0
  %3966 = vmatpush1.bf16.msra.mxu0 %v3917
  %3967 = vmatprep.subr.bf16.mxu0 0
  %3968 = vmatpush1.bf16.msra.mxu0 %v3918
  %3969 = vmatprep.subr.bf16.mxu0 0
  %3970 = vmatpush1.bf16.msra.mxu0 0
  %3971 = vmatprep.subr.bf16.mxu0 0
  %3972 = vmatpush1.bf16.msra.mxu0 0
  %3973 = vmatprep.subr.bf16.mxu0 0
  %3974 = vmatpush1.bf16.msra.mxu0 0
  %3975 = vmatprep.subr.bf16.mxu0 0
  %3976 = vmatpush1.bf16.msra.mxu0 0
  %3977 = vmatprep.subr.bf16.mxu0 0
  %3978 = vmatpush1.bf16.msra.mxu0 0
  %3979 = vmatprep.subr.bf16.mxu0 0
  %3980 = vmatpush1.bf16.msra.mxu0 0
  %3981 = vmatprep.subr.bf16.mxu0 0
  %3982 = vmatpush1.bf16.msra.mxu0 0
  %3983 = vmatprep.subr.bf16.mxu0 0
  %3984 = vmatpush1.bf16.msra.mxu0 0
  %3985 = vmatprep.subr.bf16.mxu0 0
  %3986 = vmatpush1.bf16.msra.mxu0 0
  %3987 = vmatprep.subr.bf16.mxu0 0
  %3988 = vmatpush1.bf16.msra.mxu0 0
  %3989 = vmatprep.subr.bf16.mxu0 0
  %3990 = vmatpush1.bf16.msra.mxu0 0
  %3991 = vmatprep.subr.bf16.mxu0 0
  %3992 = vmatpush1.bf16.msra.mxu0 0
  %3993 = vmatprep.subr.bf16.mxu0 0
  %3994 = vmatpush1.bf16.msra.mxu0 0
  %3995 = vmatprep.mubr.bf16.mxu0 0
  %3996 = vmatmul.mubr.bf16.gmra.mrb[0].mxu0 %v3928
  %v3997 = vpop.f32.mrb[0].mxu0
  %v3998 = vadd.f32 %v3925, %v3997
  %v3999 = vpop.f32.mrb[0].mxu0
  %v4000 = vpop.f32.mrb[0].mxu0
  %v4001 = vadd.f32 %v3925, %v4000
  %v4002 = vpop.f32.mrb[0].mxu0
  %4003 = vmatprep.mubr.bf16.mxu0 0
  %4004 = vmatmul.mubr.bf16.gmra.mrb[0].mxu0 %v3931
  %v4005 = vpop.f32.mrb[0].mxu0
  %v4006 = vadd.f32 %v3925, %v4005
  %v4007 = vpop.f32.mrb[0].mxu0
  %v4008 = vpop.f32.mrb[0].mxu0
  %v4009 = vadd.f32 %v3925, %v4008
  %v4010 = vpop.f32.mrb[0].mxu0
  %4011 = vmatprep.mubr.bf16.mxu0 0
  %4012 = vmatmul.mubr.bf16.gmra.mrb[0].mxu0 %v3934
  %v4013 = vpop.f32.mrb[0].mxu0
  %v4014 = vadd.f32 %v3925, %v4013
  %v4015 = vpop.f32.mrb[0].mxu0
  %v4016 = vpop.f32.mrb[0].mxu0
  %v4017 = vadd.f32 %v3925, %v4016
  %v4018 = vpop.f32.mrb[0].mxu0
  %4019 = vmatprep.mubr.bf16.mxu0 0
  %4020 = vmatmul.mubr.bf16.gmra.mrb[0].mxu0 %v3937
  %v4021 = vpop.f32.mrb[0].mxu0
  %v4022 = vadd.f32 %v3925, %v4021
  %v4023 = vpop.f32.mrb[0].mxu0
  %v4024 = vpop.f32.mrb[0].mxu0
  %v4025 = vadd.f32 %v3925, %v4024
  %v4026 = vpop.f32.mrb[0].mxu0
  %4027 = vmatprep.mubr.bf16.mxu0 0
  %4028 = vmatmul.mubr.bf16.gmra.mrb[0].mxu0 %v3940
  %v4029 = vpop.f32.mrb[0].mxu0
  %v4030 = vadd.f32 %v3925, %v4029
  %v4031 = vpop.f32.mrb[0].mxu0
  %v4032 = vpop.f32.mrb[0].mxu0
  %v4033 = vadd.f32 %v3925, %v4032
  %v4034 = vpop.f32.mrb[0].mxu0
  %4035 = vmatprep.mubr.bf16.mxu0 0
  %4036 = vmatmul.mubr.bf16.gmra.mrb[0].mxu0 %v3943
  %v4037 = vpop.f32.mrb[0].mxu0
  %v4038 = vadd.f32 %v3925, %v4037
  %v4039 = vpop.f32.mrb[0].mxu0
  %v4040 = vpop.f32.mrb[0].mxu0
  %v4041 = vadd.f32 %v3925, %v4040
  %v4042 = vpop.f32.mrb[0].mxu0
  %4043 = vmatprep.mubr.bf16.mxu0 0
  %4044 = vmatmul.mubr.bf16.gmra.mrb[0].mxu0 %v3946
  %v4045 = vpop.f32.mrb[0].mxu0
  %v4046 = vadd.f32 %v3925, %v4045
  %v4047 = vpop.f32.mrb[0].mxu0
  %v4048 = vpop.f32.mrb[0].mxu0
  %v4049 = vadd.f32 %v3925, %v4048
  %v4050 = vpop.f32.mrb[0].mxu0
  %4051 = vmatprep.mubr.bf16.mxu0 0
  %4052 = vmatmul.mubr.bf16.gmra.mrb[0].mxu0 %v3949
  %v4053 = vpop.f32.mrb[0].mxu0
  %v4054 = vadd.f32 %v3925, %v4053
  %v4055 = vpop.f32.mrb[0].mxu0
  %v4056 = vpop.f32.mrb[0].mxu0
  %v4057 = vadd.f32 %v3925, %v4056
  %v4058 = vpop.f32.mrb[0].mxu0
  %4059 = vmatprep.mubr.bf16.mxu0 0
  %4060 = vmatmul.mubr.bf16.gmra.mrb[0].mxu0 %v3952
  %v4061 = vpop.f32.mrb[0].mxu0
  %v4062 = vadd.f32 %v3925, %v4061
  %v4063 = vpop.f32.mrb[0].mxu0
  %v4064 = vpop.f32.mrb[0].mxu0
  %v4065 = vadd.f32 %v3925, %v4064
  %v4066 = vpop.f32.mrb[0].mxu0
  %4067 = vmatprep.mubr.bf16.mxu0 0
  %4068 = vmatmul.mubr.bf16.gmra.mrb[0].mxu0 %v3955
  %v4069 = vpop.f32.mrb[0].mxu0
  %v4070 = vadd.f32 %v3925, %v4069
  %v4071 = vpop.f32.mrb[0].mxu0
  %v4072 = vpop.f32.mrb[0].mxu0
  %v4073 = vadd.f32 %v3925, %v4072
  %v4074 = vpop.f32.mrb[0].mxu0
  %4075 = vmatprep.mubr.bf16.mxu0 0
  %4076 = vmatmul.mubr.bf16.gmra.mrb[0].mxu0 %v3958
  %v4077 = vpop.f32.mrb[0].mxu0
  %v4078 = vadd.f32 %v3925, %v4077
  %v4079 = vpop.f32.mrb[0].mxu0
  %v4080 = vpop.f32.mrb[0].mxu0
  %v4081 = vadd.f32 %v3925, %v4080
  %v4082 = vpop.f32.mrb[0].mxu0
  %4083 = vmatprep.mubr.bf16.mxu0 0
  %4084 = vmatmul.mubr.bf16.gmra.mrb[0].mxu0 %v3961
  %v4085 = vpop.f32.mrb[0].mxu0
  %v4086 = vadd.f32 %v3925, %v4085
  %v4087 = vpop.f32.mrb[0].mxu0
  %v4088 = vpop.f32.mrb[0].mxu0
  %v4089 = vadd.f32 %v3925, %v4088
  %v4090 = vpop.f32.mrb[0].mxu0
  %4091 = vdwg.mxu0
  %v4092 = vmax.f32 %v3998, 0.0
  %v4093 = vmax.f32 %v4001, 0.0
  %v4094 = vmax.f32 %v4006, 0.0
  %v4095 = vmax.f32 %v4009, 0.0
  %v4096 = vmax.f32 %v4014, 0.0
  %v4097 = vmax.f32 %v4017, 0.0
  %v4098 = vmax.f32 %v4022, 0.0
  %v4099 = vmax.f32 %v4025, 0.0
  %v4100 = vmax.f32 %v4030, 0.0
  %v4101 = vmax.f32 %v4033, 0.0
  %v4102 = vmax.f32 %v4038, 0.0
  %v4103 = vmax.f32 %v4041, 0.0
  %v4104 = vmax.f32 %v4046, 0.0
  %v4105 = vmax.f32 %v4049, 0.0
  %v4106 = vmax.f32 %v4054, 0.0
  %v4107 = vmax.f32 %v4057, 0.0
  %v4108 = vmax.f32 %v4062, 0.0
  %v4109 = vmax.f32 %v4065, 0.0
  %v4110 = vmax.f32 %v4070, 0.0
  %v4111 = vmax.f32 %v4073, 0.0
  %v4112 = vmax.f32 %v4078, 0.0
  %v4113 = vmax.f32 %v4081, 0.0
  %v4114 = vmax.f32 %v4086, 0.0
  %v4115 = vmax.f32 %v4089, 0.0
  %v4116 = vmul.f32 %v4092, %v4092
  %v4117 = vmul.f32 %v4093, %v4093
  %v4118 = vmul.f32 %v4094, %v4094
  %v4119 = vmul.f32 %v4095, %v4095
  %v4120 = vmul.f32 %v4096, %v4096
  %v4121 = vmul.f32 %v4097, %v4097
  %v4122 = vmul.f32 %v4098, %v4098
  %v4123 = vmul.f32 %v4099, %v4099
  %v4124 = vmul.f32 %v4100, %v4100
  %v4125 = vmul.f32 %v4101, %v4101
  %v4126 = vmul.f32 %v4102, %v4102
  %v4127 = vmul.f32 %v4103, %v4103
  %v4128 = vmul.f32 %v4104, %v4104
  %v4129 = vmul.f32 %v4105, %v4105
  %v4130 = vmul.f32 %v4106, %v4106
  %v4131 = vmul.f32 %v4107, %v4107
  %v4132 = vmul.f32 %v4108, %v4108
  %v4133 = vmul.f32 %v4109, %v4109
  %v4134 = vmul.f32 %v4110, %v4110
  %v4135 = vmul.f32 %v4111, %v4111
  %v4136 = vmul.f32 %v4112, %v4112
  %v4137 = vmul.f32 %v4113, %v4113
  %v4138 = vmul.f32 %v4114, %v4114
  %v4139 = vmul.f32 %v4115, %v4115
  %v4140 = vsel %vm203, %v4116, 0.0
  %4141 = vadd.xlane.f32.xlu0 %v4140
  %v4142 = vpop.xlane.xlu0 %4141
  %v4143 = vsel %vm203, %v4117, 0.0
  %4144 = vadd.xlane.f32.xlu0 %v4143
  %v4145 = vpop.xlane.xlu0 %4144
  %v4146 = vsel %vm203, %v4118, 0.0
  %4147 = vadd.xlane.f32.xlu0 %v4146
  %v4148 = vpop.xlane.xlu0 %4147
  %v4149 = vsel %vm203, %v4119, 0.0
  %4150 = vadd.xlane.f32.xlu0 %v4149
  %v4151 = vpop.xlane.xlu0 %4150
  %v4152 = vsel %vm203, %v4120, 0.0
  %4153 = vadd.xlane.f32.xlu0 %v4152
  %v4154 = vpop.xlane.xlu0 %4153
  %v4155 = vsel %vm203, %v4121, 0.0
  %4156 = vadd.xlane.f32.xlu0 %v4155
  %v4157 = vpop.xlane.xlu0 %4156
  %v4158 = vsel %vm203, %v4122, 0.0
  %4159 = vadd.xlane.f32.xlu0 %v4158
  %v4160 = vpop.xlane.xlu0 %4159
  %v4161 = vsel %vm203, %v4123, 0.0
  %4162 = vadd.xlane.f32.xlu0 %v4161
  %v4163 = vpop.xlane.xlu0 %4162
  %v4164 = vsel %vm203, %v4124, 0.0
  %4165 = vadd.xlane.f32.xlu0 %v4164
  %v4166 = vpop.xlane.xlu0 %4165
  %v4167 = vsel %vm203, %v4125, 0.0
  %4168 = vadd.xlane.f32.xlu0 %v4167
  %v4169 = vpop.xlane.xlu0 %4168
  %v4170 = vsel %vm203, %v4126, 0.0
  %4171 = vadd.xlane.f32.xlu0 %v4170
  %v4172 = vpop.xlane.xlu0 %4171
  %v4173 = vsel %vm203, %v4127, 0.0
  %4174 = vadd.xlane.f32.xlu0 %v4173
  %v4175 = vpop.xlane.xlu0 %4174
  %v4176 = vsel %vm203, %v4128, 0.0
  %4177 = vadd.xlane.f32.xlu0 %v4176
  %v4178 = vpop.xlane.xlu0 %4177
  %v4179 = vsel %vm203, %v4129, 0.0
  %4180 = vadd.xlane.f32.xlu0 %v4179
  %v4181 = vpop.xlane.xlu0 %4180
  %v4182 = vsel %vm203, %v4130, 0.0
  %4183 = vadd.xlane.f32.xlu0 %v4182
  %v4184 = vpop.xlane.xlu0 %4183
  %v4185 = vsel %vm203, %v4131, 0.0
  %4186 = vadd.xlane.f32.xlu0 %v4185
  %v4187 = vpop.xlane.xlu0 %4186
  %v4188 = vsel %vm203, %v4132, 0.0
  %4189 = vadd.xlane.f32.xlu0 %v4188
  %v4190 = vpop.xlane.xlu0 %4189
  %v4191 = vsel %vm203, %v4133, 0.0
  %4192 = vadd.xlane.f32.xlu0 %v4191
  %v4193 = vpop.xlane.xlu0 %4192
  %v4194 = vsel %vm203, %v4134, 0.0
  %4195 = vadd.xlane.f32.xlu0 %v4194
  %v4196 = vpop.xlane.xlu0 %4195
  %v4197 = vsel %vm203, %v4135, 0.0
  %4198 = vadd.xlane.f32.xlu0 %v4197
  %v4199 = vpop.xlane.xlu0 %4198
  %v4200 = vsel %vm203, %v4136, 0.0
  %4201 = vadd.xlane.f32.xlu0 %v4200
  %v4202 = vpop.xlane.xlu0 %4201
  %v4203 = vsel %vm203, %v4137, 0.0
  %4204 = vadd.xlane.f32.xlu0 %v4203
  %v4205 = vpop.xlane.xlu0 %4204
  %v4206 = vsel %vm203, %v4138, 0.0
  %4207 = vadd.xlane.f32.xlu0 %v4206
  %v4208 = vpop.xlane.xlu0 %4207
  %v4209 = vsel %vm203, %v4139, 0.0
  %4210 = vadd.xlane.f32.xlu0 %v4209
  %v4211 = vpop.xlane.xlu0 %4210
  %v4212 = vadd.f32 %v4142, 1e-08
  %v4213 = vadd.f32 %v4145, 1e-08
  %v4214 = vadd.f32 %v4148, 1e-08
  %v4215 = vadd.f32 %v4151, 1e-08
  %v4216 = vadd.f32 %v4154, 1e-08
  %v4217 = vadd.f32 %v4157, 1e-08
  %v4218 = vadd.f32 %v4160, 1e-08
  %v4219 = vadd.f32 %v4163, 1e-08
  %v4220 = vadd.f32 %v4166, 1e-08
  %v4221 = vadd.f32 %v4169, 1e-08
  %v4222 = vadd.f32 %v4172, 1e-08
  %v4223 = vadd.f32 %v4175, 1e-08
  %v4224 = vadd.f32 %v4178, 1e-08
  %v4225 = vadd.f32 %v4181, 1e-08
  %v4226 = vadd.f32 %v4184, 1e-08
  %v4227 = vadd.f32 %v4187, 1e-08
  %v4228 = vadd.f32 %v4190, 1e-08
  %v4229 = vadd.f32 %v4193, 1e-08
  %v4230 = vadd.f32 %v4196, 1e-08
  %v4231 = vadd.f32 %v4199, 1e-08
  %v4232 = vadd.f32 %v4202, 1e-08
  %v4233 = vadd.f32 %v4205, 1e-08
  %v4234 = vadd.f32 %v4208, 1e-08
  %v4235 = vadd.f32 %v4211, 1e-08
  %v4236 = vrsqrt.pop %v4212
  %v4237 = vrsqrt.pop %v4213
  %v4238 = vrsqrt.pop %v4214
  %v4239 = vrsqrt.pop %v4215
  %v4240 = vrsqrt.pop %v4216
  %v4241 = vrsqrt.pop %v4217
  %v4242 = vrsqrt.pop %v4218
  %v4243 = vrsqrt.pop %v4219
  %v4244 = vrsqrt.pop %v4220
  %v4245 = vrsqrt.pop %v4221
  %v4246 = vrsqrt.pop %v4222
  %v4247 = vrsqrt.pop %v4223
  %v4248 = vrsqrt.pop %v4224
  %v4249 = vrsqrt.pop %v4225
  %v4250 = vrsqrt.pop %v4226
  %v4251 = vrsqrt.pop %v4227
  %v4252 = vrsqrt.pop %v4228
  %v4253 = vrsqrt.pop %v4229
  %v4254 = vrsqrt.pop %v4230
  %v4255 = vrsqrt.pop %v4231
  %v4256 = vrsqrt.pop %v4232
  %v4257 = vrsqrt.pop %v4233
  %v4258 = vrsqrt.pop %v4234
  %v4259 = vrsqrt.pop %v4235
  %s4260 = sld [smem:[#allocation5 + $0x3]]
  %v4261 = vmul.f32 %v679, %v4236
  %v4262 = vmul.f32 %v686, %v4237
  %v4263 = vmul.f32 %v693, %v4238
  %v4264 = vmul.f32 %v700, %v4239
  %v4265 = vmul.f32 %v707, %v4240
  %v4266 = vmul.f32 %v714, %v4241
  %v4267 = vmul.f32 %v721, %v4242
  %v4268 = vmul.f32 %v728, %v4243
  %v4269 = vmul.f32 %v735, %v4244
  %v4270 = vmul.f32 %v742, %v4245
  %v4271 = vmul.f32 %v749, %v4246
  %v4272 = vmul.f32 %v756, %v4247
  %v4273 = vmul.f32 %v763, %v4248
  %v4274 = vmul.f32 %v770, %v4249
  %v4275 = vmul.f32 %v777, %v4250
  %v4276 = vmul.f32 %v784, %v4251
  %v4277 = vmul.f32 %v791, %v4252
  %v4278 = vmul.f32 %v798, %v4253
  %v4279 = vmul.f32 %v805, %v4254
  %v4280 = vmul.f32 %v812, %v4255
  %v4281 = vmul.f32 %v819, %v4256
  %v4282 = vmul.f32 %v826, %v4257
  %v4283 = vmul.f32 %v833, %v4258
  %v4284 = vmul.f32 %v840, %v4259
  %v4285 = vmul.f32 %v4092, %v4261
  %v4286 = vmul.f32 %v4093, %v4262
  %v4287 = vmul.f32 %v4094, %v4263
  %v4288 = vmul.f32 %v4095, %v4264
  %v4289 = vmul.f32 %v4096, %v4265
  %v4290 = vmul.f32 %v4097, %v4266
  %v4291 = vmul.f32 %v4098, %v4267
  %v4292 = vmul.f32 %v4099, %v4268
  %v4293 = vmul.f32 %v4100, %v4269
  %v4294 = vmul.f32 %v4101, %v4270
  %v4295 = vmul.f32 %v4102, %v4271
  %v4296 = vmul.f32 %v4103, %v4272
  %v4297 = vmul.f32 %v4104, %v4273
  %v4298 = vmul.f32 %v4105, %v4274
  %v4299 = vmul.f32 %v4106, %v4275
  %v4300 = vmul.f32 %v4107, %v4276
  %v4301 = vmul.f32 %v4108, %v4277
  %v4302 = vmul.f32 %v4109, %v4278
  %v4303 = vmul.f32 %v4110, %v4279
  %v4304 = vmul.f32 %v4111, %v4280
  %v4305 = vmul.f32 %v4112, %v4281
  %v4306 = vmul.f32 %v4113, %v4282
  %v4307 = vmul.f32 %v4114, %v4283
  %v4308 = vmul.f32 %v4115, %v4284
  %v4309 = vstv %s4260
  %v4310 = vmul.f32 %v4309, %v4285
  %v4311 = vmul.f32 %v4309, %v4286
  %v4312 = vmul.f32 %v4309, %v4287
  %v4313 = vmul.f32 %v4309, %v4288
  %v4314 = vmul.f32 %v4309, %v4289
  %v4315 = vmul.f32 %v4309, %v4290
  %v4316 = vmul.f32 %v4309, %v4291
  %v4317 = vmul.f32 %v4309, %v4292
  %v4318 = vmul.f32 %v4309, %v4293
  %v4319 = vmul.f32 %v4309, %v4294
  %v4320 = vmul.f32 %v4309, %v4295
  %v4321 = vmul.f32 %v4309, %v4296
  %v4322 = vmul.f32 %v4309, %v4297
  %v4323 = vmul.f32 %v4309, %v4298
  %v4324 = vmul.f32 %v4309, %v4299
  %v4325 = vmul.f32 %v4309, %v4300
  %v4326 = vmul.f32 %v4309, %v4301
  %v4327 = vmul.f32 %v4309, %v4302
  %v4328 = vmul.f32 %v4309, %v4303
  %v4329 = vmul.f32 %v4309, %v4304
  %v4330 = vmul.f32 %v4309, %v4305
  %v4331 = vmul.f32 %v4309, %v4306
  %v4332 = vmul.f32 %v4309, %v4307
  %v4333 = vmul.f32 %v4309, %v4308
  %v4334 = vadd.f32 %v3454, %v4310
  %v4335 = vadd.f32 %v3455, %v4311
  %v4336 = vadd.f32 %v3456, %v4312
  %v4337 = vadd.f32 %v3457, %v4313
  %v4338 = vadd.f32 %v3458, %v4314
  %v4339 = vadd.f32 %v3459, %v4315
  %v4340 = vadd.f32 %v3460, %v4316
  %v4341 = vadd.f32 %v3461, %v4317
  %v4342 = vadd.f32 %v3462, %v4318
  %v4343 = vadd.f32 %v3463, %v4319
  %v4344 = vadd.f32 %v3464, %v4320
  %v4345 = vadd.f32 %v3465, %v4321
  %v4346 = vadd.f32 %v3466, %v4322
  %v4347 = vadd.f32 %v3467, %v4323
  %v4348 = vadd.f32 %v3468, %v4324
  %v4349 = vadd.f32 %v3469, %v4325
  %v4350 = vadd.f32 %v3470, %v4326
  %v4351 = vadd.f32 %v3471, %v4327
  %v4352 = vadd.f32 %v3472, %v4328
  %v4353 = vadd.f32 %v3473, %v4329
  %v4354 = vadd.f32 %v3474, %v4330
  %v4355 = vadd.f32 %v3475, %v4331
  %v4356 = vadd.f32 %v3476, %v4332
  %v4357 = vadd.f32 %v3477, %v4333
  %s4358 = scalar_lea.vmem %s2, 384
  %v4359 = vld [vmem:[%s4358] sm:$0xf]
  %v4360 = vld [vmem:[%s4358 + $0x4] sm:$0xf]
  %v4361 = vld [vmem:[%s4358 + $0x8] sm:$0xf]
  %v4362 = vld [vmem:[%s4358 + $0xc] sm:$0xf]
  %v4363 = vld [vmem:[%s4358 + $0x10] sm:$0xf]
  %v4364 = vld [vmem:[%s4358 + $0x14] sm:$0xf]
  %v4365 = vld [vmem:[%s4358 + $0x18] sm:$0xf]
  %v4366 = vld [vmem:[%s4358 + $0x1c] sm:$0xf]
  %v4367 = vld [vmem:[%s4358 + $0x20] sm:$0xf]
  %v4368 = vld [vmem:[%s4358 + $0x24] sm:$0xf]
  %v4369 = vld [vmem:[%s4358 + $0x28] sm:$0xf]
  %v4370 = vld [vmem:[%s4358 + $0x2c] sm:$0xf]
  %v4371 = vld [vmem:[%s4358 + $0x30] sm:$0xf]
  %v4372 = vld [vmem:[%s4358 + $0x34] sm:$0xf]
  %v4373 = vld [vmem:[%s4358 + $0x38] sm:$0xf]
  %v4374 = vld [vmem:[%s4358 + $0x3c] sm:$0xf]
  %v4375 = vld [vmem:[%s4358 + $0x40] sm:$0xf]
  %v4376 = vld [vmem:[%s4358 + $0x44] sm:$0xf]
  %v4377 = vld [vmem:[%s4358 + $0x48] sm:$0xf]
  %v4378 = vld [vmem:[%s4358 + $0x4c] sm:$0xf]
  %v4379 = vld [vmem:[%s4358 + $0x50] sm:$0xf]
  %v4380 = vld [vmem:[%s4358 + $0x54] sm:$0xf]
  %v4381 = vld [vmem:[%s4358 + $0x58] sm:$0xf]
  %v4382 = vld [vmem:[%s4358 + $0x5c] sm:$0xf]
  %v4383 = vunpack.c.l.bf16 %v4359
  %v4384 = vunpack.c.l.bf16 %v4360
  %v4385 = vunpack.c.l.bf16 %v4361
  %v4386 = vunpack.c.l.bf16 %v4362
  %v4387 = vunpack.c.l.bf16 %v4363
  %v4388 = vunpack.c.l.bf16 %v4364
  %v4389 = vunpack.c.l.bf16 %v4365
  %v4390 = vunpack.c.l.bf16 %v4366
  %v4391 = vunpack.c.l.bf16 %v4367
  %v4392 = vunpack.c.l.bf16 %v4368
  %v4393 = vunpack.c.l.bf16 %v4369
  %v4394 = vunpack.c.l.bf16 %v4370
  %v4395 = vunpack.c.l.bf16 %v4371
  %v4396 = vunpack.c.l.bf16 %v4372
  %v4397 = vunpack.c.l.bf16 %v4373
  %v4398 = vunpack.c.l.bf16 %v4374
  %v4399 = vunpack.c.l.bf16 %v4375
  %v4400 = vunpack.c.l.bf16 %v4376
  %v4401 = vunpack.c.l.bf16 %v4377
  %v4402 = vunpack.c.l.bf16 %v4378
  %v4403 = vunpack.c.l.bf16 %v4379
  %v4404 = vunpack.c.l.bf16 %v4380
  %v4405 = vunpack.c.l.bf16 %v4381
  %v4406 = vunpack.c.l.bf16 %v4382
  %s4407 = scalar_lea.vmem %s6, 4
  %v4408 = vld [vmem:[%s4407] sm:$0x1]
  %s4409 = scalar_lea.vmem %s7, 4
  %v4410 = vld [vmem:[%s4409] sm:$0x1]
  %v4411 = vsel %vm891, %v4383, 0.0
  %4412 = vadd.xlane.f32.xlu0 %v4411
  %v4413 = vpop.xlane.xlu0 %4412
  %v4414 = vsel %vm891, %v4384, 0.0
  %4415 = vadd.xlane.f32.xlu0 %v4414
  %v4416 = vpop.xlane.xlu0 %4415
  %v4417 = vsel %vm891, %v4385, 0.0
  %4418 = vadd.xlane.f32.xlu0 %v4417
  %v4419 = vpop.xlane.xlu0 %4418
  %v4420 = vsel %vm891, %v4386, 0.0
  %4421 = vadd.xlane.f32.xlu0 %v4420
  %v4422 = vpop.xlane.xlu0 %4421
  %v4423 = vsel %vm891, %v4387, 0.0
  %4424 = vadd.xlane.f32.xlu0 %v4423
  %v4425 = vpop.xlane.xlu0 %4424
  %v4426 = vsel %vm891, %v4388, 0.0
  %4427 = vadd.xlane.f32.xlu0 %v4426
  %v4428 = vpop.xlane.xlu0 %4427
  %v4429 = vsel %vm891, %v4389, 0.0
  %4430 = vadd.xlane.f32.xlu0 %v4429
  %v4431 = vpop.xlane.xlu0 %4430
  %v4432 = vsel %vm891, %v4390, 0.0
  %4433 = vadd.xlane.f32.xlu0 %v4432
  %v4434 = vpop.xlane.xlu0 %4433
  %v4435 = vsel %vm891, %v4391, 0.0
  %4436 = vadd.xlane.f32.xlu0 %v4435
  %v4437 = vpop.xlane.xlu0 %4436
  %v4438 = vsel %vm891, %v4392, 0.0
  %4439 = vadd.xlane.f32.xlu0 %v4438
  %v4440 = vpop.xlane.xlu0 %4439
  %v4441 = vsel %vm891, %v4393, 0.0
  %4442 = vadd.xlane.f32.xlu0 %v4441
  %v4443 = vpop.xlane.xlu0 %4442
  %v4444 = vsel %vm891, %v4394, 0.0
  %4445 = vadd.xlane.f32.xlu0 %v4444
  %v4446 = vpop.xlane.xlu0 %4445
  %v4447 = vsel %vm891, %v4395, 0.0
  %4448 = vadd.xlane.f32.xlu0 %v4447
  %v4449 = vpop.xlane.xlu0 %4448
  %v4450 = vsel %vm891, %v4396, 0.0
  %4451 = vadd.xlane.f32.xlu0 %v4450
  %v4452 = vpop.xlane.xlu0 %4451
  %v4453 = vsel %vm891, %v4397, 0.0
  %4454 = vadd.xlane.f32.xlu0 %v4453
  %v4455 = vpop.xlane.xlu0 %4454
  %v4456 = vsel %vm891, %v4398, 0.0
  %4457 = vadd.xlane.f32.xlu0 %v4456
  %v4458 = vpop.xlane.xlu0 %4457
  %v4459 = vsel %vm891, %v4399, 0.0
  %4460 = vadd.xlane.f32.xlu0 %v4459
  %v4461 = vpop.xlane.xlu0 %4460
  %v4462 = vsel %vm891, %v4400, 0.0
  %4463 = vadd.xlane.f32.xlu0 %v4462
  %v4464 = vpop.xlane.xlu0 %4463
  %v4465 = vsel %vm891, %v4401, 0.0
  %4466 = vadd.xlane.f32.xlu0 %v4465
  %v4467 = vpop.xlane.xlu0 %4466
  %v4468 = vsel %vm891, %v4402, 0.0
  %4469 = vadd.xlane.f32.xlu0 %v4468
  %v4470 = vpop.xlane.xlu0 %4469
  %v4471 = vsel %vm891, %v4403, 0.0
  %4472 = vadd.xlane.f32.xlu0 %v4471
  %v4473 = vpop.xlane.xlu0 %4472
  %v4474 = vsel %vm891, %v4404, 0.0
  %4475 = vadd.xlane.f32.xlu0 %v4474
  %v4476 = vpop.xlane.xlu0 %4475
  %v4477 = vsel %vm891, %v4405, 0.0
  %4478 = vadd.xlane.f32.xlu0 %v4477
  %v4479 = vpop.xlane.xlu0 %4478
  %v4480 = vsel %vm891, %v4406, 0.0
  %4481 = vadd.xlane.f32.xlu0 %v4480
  %v4482 = vpop.xlane.xlu0 %4481
  %v4483 = vmul.f32 %v4413, %v964
  %v4484 = vmul.f32 %v4416, %v964
  %v4485 = vmul.f32 %v4419, %v964
  %v4486 = vmul.f32 %v4422, %v964
  %v4487 = vmul.f32 %v4425, %v964
  %v4488 = vmul.f32 %v4428, %v964
  %v4489 = vmul.f32 %v4431, %v964
  %v4490 = vmul.f32 %v4434, %v964
  %v4491 = vmul.f32 %v4437, %v964
  %v4492 = vmul.f32 %v4440, %v964
  %v4493 = vmul.f32 %v4443, %v964
  %v4494 = vmul.f32 %v4446, %v964
  %v4495 = vmul.f32 %v4449, %v964
  %v4496 = vmul.f32 %v4452, %v964
  %v4497 = vmul.f32 %v4455, %v964
  %v4498 = vmul.f32 %v4458, %v964
  %v4499 = vmul.f32 %v4461, %v964
  %v4500 = vmul.f32 %v4464, %v964
  %v4501 = vmul.f32 %v4467, %v964
  %v4502 = vmul.f32 %v4470, %v964
  %v4503 = vmul.f32 %v4473, %v964
  %v4504 = vmul.f32 %v4476, %v964
  %v4505 = vmul.f32 %v4479, %v964
  %v4506 = vmul.f32 %v4482, %v964
  %v4507 = vsub.f32 %v4383, %v4483
  %v4508 = vsub.f32 %v4384, %v4484
  %v4509 = vsub.f32 %v4385, %v4485
  %v4510 = vsub.f32 %v4386, %v4486
  %v4511 = vsub.f32 %v4387, %v4487
  %v4512 = vsub.f32 %v4388, %v4488
  %v4513 = vsub.f32 %v4389, %v4489
  %v4514 = vsub.f32 %v4390, %v4490
  %v4515 = vsub.f32 %v4391, %v4491
  %v4516 = vsub.f32 %v4392, %v4492
  %v4517 = vsub.f32 %v4393, %v4493
  %v4518 = vsub.f32 %v4394, %v4494
  %v4519 = vsub.f32 %v4395, %v4495
  %v4520 = vsub.f32 %v4396, %v4496
  %v4521 = vsub.f32 %v4397, %v4497
  %v4522 = vsub.f32 %v4398, %v4498
  %v4523 = vsub.f32 %v4399, %v4499
  %v4524 = vsub.f32 %v4400, %v4500
  %v4525 = vsub.f32 %v4401, %v4501
  %v4526 = vsub.f32 %v4402, %v4502
  %v4527 = vsub.f32 %v4403, %v4503
  %v4528 = vsub.f32 %v4404, %v4504
  %v4529 = vsub.f32 %v4405, %v4505
  %v4530 = vsub.f32 %v4406, %v4506
  %v4531 = vmul.f32 %v4507, %v4507
  %v4532 = vmul.f32 %v4508, %v4508
  %v4533 = vmul.f32 %v4509, %v4509
  %v4534 = vmul.f32 %v4510, %v4510
  %v4535 = vmul.f32 %v4511, %v4511
  %v4536 = vmul.f32 %v4512, %v4512
  %v4537 = vmul.f32 %v4513, %v4513
  %v4538 = vmul.f32 %v4514, %v4514
  %v4539 = vmul.f32 %v4515, %v4515
  %v4540 = vmul.f32 %v4516, %v4516
  %v4541 = vmul.f32 %v4517, %v4517
  %v4542 = vmul.f32 %v4518, %v4518
  %v4543 = vmul.f32 %v4519, %v4519
  %v4544 = vmul.f32 %v4520, %v4520
  %v4545 = vmul.f32 %v4521, %v4521
  %v4546 = vmul.f32 %v4522, %v4522
  %v4547 = vmul.f32 %v4523, %v4523
  %v4548 = vmul.f32 %v4524, %v4524
  %v4549 = vmul.f32 %v4525, %v4525
  %v4550 = vmul.f32 %v4526, %v4526
  %v4551 = vmul.f32 %v4527, %v4527
  %v4552 = vmul.f32 %v4528, %v4528
  %v4553 = vmul.f32 %v4529, %v4529
  %v4554 = vmul.f32 %v4530, %v4530
  %v4555 = vsel %vm891, %v4531, 0.0
  %4556 = vadd.xlane.f32.xlu0 %v4555
  %v4557 = vpop.xlane.xlu0 %4556
  %v4558 = vsel %vm891, %v4532, 0.0
  %4559 = vadd.xlane.f32.xlu0 %v4558
  %v4560 = vpop.xlane.xlu0 %4559
  %v4561 = vsel %vm891, %v4533, 0.0
  %4562 = vadd.xlane.f32.xlu0 %v4561
  %v4563 = vpop.xlane.xlu0 %4562
  %v4564 = vsel %vm891, %v4534, 0.0
  %4565 = vadd.xlane.f32.xlu0 %v4564
  %v4566 = vpop.xlane.xlu0 %4565
  %v4567 = vsel %vm891, %v4535, 0.0
  %4568 = vadd.xlane.f32.xlu0 %v4567
  %v4569 = vpop.xlane.xlu0 %4568
  %v4570 = vsel %vm891, %v4536, 0.0
  %4571 = vadd.xlane.f32.xlu0 %v4570
  %v4572 = vpop.xlane.xlu0 %4571
  %v4573 = vsel %vm891, %v4537, 0.0
  %4574 = vadd.xlane.f32.xlu0 %v4573
  %v4575 = vpop.xlane.xlu0 %4574
  %v4576 = vsel %vm891, %v4538, 0.0
  %4577 = vadd.xlane.f32.xlu0 %v4576
  %v4578 = vpop.xlane.xlu0 %4577
  %v4579 = vsel %vm891, %v4539, 0.0
  %4580 = vadd.xlane.f32.xlu0 %v4579
  %v4581 = vpop.xlane.xlu0 %4580
  %v4582 = vsel %vm891, %v4540, 0.0
  %4583 = vadd.xlane.f32.xlu0 %v4582
  %v4584 = vpop.xlane.xlu0 %4583
  %v4585 = vsel %vm891, %v4541, 0.0
  %4586 = vadd.xlane.f32.xlu0 %v4585
  %v4587 = vpop.xlane.xlu0 %4586
  %v4588 = vsel %vm891, %v4542, 0.0
  %4589 = vadd.xlane.f32.xlu0 %v4588
  %v4590 = vpop.xlane.xlu0 %4589
  %v4591 = vsel %vm891, %v4543, 0.0
  %4592 = vadd.xlane.f32.xlu0 %v4591
  %v4593 = vpop.xlane.xlu0 %4592
  %v4594 = vsel %vm891, %v4544, 0.0
  %4595 = vadd.xlane.f32.xlu0 %v4594
  %v4596 = vpop.xlane.xlu0 %4595
  %v4597 = vsel %vm891, %v4545, 0.0
  %4598 = vadd.xlane.f32.xlu0 %v4597
  %v4599 = vpop.xlane.xlu0 %4598
  %v4600 = vsel %vm891, %v4546, 0.0
  %4601 = vadd.xlane.f32.xlu0 %v4600
  %v4602 = vpop.xlane.xlu0 %4601
  %v4603 = vsel %vm891, %v4547, 0.0
  %4604 = vadd.xlane.f32.xlu0 %v4603
  %v4605 = vpop.xlane.xlu0 %4604
  %v4606 = vsel %vm891, %v4548, 0.0
  %4607 = vadd.xlane.f32.xlu0 %v4606
  %v4608 = vpop.xlane.xlu0 %4607
  %v4609 = vsel %vm891, %v4549, 0.0
  %4610 = vadd.xlane.f32.xlu0 %v4609
  %v4611 = vpop.xlane.xlu0 %4610
  %v4612 = vsel %vm891, %v4550, 0.0
  %4613 = vadd.xlane.f32.xlu0 %v4612
  %v4614 = vpop.xlane.xlu0 %4613
  %v4615 = vsel %vm891, %v4551, 0.0
  %4616 = vadd.xlane.f32.xlu0 %v4615
  %v4617 = vpop.xlane.xlu0 %4616
  %v4618 = vsel %vm891, %v4552, 0.0
  %4619 = vadd.xlane.f32.xlu0 %v4618
  %v4620 = vpop.xlane.xlu0 %4619
  %v4621 = vsel %vm891, %v4553, 0.0
  %4622 = vadd.xlane.f32.xlu0 %v4621
  %v4623 = vpop.xlane.xlu0 %4622
  %v4624 = vsel %vm891, %v4554, 0.0
  %4625 = vadd.xlane.f32.xlu0 %v4624
  %v4626 = vpop.xlane.xlu0 %4625
  %v4627 = vmul.f32 %v4557, %v964
  %v4628 = vmul.f32 %v4560, %v964
  %v4629 = vmul.f32 %v4563, %v964
  %v4630 = vmul.f32 %v4566, %v964
  %v4631 = vmul.f32 %v4569, %v964
  %v4632 = vmul.f32 %v4572, %v964
  %v4633 = vmul.f32 %v4575, %v964
  %v4634 = vmul.f32 %v4578, %v964
  %v4635 = vmul.f32 %v4581, %v964
  %v4636 = vmul.f32 %v4584, %v964
  %v4637 = vmul.f32 %v4587, %v964
  %v4638 = vmul.f32 %v4590, %v964
  %v4639 = vmul.f32 %v4593, %v964
  %v4640 = vmul.f32 %v4596, %v964
  %v4641 = vmul.f32 %v4599, %v964
  %v4642 = vmul.f32 %v4602, %v964
  %v4643 = vmul.f32 %v4605, %v964
  %v4644 = vmul.f32 %v4608, %v964
  %v4645 = vmul.f32 %v4611, %v964
  %v4646 = vmul.f32 %v4614, %v964
  %v4647 = vmul.f32 %v4617, %v964
  %v4648 = vmul.f32 %v4620, %v964
  %v4649 = vmul.f32 %v4623, %v964
  %v4650 = vmul.f32 %v4626, %v964
  %v4651 = vadd.f32 %v4627, 1e-05
  %v4652 = vadd.f32 %v4628, 1e-05
  %v4653 = vadd.f32 %v4629, 1e-05
  %v4654 = vadd.f32 %v4630, 1e-05
  %v4655 = vadd.f32 %v4631, 1e-05
  %v4656 = vadd.f32 %v4632, 1e-05
  %v4657 = vadd.f32 %v4633, 1e-05
  %v4658 = vadd.f32 %v4634, 1e-05
  %v4659 = vadd.f32 %v4635, 1e-05
  %v4660 = vadd.f32 %v4636, 1e-05
  %v4661 = vadd.f32 %v4637, 1e-05
  %v4662 = vadd.f32 %v4638, 1e-05
  %v4663 = vadd.f32 %v4639, 1e-05
  %v4664 = vadd.f32 %v4640, 1e-05
  %v4665 = vadd.f32 %v4641, 1e-05
  %v4666 = vadd.f32 %v4642, 1e-05
  %v4667 = vadd.f32 %v4643, 1e-05
  %v4668 = vadd.f32 %v4644, 1e-05
  %v4669 = vadd.f32 %v4645, 1e-05
  %v4670 = vadd.f32 %v4646, 1e-05
  %v4671 = vadd.f32 %v4647, 1e-05
  %v4672 = vadd.f32 %v4648, 1e-05
  %v4673 = vadd.f32 %v4649, 1e-05
  %v4674 = vadd.f32 %v4650, 1e-05
  %v4675 = vrsqrt.pop %v4651
  %v4676 = vrsqrt.pop %v4652
  %v4677 = vrsqrt.pop %v4653
  %v4678 = vrsqrt.pop %v4654
  %v4679 = vrsqrt.pop %v4655
  %v4680 = vrsqrt.pop %v4656
  %v4681 = vrsqrt.pop %v4657
  %v4682 = vrsqrt.pop %v4658
  %v4683 = vrsqrt.pop %v4659
  %v4684 = vrsqrt.pop %v4660
  %v4685 = vrsqrt.pop %v4661
  %v4686 = vrsqrt.pop %v4662
  %v4687 = vrsqrt.pop %v4663
  %v4688 = vrsqrt.pop %v4664
  %v4689 = vrsqrt.pop %v4665
  %v4690 = vrsqrt.pop %v4666
  %v4691 = vrsqrt.pop %v4667
  %v4692 = vrsqrt.pop %v4668
  %v4693 = vrsqrt.pop %v4669
  %v4694 = vrsqrt.pop %v4670
  %v4695 = vrsqrt.pop %v4671
  %v4696 = vrsqrt.pop %v4672
  %v4697 = vrsqrt.pop %v4673
  %v4698 = vrsqrt.pop %v4674
  %v4699 = vmul.f32 %v4507, %v4675
  %v4700 = vmul.f32 %v4508, %v4676
  %v4701 = vmul.f32 %v4509, %v4677
  %v4702 = vmul.f32 %v4510, %v4678
  %v4703 = vmul.f32 %v4511, %v4679
  %v4704 = vmul.f32 %v4512, %v4680
  %v4705 = vmul.f32 %v4513, %v4681
  %v4706 = vmul.f32 %v4514, %v4682
  %v4707 = vmul.f32 %v4515, %v4683
  %v4708 = vmul.f32 %v4516, %v4684
  %v4709 = vmul.f32 %v4517, %v4685
  %v4710 = vmul.f32 %v4518, %v4686
  %v4711 = vmul.f32 %v4519, %v4687
  %v4712 = vmul.f32 %v4520, %v4688
  %v4713 = vmul.f32 %v4521, %v4689
  %v4714 = vmul.f32 %v4522, %v4690
  %v4715 = vmul.f32 %v4523, %v4691
  %v4716 = vmul.f32 %v4524, %v4692
  %v4717 = vmul.f32 %v4525, %v4693
  %v4718 = vmul.f32 %v4526, %v4694
  %v4719 = vmul.f32 %v4527, %v4695
  %v4720 = vmul.f32 %v4528, %v4696
  %v4721 = vmul.f32 %v4529, %v4697
  %v4722 = vmul.f32 %v4530, %v4698
  %v4724 = vlaneseq
  %v4725 = vshrl.u32 %v4724, 7
  %v4726 = vsub.s32 0, %v4725
  %v4727 = vrot.slane %v4408, %v4726
  %v4729 = vmul.f32 %v4699, %v4727
  %v4730 = vmul.f32 %v4700, %v4727
  %v4731 = vmul.f32 %v4701, %v4727
  %v4732 = vmul.f32 %v4702, %v4727
  %v4733 = vmul.f32 %v4703, %v4727
  %v4734 = vmul.f32 %v4704, %v4727
  %v4735 = vmul.f32 %v4705, %v4727
  %v4736 = vmul.f32 %v4706, %v4727
  %v4737 = vmul.f32 %v4707, %v4727
  %v4738 = vmul.f32 %v4708, %v4727
  %v4739 = vmul.f32 %v4709, %v4727
  %v4740 = vmul.f32 %v4710, %v4727
  %v4741 = vmul.f32 %v4711, %v4727
  %v4742 = vmul.f32 %v4712, %v4727
  %v4743 = vmul.f32 %v4713, %v4727
  %v4744 = vmul.f32 %v4714, %v4727
  %v4745 = vmul.f32 %v4715, %v4727
  %v4746 = vmul.f32 %v4716, %v4727
  %v4747 = vmul.f32 %v4717, %v4727
  %v4748 = vmul.f32 %v4718, %v4727
  %v4749 = vmul.f32 %v4719, %v4727
  %v4750 = vmul.f32 %v4720, %v4727
  %v4751 = vmul.f32 %v4721, %v4727
  %v4752 = vmul.f32 %v4722, %v4727
  %v4754 = vlaneseq
  %v4755 = vshrl.u32 %v4754, 7
  %v4756 = vsub.s32 0, %v4755
  %v4757 = vrot.slane %v4410, %v4756
  %v4759 = vadd.f32 %v4729, %v4757
  %v4760 = vadd.f32 %v4730, %v4757
  %v4761 = vadd.f32 %v4731, %v4757
  %v4762 = vadd.f32 %v4732, %v4757
  %v4763 = vadd.f32 %v4733, %v4757
  %v4764 = vadd.f32 %v4734, %v4757
  %v4765 = vadd.f32 %v4735, %v4757
  %v4766 = vadd.f32 %v4736, %v4757
  %v4767 = vadd.f32 %v4737, %v4757
  %v4768 = vadd.f32 %v4738, %v4757
  %v4769 = vadd.f32 %v4739, %v4757
  %v4770 = vadd.f32 %v4740, %v4757
  %v4771 = vadd.f32 %v4741, %v4757
  %v4772 = vadd.f32 %v4742, %v4757
  %v4773 = vadd.f32 %v4743, %v4757
  %v4774 = vadd.f32 %v4744, %v4757
  %v4775 = vadd.f32 %v4745, %v4757
  %v4776 = vadd.f32 %v4746, %v4757
  %v4777 = vadd.f32 %v4747, %v4757
  %v4778 = vadd.f32 %v4748, %v4757
  %v4779 = vadd.f32 %v4749, %v4757
  %v4780 = vadd.f32 %v4750, %v4757
  %v4781 = vadd.f32 %v4751, %v4757
  %v4782 = vadd.f32 %v4752, %v4757
  %v4783 = vpack.c.bf16 %v4760, %v4759
  %v4784 = vpack.c.bf16 %v4762, %v4761
  %v4785 = vpack.c.bf16 %v4764, %v4763
  %v4786 = vpack.c.bf16 %v4766, %v4765
  %v4787 = vpack.c.bf16 %v4768, %v4767
  %v4788 = vpack.c.bf16 %v4770, %v4769
  %v4789 = vpack.c.bf16 %v4772, %v4771
  %v4790 = vpack.c.bf16 %v4774, %v4773
  %v4791 = vpack.c.bf16 %v4776, %v4775
  %v4792 = vpack.c.bf16 %v4778, %v4777
  %v4793 = vpack.c.bf16 %v4780, %v4779
  %v4794 = vpack.c.bf16 %v4782, %v4781
  %s4795 = scalar_lea.vmem [#allocation2], 96
  %v4796 = vld [vmem:[%s4795] sm:$0xff]
  %v4797 = vld [vmem:[%s4795 + $0x8] sm:$0xff]
  %v4798 = vld [vmem:[%s4795 + $0x10] sm:$0xff]
  %s4799 = scalar_lea.vmem %s8, 4
  %v4800 = vld [vmem:[%s4799] sm:$0x1]
  %v4802 = vlaneseq
  %v4803 = vshrl.u32 %v4802, 7
  %v4804 = vsub.s32 0, %v4803
  %v4805 = vrot.slane %v4800, %v4804
  %v4808 = vsel %vm891, %v4783, 0
  %v4811 = vsel %vm891, %v4784, 0
  %v4814 = vsel %vm891, %v4785, 0
  %v4817 = vsel %vm891, %v4786, 0
  %v4820 = vsel %vm891, %v4787, 0
  %v4823 = vsel %vm891, %v4788, 0
  %v4826 = vsel %vm891, %v4789, 0
  %v4829 = vsel %vm891, %v4790, 0
  %v4832 = vsel %vm891, %v4791, 0
  %v4835 = vsel %vm891, %v4792, 0
  %v4838 = vsel %vm891, %v4793, 0
  %v4841 = vsel %vm891, %v4794, 0
  %4843 = vmatprep.subr.bf16.mxu0 0
  %4844 = vmatpush1.bf16.msra.mxu0 %v4796
  %4845 = vmatprep.subr.bf16.mxu0 0
  %4846 = vmatpush1.bf16.msra.mxu0 %v4797
  %4847 = vmatprep.subr.bf16.mxu0 0
  %4848 = vmatpush1.bf16.msra.mxu0 %v4798
  %4849 = vmatprep.subr.bf16.mxu0 0
  %4850 = vmatpush1.bf16.msra.mxu0 0
  %4851 = vmatprep.subr.bf16.mxu0 0
  %4852 = vmatpush1.bf16.msra.mxu0 0
  %4853 = vmatprep.subr.bf16.mxu0 0
  %4854 = vmatpush1.bf16.msra.mxu0 0
  %4855 = vmatprep.subr.bf16.mxu0 0
  %4856 = vmatpush1.bf16.msra.mxu0 0
  %4857 = vmatprep.subr.bf16.mxu0 0
  %4858 = vmatpush1.bf16.msra.mxu0 0
  %4859 = vmatprep.subr.bf16.mxu0 0
  %4860 = vmatpush1.bf16.msra.mxu0 0
  %4861 = vmatprep.subr.bf16.mxu0 0
  %4862 = vmatpush1.bf16.msra.mxu0 0
  %4863 = vmatprep.subr.bf16.mxu0 0
  %4864 = vmatpush1.bf16.msra.mxu0 0
  %4865 = vmatprep.subr.bf16.mxu0 0
  %4866 = vmatpush1.bf16.msra.mxu0 0
  %4867 = vmatprep.subr.bf16.mxu0 0
  %4868 = vmatpush1.bf16.msra.mxu0 0
  %4869 = vmatprep.subr.bf16.mxu0 0
  %4870 = vmatpush1.bf16.msra.mxu0 0
  %4871 = vmatprep.subr.bf16.mxu0 0
  %4872 = vmatpush1.bf16.msra.mxu0 0
  %4873 = vmatprep.subr.bf16.mxu0 0
  %4874 = vmatpush1.bf16.msra.mxu0 0
  %4875 = vmatprep.mubr.bf16.mxu0 0
  %4876 = vmatmul.mubr.bf16.gmra.mrb[0].mxu0 %v4808
  %v4877 = vpop.f32.mrb[0].mxu0
  %v4878 = vadd.f32 %v4805, %v4877
  %v4879 = vpop.f32.mrb[0].mxu0
  %v4880 = vpop.f32.mrb[0].mxu0
  %v4881 = vadd.f32 %v4805, %v4880
  %v4882 = vpop.f32.mrb[0].mxu0
  %4883 = vmatprep.mubr.bf16.mxu0 0
  %4884 = vmatmul.mubr.bf16.gmra.mrb[0].mxu0 %v4811
  %v4885 = vpop.f32.mrb[0].mxu0
  %v4886 = vadd.f32 %v4805, %v4885
  %v4887 = vpop.f32.mrb[0].mxu0
  %v4888 = vpop.f32.mrb[0].mxu0
  %v4889 = vadd.f32 %v4805, %v4888
  %v4890 = vpop.f32.mrb[0].mxu0
  %4891 = vmatprep.mubr.bf16.mxu0 0
  %4892 = vmatmul.mubr.bf16.gmra.mrb[0].mxu0 %v4814
  %v4893 = vpop.f32.mrb[0].mxu0
  %v4894 = vadd.f32 %v4805, %v4893
  %v4895 = vpop.f32.mrb[0].mxu0
  %v4896 = vpop.f32.mrb[0].mxu0
  %v4897 = vadd.f32 %v4805, %v4896
  %v4898 = vpop.f32.mrb[0].mxu0
  %4899 = vmatprep.mubr.bf16.mxu0 0
  %4900 = vmatmul.mubr.bf16.gmra.mrb[0].mxu0 %v4817
  %v4901 = vpop.f32.mrb[0].mxu0
  %v4902 = vadd.f32 %v4805, %v4901
  %v4903 = vpop.f32.mrb[0].mxu0
  %v4904 = vpop.f32.mrb[0].mxu0
  %v4905 = vadd.f32 %v4805, %v4904
  %v4906 = vpop.f32.mrb[0].mxu0
  %4907 = vmatprep.mubr.bf16.mxu0 0
  %4908 = vmatmul.mubr.bf16.gmra.mrb[0].mxu0 %v4820
  %v4909 = vpop.f32.mrb[0].mxu0
  %v4910 = vadd.f32 %v4805, %v4909
  %v4911 = vpop.f32.mrb[0].mxu0
  %v4912 = vpop.f32.mrb[0].mxu0
  %v4913 = vadd.f32 %v4805, %v4912
  %v4914 = vpop.f32.mrb[0].mxu0
  %4915 = vmatprep.mubr.bf16.mxu0 0
  %4916 = vmatmul.mubr.bf16.gmra.mrb[0].mxu0 %v4823
  %v4917 = vpop.f32.mrb[0].mxu0
  %v4918 = vadd.f32 %v4805, %v4917
  %v4919 = vpop.f32.mrb[0].mxu0
  %v4920 = vpop.f32.mrb[0].mxu0
  %v4921 = vadd.f32 %v4805, %v4920
  %v4922 = vpop.f32.mrb[0].mxu0
  %4923 = vmatprep.mubr.bf16.mxu0 0
  %4924 = vmatmul.mubr.bf16.gmra.mrb[0].mxu0 %v4826
  %v4925 = vpop.f32.mrb[0].mxu0
  %v4926 = vadd.f32 %v4805, %v4925
  %v4927 = vpop.f32.mrb[0].mxu0
  %v4928 = vpop.f32.mrb[0].mxu0
  %v4929 = vadd.f32 %v4805, %v4928
  %v4930 = vpop.f32.mrb[0].mxu0
  %4931 = vmatprep.mubr.bf16.mxu0 0
  %4932 = vmatmul.mubr.bf16.gmra.mrb[0].mxu0 %v4829
  %v4933 = vpop.f32.mrb[0].mxu0
  %v4934 = vadd.f32 %v4805, %v4933
  %v4935 = vpop.f32.mrb[0].mxu0
  %v4936 = vpop.f32.mrb[0].mxu0
  %v4937 = vadd.f32 %v4805, %v4936
  %v4938 = vpop.f32.mrb[0].mxu0
  %4939 = vmatprep.mubr.bf16.mxu0 0
  %4940 = vmatmul.mubr.bf16.gmra.mrb[0].mxu0 %v4832
  %v4941 = vpop.f32.mrb[0].mxu0
  %v4942 = vadd.f32 %v4805, %v4941
  %v4943 = vpop.f32.mrb[0].mxu0
  %v4944 = vpop.f32.mrb[0].mxu0
  %v4945 = vadd.f32 %v4805, %v4944
  %v4946 = vpop.f32.mrb[0].mxu0
  %4947 = vmatprep.mubr.bf16.mxu0 0
  %4948 = vmatmul.mubr.bf16.gmra.mrb[0].mxu0 %v4835
  %v4949 = vpop.f32.mrb[0].mxu0
  %v4950 = vadd.f32 %v4805, %v4949
  %v4951 = vpop.f32.mrb[0].mxu0
  %v4952 = vpop.f32.mrb[0].mxu0
  %v4953 = vadd.f32 %v4805, %v4952
  %v4954 = vpop.f32.mrb[0].mxu0
  %4955 = vmatprep.mubr.bf16.mxu0 0
  %4956 = vmatmul.mubr.bf16.gmra.mrb[0].mxu0 %v4838
  %v4957 = vpop.f32.mrb[0].mxu0
  %v4958 = vadd.f32 %v4805, %v4957
  %v4959 = vpop.f32.mrb[0].mxu0
  %v4960 = vpop.f32.mrb[0].mxu0
  %v4961 = vadd.f32 %v4805, %v4960
  %v4962 = vpop.f32.mrb[0].mxu0
  %4963 = vmatprep.mubr.bf16.mxu0 0
  %4964 = vmatmul.mubr.bf16.gmra.mrb[0].mxu0 %v4841
  %v4965 = vpop.f32.mrb[0].mxu0
  %v4966 = vadd.f32 %v4805, %v4965
  %v4967 = vpop.f32.mrb[0].mxu0
  %v4968 = vpop.f32.mrb[0].mxu0
  %v4969 = vadd.f32 %v4805, %v4968
  %v4970 = vpop.f32.mrb[0].mxu0
  %4971 = vdwg.mxu0
  %v4972 = vmax.f32 %v4878, 0.0
  %v4973 = vmax.f32 %v4881, 0.0
  %v4974 = vmax.f32 %v4886, 0.0
  %v4975 = vmax.f32 %v4889, 0.0
  %v4976 = vmax.f32 %v4894, 0.0
  %v4977 = vmax.f32 %v4897, 0.0
  %v4978 = vmax.f32 %v4902, 0.0
  %v4979 = vmax.f32 %v4905, 0.0
  %v4980 = vmax.f32 %v4910, 0.0
  %v4981 = vmax.f32 %v4913, 0.0
  %v4982 = vmax.f32 %v4918, 0.0
  %v4983 = vmax.f32 %v4921, 0.0
  %v4984 = vmax.f32 %v4926, 0.0
  %v4985 = vmax.f32 %v4929, 0.0
  %v4986 = vmax.f32 %v4934, 0.0
  %v4987 = vmax.f32 %v4937, 0.0
  %v4988 = vmax.f32 %v4942, 0.0
  %v4989 = vmax.f32 %v4945, 0.0
  %v4990 = vmax.f32 %v4950, 0.0
  %v4991 = vmax.f32 %v4953, 0.0
  %v4992 = vmax.f32 %v4958, 0.0
  %v4993 = vmax.f32 %v4961, 0.0
  %v4994 = vmax.f32 %v4966, 0.0
  %v4995 = vmax.f32 %v4969, 0.0
  %v4996 = vmul.f32 %v4972, %v4972
  %v4997 = vmul.f32 %v4973, %v4973
  %v4998 = vmul.f32 %v4974, %v4974
  %v4999 = vmul.f32 %v4975, %v4975
  %v5000 = vmul.f32 %v4976, %v4976
  %v5001 = vmul.f32 %v4977, %v4977
  %v5002 = vmul.f32 %v4978, %v4978
  %v5003 = vmul.f32 %v4979, %v4979
  %v5004 = vmul.f32 %v4980, %v4980
  %v5005 = vmul.f32 %v4981, %v4981
  %v5006 = vmul.f32 %v4982, %v4982
  %v5007 = vmul.f32 %v4983, %v4983
  %v5008 = vmul.f32 %v4984, %v4984
  %v5009 = vmul.f32 %v4985, %v4985
  %v5010 = vmul.f32 %v4986, %v4986
  %v5011 = vmul.f32 %v4987, %v4987
  %v5012 = vmul.f32 %v4988, %v4988
  %v5013 = vmul.f32 %v4989, %v4989
  %v5014 = vmul.f32 %v4990, %v4990
  %v5015 = vmul.f32 %v4991, %v4991
  %v5016 = vmul.f32 %v4992, %v4992
  %v5017 = vmul.f32 %v4993, %v4993
  %v5018 = vmul.f32 %v4994, %v4994
  %v5019 = vmul.f32 %v4995, %v4995
  %v5020 = vsel %vm203, %v4996, 0.0
  %5021 = vadd.xlane.f32.xlu0 %v5020
  %v5022 = vpop.xlane.xlu0 %5021
  %v5023 = vsel %vm203, %v4997, 0.0
  %5024 = vadd.xlane.f32.xlu0 %v5023
  %v5025 = vpop.xlane.xlu0 %5024
  %v5026 = vsel %vm203, %v4998, 0.0
  %5027 = vadd.xlane.f32.xlu0 %v5026
  %v5028 = vpop.xlane.xlu0 %5027
  %v5029 = vsel %vm203, %v4999, 0.0
  %5030 = vadd.xlane.f32.xlu0 %v5029
  %v5031 = vpop.xlane.xlu0 %5030
  %v5032 = vsel %vm203, %v5000, 0.0
  %5033 = vadd.xlane.f32.xlu0 %v5032
  %v5034 = vpop.xlane.xlu0 %5033
  %v5035 = vsel %vm203, %v5001, 0.0
  %5036 = vadd.xlane.f32.xlu0 %v5035
  %v5037 = vpop.xlane.xlu0 %5036
  %v5038 = vsel %vm203, %v5002, 0.0
  %5039 = vadd.xlane.f32.xlu0 %v5038
  %v5040 = vpop.xlane.xlu0 %5039
  %v5041 = vsel %vm203, %v5003, 0.0
  %5042 = vadd.xlane.f32.xlu0 %v5041
  %v5043 = vpop.xlane.xlu0 %5042
  %v5044 = vsel %vm203, %v5004, 0.0
  %5045 = vadd.xlane.f32.xlu0 %v5044
  %v5046 = vpop.xlane.xlu0 %5045
  %v5047 = vsel %vm203, %v5005, 0.0
  %5048 = vadd.xlane.f32.xlu0 %v5047
  %v5049 = vpop.xlane.xlu0 %5048
  %v5050 = vsel %vm203, %v5006, 0.0
  %5051 = vadd.xlane.f32.xlu0 %v5050
  %v5052 = vpop.xlane.xlu0 %5051
  %v5053 = vsel %vm203, %v5007, 0.0
  %5054 = vadd.xlane.f32.xlu0 %v5053
  %v5055 = vpop.xlane.xlu0 %5054
  %v5056 = vsel %vm203, %v5008, 0.0
  %5057 = vadd.xlane.f32.xlu0 %v5056
  %v5058 = vpop.xlane.xlu0 %5057
  %v5059 = vsel %vm203, %v5009, 0.0
  %5060 = vadd.xlane.f32.xlu0 %v5059
  %v5061 = vpop.xlane.xlu0 %5060
  %v5062 = vsel %vm203, %v5010, 0.0
  %5063 = vadd.xlane.f32.xlu0 %v5062
  %v5064 = vpop.xlane.xlu0 %5063
  %v5065 = vsel %vm203, %v5011, 0.0
  %5066 = vadd.xlane.f32.xlu0 %v5065
  %v5067 = vpop.xlane.xlu0 %5066
  %v5068 = vsel %vm203, %v5012, 0.0
  %5069 = vadd.xlane.f32.xlu0 %v5068
  %v5070 = vpop.xlane.xlu0 %5069
  %v5071 = vsel %vm203, %v5013, 0.0
  %5072 = vadd.xlane.f32.xlu0 %v5071
  %v5073 = vpop.xlane.xlu0 %5072
  %v5074 = vsel %vm203, %v5014, 0.0
  %5075 = vadd.xlane.f32.xlu0 %v5074
  %v5076 = vpop.xlane.xlu0 %5075
  %v5077 = vsel %vm203, %v5015, 0.0
  %5078 = vadd.xlane.f32.xlu0 %v5077
  %v5079 = vpop.xlane.xlu0 %5078
  %v5080 = vsel %vm203, %v5016, 0.0
  %5081 = vadd.xlane.f32.xlu0 %v5080
  %v5082 = vpop.xlane.xlu0 %5081
  %v5083 = vsel %vm203, %v5017, 0.0
  %5084 = vadd.xlane.f32.xlu0 %v5083
  %v5085 = vpop.xlane.xlu0 %5084
  %v5086 = vsel %vm203, %v5018, 0.0
  %5087 = vadd.xlane.f32.xlu0 %v5086
  %v5088 = vpop.xlane.xlu0 %5087
  %v5089 = vsel %vm203, %v5019, 0.0
  %5090 = vadd.xlane.f32.xlu0 %v5089
  %v5091 = vpop.xlane.xlu0 %5090
  %v5092 = vadd.f32 %v5022, 1e-08
  %v5093 = vadd.f32 %v5025, 1e-08
  %v5094 = vadd.f32 %v5028, 1e-08
  %v5095 = vadd.f32 %v5031, 1e-08
  %v5096 = vadd.f32 %v5034, 1e-08
  %v5097 = vadd.f32 %v5037, 1e-08
  %v5098 = vadd.f32 %v5040, 1e-08
  %v5099 = vadd.f32 %v5043, 1e-08
  %v5100 = vadd.f32 %v5046, 1e-08
  %v5101 = vadd.f32 %v5049, 1e-08
  %v5102 = vadd.f32 %v5052, 1e-08
  %v5103 = vadd.f32 %v5055, 1e-08
  %v5104 = vadd.f32 %v5058, 1e-08
  %v5105 = vadd.f32 %v5061, 1e-08
  %v5106 = vadd.f32 %v5064, 1e-08
  %v5107 = vadd.f32 %v5067, 1e-08
  %v5108 = vadd.f32 %v5070, 1e-08
  %v5109 = vadd.f32 %v5073, 1e-08
  %v5110 = vadd.f32 %v5076, 1e-08
  %v5111 = vadd.f32 %v5079, 1e-08
  %v5112 = vadd.f32 %v5082, 1e-08
  %v5113 = vadd.f32 %v5085, 1e-08
  %v5114 = vadd.f32 %v5088, 1e-08
  %v5115 = vadd.f32 %v5091, 1e-08
  %v5116 = vrsqrt.pop %v5092
  %v5117 = vrsqrt.pop %v5093
  %v5118 = vrsqrt.pop %v5094
  %v5119 = vrsqrt.pop %v5095
  %v5120 = vrsqrt.pop %v5096
  %v5121 = vrsqrt.pop %v5097
  %v5122 = vrsqrt.pop %v5098
  %v5123 = vrsqrt.pop %v5099
  %v5124 = vrsqrt.pop %v5100
  %v5125 = vrsqrt.pop %v5101
  %v5126 = vrsqrt.pop %v5102
  %v5127 = vrsqrt.pop %v5103
  %v5128 = vrsqrt.pop %v5104
  %v5129 = vrsqrt.pop %v5105
  %v5130 = vrsqrt.pop %v5106
  %v5131 = vrsqrt.pop %v5107
  %v5132 = vrsqrt.pop %v5108
  %v5133 = vrsqrt.pop %v5109
  %v5134 = vrsqrt.pop %v5110
  %v5135 = vrsqrt.pop %v5111
  %v5136 = vrsqrt.pop %v5112
  %v5137 = vrsqrt.pop %v5113
  %v5138 = vrsqrt.pop %v5114
  %v5139 = vrsqrt.pop %v5115
  %s5140 = sld [smem:[#allocation5 + $0x4]]
  %v5141 = vmul.f32 %v679, %v5116
  %v5142 = vmul.f32 %v686, %v5117
  %v5143 = vmul.f32 %v693, %v5118
  %v5144 = vmul.f32 %v700, %v5119
  %v5145 = vmul.f32 %v707, %v5120
  %v5146 = vmul.f32 %v714, %v5121
  %v5147 = vmul.f32 %v721, %v5122
  %v5148 = vmul.f32 %v728, %v5123
  %v5149 = vmul.f32 %v735, %v5124
  %v5150 = vmul.f32 %v742, %v5125
  %v5151 = vmul.f32 %v749, %v5126
  %v5152 = vmul.f32 %v756, %v5127
  %v5153 = vmul.f32 %v763, %v5128
  %v5154 = vmul.f32 %v770, %v5129
  %v5155 = vmul.f32 %v777, %v5130
  %v5156 = vmul.f32 %v784, %v5131
  %v5157 = vmul.f32 %v791, %v5132
  %v5158 = vmul.f32 %v798, %v5133
  %v5159 = vmul.f32 %v805, %v5134
  %v5160 = vmul.f32 %v812, %v5135
  %v5161 = vmul.f32 %v819, %v5136
  %v5162 = vmul.f32 %v826, %v5137
  %v5163 = vmul.f32 %v833, %v5138
  %v5164 = vmul.f32 %v840, %v5139
  %v5165 = vmul.f32 %v4972, %v5141
  %v5166 = vmul.f32 %v4973, %v5142
  %v5167 = vmul.f32 %v4974, %v5143
  %v5168 = vmul.f32 %v4975, %v5144
  %v5169 = vmul.f32 %v4976, %v5145
  %v5170 = vmul.f32 %v4977, %v5146
  %v5171 = vmul.f32 %v4978, %v5147
  %v5172 = vmul.f32 %v4979, %v5148
  %v5173 = vmul.f32 %v4980, %v5149
  %v5174 = vmul.f32 %v4981, %v5150
  %v5175 = vmul.f32 %v4982, %v5151
  %v5176 = vmul.f32 %v4983, %v5152
  %v5177 = vmul.f32 %v4984, %v5153
  %v5178 = vmul.f32 %v4985, %v5154
  %v5179 = vmul.f32 %v4986, %v5155
  %v5180 = vmul.f32 %v4987, %v5156
  %v5181 = vmul.f32 %v4988, %v5157
  %v5182 = vmul.f32 %v4989, %v5158
  %v5183 = vmul.f32 %v4990, %v5159
  %v5184 = vmul.f32 %v4991, %v5160
  %v5185 = vmul.f32 %v4992, %v5161
  %v5186 = vmul.f32 %v4993, %v5162
  %v5187 = vmul.f32 %v4994, %v5163
  %v5188 = vmul.f32 %v4995, %v5164
  %v5189 = vstv %s5140
  %v5190 = vmul.f32 %v5189, %v5165
  %v5191 = vmul.f32 %v5189, %v5166
  %v5192 = vmul.f32 %v5189, %v5167
  %v5193 = vmul.f32 %v5189, %v5168
  %v5194 = vmul.f32 %v5189, %v5169
  %v5195 = vmul.f32 %v5189, %v5170
  %v5196 = vmul.f32 %v5189, %v5171
  %v5197 = vmul.f32 %v5189, %v5172
  %v5198 = vmul.f32 %v5189, %v5173
  %v5199 = vmul.f32 %v5189, %v5174
  %v5200 = vmul.f32 %v5189, %v5175
  %v5201 = vmul.f32 %v5189, %v5176
  %v5202 = vmul.f32 %v5189, %v5177
  %v5203 = vmul.f32 %v5189, %v5178
  %v5204 = vmul.f32 %v5189, %v5179
  %v5205 = vmul.f32 %v5189, %v5180
  %v5206 = vmul.f32 %v5189, %v5181
  %v5207 = vmul.f32 %v5189, %v5182
  %v5208 = vmul.f32 %v5189, %v5183
  %v5209 = vmul.f32 %v5189, %v5184
  %v5210 = vmul.f32 %v5189, %v5185
  %v5211 = vmul.f32 %v5189, %v5186
  %v5212 = vmul.f32 %v5189, %v5187
  %v5213 = vmul.f32 %v5189, %v5188
  %v5214 = vadd.f32 %v4334, %v5190
  %v5215 = vadd.f32 %v4335, %v5191
  %v5216 = vadd.f32 %v4336, %v5192
  %v5217 = vadd.f32 %v4337, %v5193
  %v5218 = vadd.f32 %v4338, %v5194
  %v5219 = vadd.f32 %v4339, %v5195
  %v5220 = vadd.f32 %v4340, %v5196
  %v5221 = vadd.f32 %v4341, %v5197
  %v5222 = vadd.f32 %v4342, %v5198
  %v5223 = vadd.f32 %v4343, %v5199
  %v5224 = vadd.f32 %v4344, %v5200
  %v5225 = vadd.f32 %v4345, %v5201
  %v5226 = vadd.f32 %v4346, %v5202
  %v5227 = vadd.f32 %v4347, %v5203
  %v5228 = vadd.f32 %v4348, %v5204
  %v5229 = vadd.f32 %v4349, %v5205
  %v5230 = vadd.f32 %v4350, %v5206
  %v5231 = vadd.f32 %v4351, %v5207
  %v5232 = vadd.f32 %v4352, %v5208
  %v5233 = vadd.f32 %v4353, %v5209
  %v5234 = vadd.f32 %v4354, %v5210
  %v5235 = vadd.f32 %v4355, %v5211
  %v5236 = vadd.f32 %v4356, %v5212
  %v5237 = vadd.f32 %v4357, %v5213
  %v5238 = vld [vmem:[%s9] sm:$0x1]
  %v5239 = vld [vmem:[%s10] sm:$0x1]
  %v5240 = vsel %vm203, %v5214, 0.0
  %5241 = vadd.xlane.f32.xlu0 %v5240
  %v5242 = vpop.xlane.xlu0 %5241
  %v5243 = vsel %vm203, %v5215, 0.0
  %5244 = vadd.xlane.f32.xlu0 %v5243
  %v5245 = vpop.xlane.xlu0 %5244
  %v5246 = vsel %vm203, %v5216, 0.0
  %5247 = vadd.xlane.f32.xlu0 %v5246
  %v5248 = vpop.xlane.xlu0 %5247
  %v5249 = vsel %vm203, %v5217, 0.0
  %5250 = vadd.xlane.f32.xlu0 %v5249
  %v5251 = vpop.xlane.xlu0 %5250
  %v5252 = vsel %vm203, %v5218, 0.0
  %5253 = vadd.xlane.f32.xlu0 %v5252
  %v5254 = vpop.xlane.xlu0 %5253
  %v5255 = vsel %vm203, %v5219, 0.0
  %5256 = vadd.xlane.f32.xlu0 %v5255
  %v5257 = vpop.xlane.xlu0 %5256
  %v5258 = vsel %vm203, %v5220, 0.0
  %5259 = vadd.xlane.f32.xlu0 %v5258
  %v5260 = vpop.xlane.xlu0 %5259
  %v5261 = vsel %vm203, %v5221, 0.0
  %5262 = vadd.xlane.f32.xlu0 %v5261
  %v5263 = vpop.xlane.xlu0 %5262
  %v5264 = vsel %vm203, %v5222, 0.0
  %5265 = vadd.xlane.f32.xlu0 %v5264
  %v5266 = vpop.xlane.xlu0 %5265
  %v5267 = vsel %vm203, %v5223, 0.0
  %5268 = vadd.xlane.f32.xlu0 %v5267
  %v5269 = vpop.xlane.xlu0 %5268
  %v5270 = vsel %vm203, %v5224, 0.0
  %5271 = vadd.xlane.f32.xlu0 %v5270
  %v5272 = vpop.xlane.xlu0 %5271
  %v5273 = vsel %vm203, %v5225, 0.0
  %5274 = vadd.xlane.f32.xlu0 %v5273
  %v5275 = vpop.xlane.xlu0 %5274
  %v5276 = vsel %vm203, %v5226, 0.0
  %5277 = vadd.xlane.f32.xlu0 %v5276
  %v5278 = vpop.xlane.xlu0 %5277
  %v5279 = vsel %vm203, %v5227, 0.0
  %5280 = vadd.xlane.f32.xlu0 %v5279
  %v5281 = vpop.xlane.xlu0 %5280
  %v5282 = vsel %vm203, %v5228, 0.0
  %5283 = vadd.xlane.f32.xlu0 %v5282
  %v5284 = vpop.xlane.xlu0 %5283
  %v5285 = vsel %vm203, %v5229, 0.0
  %5286 = vadd.xlane.f32.xlu0 %v5285
  %v5287 = vpop.xlane.xlu0 %5286
  %v5288 = vsel %vm203, %v5230, 0.0
  %5289 = vadd.xlane.f32.xlu0 %v5288
  %v5290 = vpop.xlane.xlu0 %5289
  %v5291 = vsel %vm203, %v5231, 0.0
  %5292 = vadd.xlane.f32.xlu0 %v5291
  %v5293 = vpop.xlane.xlu0 %5292
  %v5294 = vsel %vm203, %v5232, 0.0
  %5295 = vadd.xlane.f32.xlu0 %v5294
  %v5296 = vpop.xlane.xlu0 %5295
  %v5297 = vsel %vm203, %v5233, 0.0
  %5298 = vadd.xlane.f32.xlu0 %v5297
  %v5299 = vpop.xlane.xlu0 %5298
  %v5300 = vsel %vm203, %v5234, 0.0
  %5301 = vadd.xlane.f32.xlu0 %v5300
  %v5302 = vpop.xlane.xlu0 %5301
  %v5303 = vsel %vm203, %v5235, 0.0
  %5304 = vadd.xlane.f32.xlu0 %v5303
  %v5305 = vpop.xlane.xlu0 %5304
  %v5306 = vsel %vm203, %v5236, 0.0
  %5307 = vadd.xlane.f32.xlu0 %v5306
  %v5308 = vpop.xlane.xlu0 %5307
  %v5309 = vsel %vm203, %v5237, 0.0
  %5310 = vadd.xlane.f32.xlu0 %v5309
  %v5311 = vpop.xlane.xlu0 %5310
  %v5312 = vmul.f32 %v5242, %v276
  %v5313 = vmul.f32 %v5245, %v276
  %v5314 = vmul.f32 %v5248, %v276
  %v5315 = vmul.f32 %v5251, %v276
  %v5316 = vmul.f32 %v5254, %v276
  %v5317 = vmul.f32 %v5257, %v276
  %v5318 = vmul.f32 %v5260, %v276
  %v5319 = vmul.f32 %v5263, %v276
  %v5320 = vmul.f32 %v5266, %v276
  %v5321 = vmul.f32 %v5269, %v276
  %v5322 = vmul.f32 %v5272, %v276
  %v5323 = vmul.f32 %v5275, %v276
  %v5324 = vmul.f32 %v5278, %v276
  %v5325 = vmul.f32 %v5281, %v276
  %v5326 = vmul.f32 %v5284, %v276
  %v5327 = vmul.f32 %v5287, %v276
  %v5328 = vmul.f32 %v5290, %v276
  %v5329 = vmul.f32 %v5293, %v276
  %v5330 = vmul.f32 %v5296, %v276
  %v5331 = vmul.f32 %v5299, %v276
  %v5332 = vmul.f32 %v5302, %v276
  %v5333 = vmul.f32 %v5305, %v276
  %v5334 = vmul.f32 %v5308, %v276
  %v5335 = vmul.f32 %v5311, %v276
  %v5336 = vsub.f32 %v5214, %v5312
  %v5337 = vsub.f32 %v5215, %v5313
  %v5338 = vsub.f32 %v5216, %v5314
  %v5339 = vsub.f32 %v5217, %v5315
  %v5340 = vsub.f32 %v5218, %v5316
  %v5341 = vsub.f32 %v5219, %v5317
  %v5342 = vsub.f32 %v5220, %v5318
  %v5343 = vsub.f32 %v5221, %v5319
  %v5344 = vsub.f32 %v5222, %v5320
  %v5345 = vsub.f32 %v5223, %v5321
  %v5346 = vsub.f32 %v5224, %v5322
  %v5347 = vsub.f32 %v5225, %v5323
  %v5348 = vsub.f32 %v5226, %v5324
  %v5349 = vsub.f32 %v5227, %v5325
  %v5350 = vsub.f32 %v5228, %v5326
  %v5351 = vsub.f32 %v5229, %v5327
  %v5352 = vsub.f32 %v5230, %v5328
  %v5353 = vsub.f32 %v5231, %v5329
  %v5354 = vsub.f32 %v5232, %v5330
  %v5355 = vsub.f32 %v5233, %v5331
  %v5356 = vsub.f32 %v5234, %v5332
  %v5357 = vsub.f32 %v5235, %v5333
  %v5358 = vsub.f32 %v5236, %v5334
  %v5359 = vsub.f32 %v5237, %v5335
  %v5360 = vmul.f32 %v5336, %v5336
  %v5361 = vmul.f32 %v5337, %v5337
  %v5362 = vmul.f32 %v5338, %v5338
  %v5363 = vmul.f32 %v5339, %v5339
  %v5364 = vmul.f32 %v5340, %v5340
  %v5365 = vmul.f32 %v5341, %v5341
  %v5366 = vmul.f32 %v5342, %v5342
  %v5367 = vmul.f32 %v5343, %v5343
  %v5368 = vmul.f32 %v5344, %v5344
  %v5369 = vmul.f32 %v5345, %v5345
  %v5370 = vmul.f32 %v5346, %v5346
  %v5371 = vmul.f32 %v5347, %v5347
  %v5372 = vmul.f32 %v5348, %v5348
  %v5373 = vmul.f32 %v5349, %v5349
  %v5374 = vmul.f32 %v5350, %v5350
  %v5375 = vmul.f32 %v5351, %v5351
  %v5376 = vmul.f32 %v5352, %v5352
  %v5377 = vmul.f32 %v5353, %v5353
  %v5378 = vmul.f32 %v5354, %v5354
  %v5379 = vmul.f32 %v5355, %v5355
  %v5380 = vmul.f32 %v5356, %v5356
  %v5381 = vmul.f32 %v5357, %v5357
  %v5382 = vmul.f32 %v5358, %v5358
  %v5383 = vmul.f32 %v5359, %v5359
  %v5384 = vsel %vm203, %v5360, 0.0
  %5385 = vadd.xlane.f32.xlu0 %v5384
  %v5386 = vpop.xlane.xlu0 %5385
  %v5387 = vsel %vm203, %v5361, 0.0
  %5388 = vadd.xlane.f32.xlu0 %v5387
  %v5389 = vpop.xlane.xlu0 %5388
  %v5390 = vsel %vm203, %v5362, 0.0
  %5391 = vadd.xlane.f32.xlu0 %v5390
  %v5392 = vpop.xlane.xlu0 %5391
  %v5393 = vsel %vm203, %v5363, 0.0
  %5394 = vadd.xlane.f32.xlu0 %v5393
  %v5395 = vpop.xlane.xlu0 %5394
  %v5396 = vsel %vm203, %v5364, 0.0
  %5397 = vadd.xlane.f32.xlu0 %v5396
  %v5398 = vpop.xlane.xlu0 %5397
  %v5399 = vsel %vm203, %v5365, 0.0
  %5400 = vadd.xlane.f32.xlu0 %v5399
  %v5401 = vpop.xlane.xlu0 %5400
  %v5402 = vsel %vm203, %v5366, 0.0
  %5403 = vadd.xlane.f32.xlu0 %v5402
  %v5404 = vpop.xlane.xlu0 %5403
  %v5405 = vsel %vm203, %v5367, 0.0
  %5406 = vadd.xlane.f32.xlu0 %v5405
  %v5407 = vpop.xlane.xlu0 %5406
  %v5408 = vsel %vm203, %v5368, 0.0
  %5409 = vadd.xlane.f32.xlu0 %v5408
  %v5410 = vpop.xlane.xlu0 %5409
  %v5411 = vsel %vm203, %v5369, 0.0
  %5412 = vadd.xlane.f32.xlu0 %v5411
  %v5413 = vpop.xlane.xlu0 %5412
  %v5414 = vsel %vm203, %v5370, 0.0
  %5415 = vadd.xlane.f32.xlu0 %v5414
  %v5416 = vpop.xlane.xlu0 %5415
  %v5417 = vsel %vm203, %v5371, 0.0
  %5418 = vadd.xlane.f32.xlu0 %v5417
  %v5419 = vpop.xlane.xlu0 %5418
  %v5420 = vsel %vm203, %v5372, 0.0
  %5421 = vadd.xlane.f32.xlu0 %v5420
  %v5422 = vpop.xlane.xlu0 %5421
  %v5423 = vsel %vm203, %v5373, 0.0
  %5424 = vadd.xlane.f32.xlu0 %v5423
  %v5425 = vpop.xlane.xlu0 %5424
  %v5426 = vsel %vm203, %v5374, 0.0
  %5427 = vadd.xlane.f32.xlu0 %v5426
  %v5428 = vpop.xlane.xlu0 %5427
  %v5429 = vsel %vm203, %v5375, 0.0
  %5430 = vadd.xlane.f32.xlu0 %v5429
  %v5431 = vpop.xlane.xlu0 %5430
  %v5432 = vsel %vm203, %v5376, 0.0
  %5433 = vadd.xlane.f32.xlu0 %v5432
  %v5434 = vpop.xlane.xlu0 %5433
  %v5435 = vsel %vm203, %v5377, 0.0
  %5436 = vadd.xlane.f32.xlu0 %v5435
  %v5437 = vpop.xlane.xlu0 %5436
  %v5438 = vsel %vm203, %v5378, 0.0
  %5439 = vadd.xlane.f32.xlu0 %v5438
  %v5440 = vpop.xlane.xlu0 %5439
  %v5441 = vsel %vm203, %v5379, 0.0
  %5442 = vadd.xlane.f32.xlu0 %v5441
  %v5443 = vpop.xlane.xlu0 %5442
  %v5444 = vsel %vm203, %v5380, 0.0
  %5445 = vadd.xlane.f32.xlu0 %v5444
  %v5446 = vpop.xlane.xlu0 %5445
  %v5447 = vsel %vm203, %v5381, 0.0
  %5448 = vadd.xlane.f32.xlu0 %v5447
  %v5449 = vpop.xlane.xlu0 %5448
  %v5450 = vsel %vm203, %v5382, 0.0
  %5451 = vadd.xlane.f32.xlu0 %v5450
  %v5452 = vpop.xlane.xlu0 %5451
  %v5453 = vsel %vm203, %v5383, 0.0
  %5454 = vadd.xlane.f32.xlu0 %v5453
  %v5455 = vpop.xlane.xlu0 %5454
  %v5456 = vmul.f32 %v5386, %v276
  %v5457 = vmul.f32 %v5389, %v276
  %v5458 = vmul.f32 %v5392, %v276
  %v5459 = vmul.f32 %v5395, %v276
  %v5460 = vmul.f32 %v5398, %v276
  %v5461 = vmul.f32 %v5401, %v276
  %v5462 = vmul.f32 %v5404, %v276
  %v5463 = vmul.f32 %v5407, %v276
  %v5464 = vmul.f32 %v5410, %v276
  %v5465 = vmul.f32 %v5413, %v276
  %v5466 = vmul.f32 %v5416, %v276
  %v5467 = vmul.f32 %v5419, %v276
  %v5468 = vmul.f32 %v5422, %v276
  %v5469 = vmul.f32 %v5425, %v276
  %v5470 = vmul.f32 %v5428, %v276
  %v5471 = vmul.f32 %v5431, %v276
  %v5472 = vmul.f32 %v5434, %v276
  %v5473 = vmul.f32 %v5437, %v276
  %v5474 = vmul.f32 %v5440, %v276
  %v5475 = vmul.f32 %v5443, %v276
  %v5476 = vmul.f32 %v5446, %v276
  %v5477 = vmul.f32 %v5449, %v276
  %v5478 = vmul.f32 %v5452, %v276
  %v5479 = vmul.f32 %v5455, %v276
  %v5480 = vadd.f32 %v5456, 1e-05
  %v5481 = vadd.f32 %v5457, 1e-05
  %v5482 = vadd.f32 %v5458, 1e-05
  %v5483 = vadd.f32 %v5459, 1e-05
  %v5484 = vadd.f32 %v5460, 1e-05
  %v5485 = vadd.f32 %v5461, 1e-05
  %v5486 = vadd.f32 %v5462, 1e-05
  %v5487 = vadd.f32 %v5463, 1e-05
  %v5488 = vadd.f32 %v5464, 1e-05
  %v5489 = vadd.f32 %v5465, 1e-05
  %v5490 = vadd.f32 %v5466, 1e-05
  %v5491 = vadd.f32 %v5467, 1e-05
  %v5492 = vadd.f32 %v5468, 1e-05
  %v5493 = vadd.f32 %v5469, 1e-05
  %v5494 = vadd.f32 %v5470, 1e-05
  %v5495 = vadd.f32 %v5471, 1e-05
  %v5496 = vadd.f32 %v5472, 1e-05
  %v5497 = vadd.f32 %v5473, 1e-05
  %v5498 = vadd.f32 %v5474, 1e-05
  %v5499 = vadd.f32 %v5475, 1e-05
  %v5500 = vadd.f32 %v5476, 1e-05
  %v5501 = vadd.f32 %v5477, 1e-05
  %v5502 = vadd.f32 %v5478, 1e-05
  %v5503 = vadd.f32 %v5479, 1e-05
  %v5504 = vrsqrt.pop %v5480
  %v5505 = vrsqrt.pop %v5481
  %v5506 = vrsqrt.pop %v5482
  %v5507 = vrsqrt.pop %v5483
  %v5508 = vrsqrt.pop %v5484
  %v5509 = vrsqrt.pop %v5485
  %v5510 = vrsqrt.pop %v5486
  %v5511 = vrsqrt.pop %v5487
  %v5512 = vrsqrt.pop %v5488
  %v5513 = vrsqrt.pop %v5489
  %v5514 = vrsqrt.pop %v5490
  %v5515 = vrsqrt.pop %v5491
  %v5516 = vrsqrt.pop %v5492
  %v5517 = vrsqrt.pop %v5493
  %v5518 = vrsqrt.pop %v5494
  %v5519 = vrsqrt.pop %v5495
  %v5520 = vrsqrt.pop %v5496
  %v5521 = vrsqrt.pop %v5497
  %v5522 = vrsqrt.pop %v5498
  %v5523 = vrsqrt.pop %v5499
  %v5524 = vrsqrt.pop %v5500
  %v5525 = vrsqrt.pop %v5501
  %v5526 = vrsqrt.pop %v5502
  %v5527 = vrsqrt.pop %v5503
  %v5528 = vmul.f32 %v5336, %v5504
  %v5529 = vmul.f32 %v5337, %v5505
  %v5530 = vmul.f32 %v5338, %v5506
  %v5531 = vmul.f32 %v5339, %v5507
  %v5532 = vmul.f32 %v5340, %v5508
  %v5533 = vmul.f32 %v5341, %v5509
  %v5534 = vmul.f32 %v5342, %v5510
  %v5535 = vmul.f32 %v5343, %v5511
  %v5536 = vmul.f32 %v5344, %v5512
  %v5537 = vmul.f32 %v5345, %v5513
  %v5538 = vmul.f32 %v5346, %v5514
  %v5539 = vmul.f32 %v5347, %v5515
  %v5540 = vmul.f32 %v5348, %v5516
  %v5541 = vmul.f32 %v5349, %v5517
  %v5542 = vmul.f32 %v5350, %v5518
  %v5543 = vmul.f32 %v5351, %v5519
  %v5544 = vmul.f32 %v5352, %v5520
  %v5545 = vmul.f32 %v5353, %v5521
  %v5546 = vmul.f32 %v5354, %v5522
  %v5547 = vmul.f32 %v5355, %v5523
  %v5548 = vmul.f32 %v5356, %v5524
  %v5549 = vmul.f32 %v5357, %v5525
  %v5550 = vmul.f32 %v5358, %v5526
  %v5551 = vmul.f32 %v5359, %v5527
  %v5553 = vlaneseq
  %v5554 = vshrl.u32 %v5553, 7
  %v5555 = vsub.s32 0, %v5554
  %v5556 = vrot.slane %v5238, %v5555
  %v5558 = vmul.f32 %v5528, %v5556
  %v5559 = vmul.f32 %v5529, %v5556
  %v5560 = vmul.f32 %v5530, %v5556
  %v5561 = vmul.f32 %v5531, %v5556
  %v5562 = vmul.f32 %v5532, %v5556
  %v5563 = vmul.f32 %v5533, %v5556
  %v5564 = vmul.f32 %v5534, %v5556
  %v5565 = vmul.f32 %v5535, %v5556
  %v5566 = vmul.f32 %v5536, %v5556
  %v5567 = vmul.f32 %v5537, %v5556
  %v5568 = vmul.f32 %v5538, %v5556
  %v5569 = vmul.f32 %v5539, %v5556
  %v5570 = vmul.f32 %v5540, %v5556
  %v5571 = vmul.f32 %v5541, %v5556
  %v5572 = vmul.f32 %v5542, %v5556
  %v5573 = vmul.f32 %v5543, %v5556
  %v5574 = vmul.f32 %v5544, %v5556
  %v5575 = vmul.f32 %v5545, %v5556
  %v5576 = vmul.f32 %v5546, %v5556
  %v5577 = vmul.f32 %v5547, %v5556
  %v5578 = vmul.f32 %v5548, %v5556
  %v5579 = vmul.f32 %v5549, %v5556
  %v5580 = vmul.f32 %v5550, %v5556
  %v5581 = vmul.f32 %v5551, %v5556
  %v5583 = vlaneseq
  %v5584 = vshrl.u32 %v5583, 7
  %v5585 = vsub.s32 0, %v5584
  %v5586 = vrot.slane %v5239, %v5585
  %v5588 = vadd.f32 %v5558, %v5586
  %v5589 = vadd.f32 %v5559, %v5586
  %v5590 = vadd.f32 %v5560, %v5586
  %v5591 = vadd.f32 %v5561, %v5586
  %v5592 = vadd.f32 %v5562, %v5586
  %v5593 = vadd.f32 %v5563, %v5586
  %v5594 = vadd.f32 %v5564, %v5586
  %v5595 = vadd.f32 %v5565, %v5586
  %v5596 = vadd.f32 %v5566, %v5586
  %v5597 = vadd.f32 %v5567, %v5586
  %v5598 = vadd.f32 %v5568, %v5586
  %v5599 = vadd.f32 %v5569, %v5586
  %v5600 = vadd.f32 %v5570, %v5586
  %v5601 = vadd.f32 %v5571, %v5586
  %v5602 = vadd.f32 %v5572, %v5586
  %v5603 = vadd.f32 %v5573, %v5586
  %v5604 = vadd.f32 %v5574, %v5586
  %v5605 = vadd.f32 %v5575, %v5586
  %v5606 = vadd.f32 %v5576, %v5586
  %v5607 = vadd.f32 %v5577, %v5586
  %v5608 = vadd.f32 %v5578, %v5586
  %v5609 = vadd.f32 %v5579, %v5586
  %v5610 = vadd.f32 %v5580, %v5586
  %v5611 = vadd.f32 %v5581, %v5586
  %v5612 = vpack.c.bf16 %v5589, %v5588
  %v5613 = vpack.c.bf16 %v5591, %v5590
  %v5614 = vpack.c.bf16 %v5593, %v5592
  %v5615 = vpack.c.bf16 %v5595, %v5594
  %v5616 = vpack.c.bf16 %v5597, %v5596
  %v5617 = vpack.c.bf16 %v5599, %v5598
  %v5618 = vpack.c.bf16 %v5601, %v5600
  %v5619 = vpack.c.bf16 %v5603, %v5602
  %v5620 = vpack.c.bf16 %v5605, %v5604
  %v5621 = vpack.c.bf16 %v5607, %v5606
  %v5622 = vpack.c.bf16 %v5609, %v5608
  %v5623 = vpack.c.bf16 %v5611, %v5610
  %v5624 = vld [vmem:[%s11] sm:$0xf]
  %v5625 = vld [vmem:[%s11 + $0x4] sm:$0xf]
  %v5626 = vld [vmem:[%s11 + $0x8] sm:$0xf]
  %v5627 = vld [vmem:[%s11 + $0xc] sm:$0xf]
  %v5628 = vld [vmem:[%s12] sm:$0x1]
  %v5630 = vlaneseq
  %v5631 = vshrl.u32 %v5630, 7
  %v5632 = vsub.s32 0, %v5631
  %v5633 = vrot.slane %v5628, %v5632
  %v5639 = vunpack.c.l.b16 %v5624
  %v5640 = vunpack.c.l.b16 %v5625
  %v5641 = vunpack.c.l.b16 %v5626
  %v5642 = vunpack.c.l.b16 %v5627
  %v5643 = vpack.c.b16 %v5640, %v5639
  %v5644 = vpack.c.b16 %v5642, %v5641
  %v5648 = vsel %vm203, %v5612, 0
  %v5651 = vsel %vm203, %v5613, 0
  %v5654 = vsel %vm203, %v5614, 0
  %v5657 = vsel %vm203, %v5615, 0
  %v5660 = vsel %vm203, %v5616, 0
  %v5663 = vsel %vm203, %v5617, 0
  %v5666 = vsel %vm203, %v5618, 0
  %v5669 = vsel %vm203, %v5619, 0
  %v5672 = vsel %vm203, %v5620, 0
  %v5675 = vsel %vm203, %v5621, 0
  %v5678 = vsel %vm203, %v5622, 0
  %v5681 = vsel %vm203, %v5623, 0
  %5683 = vmatprep.subr.bf16.mxu0 0
  %5684 = vmatpush1.bf16.msra.mxu0 %v5643
  %5685 = vmatprep.subr.bf16.mxu0 0
  %5686 = vmatpush1.bf16.msra.mxu0 %v5644
  %5687 = vmatprep.subr.bf16.mxu0 0
  %5688 = vmatpush1.bf16.msra.mxu0 0
  %5689 = vmatprep.subr.bf16.mxu0 0
  %5690 = vmatpush1.bf16.msra.mxu0 0
  %5691 = vmatprep.subr.bf16.mxu0 0
  %5692 = vmatpush1.bf16.msra.mxu0 0
  %5693 = vmatprep.subr.bf16.mxu0 0
  %5694 = vmatpush1.bf16.msra.mxu0 0
  %5695 = vmatprep.subr.bf16.mxu0 0
  %5696 = vmatpush1.bf16.msra.mxu0 0
  %5697 = vmatprep.subr.bf16.mxu0 0
  %5698 = vmatpush1.bf16.msra.mxu0 0
  %5699 = vmatprep.subr.bf16.mxu0 0
  %5700 = vmatpush1.bf16.msra.mxu0 0
  %5701 = vmatprep.subr.bf16.mxu0 0
  %5702 = vmatpush1.bf16.msra.mxu0 0
  %5703 = vmatprep.subr.bf16.mxu0 0
  %5704 = vmatpush1.bf16.msra.mxu0 0
  %5705 = vmatprep.subr.bf16.mxu0 0
  %5706 = vmatpush1.bf16.msra.mxu0 0
  %5707 = vmatprep.subr.bf16.mxu0 0
  %5708 = vmatpush1.bf16.msra.mxu0 0
  %5709 = vmatprep.subr.bf16.mxu0 0
  %5710 = vmatpush1.bf16.msra.mxu0 0
  %5711 = vmatprep.subr.bf16.mxu0 0
  %5712 = vmatpush1.bf16.msra.mxu0 0
  %5713 = vmatprep.subr.bf16.mxu0 0
  %5714 = vmatpush1.bf16.msra.mxu0 0
  %5715 = vmatprep.mubr.bf16.mxu0 0
  %5716 = vmatmul.mubr.bf16.gmra.mrb[0].mxu0 %v5648
  %v5717 = vpop.f32.mrb[0].mxu0
  %v5718 = vadd.f32 %v5633, %v5717
  %v5719 = vpop.f32.mrb[0].mxu0
  %v5720 = vpop.f32.mrb[0].mxu0
  %v5721 = vadd.f32 %v5633, %v5720
  %v5722 = vpop.f32.mrb[0].mxu0
  %5723 = vmatprep.mubr.bf16.mxu0 0
  %5724 = vmatmul.mubr.bf16.gmra.mrb[0].mxu0 %v5651
  %v5725 = vpop.f32.mrb[0].mxu0
  %v5726 = vadd.f32 %v5633, %v5725
  %v5727 = vpop.f32.mrb[0].mxu0
  %v5728 = vpop.f32.mrb[0].mxu0
  %v5729 = vadd.f32 %v5633, %v5728
  %v5730 = vpop.f32.mrb[0].mxu0
  %5731 = vmatprep.mubr.bf16.mxu0 0
  %5732 = vmatmul.mubr.bf16.gmra.mrb[0].mxu0 %v5654
  %v5733 = vpop.f32.mrb[0].mxu0
  %v5734 = vadd.f32 %v5633, %v5733
  %v5735 = vpop.f32.mrb[0].mxu0
  %v5736 = vpop.f32.mrb[0].mxu0
  %v5737 = vadd.f32 %v5633, %v5736
  %v5738 = vpop.f32.mrb[0].mxu0
  %5739 = vmatprep.mubr.bf16.mxu0 0
  %5740 = vmatmul.mubr.bf16.gmra.mrb[0].mxu0 %v5657
  %v5741 = vpop.f32.mrb[0].mxu0
  %v5742 = vadd.f32 %v5633, %v5741
  %v5743 = vpop.f32.mrb[0].mxu0
  %v5744 = vpop.f32.mrb[0].mxu0
  %v5745 = vadd.f32 %v5633, %v5744
  %v5746 = vpop.f32.mrb[0].mxu0
  %5747 = vmatprep.mubr.bf16.mxu0 0
  %5748 = vmatmul.mubr.bf16.gmra.mrb[0].mxu0 %v5660
  %v5749 = vpop.f32.mrb[0].mxu0
  %v5750 = vadd.f32 %v5633, %v5749
  %v5751 = vpop.f32.mrb[0].mxu0
  %v5752 = vpop.f32.mrb[0].mxu0
  %v5753 = vadd.f32 %v5633, %v5752
  %v5754 = vpop.f32.mrb[0].mxu0
  %5755 = vmatprep.mubr.bf16.mxu0 0
  %5756 = vmatmul.mubr.bf16.gmra.mrb[0].mxu0 %v5663
  %v5757 = vpop.f32.mrb[0].mxu0
  %v5758 = vadd.f32 %v5633, %v5757
  %v5759 = vpop.f32.mrb[0].mxu0
  %v5760 = vpop.f32.mrb[0].mxu0
  %v5761 = vadd.f32 %v5633, %v5760
  %v5762 = vpop.f32.mrb[0].mxu0
  %5763 = vmatprep.mubr.bf16.mxu0 0
  %5764 = vmatmul.mubr.bf16.gmra.mrb[0].mxu0 %v5666
  %v5765 = vpop.f32.mrb[0].mxu0
  %v5766 = vadd.f32 %v5633, %v5765
  %v5767 = vpop.f32.mrb[0].mxu0
  %v5768 = vpop.f32.mrb[0].mxu0
  %v5769 = vadd.f32 %v5633, %v5768
  %v5770 = vpop.f32.mrb[0].mxu0
  %5771 = vmatprep.mubr.bf16.mxu0 0
  %5772 = vmatmul.mubr.bf16.gmra.mrb[0].mxu0 %v5669
  %v5773 = vpop.f32.mrb[0].mxu0
  %v5774 = vadd.f32 %v5633, %v5773
  %v5775 = vpop.f32.mrb[0].mxu0
  %v5776 = vpop.f32.mrb[0].mxu0
  %v5777 = vadd.f32 %v5633, %v5776
  %v5778 = vpop.f32.mrb[0].mxu0
  %5779 = vmatprep.mubr.bf16.mxu0 0
  %5780 = vmatmul.mubr.bf16.gmra.mrb[0].mxu0 %v5672
  %v5781 = vpop.f32.mrb[0].mxu0
  %v5782 = vadd.f32 %v5633, %v5781
  %v5783 = vpop.f32.mrb[0].mxu0
  %v5784 = vpop.f32.mrb[0].mxu0
  %v5785 = vadd.f32 %v5633, %v5784
  %v5786 = vpop.f32.mrb[0].mxu0
  %5787 = vmatprep.mubr.bf16.mxu0 0
  %5788 = vmatmul.mubr.bf16.gmra.mrb[0].mxu0 %v5675
  %v5789 = vpop.f32.mrb[0].mxu0
  %v5790 = vadd.f32 %v5633, %v5789
  %v5791 = vpop.f32.mrb[0].mxu0
  %v5792 = vpop.f32.mrb[0].mxu0
  %v5793 = vadd.f32 %v5633, %v5792
  %v5794 = vpop.f32.mrb[0].mxu0
  %5795 = vmatprep.mubr.bf16.mxu0 0
  %5796 = vmatmul.mubr.bf16.gmra.mrb[0].mxu0 %v5678
  %v5797 = vpop.f32.mrb[0].mxu0
  %v5798 = vadd.f32 %v5633, %v5797
  %v5799 = vpop.f32.mrb[0].mxu0
  %v5800 = vpop.f32.mrb[0].mxu0
  %v5801 = vadd.f32 %v5633, %v5800
  %v5802 = vpop.f32.mrb[0].mxu0
  %5803 = vmatprep.mubr.bf16.mxu0 0
  %5804 = vmatmul.mubr.bf16.gmra.mrb[0].mxu0 %v5681
  %v5805 = vpop.f32.mrb[0].mxu0
  %v5806 = vadd.f32 %v5633, %v5805
  %v5807 = vpop.f32.mrb[0].mxu0
  %v5808 = vpop.f32.mrb[0].mxu0
  %v5809 = vadd.f32 %v5633, %v5808
  %v5810 = vpop.f32.mrb[0].mxu0
  %5811 = vdwg.mxu0
  %v5812 = vmax.f32 %v5718, 0.0
  %v5813 = vmax.f32 %v5721, 0.0
  %v5814 = vmax.f32 %v5726, 0.0
  %v5815 = vmax.f32 %v5729, 0.0
  %v5816 = vmax.f32 %v5734, 0.0
  %v5817 = vmax.f32 %v5737, 0.0
  %v5818 = vmax.f32 %v5742, 0.0
  %v5819 = vmax.f32 %v5745, 0.0
  %v5820 = vmax.f32 %v5750, 0.0
  %v5821 = vmax.f32 %v5753, 0.0
  %v5822 = vmax.f32 %v5758, 0.0
  %v5823 = vmax.f32 %v5761, 0.0
  %v5824 = vmax.f32 %v5766, 0.0
  %v5825 = vmax.f32 %v5769, 0.0
  %v5826 = vmax.f32 %v5774, 0.0
  %v5827 = vmax.f32 %v5777, 0.0
  %v5828 = vmax.f32 %v5782, 0.0
  %v5829 = vmax.f32 %v5785, 0.0
  %v5830 = vmax.f32 %v5790, 0.0
  %v5831 = vmax.f32 %v5793, 0.0
  %v5832 = vmax.f32 %v5798, 0.0
  %v5833 = vmax.f32 %v5801, 0.0
  %v5834 = vmax.f32 %v5806, 0.0
  %v5835 = vmax.f32 %v5809, 0.0
  %v5836 = vld [vmem:[%s13] sm:$0x1]
  %v5837 = vld [vmem:[%s14] sm:$0x1]
  %v5838 = vsel %vm203, %v5812, 0.0
  %5839 = vadd.xlane.f32.xlu0 %v5838
  %v5840 = vpop.xlane.xlu0 %5839
  %v5841 = vsel %vm203, %v5813, 0.0
  %5842 = vadd.xlane.f32.xlu0 %v5841
  %v5843 = vpop.xlane.xlu0 %5842
  %v5844 = vsel %vm203, %v5814, 0.0
  %5845 = vadd.xlane.f32.xlu0 %v5844
  %v5846 = vpop.xlane.xlu0 %5845
  %v5847 = vsel %vm203, %v5815, 0.0
  %5848 = vadd.xlane.f32.xlu0 %v5847
  %v5849 = vpop.xlane.xlu0 %5848
  %v5850 = vsel %vm203, %v5816, 0.0
  %5851 = vadd.xlane.f32.xlu0 %v5850
  %v5852 = vpop.xlane.xlu0 %5851
  %v5853 = vsel %vm203, %v5817, 0.0
  %5854 = vadd.xlane.f32.xlu0 %v5853
  %v5855 = vpop.xlane.xlu0 %5854
  %v5856 = vsel %vm203, %v5818, 0.0
  %5857 = vadd.xlane.f32.xlu0 %v5856
  %v5858 = vpop.xlane.xlu0 %5857
  %v5859 = vsel %vm203, %v5819, 0.0
  %5860 = vadd.xlane.f32.xlu0 %v5859
  %v5861 = vpop.xlane.xlu0 %5860
  %v5862 = vsel %vm203, %v5820, 0.0
  %5863 = vadd.xlane.f32.xlu0 %v5862
  %v5864 = vpop.xlane.xlu0 %5863
  %v5865 = vsel %vm203, %v5821, 0.0
  %5866 = vadd.xlane.f32.xlu0 %v5865
  %v5867 = vpop.xlane.xlu0 %5866
  %v5868 = vsel %vm203, %v5822, 0.0
  %5869 = vadd.xlane.f32.xlu0 %v5868
  %v5870 = vpop.xlane.xlu0 %5869
  %v5871 = vsel %vm203, %v5823, 0.0
  %5872 = vadd.xlane.f32.xlu0 %v5871
  %v5873 = vpop.xlane.xlu0 %5872
  %v5874 = vsel %vm203, %v5824, 0.0
  %5875 = vadd.xlane.f32.xlu0 %v5874
  %v5876 = vpop.xlane.xlu0 %5875
  %v5877 = vsel %vm203, %v5825, 0.0
  %5878 = vadd.xlane.f32.xlu0 %v5877
  %v5879 = vpop.xlane.xlu0 %5878
  %v5880 = vsel %vm203, %v5826, 0.0
  %5881 = vadd.xlane.f32.xlu0 %v5880
  %v5882 = vpop.xlane.xlu0 %5881
  %v5883 = vsel %vm203, %v5827, 0.0
  %5884 = vadd.xlane.f32.xlu0 %v5883
  %v5885 = vpop.xlane.xlu0 %5884
  %v5886 = vsel %vm203, %v5828, 0.0
  %5887 = vadd.xlane.f32.xlu0 %v5886
  %v5888 = vpop.xlane.xlu0 %5887
  %v5889 = vsel %vm203, %v5829, 0.0
  %5890 = vadd.xlane.f32.xlu0 %v5889
  %v5891 = vpop.xlane.xlu0 %5890
  %v5892 = vsel %vm203, %v5830, 0.0
  %5893 = vadd.xlane.f32.xlu0 %v5892
  %v5894 = vpop.xlane.xlu0 %5893
  %v5895 = vsel %vm203, %v5831, 0.0
  %5896 = vadd.xlane.f32.xlu0 %v5895
  %v5897 = vpop.xlane.xlu0 %5896
  %v5898 = vsel %vm203, %v5832, 0.0
  %5899 = vadd.xlane.f32.xlu0 %v5898
  %v5900 = vpop.xlane.xlu0 %5899
  %v5901 = vsel %vm203, %v5833, 0.0
  %5902 = vadd.xlane.f32.xlu0 %v5901
  %v5903 = vpop.xlane.xlu0 %5902
  %v5904 = vsel %vm203, %v5834, 0.0
  %5905 = vadd.xlane.f32.xlu0 %v5904
  %v5906 = vpop.xlane.xlu0 %5905
  %v5907 = vsel %vm203, %v5835, 0.0
  %5908 = vadd.xlane.f32.xlu0 %v5907
  %v5909 = vpop.xlane.xlu0 %5908
  %v5910 = vmul.f32 %v5840, %v276
  %v5911 = vmul.f32 %v5843, %v276
  %v5912 = vmul.f32 %v5846, %v276
  %v5913 = vmul.f32 %v5849, %v276
  %v5914 = vmul.f32 %v5852, %v276
  %v5915 = vmul.f32 %v5855, %v276
  %v5916 = vmul.f32 %v5858, %v276
  %v5917 = vmul.f32 %v5861, %v276
  %v5918 = vmul.f32 %v5864, %v276
  %v5919 = vmul.f32 %v5867, %v276
  %v5920 = vmul.f32 %v5870, %v276
  %v5921 = vmul.f32 %v5873, %v276
  %v5922 = vmul.f32 %v5876, %v276
  %v5923 = vmul.f32 %v5879, %v276
  %v5924 = vmul.f32 %v5882, %v276
  %v5925 = vmul.f32 %v5885, %v276
  %v5926 = vmul.f32 %v5888, %v276
  %v5927 = vmul.f32 %v5891, %v276
  %v5928 = vmul.f32 %v5894, %v276
  %v5929 = vmul.f32 %v5897, %v276
  %v5930 = vmul.f32 %v5900, %v276
  %v5931 = vmul.f32 %v5903, %v276
  %v5932 = vmul.f32 %v5906, %v276
  %v5933 = vmul.f32 %v5909, %v276
  %v5934 = vsub.f32 %v5812, %v5910
  %v5935 = vsub.f32 %v5813, %v5911
  %v5936 = vsub.f32 %v5814, %v5912
  %v5937 = vsub.f32 %v5815, %v5913
  %v5938 = vsub.f32 %v5816, %v5914
  %v5939 = vsub.f32 %v5817, %v5915
  %v5940 = vsub.f32 %v5818, %v5916
  %v5941 = vsub.f32 %v5819, %v5917
  %v5942 = vsub.f32 %v5820, %v5918
  %v5943 = vsub.f32 %v5821, %v5919
  %v5944 = vsub.f32 %v5822, %v5920
  %v5945 = vsub.f32 %v5823, %v5921
  %v5946 = vsub.f32 %v5824, %v5922
  %v5947 = vsub.f32 %v5825, %v5923
  %v5948 = vsub.f32 %v5826, %v5924
  %v5949 = vsub.f32 %v5827, %v5925
  %v5950 = vsub.f32 %v5828, %v5926
  %v5951 = vsub.f32 %v5829, %v5927
  %v5952 = vsub.f32 %v5830, %v5928
  %v5953 = vsub.f32 %v5831, %v5929
  %v5954 = vsub.f32 %v5832, %v5930
  %v5955 = vsub.f32 %v5833, %v5931
  %v5956 = vsub.f32 %v5834, %v5932
  %v5957 = vsub.f32 %v5835, %v5933
  %v5958 = vmul.f32 %v5934, %v5934
  %v5959 = vmul.f32 %v5935, %v5935
  %v5960 = vmul.f32 %v5936, %v5936
  %v5961 = vmul.f32 %v5937, %v5937
  %v5962 = vmul.f32 %v5938, %v5938
  %v5963 = vmul.f32 %v5939, %v5939
  %v5964 = vmul.f32 %v5940, %v5940
  %v5965 = vmul.f32 %v5941, %v5941
  %v5966 = vmul.f32 %v5942, %v5942
  %v5967 = vmul.f32 %v5943, %v5943
  %v5968 = vmul.f32 %v5944, %v5944
  %v5969 = vmul.f32 %v5945, %v5945
  %v5970 = vmul.f32 %v5946, %v5946
  %v5971 = vmul.f32 %v5947, %v5947
  %v5972 = vmul.f32 %v5948, %v5948
  %v5973 = vmul.f32 %v5949, %v5949
  %v5974 = vmul.f32 %v5950, %v5950
  %v5975 = vmul.f32 %v5951, %v5951
  %v5976 = vmul.f32 %v5952, %v5952
  %v5977 = vmul.f32 %v5953, %v5953
  %v5978 = vmul.f32 %v5954, %v5954
  %v5979 = vmul.f32 %v5955, %v5955
  %v5980 = vmul.f32 %v5956, %v5956
  %v5981 = vmul.f32 %v5957, %v5957
  %v5982 = vsel %vm203, %v5958, 0.0
  %5983 = vadd.xlane.f32.xlu0 %v5982
  %v5984 = vpop.xlane.xlu0 %5983
  %v5985 = vsel %vm203, %v5959, 0.0
  %5986 = vadd.xlane.f32.xlu0 %v5985
  %v5987 = vpop.xlane.xlu0 %5986
  %v5988 = vsel %vm203, %v5960, 0.0
  %5989 = vadd.xlane.f32.xlu0 %v5988
  %v5990 = vpop.xlane.xlu0 %5989
  %v5991 = vsel %vm203, %v5961, 0.0
  %5992 = vadd.xlane.f32.xlu0 %v5991
  %v5993 = vpop.xlane.xlu0 %5992
  %v5994 = vsel %vm203, %v5962, 0.0
  %5995 = vadd.xlane.f32.xlu0 %v5994
  %v5996 = vpop.xlane.xlu0 %5995
  %v5997 = vsel %vm203, %v5963, 0.0
  %5998 = vadd.xlane.f32.xlu0 %v5997
  %v5999 = vpop.xlane.xlu0 %5998
  %v6000 = vsel %vm203, %v5964, 0.0
  %6001 = vadd.xlane.f32.xlu0 %v6000
  %v6002 = vpop.xlane.xlu0 %6001
  %v6003 = vsel %vm203, %v5965, 0.0
  %6004 = vadd.xlane.f32.xlu0 %v6003
  %v6005 = vpop.xlane.xlu0 %6004
  %v6006 = vsel %vm203, %v5966, 0.0
  %6007 = vadd.xlane.f32.xlu0 %v6006
  %v6008 = vpop.xlane.xlu0 %6007
  %v6009 = vsel %vm203, %v5967, 0.0
  %6010 = vadd.xlane.f32.xlu0 %v6009
  %v6011 = vpop.xlane.xlu0 %6010
  %v6012 = vsel %vm203, %v5968, 0.0
  %6013 = vadd.xlane.f32.xlu0 %v6012
  %v6014 = vpop.xlane.xlu0 %6013
  %v6015 = vsel %vm203, %v5969, 0.0
  %6016 = vadd.xlane.f32.xlu0 %v6015
  %v6017 = vpop.xlane.xlu0 %6016
  %v6018 = vsel %vm203, %v5970, 0.0
  %6019 = vadd.xlane.f32.xlu0 %v6018
  %v6020 = vpop.xlane.xlu0 %6019
  %v6021 = vsel %vm203, %v5971, 0.0
  %6022 = vadd.xlane.f32.xlu0 %v6021
  %v6023 = vpop.xlane.xlu0 %6022
  %v6024 = vsel %vm203, %v5972, 0.0
  %6025 = vadd.xlane.f32.xlu0 %v6024
  %v6026 = vpop.xlane.xlu0 %6025
  %v6027 = vsel %vm203, %v5973, 0.0
  %6028 = vadd.xlane.f32.xlu0 %v6027
  %v6029 = vpop.xlane.xlu0 %6028
  %v6030 = vsel %vm203, %v5974, 0.0
  %6031 = vadd.xlane.f32.xlu0 %v6030
  %v6032 = vpop.xlane.xlu0 %6031
  %v6033 = vsel %vm203, %v5975, 0.0
  %6034 = vadd.xlane.f32.xlu0 %v6033
  %v6035 = vpop.xlane.xlu0 %6034
  %v6036 = vsel %vm203, %v5976, 0.0
  %6037 = vadd.xlane.f32.xlu0 %v6036
  %v6038 = vpop.xlane.xlu0 %6037
  %v6039 = vsel %vm203, %v5977, 0.0
  %6040 = vadd.xlane.f32.xlu0 %v6039
  %v6041 = vpop.xlane.xlu0 %6040
  %v6042 = vsel %vm203, %v5978, 0.0
  %6043 = vadd.xlane.f32.xlu0 %v6042
  %v6044 = vpop.xlane.xlu0 %6043
  %v6045 = vsel %vm203, %v5979, 0.0
  %6046 = vadd.xlane.f32.xlu0 %v6045
  %v6047 = vpop.xlane.xlu0 %6046
  %v6048 = vsel %vm203, %v5980, 0.0
  %6049 = vadd.xlane.f32.xlu0 %v6048
  %v6050 = vpop.xlane.xlu0 %6049
  %v6051 = vsel %vm203, %v5981, 0.0
  %6052 = vadd.xlane.f32.xlu0 %v6051
  %v6053 = vpop.xlane.xlu0 %6052
  %v6054 = vmul.f32 %v5984, %v276
  %v6055 = vmul.f32 %v5987, %v276
  %v6056 = vmul.f32 %v5990, %v276
  %v6057 = vmul.f32 %v5993, %v276
  %v6058 = vmul.f32 %v5996, %v276
  %v6059 = vmul.f32 %v5999, %v276
  %v6060 = vmul.f32 %v6002, %v276
  %v6061 = vmul.f32 %v6005, %v276
  %v6062 = vmul.f32 %v6008, %v276
  %v6063 = vmul.f32 %v6011, %v276
  %v6064 = vmul.f32 %v6014, %v276
  %v6065 = vmul.f32 %v6017, %v276
  %v6066 = vmul.f32 %v6020, %v276
  %v6067 = vmul.f32 %v6023, %v276
  %v6068 = vmul.f32 %v6026, %v276
  %v6069 = vmul.f32 %v6029, %v276
  %v6070 = vmul.f32 %v6032, %v276
  %v6071 = vmul.f32 %v6035, %v276
  %v6072 = vmul.f32 %v6038, %v276
  %v6073 = vmul.f32 %v6041, %v276
  %v6074 = vmul.f32 %v6044, %v276
  %v6075 = vmul.f32 %v6047, %v276
  %v6076 = vmul.f32 %v6050, %v276
  %v6077 = vmul.f32 %v6053, %v276
  %v6078 = vadd.f32 %v6054, 1e-05
  %v6079 = vadd.f32 %v6055, 1e-05
  %v6080 = vadd.f32 %v6056, 1e-05
  %v6081 = vadd.f32 %v6057, 1e-05
  %v6082 = vadd.f32 %v6058, 1e-05
  %v6083 = vadd.f32 %v6059, 1e-05
  %v6084 = vadd.f32 %v6060, 1e-05
  %v6085 = vadd.f32 %v6061, 1e-05
  %v6086 = vadd.f32 %v6062, 1e-05
  %v6087 = vadd.f32 %v6063, 1e-05
  %v6088 = vadd.f32 %v6064, 1e-05
  %v6089 = vadd.f32 %v6065, 1e-05
  %v6090 = vadd.f32 %v6066, 1e-05
  %v6091 = vadd.f32 %v6067, 1e-05
  %v6092 = vadd.f32 %v6068, 1e-05
  %v6093 = vadd.f32 %v6069, 1e-05
  %v6094 = vadd.f32 %v6070, 1e-05
  %v6095 = vadd.f32 %v6071, 1e-05
  %v6096 = vadd.f32 %v6072, 1e-05
  %v6097 = vadd.f32 %v6073, 1e-05
  %v6098 = vadd.f32 %v6074, 1e-05
  %v6099 = vadd.f32 %v6075, 1e-05
  %v6100 = vadd.f32 %v6076, 1e-05
  %v6101 = vadd.f32 %v6077, 1e-05
  %v6102 = vrsqrt.pop %v6078
  %v6103 = vrsqrt.pop %v6079
  %v6104 = vrsqrt.pop %v6080
  %v6105 = vrsqrt.pop %v6081
  %v6106 = vrsqrt.pop %v6082
  %v6107 = vrsqrt.pop %v6083
  %v6108 = vrsqrt.pop %v6084
  %v6109 = vrsqrt.pop %v6085
  %v6110 = vrsqrt.pop %v6086
  %v6111 = vrsqrt.pop %v6087
  %v6112 = vrsqrt.pop %v6088
  %v6113 = vrsqrt.pop %v6089
  %v6114 = vrsqrt.pop %v6090
  %v6115 = vrsqrt.pop %v6091
  %v6116 = vrsqrt.pop %v6092
  %v6117 = vrsqrt.pop %v6093
  %v6118 = vrsqrt.pop %v6094
  %v6119 = vrsqrt.pop %v6095
  %v6120 = vrsqrt.pop %v6096
  %v6121 = vrsqrt.pop %v6097
  %v6122 = vrsqrt.pop %v6098
  %v6123 = vrsqrt.pop %v6099
  %v6124 = vrsqrt.pop %v6100
  %v6125 = vrsqrt.pop %v6101
  %v6126 = vmul.f32 %v5934, %v6102
  %v6127 = vmul.f32 %v5935, %v6103
  %v6128 = vmul.f32 %v5936, %v6104
  %v6129 = vmul.f32 %v5937, %v6105
  %v6130 = vmul.f32 %v5938, %v6106
  %v6131 = vmul.f32 %v5939, %v6107
  %v6132 = vmul.f32 %v5940, %v6108
  %v6133 = vmul.f32 %v5941, %v6109
  %v6134 = vmul.f32 %v5942, %v6110
  %v6135 = vmul.f32 %v5943, %v6111
  %v6136 = vmul.f32 %v5944, %v6112
  %v6137 = vmul.f32 %v5945, %v6113
  %v6138 = vmul.f32 %v5946, %v6114
  %v6139 = vmul.f32 %v5947, %v6115
  %v6140 = vmul.f32 %v5948, %v6116
  %v6141 = vmul.f32 %v5949, %v6117
  %v6142 = vmul.f32 %v5950, %v6118
  %v6143 = vmul.f32 %v5951, %v6119
  %v6144 = vmul.f32 %v5952, %v6120
  %v6145 = vmul.f32 %v5953, %v6121
  %v6146 = vmul.f32 %v5954, %v6122
  %v6147 = vmul.f32 %v5955, %v6123
  %v6148 = vmul.f32 %v5956, %v6124
  %v6149 = vmul.f32 %v5957, %v6125
  %v6151 = vlaneseq
  %v6152 = vshrl.u32 %v6151, 7
  %v6153 = vsub.s32 0, %v6152
  %v6154 = vrot.slane %v5836, %v6153
  %v6156 = vmul.f32 %v6126, %v6154
  %v6157 = vmul.f32 %v6127, %v6154
  %v6158 = vmul.f32 %v6128, %v6154
  %v6159 = vmul.f32 %v6129, %v6154
  %v6160 = vmul.f32 %v6130, %v6154
  %v6161 = vmul.f32 %v6131, %v6154
  %v6162 = vmul.f32 %v6132, %v6154
  %v6163 = vmul.f32 %v6133, %v6154
  %v6164 = vmul.f32 %v6134, %v6154
  %v6165 = vmul.f32 %v6135, %v6154
  %v6166 = vmul.f32 %v6136, %v6154
  %v6167 = vmul.f32 %v6137, %v6154
  %v6168 = vmul.f32 %v6138, %v6154
  %v6169 = vmul.f32 %v6139, %v6154
  %v6170 = vmul.f32 %v6140, %v6154
  %v6171 = vmul.f32 %v6141, %v6154
  %v6172 = vmul.f32 %v6142, %v6154
  %v6173 = vmul.f32 %v6143, %v6154
  %v6174 = vmul.f32 %v6144, %v6154
  %v6175 = vmul.f32 %v6145, %v6154
  %v6176 = vmul.f32 %v6146, %v6154
  %v6177 = vmul.f32 %v6147, %v6154
  %v6178 = vmul.f32 %v6148, %v6154
  %v6179 = vmul.f32 %v6149, %v6154
  %v6181 = vlaneseq
  %v6182 = vshrl.u32 %v6181, 7
  %v6183 = vsub.s32 0, %v6182
  %v6184 = vrot.slane %v5837, %v6183
  %v6186 = vadd.f32 %v6156, %v6184
  %v6187 = vadd.f32 %v6157, %v6184
  %v6188 = vadd.f32 %v6158, %v6184
  %v6189 = vadd.f32 %v6159, %v6184
  %v6190 = vadd.f32 %v6160, %v6184
  %v6191 = vadd.f32 %v6161, %v6184
  %v6192 = vadd.f32 %v6162, %v6184
  %v6193 = vadd.f32 %v6163, %v6184
  %v6194 = vadd.f32 %v6164, %v6184
  %v6195 = vadd.f32 %v6165, %v6184
  %v6196 = vadd.f32 %v6166, %v6184
  %v6197 = vadd.f32 %v6167, %v6184
  %v6198 = vadd.f32 %v6168, %v6184
  %v6199 = vadd.f32 %v6169, %v6184
  %v6200 = vadd.f32 %v6170, %v6184
  %v6201 = vadd.f32 %v6171, %v6184
  %v6202 = vadd.f32 %v6172, %v6184
  %v6203 = vadd.f32 %v6173, %v6184
  %v6204 = vadd.f32 %v6174, %v6184
  %v6205 = vadd.f32 %v6175, %v6184
  %v6206 = vadd.f32 %v6176, %v6184
  %v6207 = vadd.f32 %v6177, %v6184
  %v6208 = vadd.f32 %v6178, %v6184
  %v6209 = vadd.f32 %v6179, %v6184
  %v6210 = vsel %vm203, %v553, 0.0
  %6211 = vadd.xlane.f32.xlu0 %v6210
  %v6212 = vpop.xlane.xlu0 %6211
  %v6213 = vsel %vm203, %v554, 0.0
  %6214 = vadd.xlane.f32.xlu0 %v6213
  %v6215 = vpop.xlane.xlu0 %6214
  %v6216 = vsel %vm203, %v555, 0.0
  %6217 = vadd.xlane.f32.xlu0 %v6216
  %v6218 = vpop.xlane.xlu0 %6217
  %v6219 = vsel %vm203, %v556, 0.0
  %6220 = vadd.xlane.f32.xlu0 %v6219
  %v6221 = vpop.xlane.xlu0 %6220
  %v6222 = vsel %vm203, %v557, 0.0
  %6223 = vadd.xlane.f32.xlu0 %v6222
  %v6224 = vpop.xlane.xlu0 %6223
  %v6225 = vsel %vm203, %v558, 0.0
  %6226 = vadd.xlane.f32.xlu0 %v6225
  %v6227 = vpop.xlane.xlu0 %6226
  %v6228 = vsel %vm203, %v559, 0.0
  %6229 = vadd.xlane.f32.xlu0 %v6228
  %v6230 = vpop.xlane.xlu0 %6229
  %v6231 = vsel %vm203, %v560, 0.0
  %6232 = vadd.xlane.f32.xlu0 %v6231
  %v6233 = vpop.xlane.xlu0 %6232
  %v6234 = vsel %vm203, %v561, 0.0
  %6235 = vadd.xlane.f32.xlu0 %v6234
  %v6236 = vpop.xlane.xlu0 %6235
  %v6237 = vsel %vm203, %v562, 0.0
  %6238 = vadd.xlane.f32.xlu0 %v6237
  %v6239 = vpop.xlane.xlu0 %6238
  %v6240 = vsel %vm203, %v563, 0.0
  %6241 = vadd.xlane.f32.xlu0 %v6240
  %v6242 = vpop.xlane.xlu0 %6241
  %v6243 = vsel %vm203, %v564, 0.0
  %6244 = vadd.xlane.f32.xlu0 %v6243
  %v6245 = vpop.xlane.xlu0 %6244
  %v6246 = vsel %vm203, %v565, 0.0
  %6247 = vadd.xlane.f32.xlu0 %v6246
  %v6248 = vpop.xlane.xlu0 %6247
  %v6249 = vsel %vm203, %v566, 0.0
  %6250 = vadd.xlane.f32.xlu0 %v6249
  %v6251 = vpop.xlane.xlu0 %6250
  %v6252 = vsel %vm203, %v567, 0.0
  %6253 = vadd.xlane.f32.xlu0 %v6252
  %v6254 = vpop.xlane.xlu0 %6253
  %v6255 = vsel %vm203, %v568, 0.0
  %6256 = vadd.xlane.f32.xlu0 %v6255
  %v6257 = vpop.xlane.xlu0 %6256
  %v6258 = vsel %vm203, %v569, 0.0
  %6259 = vadd.xlane.f32.xlu0 %v6258
  %v6260 = vpop.xlane.xlu0 %6259
  %v6261 = vsel %vm203, %v570, 0.0
  %6262 = vadd.xlane.f32.xlu0 %v6261
  %v6263 = vpop.xlane.xlu0 %6262
  %v6264 = vsel %vm203, %v571, 0.0
  %6265 = vadd.xlane.f32.xlu0 %v6264
  %v6266 = vpop.xlane.xlu0 %6265
  %v6267 = vsel %vm203, %v572, 0.0
  %6268 = vadd.xlane.f32.xlu0 %v6267
  %v6269 = vpop.xlane.xlu0 %6268
  %v6270 = vsel %vm203, %v573, 0.0
  %6271 = vadd.xlane.f32.xlu0 %v6270
  %v6272 = vpop.xlane.xlu0 %6271
  %v6273 = vsel %vm203, %v574, 0.0
  %6274 = vadd.xlane.f32.xlu0 %v6273
  %v6275 = vpop.xlane.xlu0 %6274
  %v6276 = vsel %vm203, %v575, 0.0
  %6277 = vadd.xlane.f32.xlu0 %v6276
  %v6278 = vpop.xlane.xlu0 %6277
  %v6279 = vsel %vm203, %v576, 0.0
  %6280 = vadd.xlane.f32.xlu0 %v6279
  %v6281 = vpop.xlane.xlu0 %6280
  %v6282 = vsel %vm203, %v6186, 0.0
  %6283 = vadd.xlane.f32.xlu0 %v6282
  %v6284 = vpop.xlane.xlu0 %6283
  %v6285 = vsel %vm203, %v6187, 0.0
  %6286 = vadd.xlane.f32.xlu0 %v6285
  %v6287 = vpop.xlane.xlu0 %6286
  %v6288 = vsel %vm203, %v6188, 0.0
  %6289 = vadd.xlane.f32.xlu0 %v6288
  %v6290 = vpop.xlane.xlu0 %6289
  %v6291 = vsel %vm203, %v6189, 0.0
  %6292 = vadd.xlane.f32.xlu0 %v6291
  %v6293 = vpop.xlane.xlu0 %6292
  %v6294 = vsel %vm203, %v6190, 0.0
  %6295 = vadd.xlane.f32.xlu0 %v6294
  %v6296 = vpop.xlane.xlu0 %6295
  %v6297 = vsel %vm203, %v6191, 0.0
  %6298 = vadd.xlane.f32.xlu0 %v6297
  %v6299 = vpop.xlane.xlu0 %6298
  %v6300 = vsel %vm203, %v6192, 0.0
  %6301 = vadd.xlane.f32.xlu0 %v6300
  %v6302 = vpop.xlane.xlu0 %6301
  %v6303 = vsel %vm203, %v6193, 0.0
  %6304 = vadd.xlane.f32.xlu0 %v6303
  %v6305 = vpop.xlane.xlu0 %6304
  %v6306 = vsel %vm203, %v6194, 0.0
  %6307 = vadd.xlane.f32.xlu0 %v6306
  %v6308 = vpop.xlane.xlu0 %6307
  %v6309 = vsel %vm203, %v6195, 0.0
  %6310 = vadd.xlane.f32.xlu0 %v6309
  %v6311 = vpop.xlane.xlu0 %6310
  %v6312 = vsel %vm203, %v6196, 0.0
  %6313 = vadd.xlane.f32.xlu0 %v6312
  %v6314 = vpop.xlane.xlu0 %6313
  %v6315 = vsel %vm203, %v6197, 0.0
  %6316 = vadd.xlane.f32.xlu0 %v6315
  %v6317 = vpop.xlane.xlu0 %6316
  %v6318 = vsel %vm203, %v6198, 0.0
  %6319 = vadd.xlane.f32.xlu0 %v6318
  %v6320 = vpop.xlane.xlu0 %6319
  %v6321 = vsel %vm203, %v6199, 0.0
  %6322 = vadd.xlane.f32.xlu0 %v6321
  %v6323 = vpop.xlane.xlu0 %6322
  %v6324 = vsel %vm203, %v6200, 0.0
  %6325 = vadd.xlane.f32.xlu0 %v6324
  %v6326 = vpop.xlane.xlu0 %6325
  %v6327 = vsel %vm203, %v6201, 0.0
  %6328 = vadd.xlane.f32.xlu0 %v6327
  %v6329 = vpop.xlane.xlu0 %6328
  %v6330 = vsel %vm203, %v6202, 0.0
  %6331 = vadd.xlane.f32.xlu0 %v6330
  %v6332 = vpop.xlane.xlu0 %6331
  %v6333 = vsel %vm203, %v6203, 0.0
  %6334 = vadd.xlane.f32.xlu0 %v6333
  %v6335 = vpop.xlane.xlu0 %6334
  %v6336 = vsel %vm203, %v6204, 0.0
  %6337 = vadd.xlane.f32.xlu0 %v6336
  %v6338 = vpop.xlane.xlu0 %6337
  %v6339 = vsel %vm203, %v6205, 0.0
  %6340 = vadd.xlane.f32.xlu0 %v6339
  %v6341 = vpop.xlane.xlu0 %6340
  %v6342 = vsel %vm203, %v6206, 0.0
  %6343 = vadd.xlane.f32.xlu0 %v6342
  %v6344 = vpop.xlane.xlu0 %6343
  %v6345 = vsel %vm203, %v6207, 0.0
  %6346 = vadd.xlane.f32.xlu0 %v6345
  %v6347 = vpop.xlane.xlu0 %6346
  %v6348 = vsel %vm203, %v6208, 0.0
  %6349 = vadd.xlane.f32.xlu0 %v6348
  %v6350 = vpop.xlane.xlu0 %6349
  %v6351 = vsel %vm203, %v6209, 0.0
  %6352 = vadd.xlane.f32.xlu0 %v6351
  %v6353 = vpop.xlane.xlu0 %6352
  %v6354 = vadd.f32 %v6212, %v6284
  %v6355 = vadd.f32 %v6215, %v6287
  %v6356 = vadd.f32 %v6218, %v6290
  %v6357 = vadd.f32 %v6221, %v6293
  %v6358 = vadd.f32 %v6224, %v6296
  %v6359 = vadd.f32 %v6227, %v6299
  %v6360 = vadd.f32 %v6230, %v6302
  %v6361 = vadd.f32 %v6233, %v6305
  %v6362 = vadd.f32 %v6236, %v6308
  %v6363 = vadd.f32 %v6239, %v6311
  %v6364 = vadd.f32 %v6242, %v6314
  %v6365 = vadd.f32 %v6245, %v6317
  %v6366 = vadd.f32 %v6248, %v6320
  %v6367 = vadd.f32 %v6251, %v6323
  %v6368 = vadd.f32 %v6254, %v6326
  %v6369 = vadd.f32 %v6257, %v6329
  %v6370 = vadd.f32 %v6260, %v6332
  %v6371 = vadd.f32 %v6263, %v6335
  %v6372 = vadd.f32 %v6266, %v6338
  %v6373 = vadd.f32 %v6269, %v6341
  %v6374 = vadd.f32 %v6272, %v6344
  %v6375 = vadd.f32 %v6275, %v6347
  %v6376 = vadd.f32 %v6278, %v6350
  %v6377 = vadd.f32 %v6281, %v6353
  %v6378 = vrcp.pop 64.0
  %v6379 = vmul.f32 %v6354, %v6378
  %v6380 = vmul.f32 %v6355, %v6378
  %v6381 = vmul.f32 %v6356, %v6378
  %v6382 = vmul.f32 %v6357, %v6378
  %v6383 = vmul.f32 %v6358, %v6378
  %v6384 = vmul.f32 %v6359, %v6378
  %v6385 = vmul.f32 %v6360, %v6378
  %v6386 = vmul.f32 %v6361, %v6378
  %v6387 = vmul.f32 %v6362, %v6378
  %v6388 = vmul.f32 %v6363, %v6378
  %v6389 = vmul.f32 %v6364, %v6378
  %v6390 = vmul.f32 %v6365, %v6378
  %v6391 = vmul.f32 %v6366, %v6378
  %v6392 = vmul.f32 %v6367, %v6378
  %v6393 = vmul.f32 %v6368, %v6378
  %v6394 = vmul.f32 %v6369, %v6378
  %v6395 = vmul.f32 %v6370, %v6378
  %v6396 = vmul.f32 %v6371, %v6378
  %v6397 = vmul.f32 %v6372, %v6378
  %v6398 = vmul.f32 %v6373, %v6378
  %v6399 = vmul.f32 %v6374, %v6378
  %v6400 = vmul.f32 %v6375, %v6378
  %v6401 = vmul.f32 %v6376, %v6378
  %v6402 = vmul.f32 %v6377, %v6378
  %v6403 = vsub.f32 %v553, %v6379
  %v6404 = vsub.f32 %v554, %v6380
  %v6405 = vsub.f32 %v555, %v6381
  %v6406 = vsub.f32 %v556, %v6382
  %v6407 = vsub.f32 %v557, %v6383
  %v6408 = vsub.f32 %v558, %v6384
  %v6409 = vsub.f32 %v559, %v6385
  %v6410 = vsub.f32 %v560, %v6386
  %v6411 = vsub.f32 %v561, %v6387
  %v6412 = vsub.f32 %v562, %v6388
  %v6413 = vsub.f32 %v563, %v6389
  %v6414 = vsub.f32 %v564, %v6390
  %v6415 = vsub.f32 %v565, %v6391
  %v6416 = vsub.f32 %v566, %v6392
  %v6417 = vsub.f32 %v567, %v6393
  %v6418 = vsub.f32 %v568, %v6394
  %v6419 = vsub.f32 %v569, %v6395
  %v6420 = vsub.f32 %v570, %v6396
  %v6421 = vsub.f32 %v571, %v6397
  %v6422 = vsub.f32 %v572, %v6398
  %v6423 = vsub.f32 %v573, %v6399
  %v6424 = vsub.f32 %v574, %v6400
  %v6425 = vsub.f32 %v575, %v6401
  %v6426 = vsub.f32 %v576, %v6402
  %v6427 = vsub.f32 %v6186, %v6379
  %v6428 = vsub.f32 %v6187, %v6380
  %v6429 = vsub.f32 %v6188, %v6381
  %v6430 = vsub.f32 %v6189, %v6382
  %v6431 = vsub.f32 %v6190, %v6383
  %v6432 = vsub.f32 %v6191, %v6384
  %v6433 = vsub.f32 %v6192, %v6385
  %v6434 = vsub.f32 %v6193, %v6386
  %v6435 = vsub.f32 %v6194, %v6387
  %v6436 = vsub.f32 %v6195, %v6388
  %v6437 = vsub.f32 %v6196, %v6389
  %v6438 = vsub.f32 %v6197, %v6390
  %v6439 = vsub.f32 %v6198, %v6391
  %v6440 = vsub.f32 %v6199, %v6392
  %v6441 = vsub.f32 %v6200, %v6393
  %v6442 = vsub.f32 %v6201, %v6394
  %v6443 = vsub.f32 %v6202, %v6395
  %v6444 = vsub.f32 %v6203, %v6396
  %v6445 = vsub.f32 %v6204, %v6397
  %v6446 = vsub.f32 %v6205, %v6398
  %v6447 = vsub.f32 %v6206, %v6399
  %v6448 = vsub.f32 %v6207, %v6400
  %v6449 = vsub.f32 %v6208, %v6401
  %v6450 = vsub.f32 %v6209, %v6402
  %v6451 = vmul.f32 %v6403, %v6403
  %v6452 = vmul.f32 %v6404, %v6404
  %v6453 = vmul.f32 %v6405, %v6405
  %v6454 = vmul.f32 %v6406, %v6406
  %v6455 = vmul.f32 %v6407, %v6407
  %v6456 = vmul.f32 %v6408, %v6408
  %v6457 = vmul.f32 %v6409, %v6409
  %v6458 = vmul.f32 %v6410, %v6410
  %v6459 = vmul.f32 %v6411, %v6411
  %v6460 = vmul.f32 %v6412, %v6412
  %v6461 = vmul.f32 %v6413, %v6413
  %v6462 = vmul.f32 %v6414, %v6414
  %v6463 = vmul.f32 %v6415, %v6415
  %v6464 = vmul.f32 %v6416, %v6416
  %v6465 = vmul.f32 %v6417, %v6417
  %v6466 = vmul.f32 %v6418, %v6418
  %v6467 = vmul.f32 %v6419, %v6419
  %v6468 = vmul.f32 %v6420, %v6420
  %v6469 = vmul.f32 %v6421, %v6421
  %v6470 = vmul.f32 %v6422, %v6422
  %v6471 = vmul.f32 %v6423, %v6423
  %v6472 = vmul.f32 %v6424, %v6424
  %v6473 = vmul.f32 %v6425, %v6425
  %v6474 = vmul.f32 %v6426, %v6426
  %v6475 = vsel %vm203, %v6451, 0.0
  %6476 = vadd.xlane.f32.xlu0 %v6475
  %v6477 = vpop.xlane.xlu0 %6476
  %v6478 = vsel %vm203, %v6452, 0.0
  %6479 = vadd.xlane.f32.xlu0 %v6478
  %v6480 = vpop.xlane.xlu0 %6479
  %v6481 = vsel %vm203, %v6453, 0.0
  %6482 = vadd.xlane.f32.xlu0 %v6481
  %v6483 = vpop.xlane.xlu0 %6482
  %v6484 = vsel %vm203, %v6454, 0.0
  %6485 = vadd.xlane.f32.xlu0 %v6484
  %v6486 = vpop.xlane.xlu0 %6485
  %v6487 = vsel %vm203, %v6455, 0.0
  %6488 = vadd.xlane.f32.xlu0 %v6487
  %v6489 = vpop.xlane.xlu0 %6488
  %v6490 = vsel %vm203, %v6456, 0.0
  %6491 = vadd.xlane.f32.xlu0 %v6490
  %v6492 = vpop.xlane.xlu0 %6491
  %v6493 = vsel %vm203, %v6457, 0.0
  %6494 = vadd.xlane.f32.xlu0 %v6493
  %v6495 = vpop.xlane.xlu0 %6494
  %v6496 = vsel %vm203, %v6458, 0.0
  %6497 = vadd.xlane.f32.xlu0 %v6496
  %v6498 = vpop.xlane.xlu0 %6497
  %v6499 = vsel %vm203, %v6459, 0.0
  %6500 = vadd.xlane.f32.xlu0 %v6499
  %v6501 = vpop.xlane.xlu0 %6500
  %v6502 = vsel %vm203, %v6460, 0.0
  %6503 = vadd.xlane.f32.xlu0 %v6502
  %v6504 = vpop.xlane.xlu0 %6503
  %v6505 = vsel %vm203, %v6461, 0.0
  %6506 = vadd.xlane.f32.xlu0 %v6505
  %v6507 = vpop.xlane.xlu0 %6506
  %v6508 = vsel %vm203, %v6462, 0.0
  %6509 = vadd.xlane.f32.xlu0 %v6508
  %v6510 = vpop.xlane.xlu0 %6509
  %v6511 = vsel %vm203, %v6463, 0.0
  %6512 = vadd.xlane.f32.xlu0 %v6511
  %v6513 = vpop.xlane.xlu0 %6512
  %v6514 = vsel %vm203, %v6464, 0.0
  %6515 = vadd.xlane.f32.xlu0 %v6514
  %v6516 = vpop.xlane.xlu0 %6515
  %v6517 = vsel %vm203, %v6465, 0.0
  %6518 = vadd.xlane.f32.xlu0 %v6517
  %v6519 = vpop.xlane.xlu0 %6518
  %v6520 = vsel %vm203, %v6466, 0.0
  %6521 = vadd.xlane.f32.xlu0 %v6520
  %v6522 = vpop.xlane.xlu0 %6521
  %v6523 = vsel %vm203, %v6467, 0.0
  %6524 = vadd.xlane.f32.xlu0 %v6523
  %v6525 = vpop.xlane.xlu0 %6524
  %v6526 = vsel %vm203, %v6468, 0.0
  %6527 = vadd.xlane.f32.xlu0 %v6526
  %v6528 = vpop.xlane.xlu0 %6527
  %v6529 = vsel %vm203, %v6469, 0.0
  %6530 = vadd.xlane.f32.xlu0 %v6529
  %v6531 = vpop.xlane.xlu0 %6530
  %v6532 = vsel %vm203, %v6470, 0.0
  %6533 = vadd.xlane.f32.xlu0 %v6532
  %v6534 = vpop.xlane.xlu0 %6533
  %v6535 = vsel %vm203, %v6471, 0.0
  %6536 = vadd.xlane.f32.xlu0 %v6535
  %v6537 = vpop.xlane.xlu0 %6536
  %v6538 = vsel %vm203, %v6472, 0.0
  %6539 = vadd.xlane.f32.xlu0 %v6538
  %v6540 = vpop.xlane.xlu0 %6539
  %v6541 = vsel %vm203, %v6473, 0.0
  %6542 = vadd.xlane.f32.xlu0 %v6541
  %v6543 = vpop.xlane.xlu0 %6542
  %v6544 = vsel %vm203, %v6474, 0.0
  %6545 = vadd.xlane.f32.xlu0 %v6544
  %v6546 = vpop.xlane.xlu0 %6545
  %v6547 = vmul.f32 %v6427, %v6427
  %v6548 = vmul.f32 %v6428, %v6428
  %v6549 = vmul.f32 %v6429, %v6429
  %v6550 = vmul.f32 %v6430, %v6430
  %v6551 = vmul.f32 %v6431, %v6431
  %v6552 = vmul.f32 %v6432, %v6432
  %v6553 = vmul.f32 %v6433, %v6433
  %v6554 = vmul.f32 %v6434, %v6434
  %v6555 = vmul.f32 %v6435, %v6435
  %v6556 = vmul.f32 %v6436, %v6436
  %v6557 = vmul.f32 %v6437, %v6437
  %v6558 = vmul.f32 %v6438, %v6438
  %v6559 = vmul.f32 %v6439, %v6439
  %v6560 = vmul.f32 %v6440, %v6440
  %v6561 = vmul.f32 %v6441, %v6441
  %v6562 = vmul.f32 %v6442, %v6442
  %v6563 = vmul.f32 %v6443, %v6443
  %v6564 = vmul.f32 %v6444, %v6444
  %v6565 = vmul.f32 %v6445, %v6445
  %v6566 = vmul.f32 %v6446, %v6446
  %v6567 = vmul.f32 %v6447, %v6447
  %v6568 = vmul.f32 %v6448, %v6448
  %v6569 = vmul.f32 %v6449, %v6449
  %v6570 = vmul.f32 %v6450, %v6450
  %v6571 = vsel %vm203, %v6547, 0.0
  %6572 = vadd.xlane.f32.xlu0 %v6571
  %v6573 = vpop.xlane.xlu0 %6572
  %v6574 = vsel %vm203, %v6548, 0.0
  %6575 = vadd.xlane.f32.xlu0 %v6574
  %v6576 = vpop.xlane.xlu0 %6575
  %v6577 = vsel %vm203, %v6549, 0.0
  %6578 = vadd.xlane.f32.xlu0 %v6577
  %v6579 = vpop.xlane.xlu0 %6578
  %v6580 = vsel %vm203, %v6550, 0.0
  %6581 = vadd.xlane.f32.xlu0 %v6580
  %v6582 = vpop.xlane.xlu0 %6581
  %v6583 = vsel %vm203, %v6551, 0.0
  %6584 = vadd.xlane.f32.xlu0 %v6583
  %v6585 = vpop.xlane.xlu0 %6584
  %v6586 = vsel %vm203, %v6552, 0.0
  %6587 = vadd.xlane.f32.xlu0 %v6586
  %v6588 = vpop.xlane.xlu0 %6587
  %v6589 = vsel %vm203, %v6553, 0.0
  %6590 = vadd.xlane.f32.xlu0 %v6589
  %v6591 = vpop.xlane.xlu0 %6590
  %v6592 = vsel %vm203, %v6554, 0.0
  %6593 = vadd.xlane.f32.xlu0 %v6592
  %v6594 = vpop.xlane.xlu0 %6593
  %v6595 = vsel %vm203, %v6555, 0.0
  %6596 = vadd.xlane.f32.xlu0 %v6595
  %v6597 = vpop.xlane.xlu0 %6596
  %v6598 = vsel %vm203, %v6556, 0.0
  %6599 = vadd.xlane.f32.xlu0 %v6598
  %v6600 = vpop.xlane.xlu0 %6599
  %v6601 = vsel %vm203, %v6557, 0.0
  %6602 = vadd.xlane.f32.xlu0 %v6601
  %v6603 = vpop.xlane.xlu0 %6602
  %v6604 = vsel %vm203, %v6558, 0.0
  %6605 = vadd.xlane.f32.xlu0 %v6604
  %v6606 = vpop.xlane.xlu0 %6605
  %v6607 = vsel %vm203, %v6559, 0.0
  %6608 = vadd.xlane.f32.xlu0 %v6607
  %v6609 = vpop.xlane.xlu0 %6608
  %v6610 = vsel %vm203, %v6560, 0.0
  %6611 = vadd.xlane.f32.xlu0 %v6610
  %v6612 = vpop.xlane.xlu0 %6611
  %v6613 = vsel %vm203, %v6561, 0.0
  %6614 = vadd.xlane.f32.xlu0 %v6613
  %v6615 = vpop.xlane.xlu0 %6614
  %v6616 = vsel %vm203, %v6562, 0.0
  %6617 = vadd.xlane.f32.xlu0 %v6616
  %v6618 = vpop.xlane.xlu0 %6617
  %v6619 = vsel %vm203, %v6563, 0.0
  %6620 = vadd.xlane.f32.xlu0 %v6619
  %v6621 = vpop.xlane.xlu0 %6620
  %v6622 = vsel %vm203, %v6564, 0.0
  %6623 = vadd.xlane.f32.xlu0 %v6622
  %v6624 = vpop.xlane.xlu0 %6623
  %v6625 = vsel %vm203, %v6565, 0.0
  %6626 = vadd.xlane.f32.xlu0 %v6625
  %v6627 = vpop.xlane.xlu0 %6626
  %v6628 = vsel %vm203, %v6566, 0.0
  %6629 = vadd.xlane.f32.xlu0 %v6628
  %v6630 = vpop.xlane.xlu0 %6629
  %v6631 = vsel %vm203, %v6567, 0.0
  %6632 = vadd.xlane.f32.xlu0 %v6631
  %v6633 = vpop.xlane.xlu0 %6632
  %v6634 = vsel %vm203, %v6568, 0.0
  %6635 = vadd.xlane.f32.xlu0 %v6634
  %v6636 = vpop.xlane.xlu0 %6635
  %v6637 = vsel %vm203, %v6569, 0.0
  %6638 = vadd.xlane.f32.xlu0 %v6637
  %v6639 = vpop.xlane.xlu0 %6638
  %v6640 = vsel %vm203, %v6570, 0.0
  %6641 = vadd.xlane.f32.xlu0 %v6640
  %v6642 = vpop.xlane.xlu0 %6641
  %v6643 = vadd.f32 %v6477, %v6573
  %v6644 = vadd.f32 %v6480, %v6576
  %v6645 = vadd.f32 %v6483, %v6579
  %v6646 = vadd.f32 %v6486, %v6582
  %v6647 = vadd.f32 %v6489, %v6585
  %v6648 = vadd.f32 %v6492, %v6588
  %v6649 = vadd.f32 %v6495, %v6591
  %v6650 = vadd.f32 %v6498, %v6594
  %v6651 = vadd.f32 %v6501, %v6597
  %v6652 = vadd.f32 %v6504, %v6600
  %v6653 = vadd.f32 %v6507, %v6603
  %v6654 = vadd.f32 %v6510, %v6606
  %v6655 = vadd.f32 %v6513, %v6609
  %v6656 = vadd.f32 %v6516, %v6612
  %v6657 = vadd.f32 %v6519, %v6615
  %v6658 = vadd.f32 %v6522, %v6618
  %v6659 = vadd.f32 %v6525, %v6621
  %v6660 = vadd.f32 %v6528, %v6624
  %v6661 = vadd.f32 %v6531, %v6627
  %v6662 = vadd.f32 %v6534, %v6630
  %v6663 = vadd.f32 %v6537, %v6633
  %v6664 = vadd.f32 %v6540, %v6636
  %v6665 = vadd.f32 %v6543, %v6639
  %v6666 = vadd.f32 %v6546, %v6642
  %v6667 = vmul.f32 %v6643, %v6378
  %v6668 = vmul.f32 %v6644, %v6378
  %v6669 = vmul.f32 %v6645, %v6378
  %v6670 = vmul.f32 %v6646, %v6378
  %v6671 = vmul.f32 %v6647, %v6378
  %v6672 = vmul.f32 %v6648, %v6378
  %v6673 = vmul.f32 %v6649, %v6378
  %v6674 = vmul.f32 %v6650, %v6378
  %v6675 = vmul.f32 %v6651, %v6378
  %v6676 = vmul.f32 %v6652, %v6378
  %v6677 = vmul.f32 %v6653, %v6378
  %v6678 = vmul.f32 %v6654, %v6378
  %v6679 = vmul.f32 %v6655, %v6378
  %v6680 = vmul.f32 %v6656, %v6378
  %v6681 = vmul.f32 %v6657, %v6378
  %v6682 = vmul.f32 %v6658, %v6378
  %v6683 = vmul.f32 %v6659, %v6378
  %v6684 = vmul.f32 %v6660, %v6378
  %v6685 = vmul.f32 %v6661, %v6378
  %v6686 = vmul.f32 %v6662, %v6378
  %v6687 = vmul.f32 %v6663, %v6378
  %v6688 = vmul.f32 %v6664, %v6378
  %v6689 = vmul.f32 %v6665, %v6378
  %v6690 = vmul.f32 %v6666, %v6378
  %v6691 = vadd.f32 %v6667, 1e-05
  %v6692 = vadd.f32 %v6668, 1e-05
  %v6693 = vadd.f32 %v6669, 1e-05
  %v6694 = vadd.f32 %v6670, 1e-05
  %v6695 = vadd.f32 %v6671, 1e-05
  %v6696 = vadd.f32 %v6672, 1e-05
  %v6697 = vadd.f32 %v6673, 1e-05
  %v6698 = vadd.f32 %v6674, 1e-05
  %v6699 = vadd.f32 %v6675, 1e-05
  %v6700 = vadd.f32 %v6676, 1e-05
  %v6701 = vadd.f32 %v6677, 1e-05
  %v6702 = vadd.f32 %v6678, 1e-05
  %v6703 = vadd.f32 %v6679, 1e-05
  %v6704 = vadd.f32 %v6680, 1e-05
  %v6705 = vadd.f32 %v6681, 1e-05
  %v6706 = vadd.f32 %v6682, 1e-05
  %v6707 = vadd.f32 %v6683, 1e-05
  %v6708 = vadd.f32 %v6684, 1e-05
  %v6709 = vadd.f32 %v6685, 1e-05
  %v6710 = vadd.f32 %v6686, 1e-05
  %v6711 = vadd.f32 %v6687, 1e-05
  %v6712 = vadd.f32 %v6688, 1e-05
  %v6713 = vadd.f32 %v6689, 1e-05
  %v6714 = vadd.f32 %v6690, 1e-05
  %v6715 = vrsqrt.pop %v6691
  %v6716 = vrsqrt.pop %v6692
  %v6717 = vrsqrt.pop %v6693
  %v6718 = vrsqrt.pop %v6694
  %v6719 = vrsqrt.pop %v6695
  %v6720 = vrsqrt.pop %v6696
  %v6721 = vrsqrt.pop %v6697
  %v6722 = vrsqrt.pop %v6698
  %v6723 = vrsqrt.pop %v6699
  %v6724 = vrsqrt.pop %v6700
  %v6725 = vrsqrt.pop %v6701
  %v6726 = vrsqrt.pop %v6702
  %v6727 = vrsqrt.pop %v6703
  %v6728 = vrsqrt.pop %v6704
  %v6729 = vrsqrt.pop %v6705
  %v6730 = vrsqrt.pop %v6706
  %v6731 = vrsqrt.pop %v6707
  %v6732 = vrsqrt.pop %v6708
  %v6733 = vrsqrt.pop %v6709
  %v6734 = vrsqrt.pop %v6710
  %v6735 = vrsqrt.pop %v6711
  %v6736 = vrsqrt.pop %v6712
  %v6737 = vrsqrt.pop %v6713
  %v6738 = vrsqrt.pop %v6714
  %v6739 = vmul.f32 %v6403, %v6715
  %v6740 = vmul.f32 %v6404, %v6716
  %v6741 = vmul.f32 %v6405, %v6717
  %v6742 = vmul.f32 %v6406, %v6718
  %v6743 = vmul.f32 %v6407, %v6719
  %v6744 = vmul.f32 %v6408, %v6720
  %v6745 = vmul.f32 %v6409, %v6721
  %v6746 = vmul.f32 %v6410, %v6722
  %v6747 = vmul.f32 %v6411, %v6723
  %v6748 = vmul.f32 %v6412, %v6724
  %v6749 = vmul.f32 %v6413, %v6725
  %v6750 = vmul.f32 %v6414, %v6726
  %v6751 = vmul.f32 %v6415, %v6727
  %v6752 = vmul.f32 %v6416, %v6728
  %v6753 = vmul.f32 %v6417, %v6729
  %v6754 = vmul.f32 %v6418, %v6730
  %v6755 = vmul.f32 %v6419, %v6731
  %v6756 = vmul.f32 %v6420, %v6732
  %v6757 = vmul.f32 %v6421, %v6733
  %v6758 = vmul.f32 %v6422, %v6734
  %v6759 = vmul.f32 %v6423, %v6735
  %v6760 = vmul.f32 %v6424, %v6736
  %v6761 = vmul.f32 %v6425, %v6737
  %v6762 = vmul.f32 %v6426, %v6738
  %v6763 = vld [vmem:[%s15] sm:$0x1]
  %v6765 = vlaneseq
  %v6766 = vshrl.u32 %v6765, 7
  %v6767 = vsub.s32 0, %v6766
  %v6768 = vrot.slane %v6763, %v6767
  %v6770 = vmul.f32 %v6739, %v6768
  %v6771 = vmul.f32 %v6740, %v6768
  %v6772 = vmul.f32 %v6741, %v6768
  %v6773 = vmul.f32 %v6742, %v6768
  %v6774 = vmul.f32 %v6743, %v6768
  %v6775 = vmul.f32 %v6744, %v6768
  %v6776 = vmul.f32 %v6745, %v6768
  %v6777 = vmul.f32 %v6746, %v6768
  %v6778 = vmul.f32 %v6747, %v6768
  %v6779 = vmul.f32 %v6748, %v6768
  %v6780 = vmul.f32 %v6749, %v6768
  %v6781 = vmul.f32 %v6750, %v6768
  %v6782 = vmul.f32 %v6751, %v6768
  %v6783 = vmul.f32 %v6752, %v6768
  %v6784 = vmul.f32 %v6753, %v6768
  %v6785 = vmul.f32 %v6754, %v6768
  %v6786 = vmul.f32 %v6755, %v6768
  %v6787 = vmul.f32 %v6756, %v6768
  %v6788 = vmul.f32 %v6757, %v6768
  %v6789 = vmul.f32 %v6758, %v6768
  %v6790 = vmul.f32 %v6759, %v6768
  %v6791 = vmul.f32 %v6760, %v6768
  %v6792 = vmul.f32 %v6761, %v6768
  %v6793 = vmul.f32 %v6762, %v6768
  %v6794 = vld [vmem:[%s16] sm:$0x1]
  %v6796 = vlaneseq
  %v6797 = vshrl.u32 %v6796, 7
  %v6798 = vsub.s32 0, %v6797
  %v6799 = vrot.slane %v6794, %v6798
  %v6801 = vadd.f32 %v6770, %v6799
  %v6802 = vadd.f32 %v6771, %v6799
  %v6803 = vadd.f32 %v6772, %v6799
  %v6804 = vadd.f32 %v6773, %v6799
  %v6805 = vadd.f32 %v6774, %v6799
  %v6806 = vadd.f32 %v6775, %v6799
  %v6807 = vadd.f32 %v6776, %v6799
  %v6808 = vadd.f32 %v6777, %v6799
  %v6809 = vadd.f32 %v6778, %v6799
  %v6810 = vadd.f32 %v6779, %v6799
  %v6811 = vadd.f32 %v6780, %v6799
  %v6812 = vadd.f32 %v6781, %v6799
  %v6813 = vadd.f32 %v6782, %v6799
  %v6814 = vadd.f32 %v6783, %v6799
  %v6815 = vadd.f32 %v6784, %v6799
  %v6816 = vadd.f32 %v6785, %v6799
  %v6817 = vadd.f32 %v6786, %v6799
  %v6818 = vadd.f32 %v6787, %v6799
  %v6819 = vadd.f32 %v6788, %v6799
  %v6820 = vadd.f32 %v6789, %v6799
  %v6821 = vadd.f32 %v6790, %v6799
  %v6822 = vadd.f32 %v6791, %v6799
  %v6823 = vadd.f32 %v6792, %v6799
  %v6824 = vadd.f32 %v6793, %v6799
  %v6825 = vmul.f32 %v6427, %v6715
  %v6826 = vmul.f32 %v6428, %v6716
  %v6827 = vmul.f32 %v6429, %v6717
  %v6828 = vmul.f32 %v6430, %v6718
  %v6829 = vmul.f32 %v6431, %v6719
  %v6830 = vmul.f32 %v6432, %v6720
  %v6831 = vmul.f32 %v6433, %v6721
  %v6832 = vmul.f32 %v6434, %v6722
  %v6833 = vmul.f32 %v6435, %v6723
  %v6834 = vmul.f32 %v6436, %v6724
  %v6835 = vmul.f32 %v6437, %v6725
  %v6836 = vmul.f32 %v6438, %v6726
  %v6837 = vmul.f32 %v6439, %v6727
  %v6838 = vmul.f32 %v6440, %v6728
  %v6839 = vmul.f32 %v6441, %v6729
  %v6840 = vmul.f32 %v6442, %v6730
  %v6841 = vmul.f32 %v6443, %v6731
  %v6842 = vmul.f32 %v6444, %v6732
  %v6843 = vmul.f32 %v6445, %v6733
  %v6844 = vmul.f32 %v6446, %v6734
  %v6845 = vmul.f32 %v6447, %v6735
  %v6846 = vmul.f32 %v6448, %v6736
  %v6847 = vmul.f32 %v6449, %v6737
  %v6848 = vmul.f32 %v6450, %v6738
  %v6849 = vld [vmem:[%s17] sm:$0x1]
  %v6851 = vlaneseq
  %v6852 = vshrl.u32 %v6851, 7
  %v6853 = vsub.s32 0, %v6852
  %v6854 = vrot.slane %v6849, %v6853
  %v6856 = vmul.f32 %v6825, %v6854
  %v6857 = vmul.f32 %v6826, %v6854
  %v6858 = vmul.f32 %v6827, %v6854
  %v6859 = vmul.f32 %v6828, %v6854
  %v6860 = vmul.f32 %v6829, %v6854
  %v6861 = vmul.f32 %v6830, %v6854
  %v6862 = vmul.f32 %v6831, %v6854
  %v6863 = vmul.f32 %v6832, %v6854
  %v6864 = vmul.f32 %v6833, %v6854
  %v6865 = vmul.f32 %v6834, %v6854
  %v6866 = vmul.f32 %v6835, %v6854
  %v6867 = vmul.f32 %v6836, %v6854
  %v6868 = vmul.f32 %v6837, %v6854
  %v6869 = vmul.f32 %v6838, %v6854
  %v6870 = vmul.f32 %v6839, %v6854
  %v6871 = vmul.f32 %v6840, %v6854
  %v6872 = vmul.f32 %v6841, %v6854
  %v6873 = vmul.f32 %v6842, %v6854
  %v6874 = vmul.f32 %v6843, %v6854
  %v6875 = vmul.f32 %v6844, %v6854
  %v6876 = vmul.f32 %v6845, %v6854
  %v6877 = vmul.f32 %v6846, %v6854
  %v6878 = vmul.f32 %v6847, %v6854
  %v6879 = vmul.f32 %v6848, %v6854
  %v6880 = vld [vmem:[%s18] sm:$0x1]
  %v6882 = vlaneseq
  %v6883 = vshrl.u32 %v6882, 7
  %v6884 = vsub.s32 0, %v6883
  %v6885 = vrot.slane %v6880, %v6884
  %v6887 = vadd.f32 %v6856, %v6885
  %v6888 = vadd.f32 %v6857, %v6885
  %v6889 = vadd.f32 %v6858, %v6885
  %v6890 = vadd.f32 %v6859, %v6885
  %v6891 = vadd.f32 %v6860, %v6885
  %v6892 = vadd.f32 %v6861, %v6885
  %v6893 = vadd.f32 %v6862, %v6885
  %v6894 = vadd.f32 %v6863, %v6885
  %v6895 = vadd.f32 %v6864, %v6885
  %v6896 = vadd.f32 %v6865, %v6885
  %v6897 = vadd.f32 %v6866, %v6885
  %v6898 = vadd.f32 %v6867, %v6885
  %v6899 = vadd.f32 %v6868, %v6885
  %v6900 = vadd.f32 %v6869, %v6885
  %v6901 = vadd.f32 %v6870, %v6885
  %v6902 = vadd.f32 %v6871, %v6885
  %v6903 = vadd.f32 %v6872, %v6885
  %v6904 = vadd.f32 %v6873, %v6885
  %v6905 = vadd.f32 %v6874, %v6885
  %v6906 = vadd.f32 %v6875, %v6885
  %v6907 = vadd.f32 %v6876, %v6885
  %v6908 = vadd.f32 %v6877, %v6885
  %v6909 = vadd.f32 %v6878, %v6885
  %v6910 = vadd.f32 %v6879, %v6885
  %v6911 = vpack.c.bf16 %v6802, %v6801
  %v6912 = vpack.c.bf16 %v6804, %v6803
  %v6913 = vpack.c.bf16 %v6806, %v6805
  %v6914 = vpack.c.bf16 %v6808, %v6807
  %v6915 = vpack.c.bf16 %v6810, %v6809
  %v6916 = vpack.c.bf16 %v6812, %v6811
  %v6917 = vpack.c.bf16 %v6814, %v6813
  %v6918 = vpack.c.bf16 %v6816, %v6815
  %v6919 = vpack.c.bf16 %v6818, %v6817
  %v6920 = vpack.c.bf16 %v6820, %v6819
  %v6921 = vpack.c.bf16 %v6822, %v6821
  %v6922 = vpack.c.bf16 %v6824, %v6823
  %v6923 = vld [vmem:[%s19] sm:$0xf]
  %v6924 = vld [vmem:[%s19 + $0x4] sm:$0xf]
  %v6925 = vld [vmem:[%s19 + $0x8] sm:$0xf]
  %v6926 = vld [vmem:[%s19 + $0xc] sm:$0xf]
  %v6927 = vpack.c.bf16 %v6888, %v6887
  %v6928 = vpack.c.bf16 %v6890, %v6889
  %v6929 = vpack.c.bf16 %v6892, %v6891
  %v6930 = vpack.c.bf16 %v6894, %v6893
  %v6931 = vpack.c.bf16 %v6896, %v6895
  %v6932 = vpack.c.bf16 %v6898, %v6897
  %v6933 = vpack.c.bf16 %v6900, %v6899
  %v6934 = vpack.c.bf16 %v6902, %v6901
  %v6935 = vpack.c.bf16 %v6904, %v6903
  %v6936 = vpack.c.bf16 %v6906, %v6905
  %v6937 = vpack.c.bf16 %v6908, %v6907
  %v6938 = vpack.c.bf16 %v6910, %v6909
  %v6939 = vld [vmem:[%s20] sm:$0xf]
  %v6940 = vld [vmem:[%s20 + $0x4] sm:$0xf]
  %v6941 = vld [vmem:[%s20 + $0x8] sm:$0xf]
  %v6942 = vld [vmem:[%s20 + $0xc] sm:$0xf]
  %v6947 = vunpack.c.l.b16 %v6939
  %v6948 = vunpack.c.l.b16 %v6940
  %v6949 = vunpack.c.l.b16 %v6941
  %v6950 = vunpack.c.l.b16 %v6942
  %v6951 = vpack.c.b16 %v6948, %v6947
  %v6952 = vpack.c.b16 %v6950, %v6949
  %v6956 = vsel %vm203, %v6927, 0
  %v6959 = vsel %vm203, %v6928, 0
  %v6962 = vsel %vm203, %v6929, 0
  %v6965 = vsel %vm203, %v6930, 0
  %v6968 = vsel %vm203, %v6931, 0
  %v6971 = vsel %vm203, %v6932, 0
  %v6974 = vsel %vm203, %v6933, 0
  %v6977 = vsel %vm203, %v6934, 0
  %v6980 = vsel %vm203, %v6935, 0
  %v6983 = vsel %vm203, %v6936, 0
  %v6986 = vsel %vm203, %v6937, 0
  %v6989 = vsel %vm203, %v6938, 0
  %6991 = vmatprep.subr.bf16.mxu0 0
  %6992 = vmatpush1.bf16.msra.mxu0 %v6951
  %6993 = vmatprep.subr.bf16.mxu0 0
  %6994 = vmatpush1.bf16.msra.mxu0 %v6952
  %6995 = vmatprep.subr.bf16.mxu0 0
  %6996 = vmatpush1.bf16.msra.mxu0 0
  %6997 = vmatprep.subr.bf16.mxu0 0
  %6998 = vmatpush1.bf16.msra.mxu0 0
  %6999 = vmatprep.subr.bf16.mxu0 0
  %7000 = vmatpush1.bf16.msra.mxu0 0
  %7001 = vmatprep.subr.bf16.mxu0 0
  %7002 = vmatpush1.bf16.msra.mxu0 0
  %7003 = vmatprep.subr.bf16.mxu0 0
  %7004 = vmatpush1.bf16.msra.mxu0 0
  %7005 = vmatprep.subr.bf16.mxu0 0
  %7006 = vmatpush1.bf16.msra.mxu0 0
  %7007 = vmatprep.subr.bf16.mxu0 0
  %7008 = vmatpush1.bf16.msra.mxu0 0
  %7009 = vmatprep.subr.bf16.mxu0 0
  %7010 = vmatpush1.bf16.msra.mxu0 0
  %7011 = vmatprep.subr.bf16.mxu0 0
  %7012 = vmatpush1.bf16.msra.mxu0 0
  %7013 = vmatprep.subr.bf16.mxu0 0
  %7014 = vmatpush1.bf16.msra.mxu0 0
  %7015 = vmatprep.subr.bf16.mxu0 0
  %7016 = vmatpush1.bf16.msra.mxu0 0
  %7017 = vmatprep.subr.bf16.mxu0 0
  %7018 = vmatpush1.bf16.msra.mxu0 0
  %7019 = vmatprep.subr.bf16.mxu0 0
  %7020 = vmatpush1.bf16.msra.mxu0 0
  %7021 = vmatprep.subr.bf16.mxu0 0
  %7022 = vmatpush1.bf16.msra.mxu0 0
  %7023 = vmatprep.mubr.bf16.mxu0 0
  %7024 = vmatmul.mubr.bf16.gmra.mrb[0].mxu0 %v6956
  %v7025 = vpop.f32.mrb[0].mxu0
  %v7026 = vadd.f32 0.0, %v7025
  %v7027 = vpop.f32.mrb[0].mxu0
  %v7028 = vpop.f32.mrb[0].mxu0
  %v7029 = vadd.f32 0.0, %v7028
  %v7030 = vpop.f32.mrb[0].mxu0
  %7031 = vmatprep.mubr.bf16.mxu0 0
  %7032 = vmatmul.mubr.bf16.gmra.mrb[0].mxu0 %v6959
  %v7033 = vpop.f32.mrb[0].mxu0
  %v7034 = vadd.f32 0.0, %v7033
  %v7035 = vpop.f32.mrb[0].mxu0
  %v7036 = vpop.f32.mrb[0].mxu0
  %v7037 = vadd.f32 0.0, %v7036
  %v7038 = vpop.f32.mrb[0].mxu0
  %7039 = vmatprep.mubr.bf16.mxu0 0
  %7040 = vmatmul.mubr.bf16.gmra.mrb[0].mxu0 %v6962
  %v7041 = vpop.f32.mrb[0].mxu0
  %v7042 = vadd.f32 0.0, %v7041
  %v7043 = vpop.f32.mrb[0].mxu0
  %v7044 = vpop.f32.mrb[0].mxu0
  %v7045 = vadd.f32 0.0, %v7044
  %v7046 = vpop.f32.mrb[0].mxu0
  %7047 = vmatprep.mubr.bf16.mxu0 0
  %7048 = vmatmul.mubr.bf16.gmra.mrb[0].mxu0 %v6965
  %v7049 = vpop.f32.mrb[0].mxu0
  %v7050 = vadd.f32 0.0, %v7049
  %v7051 = vpop.f32.mrb[0].mxu0
  %v7052 = vpop.f32.mrb[0].mxu0
  %v7053 = vadd.f32 0.0, %v7052
  %v7054 = vpop.f32.mrb[0].mxu0
  %7055 = vmatprep.mubr.bf16.mxu0 0
  %7056 = vmatmul.mubr.bf16.gmra.mrb[0].mxu0 %v6968
  %v7057 = vpop.f32.mrb[0].mxu0
  %v7058 = vadd.f32 0.0, %v7057
  %v7059 = vpop.f32.mrb[0].mxu0
  %v7060 = vpop.f32.mrb[0].mxu0
  %v7061 = vadd.f32 0.0, %v7060
  %v7062 = vpop.f32.mrb[0].mxu0
  %7063 = vmatprep.mubr.bf16.mxu0 0
  %7064 = vmatmul.mubr.bf16.gmra.mrb[0].mxu0 %v6971
  %v7065 = vpop.f32.mrb[0].mxu0
  %v7066 = vadd.f32 0.0, %v7065
  %v7067 = vpop.f32.mrb[0].mxu0
  %v7068 = vpop.f32.mrb[0].mxu0
  %v7069 = vadd.f32 0.0, %v7068
  %v7070 = vpop.f32.mrb[0].mxu0
  %7071 = vmatprep.mubr.bf16.mxu0 0
  %7072 = vmatmul.mubr.bf16.gmra.mrb[0].mxu0 %v6974
  %v7073 = vpop.f32.mrb[0].mxu0
  %v7074 = vadd.f32 0.0, %v7073
  %v7075 = vpop.f32.mrb[0].mxu0
  %v7076 = vpop.f32.mrb[0].mxu0
  %v7077 = vadd.f32 0.0, %v7076
  %v7078 = vpop.f32.mrb[0].mxu0
  %7079 = vmatprep.mubr.bf16.mxu0 0
  %7080 = vmatmul.mubr.bf16.gmra.mrb[0].mxu0 %v6977
  %v7081 = vpop.f32.mrb[0].mxu0
  %v7082 = vadd.f32 0.0, %v7081
  %v7083 = vpop.f32.mrb[0].mxu0
  %v7084 = vpop.f32.mrb[0].mxu0
  %v7085 = vadd.f32 0.0, %v7084
  %v7086 = vpop.f32.mrb[0].mxu0
  %7087 = vmatprep.mubr.bf16.mxu0 0
  %7088 = vmatmul.mubr.bf16.gmra.mrb[0].mxu0 %v6980
  %v7089 = vpop.f32.mrb[0].mxu0
  %v7090 = vadd.f32 0.0, %v7089
  %v7091 = vpop.f32.mrb[0].mxu0
  %v7092 = vpop.f32.mrb[0].mxu0
  %v7093 = vadd.f32 0.0, %v7092
  %v7094 = vpop.f32.mrb[0].mxu0
  %7095 = vmatprep.mubr.bf16.mxu0 0
  %7096 = vmatmul.mubr.bf16.gmra.mrb[0].mxu0 %v6983
  %v7097 = vpop.f32.mrb[0].mxu0
  %v7098 = vadd.f32 0.0, %v7097
  %v7099 = vpop.f32.mrb[0].mxu0
  %v7100 = vpop.f32.mrb[0].mxu0
  %v7101 = vadd.f32 0.0, %v7100
  %v7102 = vpop.f32.mrb[0].mxu0
  %7103 = vmatprep.mubr.bf16.mxu0 0
  %7104 = vmatmul.mubr.bf16.gmra.mrb[0].mxu0 %v6986
  %v7105 = vpop.f32.mrb[0].mxu0
  %v7106 = vadd.f32 0.0, %v7105
  %v7107 = vpop.f32.mrb[0].mxu0
  %v7108 = vpop.f32.mrb[0].mxu0
  %v7109 = vadd.f32 0.0, %v7108
  %v7110 = vpop.f32.mrb[0].mxu0
  %7111 = vmatprep.mubr.bf16.mxu0 0
  %7112 = vmatmul.mubr.bf16.gmra.mrb[0].mxu0 %v6989
  %v7113 = vpop.f32.mrb[0].mxu0
  %v7114 = vadd.f32 0.0, %v7113
  %v7115 = vpop.f32.mrb[0].mxu0
  %v7116 = vpop.f32.mrb[0].mxu0
  %v7117 = vadd.f32 0.0, %v7116
  %v7118 = vpop.f32.mrb[0].mxu0
  %7119 = vdwg.mxu0
  %v7124 = vunpack.c.l.b16 %v6923
  %v7125 = vunpack.c.l.b16 %v6924
  %v7126 = vunpack.c.l.b16 %v6925
  %v7127 = vunpack.c.l.b16 %v6926
  %v7128 = vpack.c.b16 %v7125, %v7124
  %v7129 = vpack.c.b16 %v7127, %v7126
  %v7133 = vsel %vm203, %v6911, 0
  %v7136 = vsel %vm203, %v6912, 0
  %v7139 = vsel %vm203, %v6913, 0
  %v7142 = vsel %vm203, %v6914, 0
  %v7145 = vsel %vm203, %v6915, 0
  %v7148 = vsel %vm203, %v6916, 0
  %v7151 = vsel %vm203, %v6917, 0
  %v7154 = vsel %vm203, %v6918, 0
  %v7157 = vsel %vm203, %v6919, 0
  %v7160 = vsel %vm203, %v6920, 0
  %v7163 = vsel %vm203, %v6921, 0
  %v7166 = vsel %vm203, %v6922, 0
  %7168 = vmatprep.subr.bf16.mxu0 0
  %7169 = vmatpush1.bf16.msra.mxu0 %v7128
  %7170 = vmatprep.subr.bf16.mxu0 0
  %7171 = vmatpush1.bf16.msra.mxu0 %v7129
  %7172 = vmatprep.subr.bf16.mxu0 0
  %7173 = vmatpush1.bf16.msra.mxu0 0
  %7174 = vmatprep.subr.bf16.mxu0 0
  %7175 = vmatpush1.bf16.msra.mxu0 0
  %7176 = vmatprep.subr.bf16.mxu0 0
  %7177 = vmatpush1.bf16.msra.mxu0 0
  %7178 = vmatprep.subr.bf16.mxu0 0
  %7179 = vmatpush1.bf16.msra.mxu0 0
  %7180 = vmatprep.subr.bf16.mxu0 0
  %7181 = vmatpush1.bf16.msra.mxu0 0
  %7182 = vmatprep.subr.bf16.mxu0 0
  %7183 = vmatpush1.bf16.msra.mxu0 0
  %7184 = vmatprep.subr.bf16.mxu0 0
  %7185 = vmatpush1.bf16.msra.mxu0 0
  %7186 = vmatprep.subr.bf16.mxu0 0
  %7187 = vmatpush1.bf16.msra.mxu0 0
  %7188 = vmatprep.subr.bf16.mxu0 0
  %7189 = vmatpush1.bf16.msra.mxu0 0
  %7190 = vmatprep.subr.bf16.mxu0 0
  %7191 = vmatpush1.bf16.msra.mxu0 0
  %7192 = vmatprep.subr.bf16.mxu0 0
  %7193 = vmatpush1.bf16.msra.mxu0 0
  %7194 = vmatprep.subr.bf16.mxu0 0
  %7195 = vmatpush1.bf16.msra.mxu0 0
  %7196 = vmatprep.subr.bf16.mxu0 0
  %7197 = vmatpush1.bf16.msra.mxu0 0
  %7198 = vmatprep.subr.bf16.mxu0 0
  %7199 = vmatpush1.bf16.msra.mxu0 0
  %7200 = vmatprep.mubr.bf16.mxu0 0
  %7201 = vmatmul.mubr.bf16.gmra.mrb[0].mxu0 %v7133
  %v7202 = vpop.f32.mrb[0].mxu0
  %v7203 = vadd.f32 %v7026, %v7202
  %v7204 = vpop.f32.mrb[0].mxu0
  %v7205 = vpop.f32.mrb[0].mxu0
  %v7206 = vadd.f32 %v7029, %v7205
  %v7207 = vpop.f32.mrb[0].mxu0
  %7208 = vmatprep.mubr.bf16.mxu0 0
  %7209 = vmatmul.mubr.bf16.gmra.mrb[0].mxu0 %v7136
  %v7210 = vpop.f32.mrb[0].mxu0
  %v7211 = vadd.f32 %v7034, %v7210
  %v7212 = vpop.f32.mrb[0].mxu0
  %v7213 = vpop.f32.mrb[0].mxu0
  %v7214 = vadd.f32 %v7037, %v7213
  %v7215 = vpop.f32.mrb[0].mxu0
  %7216 = vmatprep.mubr.bf16.mxu0 0
  %7217 = vmatmul.mubr.bf16.gmra.mrb[0].mxu0 %v7139
  %v7218 = vpop.f32.mrb[0].mxu0
  %v7219 = vadd.f32 %v7042, %v7218
  %v7220 = vpop.f32.mrb[0].mxu0
  %v7221 = vpop.f32.mrb[0].mxu0
  %v7222 = vadd.f32 %v7045, %v7221
  %v7223 = vpop.f32.mrb[0].mxu0
  %7224 = vmatprep.mubr.bf16.mxu0 0
  %7225 = vmatmul.mubr.bf16.gmra.mrb[0].mxu0 %v7142
  %v7226 = vpop.f32.mrb[0].mxu0
  %v7227 = vadd.f32 %v7050, %v7226
  %v7228 = vpop.f32.mrb[0].mxu0
  %v7229 = vpop.f32.mrb[0].mxu0
  %v7230 = vadd.f32 %v7053, %v7229
  %v7231 = vpop.f32.mrb[0].mxu0
  %7232 = vmatprep.mubr.bf16.mxu0 0
  %7233 = vmatmul.mubr.bf16.gmra.mrb[0].mxu0 %v7145
  %v7234 = vpop.f32.mrb[0].mxu0
  %v7235 = vadd.f32 %v7058, %v7234
  %v7236 = vpop.f32.mrb[0].mxu0
  %v7237 = vpop.f32.mrb[0].mxu0
  %v7238 = vadd.f32 %v7061, %v7237
  %v7239 = vpop.f32.mrb[0].mxu0
  %7240 = vmatprep.mubr.bf16.mxu0 0
  %7241 = vmatmul.mubr.bf16.gmra.mrb[0].mxu0 %v7148
  %v7242 = vpop.f32.mrb[0].mxu0
  %v7243 = vadd.f32 %v7066, %v7242
  %v7244 = vpop.f32.mrb[0].mxu0
  %v7245 = vpop.f32.mrb[0].mxu0
  %v7246 = vadd.f32 %v7069, %v7245
  %v7247 = vpop.f32.mrb[0].mxu0
  %7248 = vmatprep.mubr.bf16.mxu0 0
  %7249 = vmatmul.mubr.bf16.gmra.mrb[0].mxu0 %v7151
  %v7250 = vpop.f32.mrb[0].mxu0
  %v7251 = vadd.f32 %v7074, %v7250
  %v7252 = vpop.f32.mrb[0].mxu0
  %v7253 = vpop.f32.mrb[0].mxu0
  %v7254 = vadd.f32 %v7077, %v7253
  %v7255 = vpop.f32.mrb[0].mxu0
  %7256 = vmatprep.mubr.bf16.mxu0 0
  %7257 = vmatmul.mubr.bf16.gmra.mrb[0].mxu0 %v7154
  %v7258 = vpop.f32.mrb[0].mxu0
  %v7259 = vadd.f32 %v7082, %v7258
  %v7260 = vpop.f32.mrb[0].mxu0
  %v7261 = vpop.f32.mrb[0].mxu0
  %v7262 = vadd.f32 %v7085, %v7261
  %v7263 = vpop.f32.mrb[0].mxu0
  %7264 = vmatprep.mubr.bf16.mxu0 0
  %7265 = vmatmul.mubr.bf16.gmra.mrb[0].mxu0 %v7157
  %v7266 = vpop.f32.mrb[0].mxu0
  %v7267 = vadd.f32 %v7090, %v7266
  %v7268 = vpop.f32.mrb[0].mxu0
  %v7269 = vpop.f32.mrb[0].mxu0
  %v7270 = vadd.f32 %v7093, %v7269
  %v7271 = vpop.f32.mrb[0].mxu0
  %7272 = vmatprep.mubr.bf16.mxu0 0
  %7273 = vmatmul.mubr.bf16.gmra.mrb[0].mxu0 %v7160
  %v7274 = vpop.f32.mrb[0].mxu0
  %v7275 = vadd.f32 %v7098, %v7274
  %v7276 = vpop.f32.mrb[0].mxu0
  %v7277 = vpop.f32.mrb[0].mxu0
  %v7278 = vadd.f32 %v7101, %v7277
  %v7279 = vpop.f32.mrb[0].mxu0
  %7280 = vmatprep.mubr.bf16.mxu0 0
  %7281 = vmatmul.mubr.bf16.gmra.mrb[0].mxu0 %v7163
  %v7282 = vpop.f32.mrb[0].mxu0
  %v7283 = vadd.f32 %v7106, %v7282
  %v7284 = vpop.f32.mrb[0].mxu0
  %v7285 = vpop.f32.mrb[0].mxu0
  %v7286 = vadd.f32 %v7109, %v7285
  %v7287 = vpop.f32.mrb[0].mxu0
  %7288 = vmatprep.mubr.bf16.mxu0 0
  %7289 = vmatmul.mubr.bf16.gmra.mrb[0].mxu0 %v7166
  %v7290 = vpop.f32.mrb[0].mxu0
  %v7291 = vadd.f32 %v7114, %v7290
  %v7292 = vpop.f32.mrb[0].mxu0
  %v7293 = vpop.f32.mrb[0].mxu0
  %v7294 = vadd.f32 %v7117, %v7293
  %v7295 = vpop.f32.mrb[0].mxu0
  %7296 = vdwg.mxu0
  %v7297 = vld [vmem:[%s21] sm:$0x1]
  %v7299 = vlaneseq
  %v7300 = vshrl.u32 %v7299, 7
  %v7301 = vsub.s32 0, %v7300
  %v7302 = vrot.slane %v7297, %v7301
  %v7304 = vadd.f32 %v7203, %v7302
  %v7305 = vadd.f32 %v7206, %v7302
  %v7306 = vadd.f32 %v7211, %v7302
  %v7307 = vadd.f32 %v7214, %v7302
  %v7308 = vadd.f32 %v7219, %v7302
  %v7309 = vadd.f32 %v7222, %v7302
  %v7310 = vadd.f32 %v7227, %v7302
  %v7311 = vadd.f32 %v7230, %v7302
  %v7312 = vadd.f32 %v7235, %v7302
  %v7313 = vadd.f32 %v7238, %v7302
  %v7314 = vadd.f32 %v7243, %v7302
  %v7315 = vadd.f32 %v7246, %v7302
  %v7316 = vadd.f32 %v7251, %v7302
  %v7317 = vadd.f32 %v7254, %v7302
  %v7318 = vadd.f32 %v7259, %v7302
  %v7319 = vadd.f32 %v7262, %v7302
  %v7320 = vadd.f32 %v7267, %v7302
  %v7321 = vadd.f32 %v7270, %v7302
  %v7322 = vadd.f32 %v7275, %v7302
  %v7323 = vadd.f32 %v7278, %v7302
  %v7324 = vadd.f32 %v7283, %v7302
  %v7325 = vadd.f32 %v7286, %v7302
  %v7326 = vadd.f32 %v7291, %v7302
  %v7327 = vadd.f32 %v7294, %v7302
  %v7328 = vmax.f32 %v7304, 0.0
  %v7329 = vmax.f32 %v7305, 0.0
  %v7330 = vmax.f32 %v7306, 0.0
  %v7331 = vmax.f32 %v7307, 0.0
  %v7332 = vmax.f32 %v7308, 0.0
  %v7333 = vmax.f32 %v7309, 0.0
  %v7334 = vmax.f32 %v7310, 0.0
  %v7335 = vmax.f32 %v7311, 0.0
  %v7336 = vmax.f32 %v7312, 0.0
  %v7337 = vmax.f32 %v7313, 0.0
  %v7338 = vmax.f32 %v7314, 0.0
  %v7339 = vmax.f32 %v7315, 0.0
  %v7340 = vmax.f32 %v7316, 0.0
  %v7341 = vmax.f32 %v7317, 0.0
  %v7342 = vmax.f32 %v7318, 0.0
  %v7343 = vmax.f32 %v7319, 0.0
  %v7344 = vmax.f32 %v7320, 0.0
  %v7345 = vmax.f32 %v7321, 0.0
  %v7346 = vmax.f32 %v7322, 0.0
  %v7347 = vmax.f32 %v7323, 0.0
  %v7348 = vmax.f32 %v7324, 0.0
  %v7349 = vmax.f32 %v7325, 0.0
  %v7350 = vmax.f32 %v7326, 0.0
  %v7351 = vmax.f32 %v7327, 0.0
  %v7352 = vpack.c.bf16 %v7329, %v7328
  %v7353 = vpack.c.bf16 %v7331, %v7330
  %v7354 = vpack.c.bf16 %v7333, %v7332
  %v7355 = vpack.c.bf16 %v7335, %v7334
  %v7356 = vpack.c.bf16 %v7337, %v7336
  %v7357 = vpack.c.bf16 %v7339, %v7338
  %v7358 = vpack.c.bf16 %v7341, %v7340
  %v7359 = vpack.c.bf16 %v7343, %v7342
  %v7360 = vpack.c.bf16 %v7345, %v7344
  %v7361 = vpack.c.bf16 %v7347, %v7346
  %v7362 = vpack.c.bf16 %v7349, %v7348
  %v7363 = vpack.c.bf16 %v7351, %v7350
  %v7376 = vunpack.c.l.b16 %v7352
  %v7377 = vunpack.c.h.b16 %v7352
  %v7378 = vunpack.c.l.b16 %v7353
  %v7379 = vunpack.c.h.b16 %v7353
  %v7380 = vunpack.c.l.b16 %v7354
  %v7381 = vunpack.c.h.b16 %v7354
  %v7382 = vunpack.c.l.b16 %v7355
  %v7383 = vunpack.c.h.b16 %v7355
  %v7384 = vunpack.c.l.b16 %v7356
  %v7385 = vunpack.c.h.b16 %v7356
  %v7386 = vunpack.c.l.b16 %v7357
  %v7387 = vunpack.c.h.b16 %v7357
  %v7388 = vunpack.c.l.b16 %v7358
  %v7389 = vunpack.c.h.b16 %v7358
  %v7390 = vunpack.c.l.b16 %v7359
  %v7391 = vunpack.c.h.b16 %v7359
  %v7392 = vunpack.c.l.b16 %v7360
  %v7393 = vunpack.c.h.b16 %v7360
  %v7394 = vunpack.c.l.b16 %v7361
  %v7395 = vunpack.c.h.b16 %v7361
  %v7396 = vunpack.c.l.b16 %v7362
  %v7397 = vunpack.c.h.b16 %v7362
  %v7398 = vunpack.c.l.b16 %v7363
  %v7399 = vunpack.c.h.b16 %v7363
  %v7400 = vpack.c.b16 %v7376, %v7376
  %v7401 = vpack.c.b16 %v7377, %v7377
  %v7402 = vpack.c.b16 %v7378, %v7378
  %v7403 = vpack.c.b16 %v7379, %v7379
  %v7404 = vpack.c.b16 %v7380, %v7380
  %v7405 = vpack.c.b16 %v7381, %v7381
  %v7406 = vpack.c.b16 %v7382, %v7382
  %v7407 = vpack.c.b16 %v7383, %v7383
  %v7408 = vpack.c.b16 %v7384, %v7384
  %v7409 = vpack.c.b16 %v7385, %v7385
  %v7410 = vpack.c.b16 %v7386, %v7386
  %v7411 = vpack.c.b16 %v7387, %v7387
  %v7412 = vpack.c.b16 %v7388, %v7388
  %v7413 = vpack.c.b16 %v7389, %v7389
  %v7414 = vpack.c.b16 %v7390, %v7390
  %v7415 = vpack.c.b16 %v7391, %v7391
  %v7416 = vpack.c.b16 %v7392, %v7392
  %v7417 = vpack.c.b16 %v7393, %v7393
  %v7418 = vpack.c.b16 %v7394, %v7394
  %v7419 = vpack.c.b16 %v7395, %v7395
  %v7420 = vpack.c.b16 %v7396, %v7396
  %v7421 = vpack.c.b16 %v7397, %v7397
  %v7422 = vpack.c.b16 %v7398, %v7398
  %v7423 = vpack.c.b16 %v7399, %v7399
  %vm7448 = vcmask 257024
  %7449 = vst.msk [vmem:[%s22] sm:$0xf] %vm7448, %v7400
  %7450 = vst.msk [vmem:[%s22 + $0x4] sm:$0xf] %vm7448, %v7401
  %7451 = vst.msk [vmem:[%s22 + $0x8] sm:$0xf] %vm7448, %v7402
  %7452 = vst.msk [vmem:[%s22 + $0xc] sm:$0xf] %vm7448, %v7403
  %7453 = vst.msk [vmem:[%s22 + $0x10] sm:$0xf] %vm7448, %v7404
  %7454 = vst.msk [vmem:[%s22 + $0x14] sm:$0xf] %vm7448, %v7405
  %7455 = vst.msk [vmem:[%s22 + $0x18] sm:$0xf] %vm7448, %v7406
  %7456 = vst.msk [vmem:[%s22 + $0x1c] sm:$0xf] %vm7448, %v7407
  %7457 = vst.msk [vmem:[%s22 + $0x20] sm:$0xf] %vm7448, %v7408
  %7458 = vst.msk [vmem:[%s22 + $0x24] sm:$0xf] %vm7448, %v7409
  %7459 = vst.msk [vmem:[%s22 + $0x28] sm:$0xf] %vm7448, %v7410
  %7460 = vst.msk [vmem:[%s22 + $0x2c] sm:$0xf] %vm7448, %v7411
  %7461 = vst.msk [vmem:[%s22 + $0x30] sm:$0xf] %vm7448, %v7412
  %7462 = vst.msk [vmem:[%s22 + $0x34] sm:$0xf] %vm7448, %v7413
  %7463 = vst.msk [vmem:[%s22 + $0x38] sm:$0xf] %vm7448, %v7414
  %7464 = vst.msk [vmem:[%s22 + $0x3c] sm:$0xf] %vm7448, %v7415
  %7465 = vst.msk [vmem:[%s22 + $0x40] sm:$0xf] %vm7448, %v7416
  %7466 = vst.msk [vmem:[%s22 + $0x44] sm:$0xf] %vm7448, %v7417
  %7467 = vst.msk [vmem:[%s22 + $0x48] sm:$0xf] %vm7448, %v7418
  %7468 = vst.msk [vmem:[%s22 + $0x4c] sm:$0xf] %vm7448, %v7419
  %7469 = vst.msk [vmem:[%s22 + $0x50] sm:$0xf] %vm7448, %v7420
  %7470 = vst.msk [vmem:[%s22 + $0x54] sm:$0xf] %vm7448, %v7421
  %7471 = vst.msk [vmem:[%s22 + $0x58] sm:$0xf] %vm7448, %v7422
  %7472 = vst.msk [vmem:[%s22 + $0x5c] sm:$0xf] %vm7448, %v7423
  // Predicated region
  $region120: #{tpu_custom_call.1} parent=0 // pred_check
    _
  $region121: #{tpu_custom_call.1} parent=0 // pred_check_branch
    %7474 = sbr.rel (0) target = $region123
  $region122: #{tpu_custom_call.1} parent=0 // pred_region
    _
  $region123: #{tpu_custom_call.1} parent=0 // pred_fallthru
    _
  // Predicated region
  $region124: #{tpu_custom_call.1} parent=0 // pred_check
    _
  $region125: #{tpu_custom_call.1} parent=0 // pred_check_branch
    %7476 = sbr.rel (0) target = $region127
  $region126: #{tpu_custom_call.1} parent=0 // pred_region
    _
  $region127: #{tpu_custom_call.1} parent=0 // pred_fallthru
    _
  %7477 = vsyncmov [#allocation3]
  %s7478 = vpop.sfrf %7477
  %p7479 = scmp.eq.s32.totalorder %s7478, 0
  %p7480 = pneg %p7479
  %7482 = shalt.err (%p7480)

</llo_original>
